<compile_context>
chip_gen: v7x
topology: tpu7x:2x2x1
jax: 0.10.0
libtpu: 0.0.40
codegen_flags: <defaults>
</compile_context>

<pallas_src>
import jax
import jax.numpy as jnp
from jax.experimental import pallas as pl
from jax.experimental.pallas import tpu as pltpu

NUM_LAYERS = 6
EPS = 1e-5
TM = 256                          # layer-kernel row tile
TK = 512                          # layer-kernel adj k tile (multiple of 256 for v6e/v7x MXU)
TM_IO = 512                       # input_fc / out_head row tile (streaming kernels)
VMEM_LIMIT = 48 * 1024 * 1024     # v7x-safe (64 MiB/core); raise on v5e/v6e for bigger tiles
F32 = jnp.float32
BF16 = jnp.bfloat16


def _round_up(v, m):
    return (v + m - 1) // m * m


def _pad2(a, r, c):
    return jnp.pad(a, ((0, r - a.shape[0]), (0, c - a.shape[1])))


# --------------------------------------------------------------------------- #
# Kernels
# --------------------------------------------------------------------------- #
def input_fc_kernel(x_ref, w_ref, b_ref, o_ref):
    h = jnp.dot(x_ref[...], w_ref[...], preferred_element_type=jnp.float32)
    o_ref[...] = (h + b_ref[...]).astype(BF16)


def gcn_layer_kernel(scal_ref, adj_ref, dinv_k_ref, x_ref, w_ref, b_ref,
                     dinv_r_ref, xin_ref, prev_ref, accin_ref,
                     xout_ref, accout_ref, acc_scratch):
    k = pl.program_id(1)

    @pl.when(k == 0)
    def _():
        acc_scratch[...] = jnp.zeros_like(acc_scratch)

    # Binary (A+I) block: int8 -> bf16 on the VPU (hidden under the MXU), matmul
    # against the column-scaled features D^-1/2 x; f32 accumulation across k blocks.
    adj_blk = adj_ref[...].astype(BF16)
    xs = (x_ref[...].astype(F32) * dinv_k_ref[...]).astype(BF16)
    acc_scratch[...] += jnp.dot(adj_blk, xs, preferred_element_type=jnp.float32)

    @pl.when(k == pl.num_programs(1) - 1)
    def _():
        # Row scaling D^-1/2 completes A_hat @ x, then @ W' (BN folded), ReLU, residuals.
        t = acc_scratch[...] * dinv_r_ref[...]
        h = jnp.dot(t.astype(BF16), w_ref[...],
                    preferred_element_type=jnp.float32) + b_ref[...]
        h = jnp.maximum(h, 0.0)
        h = h + 0.2 * xin_ref[...].astype(F32) + scal_ref[1] * prev_ref[...].astype(F32)
        xout_ref[...] = h.astype(BF16)
        # Running weighted sum of layer outputs (aliased in/out f32 buffer).
        accout_ref[...] = accin_ref[...] + scal_ref[0] * h


def out_head_kernel(acc_ref, w_ref, b_ref, o_ref):
    logits = jnp.dot(acc_ref[...].astype(BF16), w_ref[...],
                     preferred_element_type=jnp.float32) + b_ref[...]
    m = jnp.max(logits, axis=-1, keepdims=True)
    z = logits - m
    lse = jnp.log(jnp.sum(jnp.exp(z), axis=-1, keepdims=True))
    o_ref[...] = z - lse


# --------------------------------------------------------------------------- #
# Wrapper
# --------------------------------------------------------------------------- #
@jax.jit
def gcn_res_forward(x, adj_bin, dinv, params):
    """adj_bin: dense binary (A+I); dinv: (N,1) f32 D^-1/2 degree scaling."""
    n, f = x.shape
    h = params["w_in"].shape[1]
    c = params["w_out"].shape[1]
    num_layers = params["w_conv"].shape[0]

    n_pad = _round_up(n, max(TM, TK, TM_IO))     # TM | TK, TM_IO == TK
    f_pad = _round_up(f, 128)
    h_pad = _round_up(h, 128)
    c_pad = _round_up(c, 128)

    # ---- wrapper-side preprocessing (cheap) ----
    # Fold eval-mode BatchNorm into conv weights / bias.
    scale = params["gamma"] * jax.lax.rsqrt(params["var"] + EPS)           # (L,1,H)
    w_fold = params["w_conv"] * scale                                      # (L,H,H)
    b_fold = (params["b_conv"] - params["mean"]) * scale + params["beta"]  # (L,1,H)
    lw = jax.nn.softmax(params["layer_w"][0])                              # (L,)

    # Lane-dense padding; bf16 matmul operands, int8 binary adjacency, f32 scalings.
    xp = _pad2(x, n_pad, f_pad).astype(BF16)
    adjp = _pad2(adj_bin, n_pad, n_pad).astype(jnp.int8)
    dinvp = _pad2(dinv, n_pad, 1).astype(F32)
    w_in = _pad2(params["w_in"], f_pad, h_pad).astype(BF16)
    b_in = _pad2(params["b_in"], 1, h_pad).astype(F32)
    w_conv = jnp.pad(w_fold, ((0, 0), (0, h_pad - h), (0, h_pad - h))).astype(BF16)
    b_conv = jnp.pad(b_fold, ((0, 0), (0, 0), (0, h_pad - h))).astype(F32)
    w_out = _pad2(params["w_out"], h_pad, c_pad).astype(BF16)
    # Padded class logits get a huge negative bias so log_softmax ignores them
    # (requires w_out padding to stay zero).
    b_out = jnp.pad(params["b_out"].astype(F32), ((0, 0), (0, c_pad - c)),
                    constant_values=-1e30)

    grid_r = n_pad // TM
    grid_k = n_pad // TK
    grid_io = n_pad // TM_IO

    cp_rows = pltpu.CompilerParams(dimension_semantics=("parallel",),
                                   vmem_limit_bytes=VMEM_LIMIT)
    cp_layer = pltpu.CompilerParams(dimension_semantics=("parallel", "arbitrary"),
                                    vmem_limit_bytes=VMEM_LIMIT)

    # ---- input_fc: Linear(F -> H), large streaming row blocks ----
    x0_bf16 = pl.pallas_call(
        input_fc_kernel,
        grid=(grid_io,),
        in_specs=[pl.BlockSpec((TM_IO, f_pad), lambda r: (r, 0)),
                  pl.BlockSpec((f_pad, h_pad), lambda r: (0, 0)),
                  pl.BlockSpec((1, h_pad), lambda r: (0, 0))],
        out_specs=pl.BlockSpec((TM_IO, h_pad), lambda r: (r, 0)),
        out_shape=jax.ShapeDtypeStruct((n_pad, h_pad), BF16),
        compiler_params=cp_rows,
        cost_estimate=pl.CostEstimate(
            flops=2 * n_pad * f_pad * h_pad, transcendentals=0,
            bytes_accessed=2 * n_pad * f_pad + 4 * n_pad * h_pad),
    )(xp, w_in, b_in)

    layer_cost = pl.CostEstimate(
        flops=2 * n_pad * n_pad * h_pad + 2 * n_pad * h_pad * h_pad,
        transcendentals=0,
        bytes_accessed=(n_pad * n_pad                       # int8 adj
                        + grid_r * n_pad * h_pad * 2        # x re-stream per row block
                        + n_pad * h_pad * (2 + 2 + 4 + 2 + 4)))  # xin/prev/accin/xout/accout

    acc = jnp.zeros((n_pad, h_pad), F32)
    xcur = x0_bf16
    prev = x0_bf16

    for i in range(num_layers):
        c_prev = 0.0 if i == 0 else 0.5
        scal = jnp.stack([lw[i], jnp.asarray(c_prev, F32)]).astype(F32)
        xnew, acc = pl.pallas_call(
            gcn_layer_kernel,
            grid=(grid_r, grid_k),
            in_specs=[
                pl.BlockSpec(memory_space=pltpu.MemorySpace.SMEM),   # [w_i, c_prev]
                pl.BlockSpec((TM, TK), lambda r, k: (r, k)),         # binary adj (int8)
                pl.BlockSpec((TK, 1), lambda r, k: (k, 0)),          # D^-1/2 (k columns)
                pl.BlockSpec((TK, h_pad), lambda r, k: (k, 0)),      # x (bf16)
                pl.BlockSpec((h_pad, h_pad), lambda r, k: (0, 0)),   # W' (BN folded)
                pl.BlockSpec((1, h_pad), lambda r, k: (0, 0)),       # b'
                pl.BlockSpec((TM, 1), lambda r, k: (r, 0)),          # D^-1/2 (rows)
                pl.BlockSpec((TM, h_pad), lambda r, k: (r, 0)),      # x_input (bf16)
                pl.BlockSpec((TM, h_pad), lambda r, k: (r, 0)),      # prev layer out (bf16)
                pl.BlockSpec((TM, h_pad), lambda r, k: (r, 0)),      # weighted-sum acc in (f32)
            ],
            out_specs=[
                pl.BlockSpec((TM, h_pad), lambda r, k: (r, 0)),      # layer out (bf16)
                pl.BlockSpec((TM, h_pad), lambda r, k: (r, 0)),      # weighted-sum acc out (f32)
            ],
            out_shape=[jax.ShapeDtypeStruct((n_pad, h_pad), BF16),
                       jax.ShapeDtypeStruct((n_pad, h_pad), F32)],
            scratch_shapes=[pltpu.VMEM((TM, h_pad), F32)],
            input_output_aliases={9: 1},
            compiler_params=cp_layer,
            cost_estimate=layer_cost,
        )(scal, adjp, dinvp, xcur, w_conv[i], b_conv[i], dinvp, x0_bf16, prev, acc)
        prev = xnew
        xcur = xnew

    # ---- out_fc + log_softmax, lane-dense (C padded to 128), large row blocks ----
    out_pad = pl.pallas_call(
        out_head_kernel,
        grid=(grid_io,),
        in_specs=[pl.BlockSpec((TM_IO, h_pad), lambda r: (r, 0)),
                  pl.BlockSpec((h_pad, c_pad), lambda r: (0, 0)),
                  pl.BlockSpec((1, c_pad), lambda r: (0, 0))],
        out_specs=pl.BlockSpec((TM_IO, c_pad), lambda r: (r, 0)),
        out_shape=jax.ShapeDtypeStruct((n_pad, c_pad), F32),
        compiler_params=cp_rows,
        cost_estimate=pl.CostEstimate(
            flops=2 * n_pad * h_pad * c_pad, transcendentals=n_pad * c_pad,
            bytes_accessed=4 * n_pad * (h_pad + c_pad)),
    )(acc, w_out, b_out)

    return out_pad[:n, :c]


# --------------------------------------------------------------------------- #
# Pure-JAX reference with the same numerical recipe (bf16 matmul inputs, f32
# accumulation, BN folded, binary adj + f32 D^-1/2 scalings, bf16 node state).
# --------------------------------------------------------------------------- #
def reference_forward(x, adj_bin, dinv, p):
    def bdot(a, b):
        return jnp.dot(a.astype(BF16), b.astype(BF16),
                       preferred_element_type=jnp.float32)

    scale = p["gamma"] * jax.lax.rsqrt(p["var"] + EPS)
    w_fold = p["w_conv"] * scale
    b_fold = (p["b_conv"] - p["mean"]) * scale + p["beta"]
    lw = jax.nn.softmax(p["layer_w"][0])

    h0 = (bdot(x, p["w_in"]) + p["b_in"]).astype(BF16)
    x_input = h0
    acc = jnp.zeros((x.shape[0], p["w_in"].shape[1]), F32)
    prev = h0
    xcur = h0
    for i in range(NUM_LAYERS):
        xs = xcur.astype(F32) * dinv                 # column scaling folded into x
        t = bdot(adj_bin, xs) * dinv                 # row scaling -> A_hat @ x
        h = bdot(t, w_fold[i]) + b_fold[i]           # (A_hat @ x) @ W' + b'
        h = jnp.maximum(h, 0.0)
        h = h + 0.2 * x_input.astype(F32) + (0.5 * prev.astype(F32) if i > 0 else 0.0)
        acc = acc + lw[i] * h
        prev = h.astype(BF16)
        xcur = prev
    logits = bdot(acc, p["w_out"]) + p["b_out"]
    return jax.nn.log_softmax(logits, axis=1)


def make_graph(key, n_nodes, p_edge=0.05):
    """Binary (A+I) plus D^-1/2 so A_hat = diag(dinv) (A+I) diag(dinv)."""
    a = (jax.random.uniform(key, (n_nodes, n_nodes)) < p_edge).astype(F32)
    a = jnp.maximum(a, a.T)
    a_bin = jnp.minimum(a + jnp.eye(n_nodes, dtype=F32), 1.0)
    deg = jnp.sum(a_bin, axis=1, keepdims=True)
    dinv = 1.0 / jnp.sqrt(deg)
    return a_bin, dinv


if __name__ == "__main__":
    # Small, non-128-aligned shapes that still exercise padding, row tiling (grid_r=4)
    # and k-accumulation (grid_k=2 with TK=512, n_pad=1024).
    N, F_IN, H, C = 600, 100, 64, 40     # nodes, node features, hidden, classes

    key = jax.random.PRNGKey(0)
    keys = jax.random.split(key, 16)

    x = jax.random.normal(keys[0], (N, F_IN), dtype=F32)
    a_bin, dinv = make_graph(keys[1], N)

    params = {
        "w_in":    jax.random.normal(keys[2], (F_IN, H), F32) * 0.1,
        "b_in":    jax.random.normal(keys[3], (1, H), F32) * 0.1,
        "w_conv":  jax.random.normal(keys[4], (NUM_LAYERS, H, H), F32) * 0.1,
        "b_conv":  jax.random.normal(keys[5], (NUM_LAYERS, 1, H), F32) * 0.1,
        "gamma":   1.0 + 0.1 * jax.random.normal(keys[6], (NUM_LAYERS, 1, H), F32),
        "beta":    0.1 * jax.random.normal(keys[7], (NUM_LAYERS, 1, H), F32),
        "mean":    0.1 * jax.random.normal(keys[8], (NUM_LAYERS, 1, H), F32),
        "var":     0.5 + jnp.abs(jax.random.normal(keys[9], (NUM_LAYERS, 1, H), F32)),
        "w_out":   jax.random.normal(keys[10], (H, C), F32) * 0.1,
        "b_out":   jax.random.normal(keys[11], (1, C), F32) * 0.1,
        "layer_w": jax.random.normal(keys[12], (1, NUM_LAYERS), F32),
    }

    out = jax.block_until_ready(gcn_res_forward(x, a_bin, dinv, params))
    ref = jax.block_until_ready(reference_forward(x, a_bin, dinv, params))

    assert out.shape == (N, C), out.shape
    assert jnp.all(jnp.isfinite(out)), "non-finite output"
    max_err = float(jnp.max(jnp.abs(out - ref)))
    assert jnp.allclose(out, ref, atol=1e-2, rtol=1e-2), max_err
    print("KERNEL_OK")
</pallas_src>

<mosaic_0001>
module attributes {stable_mosaic.version = 11 : i64} {
  func.func @input_fc_kernel(%arg0: i32, %arg1: memref<512x128xbf16, #tpu.memory_space<vmem>>, %arg2: memref<128x128xbf16, #tpu.memory_space<vmem>>, %arg3: memref<1x128xf32, #tpu.memory_space<vmem>>, %arg4: memref<512x128xbf16, #tpu.memory_space<vmem>>) attributes {dimension_semantics = [#tpu.dimension_semantics<parallel>], iteration_bounds = array<i64: 2>, scalar_prefetch = 0 : i64, scratch_operands = 0 : i64, tpu.core_type = #tpu.core_type<tc>, window_params = [{transform_indices = @transform_0, window_bounds = array<i64: 512, 128>}, {pipeline_mode = #tpu.pipeline_mode<synchronous>, transform_indices = @transform_1, window_bounds = array<i64: 128, 128>}, {pipeline_mode = #tpu.pipeline_mode<synchronous>, transform_indices = @transform_2, window_bounds = array<i64: 1, 128>}, {transform_indices = @transform_3, window_bounds = array<i64: 512, 128>}]} {
    %c0 = arith.constant 0 : index
    %c0_0 = arith.constant 0 : index
    %0 = vector.load %arg1[%c0, %c0_0] : memref<512x128xbf16, #tpu.memory_space<vmem>>, vector<512x128xbf16>
    %c0_1 = arith.constant 0 : index
    %c0_2 = arith.constant 0 : index
    %1 = vector.load %arg2[%c0_1, %c0_2] : memref<128x128xbf16, #tpu.memory_space<vmem>>, vector<128x128xbf16>
    %cst = arith.constant dense<0.000000e+00> : vector<512x128xf32>
    %2 = tpu.matmul %0, %1, %cst {dimension_numbers = #tpu.dot_dimension_numbers<[1], [0], [0], [1], [0, 0, 1, 1], [], []>} : vector<512x128xbf16>, vector<128x128xbf16>, vector<512x128xf32> -> vector<512x128xf32>
    %c0_3 = arith.constant 0 : index
    %c0_4 = arith.constant 0 : index
    %3 = vector.load %arg3[%c0_3, %c0_4] : memref<1x128xf32, #tpu.memory_space<vmem>>, vector<1x128xf32>
    %4 = vector.broadcast %3 : vector<1x128xf32> to vector<512x128xf32>
    %5 = arith.addf %2, %4 : vector<512x128xf32>
    %6 = arith.truncf %5 : vector<512x128xf32> to vector<512x128xbf16>
    %c0_5 = arith.constant 0 : index
    %c0_6 = arith.constant 0 : index
    %7 = vector.load %arg4[%c0_5, %c0_6] : memref<512x128xbf16, #tpu.memory_space<vmem>>, vector<512x128xbf16>
    tpu.vector_store %arg4[%c0_5, %c0_6], %6 {strides = array<i32>} : memref<512x128xbf16, #tpu.memory_space<vmem>>, vector<512x128xbf16>,
    return
  }
  func.func @transform_0(%arg0: i32) -> (i32, i32) {
    %c0_i32 = arith.constant 0 : i32
    %c0_i32_0 = arith.constant 0 : i32
    return %arg0, %c0_i32 : i32, i32
  }
  func.func @transform_1(%arg0: i32) -> (i32, i32) {
    %c0_i32 = arith.constant 0 : i32
    %c0_i32_0 = arith.constant 0 : i32
    %c0_i32_1 = arith.constant 0 : i32
    return %c0_i32, %c0_i32_0 : i32, i32
  }
  func.func @transform_2(%arg0: i32) -> (i32, i32) {
    %c0_i32 = arith.constant 0 : i32
    %c0_i32_0 = arith.constant 0 : i32
    %c0_i32_1 = arith.constant 0 : i32
    return %c0_i32, %c0_i32_0 : i32, i32
  }
  func.func @transform_3(%arg0: i32) -> (i32, i32) {
    %c0_i32 = arith.constant 0 : i32
    %c0_i32_0 = arith.constant 0 : i32
    return %arg0, %c0_i32 : i32, i32
  }
}

module attributes {stable_mosaic.version = 11 : i64} {
  func.func @gcn_layer_kernel(%arg0: i32, %arg1: i32, %arg2: memref<2xf32, #tpu.memory_space<smem>>, %arg3: memref<256x512xi8, #tpu.memory_space<vmem>>, %arg4: memref<512x1xf32, #tpu.memory_space<vmem>>, %arg5: memref<512x128xbf16, #tpu.memory_space<vmem>>, %arg6: memref<128x128xbf16, #tpu.memory_space<vmem>>, %arg7: memref<1x128xf32, #tpu.memory_space<vmem>>, %arg8: memref<256x1xf32, #tpu.memory_space<vmem>>, %arg9: memref<256x128xbf16, #tpu.memory_space<vmem>>, %arg10: memref<256x128xbf16, #tpu.memory_space<vmem>>, %arg11: memref<256x128xf32, #tpu.memory_space<vmem>>, %arg12: memref<256x128xbf16, #tpu.memory_space<vmem>>, %arg13: memref<256x128xf32, #tpu.memory_space<vmem>>, %arg14: memref<256x128xf32, #tpu.memory_space<vmem>>) attributes {dimension_semantics = [#tpu.dimension_semantics<parallel>, #tpu.dimension_semantics<arbitrary>], iteration_bounds = array<i64: 4, 2>, scalar_prefetch = 0 : i64, scratch_operands = 1 : i64, tpu.core_type = #tpu.core_type<tc>, window_params = [{transform_indices = @transform_0, window_bounds = array<i64: 2>}, {transform_indices = @transform_1, window_bounds = array<i64: 256, 512>}, {transform_indices = @transform_2, window_bounds = array<i64: 512, 1>}, {transform_indices = @transform_3, window_bounds = array<i64: 512, 128>}, {pipeline_mode = #tpu.pipeline_mode<synchronous>, transform_indices = @transform_4, window_bounds = array<i64: 128, 128>}, {pipeline_mode = #tpu.pipeline_mode<synchronous>, transform_indices = @transform_5, window_bounds = array<i64: 1, 128>}, {transform_indices = @transform_6, window_bounds = array<i64: 256, 1>}, {transform_indices = @transform_7, window_bounds = array<i64: 256, 128>}, {transform_indices = @transform_8, window_bounds = array<i64: 256, 128>}, {transform_indices = @transform_9, window_bounds = array<i64: 256, 128>}, {transform_indices = @transform_10, window_bounds = array<i64: 256, 128>}, {transform_indices = @transform_11, window_bounds = array<i64: 256, 128>}]} {
    %c0_i32 = arith.constant 0 : i32
    %0 = arith.cmpi eq, %arg1, %c0_i32 : i32
    %1 = arith.extui %0 : i1 to i32
    %c0_i32_0 = arith.constant 0 : i32
    %2 = arith.cmpi ne, %1, %c0_i32_0 : i32
    scf.if %2 {
      %cst_11 = arith.constant 0.000000e+00 : f32
      %18 = vector.broadcast %cst_11 : f32 to vector<256x128xf32>
      %c0_12 = arith.constant 0 : index
      %c0_13 = arith.constant 0 : index
      %19 = vector.load %arg14[%c0_12, %c0_13] : memref<256x128xf32, #tpu.memory_space<vmem>>, vector<256x128xf32>
      tpu.vector_store %arg14[%c0_12, %c0_13], %18 {strides = array<i32>} : memref<256x128xf32, #tpu.memory_space<vmem>>, vector<256x128xf32>,
    } else {
    }
    %c0 = arith.constant 0 : index
    %c0_1 = arith.constant 0 : index
    %3 = vector.load %arg3[%c0, %c0_1] : memref<256x512xi8, #tpu.memory_space<vmem>>, vector<256x512xi8>
    %4 = arith.sitofp %3 : vector<256x512xi8> to vector<256x512xbf16>
    %c0_2 = arith.constant 0 : index
    %c0_3 = arith.constant 0 : index
    %5 = vector.load %arg5[%c0_2, %c0_3] : memref<512x128xbf16, #tpu.memory_space<vmem>>, vector<512x128xbf16>
    %6 = arith.extf %5 : vector<512x128xbf16> to vector<512x128xf32>
    %c0_4 = arith.constant 0 : index
    %c0_5 = arith.constant 0 : index
    %7 = vector.load %arg4[%c0_4, %c0_5] : memref<512x1xf32, #tpu.memory_space<vmem>>, vector<512x1xf32>
    %8 = vector.broadcast %7 : vector<512x1xf32> to vector<512x128xf32>
    %9 = arith.mulf %6, %8 : vector<512x128xf32>
    %10 = arith.truncf %9 : vector<512x128xf32> to vector<512x128xbf16>
    %c0_6 = arith.constant 0 : index
    %c0_7 = arith.constant 0 : index
    %11 = vector.load %arg14[%c0_6, %c0_7] : memref<256x128xf32, #tpu.memory_space<vmem>>, vector<256x128xf32>
    %cst = arith.constant dense<0.000000e+00> : vector<256x128xf32>
    %12 = tpu.matmul %4, %10, %cst {dimension_numbers = #tpu.dot_dimension_numbers<[1], [0], [0], [1], [0, 0, 1, 1], [], []>} : vector<256x512xbf16>, vector<512x128xbf16>, vector<256x128xf32> -> vector<256x128xf32>
    %13 = arith.addf %11, %12 : vector<256x128xf32>
    %c0_8 = arith.constant 0 : index
    %c0_9 = arith.constant 0 : index
    %14 = vector.load %arg14[%c0_8, %c0_9] : memref<256x128xf32, #tpu.memory_space<vmem>>, vector<256x128xf32>
    tpu.vector_store %arg14[%c0_8, %c0_9], %13 {strides = array<i32>} : memref<256x128xf32, #tpu.memory_space<vmem>>, vector<256x128xf32>,
    %c1_i32 = arith.constant 1 : i32
    %15 = arith.cmpi eq, %arg1, %c1_i32 : i32
    %16 = arith.extui %15 : i1 to i32
    %c0_i32_10 = arith.constant 0 : i32
    %17 = arith.cmpi ne, %16, %c0_i32_10 : i32
    scf.if %17 {
      %c0_11 = arith.constant 0 : index
      %c0_12 = arith.constant 0 : index
      %18 = vector.load %arg14[%c0_11, %c0_12] : memref<256x128xf32, #tpu.memory_space<vmem>>, vector<256x128xf32>
      %c0_13 = arith.constant 0 : index
      %c0_14 = arith.constant 0 : index
      %19 = vector.load %arg8[%c0_13, %c0_14] : memref<256x1xf32, #tpu.memory_space<vmem>>, vector<256x1xf32>
      %20 = vector.broadcast %19 : vector<256x1xf32> to vector<256x128xf32>
      %21 = arith.mulf %18, %20 : vector<256x128xf32>
      %22 = arith.truncf %21 : vector<256x128xf32> to vector<256x128xbf16>
      %c0_15 = arith.constant 0 : index
      %c0_16 = arith.constant 0 : index
      %23 = vector.load %arg6[%c0_15, %c0_16] : memref<128x128xbf16, #tpu.memory_space<vmem>>, vector<128x128xbf16>
      %cst_17 = arith.constant dense<0.000000e+00> : vector<256x128xf32>
      %24 = tpu.matmul %22, %23, %cst_17 {dimension_numbers = #tpu.dot_dimension_numbers<[1], [0], [0], [1], [0, 0, 1, 1], [], []>} : vector<256x128xbf16>, vector<128x128xbf16>, vector<256x128xf32> -> vector<256x128xf32>
      %c0_18 = arith.constant 0 : index
      %c0_19 = arith.constant 0 : index
      %25 = vector.load %arg7[%c0_18, %c0_19] : memref<1x128xf32, #tpu.memory_space<vmem>>, vector<1x128xf32>
      %26 = vector.broadcast %25 : vector<1x128xf32> to vector<256x128xf32>
      %27 = arith.addf %24, %26 : vector<256x128xf32>
      %cst_20 = arith.constant 0.000000e+00 : f32
      %28 = vector.broadcast %cst_20 : f32 to vector<256x128xf32>
      %29 = arith.maximumf %27, %28 : vector<256x128xf32>
      %c0_21 = arith.constant 0 : index
      %c0_22 = arith.constant 0 : index
      %30 = vector.load %arg9[%c0_21, %c0_22] : memref<256x128xbf16, #tpu.memory_space<vmem>>, vector<256x128xbf16>
      %31 = arith.extf %30 : vector<256x128xbf16> to vector<256x128xf32>
      %cst_23 = arith.constant 2.000000e-01 : f32
      %32 = vector.broadcast %cst_23 : f32 to vector<256x128xf32>
      %33 = arith.mulf %32, %31 : vector<256x128xf32>
      %34 = arith.addf %29, %33 : vector<256x128xf32>
      %c1 = arith.constant 1 : index
      %35 = memref.load %arg2[%c1] : memref<2xf32, #tpu.memory_space<smem>>
      %c0_24 = arith.constant 0 : index
      %c0_25 = arith.constant 0 : index
      %36 = vector.load %arg10[%c0_24, %c0_25] : memref<256x128xbf16, #tpu.memory_space<vmem>>, vector<256x128xbf16>
      %37 = arith.extf %36 : vector<256x128xbf16> to vector<256x128xf32>
      %38 = vector.broadcast %35 : f32 to vector<256x128xf32>
      %39 = arith.mulf %38, %37 : vector<256x128xf32>
      %40 = arith.addf %34, %39 : vector<256x128xf32>
      %41 = arith.truncf %40 : vector<256x128xf32> to vector<256x128xbf16>
      %c0_26 = arith.constant 0 : index
      %c0_27 = arith.constant 0 : index
      %42 = vector.load %arg12[%c0_26, %c0_27] : memref<256x128xbf16, #tpu.memory_space<vmem>>, vector<256x128xbf16>
      tpu.vector_store %arg12[%c0_26, %c0_27], %41 {strides = array<i32>} : memref<256x128xbf16, #tpu.memory_space<vmem>>, vector<256x128xbf16>,
      %c0_28 = arith.constant 0 : index
      %c0_29 = arith.constant 0 : index
      %43 = vector.load %arg11[%c0_28, %c0_29] : memref<256x128xf32, #tpu.memory_space<vmem>>, vector<256x128xf32>
      %c0_30 = arith.constant 0 : index
      %44 = memref.load %arg2[%c0_30] : memref<2xf32, #tpu.memory_space<smem>>
      %45 = vector.broadcast %44 : f32 to vector<256x128xf32>
      %46 = arith.mulf %45, %40 : vector<256x128xf32>
      %47 = arith.addf %43, %46 : vector<256x128xf32>
      %c0_31 = arith.constant 0 : index
      %c0_32 = arith.constant 0 : index
      %48 = vector.load %arg13[%c0_31, %c0_32] : memref<256x128xf32, #tpu.memory_space<vmem>>, vector<256x128xf32>
      tpu.vector_store %arg13[%c0_31, %c0_32], %47 {strides = array<i32>} : memref<256x128xf32, #tpu.memory_space<vmem>>, vector<256x128xf32>,
    } else {
    }
    return
  }
  func.func @transform_0(%arg0: i32, %arg1: i32) -> i32 {
    %c0_i32 = arith.constant 0 : i32
    %c0_i32_0 = arith.constant 0 : i32
    return %c0_i32 : i32
  }
  func.func @transform_1(%arg0: i32, %arg1: i32) -> (i32, i32) {
    %c0_i32 = arith.constant 0 : i32
    return %arg0, %arg1 : i32, i32
  }
  func.func @transform_2(%arg0: i32, %arg1: i32) -> (i32, i32) {
    %c0_i32 = arith.constant 0 : i32
    %c0_i32_0 = arith.constant 0 : i32
    return %arg1, %c0_i32 : i32, i32
  }
  func.func @transform_3(%arg0: i32, %arg1: i32) -> (i32, i32) {
    %c0_i32 = arith.constant 0 : i32
    %c0_i32_0 = arith.constant 0 : i32
    return %arg1, %c0_i32 : i32, i32
  }
  func.func @transform_4(%arg0: i32, %arg1: i32) -> (i32, i32) {
    %c0_i32 = arith.constant 0 : i32
    %c0_i32_0 = arith.constant 0 : i32
    %c0_i32_1 = arith.constant 0 : i32
    return %c0_i32, %c0_i32_0 : i32, i32
  }
  func.func @transform_5(%arg0: i32, %arg1: i32) -> (i32, i32) {
    %c0_i32 = arith.constant 0 : i32
    %c0_i32_0 = arith.constant 0 : i32
    %c0_i32_1 = arith.constant 0 : i32
    return %c0_i32, %c0_i32_0 : i32, i32
  }
  func.func @transform_6(%arg0: i32, %arg1: i32) -> (i32, i32) {
    %c0_i32 = arith.constant 0 : i32
    %c0_i32_0 = arith.constant 0 : i32
    return %arg0, %c0_i32 : i32, i32
  }
  func.func @transform_7(%arg0: i32, %arg1: i32) -> (i32, i32) {
    %c0_i32 = arith.constant 0 : i32
    %c0_i32_0 = arith.constant 0 : i32
    return %arg0, %c0_i32 : i32, i32
  }
  func.func @transform_8(%arg0: i32, %arg1: i32) -> (i32, i32) {
    %c0_i32 = arith.constant 0 : i32
    %c0_i32_0 = arith.constant 0 : i32
    return %arg0, %c0_i32 : i32, i32
  }
  func.func @transform_9(%arg0: i32, %arg1: i32) -> (i32, i32) {
    %c0_i32 = arith.constant 0 : i32
    %c0_i32_0 = arith.constant 0 : i32
    return %arg0, %c0_i32 : i32, i32
  }
  func.func @transform_10(%arg0: i32, %arg1: i32) -> (i32, i32) {
    %c0_i32 = arith.constant 0 : i32
    %c0_i32_0 = arith.constant 0 : i32
    return %arg0, %c0_i32 : i32, i32
  }
  func.func @transform_11(%arg0: i32, %arg1: i32) -> (i32, i32) {
    %c0_i32 = arith.constant 0 : i32
    %c0_i32_0 = arith.constant 0 : i32
    return %arg0, %c0_i32 : i32, i32
  }
}

module attributes {stable_mosaic.version = 11 : i64} {
  func.func @gcn_layer_kernel(%arg0: i32, %arg1: i32, %arg2: memref<2xf32, #tpu.memory_space<smem>>, %arg3: memref<256x512xi8, #tpu.memory_space<vmem>>, %arg4: memref<512x1xf32, #tpu.memory_space<vmem>>, %arg5: memref<512x128xbf16, #tpu.memory_space<vmem>>, %arg6: memref<128x128xbf16, #tpu.memory_space<vmem>>, %arg7: memref<1x128xf32, #tpu.memory_space<vmem>>, %arg8: memref<256x1xf32, #tpu.memory_space<vmem>>, %arg9: memref<256x128xbf16, #tpu.memory_space<vmem>>, %arg10: memref<256x128xbf16, #tpu.memory_space<vmem>>, %arg11: memref<256x128xf32, #tpu.memory_space<vmem>>, %arg12: memref<256x128xbf16, #tpu.memory_space<vmem>>, %arg13: memref<256x128xf32, #tpu.memory_space<vmem>>, %arg14: memref<256x128xf32, #tpu.memory_space<vmem>>) attributes {dimension_semantics = [#tpu.dimension_semantics<parallel>, #tpu.dimension_semantics<arbitrary>], iteration_bounds = array<i64: 4, 2>, scalar_prefetch = 0 : i64, scratch_operands = 1 : i64, tpu.core_type = #tpu.core_type<tc>, window_params = [{transform_indices = @transform_0, window_bounds = array<i64: 2>}, {transform_indices = @transform_1, window_bounds = array<i64: 256, 512>}, {transform_indices = @transform_2, window_bounds = array<i64: 512, 1>}, {transform_indices = @transform_3, window_bounds = array<i64: 512, 128>}, {pipeline_mode = #tpu.pipeline_mode<synchronous>, transform_indices = @transform_4, window_bounds = array<i64: 128, 128>}, {pipeline_mode = #tpu.pipeline_mode<synchronous>, transform_indices = @transform_5, window_bounds = array<i64: 1, 128>}, {transform_indices = @transform_6, window_bounds = array<i64: 256, 1>}, {transform_indices = @transform_7, window_bounds = array<i64: 256, 128>}, {transform_indices = @transform_8, window_bounds = array<i64: 256, 128>}, {transform_indices = @transform_9, window_bounds = array<i64: 256, 128>}, {transform_indices = @transform_10, window_bounds = array<i64: 256, 128>}, {transform_indices = @transform_11, window_bounds = array<i64: 256, 128>}]} {
    %c0_i32 = arith.constant 0 : i32
    %0 = arith.cmpi eq, %arg1, %c0_i32 : i32
    %1 = arith.extui %0 : i1 to i32
    %c0_i32_0 = arith.constant 0 : i32
    %2 = arith.cmpi ne, %1, %c0_i32_0 : i32
    scf.if %2 {
      %cst_11 = arith.constant 0.000000e+00 : f32
      %18 = vector.broadcast %cst_11 : f32 to vector<256x128xf32>
      %c0_12 = arith.constant 0 : index
      %c0_13 = arith.constant 0 : index
      %19 = vector.load %arg14[%c0_12, %c0_13] : memref<256x128xf32, #tpu.memory_space<vmem>>, vector<256x128xf32>
      tpu.vector_store %arg14[%c0_12, %c0_13], %18 {strides = array<i32>} : memref<256x128xf32, #tpu.memory_space<vmem>>, vector<256x128xf32>,
    } else {
    }
    %c0 = arith.constant 0 : index
    %c0_1 = arith.constant 0 : index
    %3 = vector.load %arg3[%c0, %c0_1] : memref<256x512xi8, #tpu.memory_space<vmem>>, vector<256x512xi8>
    %4 = arith.sitofp %3 : vector<256x512xi8> to vector<256x512xbf16>
    %c0_2 = arith.constant 0 : index
    %c0_3 = arith.constant 0 : index
    %5 = vector.load %arg5[%c0_2, %c0_3] : memref<512x128xbf16, #tpu.memory_space<vmem>>, vector<512x128xbf16>
    %6 = arith.extf %5 : vector<512x128xbf16> to vector<512x128xf32>
    %c0_4 = arith.constant 0 : index
    %c0_5 = arith.constant 0 : index
    %7 = vector.load %arg4[%c0_4, %c0_5] : memref<512x1xf32, #tpu.memory_space<vmem>>, vector<512x1xf32>
    %8 = vector.broadcast %7 : vector<512x1xf32> to vector<512x128xf32>
    %9 = arith.mulf %6, %8 : vector<512x128xf32>
    %10 = arith.truncf %9 : vector<512x128xf32> to vector<512x128xbf16>
    %c0_6 = arith.constant 0 : index
    %c0_7 = arith.constant 0 : index
    %11 = vector.load %arg14[%c0_6, %c0_7] : memref<256x128xf32, #tpu.memory_space<vmem>>, vector<256x128xf32>
    %cst = arith.constant dense<0.000000e+00> : vector<256x128xf32>
    %12 = tpu.matmul %4, %10, %cst {dimension_numbers = #tpu.dot_dimension_numbers<[1], [0], [0], [1], [0, 0, 1, 1], [], []>} : vector<256x512xbf16>, vector<512x128xbf16>, vector<256x128xf32> -> vector<256x128xf32>
    %13 = arith.addf %11, %12 : vector<256x128xf32>
    %c0_8 = arith.constant 0 : index
    %c0_9 = arith.constant 0 : index
    %14 = vector.load %arg14[%c0_8, %c0_9] : memref<256x128xf32, #tpu.memory_space<vmem>>, vector<256x128xf32>
    tpu.vector_store %arg14[%c0_8, %c0_9], %13 {strides = array<i32>} : memref<256x128xf32, #tpu.memory_space<vmem>>, vector<256x128xf32>,
    %c1_i32 = arith.constant 1 : i32
    %15 = arith.cmpi eq, %arg1, %c1_i32 : i32
    %16 = arith.extui %15 : i1 to i32
    %c0_i32_10 = arith.constant 0 : i32
    %17 = arith.cmpi ne, %16, %c0_i32_10 : i32
    scf.if %17 {
      %c0_11 = arith.constant 0 : index
      %c0_12 = arith.constant 0 : index
      %18 = vector.load %arg14[%c0_11, %c0_12] : memref<256x128xf32, #tpu.memory_space<vmem>>, vector<256x128xf32>
      %c0_13 = arith.constant 0 : index
      %c0_14 = arith.constant 0 : index
      %19 = vector.load %arg8[%c0_13, %c0_14] : memref<256x1xf32, #tpu.memory_space<vmem>>, vector<256x1xf32>
      %20 = vector.broadcast %19 : vector<256x1xf32> to vector<256x128xf32>
      %21 = arith.mulf %18, %20 : vector<256x128xf32>
      %22 = arith.truncf %21 : vector<256x128xf32> to vector<256x128xbf16>
      %c0_15 = arith.constant 0 : index
      %c0_16 = arith.constant 0 : index
      %23 = vector.load %arg6[%c0_15, %c0_16] : memref<128x128xbf16, #tpu.memory_space<vmem>>, vector<128x128xbf16>
      %cst_17 = arith.constant dense<0.000000e+00> : vector<256x128xf32>
      %24 = tpu.matmul %22, %23, %cst_17 {dimension_numbers = #tpu.dot_dimension_numbers<[1], [0], [0], [1], [0, 0, 1, 1], [], []>} : vector<256x128xbf16>, vector<128x128xbf16>, vector<256x128xf32> -> vector<256x128xf32>
      %c0_18 = arith.constant 0 : index
      %c0_19 = arith.constant 0 : index
      %25 = vector.load %arg7[%c0_18, %c0_19] : memref<1x128xf32, #tpu.memory_space<vmem>>, vector<1x128xf32>
      %26 = vector.broadcast %25 : vector<1x128xf32> to vector<256x128xf32>
      %27 = arith.addf %24, %26 : vector<256x128xf32>
      %cst_20 = arith.constant 0.000000e+00 : f32
      %28 = vector.broadcast %cst_20 : f32 to vector<256x128xf32>
      %29 = arith.maximumf %27, %28 : vector<256x128xf32>
      %c0_21 = arith.constant 0 : index
      %c0_22 = arith.constant 0 : index
      %30 = vector.load %arg9[%c0_21, %c0_22] : memref<256x128xbf16, #tpu.memory_space<vmem>>, vector<256x128xbf16>
      %31 = arith.extf %30 : vector<256x128xbf16> to vector<256x128xf32>
      %cst_23 = arith.constant 2.000000e-01 : f32
      %32 = vector.broadcast %cst_23 : f32 to vector<256x128xf32>
      %33 = arith.mulf %32, %31 : vector<256x128xf32>
      %34 = arith.addf %29, %33 : vector<256x128xf32>
      %c1 = arith.constant 1 : index
      %35 = memref.load %arg2[%c1] : memref<2xf32, #tpu.memory_space<smem>>
      %c0_24 = arith.constant 0 : index
      %c0_25 = arith.constant 0 : index
      %36 = vector.load %arg10[%c0_24, %c0_25] : memref<256x128xbf16, #tpu.memory_space<vmem>>, vector<256x128xbf16>
      %37 = arith.extf %36 : vector<256x128xbf16> to vector<256x128xf32>
      %38 = vector.broadcast %35 : f32 to vector<256x128xf32>
      %39 = arith.mulf %38, %37 : vector<256x128xf32>
      %40 = arith.addf %34, %39 : vector<256x128xf32>
      %41 = arith.truncf %40 : vector<256x128xf32> to vector<256x128xbf16>
      %c0_26 = arith.constant 0 : index
      %c0_27 = arith.constant 0 : index
      %42 = vector.load %arg12[%c0_26, %c0_27] : memref<256x128xbf16, #tpu.memory_space<vmem>>, vector<256x128xbf16>
      tpu.vector_store %arg12[%c0_26, %c0_27], %41 {strides = array<i32>} : memref<256x128xbf16, #tpu.memory_space<vmem>>, vector<256x128xbf16>,
      %c0_28 = arith.constant 0 : index
      %c0_29 = arith.constant 0 : index
      %43 = vector.load %arg11[%c0_28, %c0_29] : memref<256x128xf32, #tpu.memory_space<vmem>>, vector<256x128xf32>
      %c0_30 = arith.constant 0 : index
      %44 = memref.load %arg2[%c0_30] : memref<2xf32, #tpu.memory_space<smem>>
      %45 = vector.broadcast %44 : f32 to vector<256x128xf32>
      %46 = arith.mulf %45, %40 : vector<256x128xf32>
      %47 = arith.addf %43, %46 : vector<256x128xf32>
      %c0_31 = arith.constant 0 : index
      %c0_32 = arith.constant 0 : index
      %48 = vector.load %arg13[%c0_31, %c0_32] : memref<256x128xf32, #tpu.memory_space<vmem>>, vector<256x128xf32>
      tpu.vector_store %arg13[%c0_31, %c0_32], %47 {strides = array<i32>} : memref<256x128xf32, #tpu.memory_space<vmem>>, vector<256x128xf32>,
    } else {
    }
    return
  }
  func.func @transform_0(%arg0: i32, %arg1: i32) -> i32 {
    %c0_i32 = arith.constant 0 : i32
    %c0_i32_0 = arith.constant 0 : i32
    return %c0_i32 : i32
  }
  func.func @transform_1(%arg0: i32, %arg1: i32) -> (i32, i32) {
    %c0_i32 = arith.constant 0 : i32
    return %arg0, %arg1 : i32, i32
  }
  func.func @transform_2(%arg0: i32, %arg1: i32) -> (i32, i32) {
    %c0_i32 = arith.constant 0 : i32
    %c0_i32_0 = arith.constant 0 : i32
    return %arg1, %c0_i32 : i32, i32
  }
  func.func @transform_3(%arg0: i32, %arg1: i32) -> (i32, i32) {
    %c0_i32 = arith.constant 0 : i32
    %c0_i32_0 = arith.constant 0 : i32
    return %arg1, %c0_i32 : i32, i32
  }
  func.func @transform_4(%arg0: i32, %arg1: i32) -> (i32, i32) {
    %c0_i32 = arith.constant 0 : i32
    %c0_i32_0 = arith.constant 0 : i32
    %c0_i32_1 = arith.constant 0 : i32
    return %c0_i32, %c0_i32_0 : i32, i32
  }
  func.func @transform_5(%arg0: i32, %arg1: i32) -> (i32, i32) {
    %c0_i32 = arith.constant 0 : i32
    %c0_i32_0 = arith.constant 0 : i32
    %c0_i32_1 = arith.constant 0 : i32
    return %c0_i32, %c0_i32_0 : i32, i32
  }
  func.func @transform_6(%arg0: i32, %arg1: i32) -> (i32, i32) {
    %c0_i32 = arith.constant 0 : i32
    %c0_i32_0 = arith.constant 0 : i32
    return %arg0, %c0_i32 : i32, i32
  }
  func.func @transform_7(%arg0: i32, %arg1: i32) -> (i32, i32) {
    %c0_i32 = arith.constant 0 : i32
    %c0_i32_0 = arith.constant 0 : i32
    return %arg0, %c0_i32 : i32, i32
  }
  func.func @transform_8(%arg0: i32, %arg1: i32) -> (i32, i32) {
    %c0_i32 = arith.constant 0 : i32
    %c0_i32_0 = arith.constant 0 : i32
    return %arg0, %c0_i32 : i32, i32
  }
  func.func @transform_9(%arg0: i32, %arg1: i32) -> (i32, i32) {
    %c0_i32 = arith.constant 0 : i32
    %c0_i32_0 = arith.constant 0 : i32
    return %arg0, %c0_i32 : i32, i32
  }
  func.func @transform_10(%arg0: i32, %arg1: i32) -> (i32, i32) {
    %c0_i32 = arith.constant 0 : i32
    %c0_i32_0 = arith.constant 0 : i32
    return %arg0, %c0_i32 : i32, i32
  }
  func.func @transform_11(%arg0: i32, %arg1: i32) -> (i32, i32) {
    %c0_i32 = arith.constant 0 : i32
    %c0_i32_0 = arith.constant 0 : i32
    return %arg0, %c0_i32 : i32, i32
  }
}

module attributes {stable_mosaic.version = 11 : i64} {
  func.func @out_head_kernel(%arg0: i32, %arg1: memref<512x128xf32, #tpu.memory_space<vmem>>, %arg2: memref<128x128xbf16, #tpu.memory_space<vmem>>, %arg3: memref<1x128xf32, #tpu.memory_space<vmem>>, %arg4: memref<512x128xf32, #tpu.memory_space<vmem>>) attributes {dimension_semantics = [#tpu.dimension_semantics<parallel>], iteration_bounds = array<i64: 2>, scalar_prefetch = 0 : i64, scratch_operands = 0 : i64, tpu.core_type = #tpu.core_type<tc>, window_params = [{transform_indices = @transform_0, window_bounds = array<i64: 512, 128>}, {pipeline_mode = #tpu.pipeline_mode<synchronous>, transform_indices = @transform_1, window_bounds = array<i64: 128, 128>}, {pipeline_mode = #tpu.pipeline_mode<synchronous>, transform_indices = @transform_2, window_bounds = array<i64: 1, 128>}, {transform_indices = @transform_3, window_bounds = array<i64: 512, 128>}]} {
    %c0 = arith.constant 0 : index
    %c0_0 = arith.constant 0 : index
    %0 = vector.load %arg1[%c0, %c0_0] : memref<512x128xf32, #tpu.memory_space<vmem>>, vector<512x128xf32>
    %1 = arith.truncf %0 : vector<512x128xf32> to vector<512x128xbf16>
    %c0_1 = arith.constant 0 : index
    %c0_2 = arith.constant 0 : index
    %2 = vector.load %arg2[%c0_1, %c0_2] : memref<128x128xbf16, #tpu.memory_space<vmem>>, vector<128x128xbf16>
    %cst = arith.constant dense<0.000000e+00> : vector<512x128xf32>
    %3 = tpu.matmul %1, %2, %cst {dimension_numbers = #tpu.dot_dimension_numbers<[1], [0], [0], [1], [0, 0, 1, 1], [], []>} : vector<512x128xbf16>, vector<128x128xbf16>, vector<512x128xf32> -> vector<512x128xf32>
    %c0_3 = arith.constant 0 : index
    %c0_4 = arith.constant 0 : index
    %4 = vector.load %arg3[%c0_3, %c0_4] : memref<1x128xf32, #tpu.memory_space<vmem>>, vector<1x128xf32>
    %5 = vector.broadcast %4 : vector<1x128xf32> to vector<512x128xf32>
    %6 = arith.addf %3, %5 : vector<512x128xf32>
    %cst_5 = arith.constant dense<0xFF800000> : vector<512xf32>
    %7 = vector.multi_reduction <maximumf>, %6, %cst_5 [1] : vector<512x128xf32> to vector<512xf32>
    %8 = vector.shape_cast %7 : vector<512xf32> to vector<512x1xf32>
    %9 = vector.broadcast %8 : vector<512x1xf32> to vector<512x128xf32>
    %10 = arith.subf %6, %9 : vector<512x128xf32>
    %11 = math.exp %10 : vector<512x128xf32>
    %cst_6 = arith.constant dense<0.000000e+00> : vector<512xf32>
    %12 = vector.multi_reduction <add>, %11, %cst_6 [1] : vector<512x128xf32> to vector<512xf32>
    %13 = vector.shape_cast %12 : vector<512xf32> to vector<512x1xf32>
    %14 = math.log %13 : vector<512x1xf32>
    %15 = vector.broadcast %14 : vector<512x1xf32> to vector<512x128xf32>
    %16 = arith.subf %10, %15 : vector<512x128xf32>
    %c0_7 = arith.constant 0 : index
    %c0_8 = arith.constant 0 : index
    %17 = vector.load %arg4[%c0_7, %c0_8] : memref<512x128xf32, #tpu.memory_space<vmem>>, vector<512x128xf32>
    tpu.vector_store %arg4[%c0_7, %c0_8], %16 {strides = array<i32>} : memref<512x128xf32, #tpu.memory_space<vmem>>, vector<512x128xf32>,
    return
  }
  func.func @transform_0(%arg0: i32) -> (i32, i32) {
    %c0_i32 = arith.constant 0 : i32
    %c0_i32_0 = arith.constant 0 : i32
    return %arg0, %c0_i32 : i32, i32
  }
  func.func @transform_1(%arg0: i32) -> (i32, i32) {
    %c0_i32 = arith.constant 0 : i32
    %c0_i32_0 = arith.constant 0 : i32
    %c0_i32_1 = arith.constant 0 : i32
    return %c0_i32, %c0_i32_0 : i32, i32
  }
  func.func @transform_2(%arg0: i32) -> (i32, i32) {
    %c0_i32 = arith.constant 0 : i32
    %c0_i32_0 = arith.constant 0 : i32
    %c0_i32_1 = arith.constant 0 : i32
    return %c0_i32, %c0_i32_0 : i32, i32
  }
  func.func @transform_3(%arg0: i32) -> (i32, i32) {
    %c0_i32 = arith.constant 0 : i32
    %c0_i32_0 = arith.constant 0 : i32
    return %arg0, %c0_i32 : i32, i32
  }
}

</mosaic_0001>

<llo_original>
// kernel: gcn_res_forward.8
$region0: #{gcn_res_forward.8}
  #allocation0 [shape = 'u32[]', space=smem, size = 0x4, offset = 0x4, fixed_abs, tag = 'smem constant byte address 0x4 - core index']
  #allocation1 [shape = 'u32[144,128]{1,0:T(1,128)}', space=vmem, size = 0x12000, scoped, tag = 'internal scratch']
  %s0 = inlined_call_operand.vmem [shape: bf16[1024,128], index: 0, kind: input, shape index: {}]
  %s1 = inlined_call_operand.vmem [shape: bf16[128,128], index: 1, kind: input, shape index: {}]
  %s2 = inlined_call_operand.vmem [shape: f32[1,128], index: 2, kind: input, shape index: {}]
  %s3 = inlined_call_operand.vmem [shape: bf16[1024,128], index: 3, kind: output, shape index: {}]
  %s4 = sld [smem:[#allocation0]]
  $region45: #{gcn_res_forward.8} parent=0
    _
  %s6 = ssub.s32 1, %s4
  %s7 = scalar_select 0, %s6, %s4
  loop: start=0, step=1, limit=4
  $region2: #{gcn_res_forward.8} parent=0 // loop_pre_header
    _
  $region3: #{gcn_res_forward.8} parent=0 // loop_header
    %s9 = sphi 0, %s13
    %p10 = scmp.ge.s32.totalorder %s9, 4
    %s19 = sphi 0, %s21
    %s22 = sphi 0, %s19
    %s23 = sphi 0, %s22
    %s39 = sphi 0, %s23
    %s43 = sphi 0, %s43
    %s45 = sphi 0, %s43
    %s46 = sphi 0, %s45
    %s60 = sphi 0, %s46
    %s64 = sphi 0, %s64
    %s66 = sphi 0, %s64
    %s67 = sphi 0, %s66
    %s81 = sphi 0, %s67
    %s87 = sphi 0, %s89
    %s90 = sphi 0, %s87
    %s91 = sphi 0, %s90
    %s107 = sphi 0, %s91
  $region4: #{gcn_res_forward.8} parent=0 // loop_header_branch
    %12 = sbr.rel (%p10) target = $region8
  $region5: #{gcn_res_forward.8} parent=0 // loop_body
    %s14 = ssub.s32 %s9, 1
    %s15 = ssub.s32 %s9, 2
    %s16 = sadd.s32 %s9, 1
    %s17 = ssub.s32 %s9, %s16
    %p18 = scmp.eq.s32.totalorder %s17, 0
    %s20 = sadd.s32 %s19, 1
    %s21 = scalar_select %p18, %s19, %s20
    %p24 = pneg %p18
    %p25 = scmp.eq.s32.totalorder %s9, 1
    %p26 = por %p24, %p25
    %p27 = scmp.ne.s32.totalorder %s19, %s22
    %p28 = scmp.eq.s32.totalorder %s9, 0
    %p29 = por %p27, %p28
    %p30 = scmp.ne.s32.totalorder %s19, %s22
    %p31 = scmp.eq.s32.totalorder %s14, 1
    %p32 = por %p30, %p31
    %p33 = scmp.ne.s32.totalorder %s22, %s23
    %p34 = scmp.eq.s32.totalorder %s14, 0
    %p35 = por %p33, %p34
    %p36 = scmp.ne.s32.totalorder %s22, %s23
    %p37 = scmp.eq.s32.totalorder %s15, 1
    %p38 = por %p36, %p37
    %p40 = scmp.ne.s32.totalorder %s23, %s39
    %p41 = scmp.eq.s32.totalorder %s15, 0
    %p42 = por %p40, %p41
    %s44 = sadd.s32 %s43, 1
    %p47 = scmp.eq.s32.totalorder %s9, 1
    %p48 = scmp.ne.s32.totalorder %s43, %s45
    %p49 = scmp.eq.s32.totalorder %s9, 0
    %p50 = por %p48, %p49
    %p51 = scmp.ne.s32.totalorder %s43, %s45
    %p52 = scmp.eq.s32.totalorder %s14, 1
    %p53 = por %p51, %p52
    %p54 = scmp.ne.s32.totalorder %s45, %s46
    %p55 = scmp.eq.s32.totalorder %s14, 0
    %p56 = por %p54, %p55
    %p57 = scmp.ne.s32.totalorder %s45, %s46
    %p58 = scmp.eq.s32.totalorder %s15, 1
    %p59 = por %p57, %p58
    %p61 = scmp.ne.s32.totalorder %s46, %s60
    %p62 = scmp.eq.s32.totalorder %s15, 0
    %p63 = por %p61, %p62
    %s65 = sadd.s32 %s64, 1
    %p68 = scmp.eq.s32.totalorder %s9, 1
    %p69 = scmp.ne.s32.totalorder %s64, %s66
    %p70 = scmp.eq.s32.totalorder %s9, 0
    %p71 = por %p69, %p70
    %p72 = scmp.ne.s32.totalorder %s64, %s66
    %p73 = scmp.eq.s32.totalorder %s14, 1
    %p74 = por %p72, %p73
    %p75 = scmp.ne.s32.totalorder %s66, %s67
    %p76 = scmp.eq.s32.totalorder %s14, 0
    %p77 = por %p75, %p76
    %p78 = scmp.ne.s32.totalorder %s66, %s67
    %p79 = scmp.eq.s32.totalorder %s15, 1
    %p80 = por %p78, %p79
    %p82 = scmp.ne.s32.totalorder %s67, %s81
    %p83 = scmp.eq.s32.totalorder %s15, 0
    %p84 = por %p82, %p83
    %s85 = ssub.s32 %s9, %s16
    %p86 = scmp.eq.s32.totalorder %s85, 0
    %s88 = sadd.s32 %s87, 1
    %s89 = scalar_select %p86, %s87, %s88
    %p92 = pneg %p86
    %p93 = scmp.eq.s32.totalorder %s9, 1
    %p94 = por %p92, %p93
    %p95 = scmp.ne.s32.totalorder %s87, %s90
    %p96 = scmp.eq.s32.totalorder %s9, 0
    %p97 = por %p95, %p96
    %p98 = scmp.ne.s32.totalorder %s87, %s90
    %p99 = scmp.eq.s32.totalorder %s14, 1
    %p100 = por %p98, %p99
    %p101 = scmp.ne.s32.totalorder %s90, %s91
    %p102 = scmp.eq.s32.totalorder %s14, 0
    %p103 = por %p101, %p102
    %p104 = scmp.ne.s32.totalorder %s90, %s91
    %p105 = scmp.eq.s32.totalorder %s15, 1
    %p106 = por %p104, %p105
    %p108 = scmp.ne.s32.totalorder %s91, %s107
    %p109 = scmp.eq.s32.totalorder %s15, 0
    %p110 = por %p108, %p109
    %p111 = scmp.le.s32.totalorder 1, %s9
    %p112 = scmp.lt.s32.totalorder %s9, 3
    %p113 = pnand %p111, %p112
    %p114 = pneg %p113
    // Predicated region
    $region9: #{gcn_res_forward.8} parent=5 // pred_check
      _
    $region10: #{gcn_res_forward.8} parent=5 // pred_check_branch
      %116 = sbr.rel (%p113) target = $region12
    $region11: #{gcn_res_forward.8} parent=5 // pred_region
      %s117 = ssub.s32 %s9, 1
      // Predicated region
      $region13: #{gcn_res_forward.8} parent=11 // pred_check
        %p118 = pneg %p56
      $region14: #{gcn_res_forward.8} parent=11 // pred_check_branch
        %120 = sbr.rel (%p118) target = $region16
      $region15: #{gcn_res_forward.8} parent=11 // pred_region
        _
      $region16: #{gcn_res_forward.8} parent=11 // pred_fallthru
        _
      // Predicated region
      $region17: #{gcn_res_forward.8} parent=11 // pred_check
        %p121 = pneg %p77
      $region18: #{gcn_res_forward.8} parent=11 // pred_check_branch
        %123 = sbr.rel (%p121) target = $region20
      $region19: #{gcn_res_forward.8} parent=11 // pred_region
        _
      $region20: #{gcn_res_forward.8} parent=11 // pred_fallthru
        _
    $region12: #{gcn_res_forward.8} parent=5 // pred_fallthru
      _
    %p124 = scmp.lt.s32.totalorder %s9, 2
    // Predicated region
    $region21: #{gcn_res_forward.8} parent=5 // pred_check
      %p125 = pneg %p124
    $region22: #{gcn_res_forward.8} parent=5 // pred_check_branch
      %127 = sbr.rel (%p125) target = $region24
    $region23: #{gcn_res_forward.8} parent=5 // pred_region
      // Predicated region
      $region25: #{gcn_res_forward.8} parent=23 // pred_check
        %p128 = pneg %p29
      $region26: #{gcn_res_forward.8} parent=23 // pred_check_branch
        %130 = sbr.rel (%p128) target = $region28
      $region27: #{gcn_res_forward.8} parent=23 // pred_region
        %s131 = smul.u32 64, %s9
        %p132 = scmp.lt.s32.totalorder %s131, 127
        %s133 = scalar_select %p132, %s131, 127
        %s134 = smul.addr %s133, 4
        %s135 = scalar_lea.vmem %s0, %s134
        %s136 = smul.u32 64, %s9
      $region28: #{gcn_res_forward.8} parent=23 // pred_fallthru
        _
    $region24: #{gcn_res_forward.8} parent=5 // pred_fallthru
      _
    %p137 = scmp.le.s32.totalorder 1, %s9
    %p138 = scmp.lt.s32.totalorder %s9, 3
    %p139 = pnand %p137, %p138
    %p140 = pneg %p139
    // Predicated region
    $region29: #{gcn_res_forward.8} parent=5 // pred_check
      _
    $region30: #{gcn_res_forward.8} parent=5 // pred_check_branch
      %142 = sbr.rel (%p139) target = $region32
    $region31: #{gcn_res_forward.8} parent=5 // pred_region
      %s143 = ssub.s32 %s9, 1
      %s144 = smul.u32 64, %s14
      %p145 = scmp.lt.s32.totalorder %s144, 127
      %s146 = scalar_select %p145, %s144, 127
      %s147 = smul.addr %s146, 4
      %s148 = scalar_lea.vmem %s0, %s147
      %p149 = pneg %p35
      %p150 = pneg %p32
      %p151 = pneg %p56
      %p152 = pneg %p53
      %p153 = pneg %p77
      %p154 = pneg %p74
      %p155 = pneg %p103
      %p156 = pneg %p100
      %s157 = smul.u32 64, %s14
      %p158 = scmp.lt.s32.totalorder %s157, 127
      %s159 = scalar_select %p158, %s157, 127
      %s160 = smul.addr %s159, 4
      %s161 = scalar_lea.vmem %s3, %s160
      %s162 = smul.u32 64, %s14
      %p163 = scmp.lt.s32.totalorder %s162, 127
      %s164 = scalar_select %p163, %s162, 127
      %s165 = smul.addr %s164, 4
      %s166 = scalar_lea.vmem %s0, %s165
      %s167 = smul.u32 64, %s14
      %s168 = smul.u32 64, %s14
      %p169 = scmp.lt.s32.totalorder %s168, 127
      %s170 = scalar_select %p169, %s168, 127
      %s171 = smul.addr %s170, 4
      %s172 = scalar_lea.vmem %s3, %s171
      %s173 = smul.u32 64, %s14
      %v175 = vld [vmem:[%s166] sm:$0xf]
      %v176 = vld [vmem:[%s166 + $0x4] sm:$0xf]
      %v177 = vld [vmem:[%s166 + $0x8] sm:$0xf]
      %v178 = vld [vmem:[%s166 + $0xc] sm:$0xf]
      %v179 = vld [vmem:[%s166 + $0x10] sm:$0xf]
      %v180 = vld [vmem:[%s166 + $0x14] sm:$0xf]
      %v181 = vld [vmem:[%s166 + $0x18] sm:$0xf]
      %v182 = vld [vmem:[%s166 + $0x1c] sm:$0xf]
      %v183 = vld [vmem:[%s166 + $0x20] sm:$0xf]
      %v184 = vld [vmem:[%s166 + $0x24] sm:$0xf]
      %v185 = vld [vmem:[%s166 + $0x28] sm:$0xf]
      %v186 = vld [vmem:[%s166 + $0x2c] sm:$0xf]
      %v187 = vld [vmem:[%s166 + $0x30] sm:$0xf]
      %v188 = vld [vmem:[%s166 + $0x34] sm:$0xf]
      %v189 = vld [vmem:[%s166 + $0x38] sm:$0xf]
      %v190 = vld [vmem:[%s166 + $0x3c] sm:$0xf]
      %v191 = vld [vmem:[%s166 + $0x40] sm:$0xf]
      %v192 = vld [vmem:[%s166 + $0x44] sm:$0xf]
      %v193 = vld [vmem:[%s166 + $0x48] sm:$0xf]
      %v194 = vld [vmem:[%s166 + $0x4c] sm:$0xf]
      %v195 = vld [vmem:[%s166 + $0x50] sm:$0xf]
      %v196 = vld [vmem:[%s166 + $0x54] sm:$0xf]
      %v197 = vld [vmem:[%s166 + $0x58] sm:$0xf]
      %v198 = vld [vmem:[%s166 + $0x5c] sm:$0xf]
      %v199 = vld [vmem:[%s166 + $0x60] sm:$0xf]
      %v200 = vld [vmem:[%s166 + $0x64] sm:$0xf]
      %v201 = vld [vmem:[%s166 + $0x68] sm:$0xf]
      %v202 = vld [vmem:[%s166 + $0x6c] sm:$0xf]
      %v203 = vld [vmem:[%s166 + $0x70] sm:$0xf]
      %v204 = vld [vmem:[%s166 + $0x74] sm:$0xf]
      %v205 = vld [vmem:[%s166 + $0x78] sm:$0xf]
      %v206 = vld [vmem:[%s166 + $0x7c] sm:$0xf]
      %v207 = vld [vmem:[%s166 + $0x80] sm:$0xf]
      %v208 = vld [vmem:[%s166 + $0x84] sm:$0xf]
      %v209 = vld [vmem:[%s166 + $0x88] sm:$0xf]
      %v210 = vld [vmem:[%s166 + $0x8c] sm:$0xf]
      %v211 = vld [vmem:[%s166 + $0x90] sm:$0xf]
      %v212 = vld [vmem:[%s166 + $0x94] sm:$0xf]
      %v213 = vld [vmem:[%s166 + $0x98] sm:$0xf]
      %v214 = vld [vmem:[%s166 + $0x9c] sm:$0xf]
      %v215 = vld [vmem:[%s166 + $0xa0] sm:$0xf]
      %v216 = vld [vmem:[%s166 + $0xa4] sm:$0xf]
      %v217 = vld [vmem:[%s166 + $0xa8] sm:$0xf]
      %v218 = vld [vmem:[%s166 + $0xac] sm:$0xf]
      %v219 = vld [vmem:[%s166 + $0xb0] sm:$0xf]
      %v220 = vld [vmem:[%s166 + $0xb4] sm:$0xf]
      %v221 = vld [vmem:[%s166 + $0xb8] sm:$0xf]
      %v222 = vld [vmem:[%s166 + $0xbc] sm:$0xf]
      %v223 = vld [vmem:[%s166 + $0xc0] sm:$0xf]
      %v224 = vld [vmem:[%s166 + $0xc4] sm:$0xf]
      %v225 = vld [vmem:[%s166 + $0xc8] sm:$0xf]
      %v226 = vld [vmem:[%s166 + $0xcc] sm:$0xf]
      %v227 = vld [vmem:[%s166 + $0xd0] sm:$0xf]
      %v228 = vld [vmem:[%s166 + $0xd4] sm:$0xf]
      %v229 = vld [vmem:[%s166 + $0xd8] sm:$0xf]
      %v230 = vld [vmem:[%s166 + $0xdc] sm:$0xf]
      %v231 = vld [vmem:[%s166 + $0xe0] sm:$0xf]
      %v232 = vld [vmem:[%s166 + $0xe4] sm:$0xf]
      %v233 = vld [vmem:[%s166 + $0xe8] sm:$0xf]
      %v234 = vld [vmem:[%s166 + $0xec] sm:$0xf]
      %v235 = vld [vmem:[%s166 + $0xf0] sm:$0xf]
      %v236 = vld [vmem:[%s166 + $0xf4] sm:$0xf]
      %v237 = vld [vmem:[%s166 + $0xf8] sm:$0xf]
      %v238 = vld [vmem:[%s166 + $0xfc] sm:$0xf]
      %v239 = vld [vmem:[%s1] sm:$0xf]
      %v240 = vld [vmem:[%s1 + $0x4] sm:$0xf]
      %v241 = vld [vmem:[%s1 + $0x8] sm:$0xf]
      %v242 = vld [vmem:[%s1 + $0xc] sm:$0xf]
      %v243 = vld [vmem:[%s1 + $0x10] sm:$0xf]
      %v244 = vld [vmem:[%s1 + $0x14] sm:$0xf]
      %v245 = vld [vmem:[%s1 + $0x18] sm:$0xf]
      %v246 = vld [vmem:[%s1 + $0x1c] sm:$0xf]
      %v247 = vld [vmem:[%s1 + $0x20] sm:$0xf]
      %v248 = vld [vmem:[%s1 + $0x24] sm:$0xf]
      %v249 = vld [vmem:[%s1 + $0x28] sm:$0xf]
      %v250 = vld [vmem:[%s1 + $0x2c] sm:$0xf]
      %v251 = vld [vmem:[%s1 + $0x30] sm:$0xf]
      %v252 = vld [vmem:[%s1 + $0x34] sm:$0xf]
      %v253 = vld [vmem:[%s1 + $0x38] sm:$0xf]
      %v254 = vld [vmem:[%s1 + $0x3c] sm:$0xf]
      %v255 = vld [vmem:[%s2] sm:$0x1]
      %v257 = vlaneseq
      %v258 = vshrl.u32 %v257, 7
      %v259 = vsub.s32 0, %v258
      %v260 = vrot.slane %v255, %v259
      %v326 = vunpack.c.l.b16 %v175
      %v327 = vunpack.c.l.b16 %v176
      %v328 = vunpack.c.l.b16 %v177
      %v329 = vunpack.c.l.b16 %v178
      %v330 = vunpack.c.l.b16 %v179
      %v331 = vunpack.c.l.b16 %v180
      %v332 = vunpack.c.l.b16 %v181
      %v333 = vunpack.c.l.b16 %v182
      %v334 = vunpack.c.l.b16 %v183
      %v335 = vunpack.c.l.b16 %v184
      %v336 = vunpack.c.l.b16 %v185
      %v337 = vunpack.c.l.b16 %v186
      %v338 = vunpack.c.l.b16 %v187
      %v339 = vunpack.c.l.b16 %v188
      %v340 = vunpack.c.l.b16 %v189
      %v341 = vunpack.c.l.b16 %v190
      %v342 = vunpack.c.l.b16 %v191
      %v343 = vunpack.c.l.b16 %v192
      %v344 = vunpack.c.l.b16 %v193
      %v345 = vunpack.c.l.b16 %v194
      %v346 = vunpack.c.l.b16 %v195
      %v347 = vunpack.c.l.b16 %v196
      %v348 = vunpack.c.l.b16 %v197
      %v349 = vunpack.c.l.b16 %v198
      %v350 = vunpack.c.l.b16 %v199
      %v351 = vunpack.c.l.b16 %v200
      %v352 = vunpack.c.l.b16 %v201
      %v353 = vunpack.c.l.b16 %v202
      %v354 = vunpack.c.l.b16 %v203
      %v355 = vunpack.c.l.b16 %v204
      %v356 = vunpack.c.l.b16 %v205
      %v357 = vunpack.c.l.b16 %v206
      %v358 = vunpack.c.l.b16 %v207
      %v359 = vunpack.c.l.b16 %v208
      %v360 = vunpack.c.l.b16 %v209
      %v361 = vunpack.c.l.b16 %v210
      %v362 = vunpack.c.l.b16 %v211
      %v363 = vunpack.c.l.b16 %v212
      %v364 = vunpack.c.l.b16 %v213
      %v365 = vunpack.c.l.b16 %v214
      %v366 = vunpack.c.l.b16 %v215
      %v367 = vunpack.c.l.b16 %v216
      %v368 = vunpack.c.l.b16 %v217
      %v369 = vunpack.c.l.b16 %v218
      %v370 = vunpack.c.l.b16 %v219
      %v371 = vunpack.c.l.b16 %v220
      %v372 = vunpack.c.l.b16 %v221
      %v373 = vunpack.c.l.b16 %v222
      %v374 = vunpack.c.l.b16 %v223
      %v375 = vunpack.c.l.b16 %v224
      %v376 = vunpack.c.l.b16 %v225
      %v377 = vunpack.c.l.b16 %v226
      %v378 = vunpack.c.l.b16 %v227
      %v379 = vunpack.c.l.b16 %v228
      %v380 = vunpack.c.l.b16 %v229
      %v381 = vunpack.c.l.b16 %v230
      %v382 = vunpack.c.l.b16 %v231
      %v383 = vunpack.c.l.b16 %v232
      %v384 = vunpack.c.l.b16 %v233
      %v385 = vunpack.c.l.b16 %v234
      %v386 = vunpack.c.l.b16 %v235
      %v387 = vunpack.c.l.b16 %v236
      %v388 = vunpack.c.l.b16 %v237
      %v389 = vunpack.c.l.b16 %v238
      %v390 = vpack.c.b16 %v327, %v326
      %v391 = vpack.c.b16 %v329, %v328
      %v392 = vpack.c.b16 %v331, %v330
      %v393 = vpack.c.b16 %v333, %v332
      %v394 = vpack.c.b16 %v335, %v334
      %v395 = vpack.c.b16 %v337, %v336
      %v396 = vpack.c.b16 %v339, %v338
      %v397 = vpack.c.b16 %v341, %v340
      %v398 = vpack.c.b16 %v343, %v342
      %v399 = vpack.c.b16 %v345, %v344
      %v400 = vpack.c.b16 %v347, %v346
      %v401 = vpack.c.b16 %v349, %v348
      %v402 = vpack.c.b16 %v351, %v350
      %v403 = vpack.c.b16 %v353, %v352
      %v404 = vpack.c.b16 %v355, %v354
      %v405 = vpack.c.b16 %v357, %v356
      %v406 = vpack.c.b16 %v359, %v358
      %v407 = vpack.c.b16 %v361, %v360
      %v408 = vpack.c.b16 %v363, %v362
      %v409 = vpack.c.b16 %v365, %v364
      %v410 = vpack.c.b16 %v367, %v366
      %v411 = vpack.c.b16 %v369, %v368
      %v412 = vpack.c.b16 %v371, %v370
      %v413 = vpack.c.b16 %v373, %v372
      %v414 = vpack.c.b16 %v375, %v374
      %v415 = vpack.c.b16 %v377, %v376
      %v416 = vpack.c.b16 %v379, %v378
      %v417 = vpack.c.b16 %v381, %v380
      %v418 = vpack.c.b16 %v383, %v382
      %v419 = vpack.c.b16 %v385, %v384
      %v420 = vpack.c.b16 %v387, %v386
      %v421 = vpack.c.b16 %v389, %v388
      %v470 = vunpack.c.l.b16 %v239
      %v471 = vunpack.c.l.b16 %v240
      %v472 = vunpack.c.l.b16 %v241
      %v473 = vunpack.c.l.b16 %v242
      %v474 = vunpack.c.l.b16 %v243
      %v475 = vunpack.c.l.b16 %v244
      %v476 = vunpack.c.l.b16 %v245
      %v477 = vunpack.c.l.b16 %v246
      %v478 = vunpack.c.l.b16 %v247
      %v479 = vunpack.c.l.b16 %v248
      %v480 = vunpack.c.l.b16 %v249
      %v481 = vunpack.c.l.b16 %v250
      %v482 = vunpack.c.l.b16 %v251
      %v483 = vunpack.c.l.b16 %v252
      %v484 = vunpack.c.l.b16 %v253
      %v485 = vunpack.c.l.b16 %v254
      %v486 = vpack.c.b16 %v471, %v470
      %v487 = vpack.c.b16 %v473, %v472
      %v488 = vpack.c.b16 %v475, %v474
      %v489 = vpack.c.b16 %v477, %v476
      %v490 = vpack.c.b16 %v479, %v478
      %v491 = vpack.c.b16 %v481, %v480
      %v492 = vpack.c.b16 %v483, %v482
      %v493 = vpack.c.b16 %v485, %v484
      %502 = vmatprep.subr.bf16.mxu0 0
      %503 = vmatpush1.bf16.msra.mxu0 %v486
      %504 = vmatprep.subr.bf16.mxu0 0
      %505 = vmatpush1.bf16.msra.mxu0 %v487
      %506 = vmatprep.subr.bf16.mxu0 0
      %507 = vmatpush1.bf16.msra.mxu0 %v488
      %508 = vmatprep.subr.bf16.mxu0 0
      %509 = vmatpush1.bf16.msra.mxu0 %v489
      %510 = vmatprep.subr.bf16.mxu0 0
      %511 = vmatpush1.bf16.msra.mxu0 %v490
      %512 = vmatprep.subr.bf16.mxu0 0
      %513 = vmatpush1.bf16.msra.mxu0 %v491
      %514 = vmatprep.subr.bf16.mxu0 0
      %515 = vmatpush1.bf16.msra.mxu0 %v492
      %516 = vmatprep.subr.bf16.mxu0 0
      %517 = vmatpush1.bf16.msra.mxu0 %v493
      %518 = vmatprep.subr.bf16.mxu0 0
      %519 = vmatpush1.bf16.msra.mxu0 0
      %520 = vmatprep.subr.bf16.mxu0 0
      %521 = vmatpush1.bf16.msra.mxu0 0
      %522 = vmatprep.subr.bf16.mxu0 0
      %523 = vmatpush1.bf16.msra.mxu0 0
      %524 = vmatprep.subr.bf16.mxu0 0
      %525 = vmatpush1.bf16.msra.mxu0 0
      %526 = vmatprep.subr.bf16.mxu0 0
      %527 = vmatpush1.bf16.msra.mxu0 0
      %528 = vmatprep.subr.bf16.mxu0 0
      %529 = vmatpush1.bf16.msra.mxu0 0
      %530 = vmatprep.subr.bf16.mxu0 0
      %531 = vmatpush1.bf16.msra.mxu0 0
      %532 = vmatprep.subr.bf16.mxu0 0
      %533 = vmatpush1.bf16.msra.mxu0 0
      %534 = vmatprep.mubr.bf16.mxu0 0
      %535 = vmatmul.mubr.bf16.gmra.mrb[0].mxu0 %v390
      %v536 = vpop.f32.mrb[0].mxu0
      %v537 = vadd.f32 %v260, %v536
      %v538 = vpop.f32.mrb[0].mxu0
      %v539 = vpop.f32.mrb[0].mxu0
      %v540 = vadd.f32 %v260, %v539
      %v541 = vpop.f32.mrb[0].mxu0
      %542 = vmatprep.mubr.bf16.mxu0 0
      %543 = vmatmul.mubr.bf16.gmra.mrb[0].mxu0 %v391
      %v544 = vpop.f32.mrb[0].mxu0
      %v545 = vadd.f32 %v260, %v544
      %v546 = vpop.f32.mrb[0].mxu0
      %v547 = vpop.f32.mrb[0].mxu0
      %v548 = vadd.f32 %v260, %v547
      %v549 = vpop.f32.mrb[0].mxu0
      %550 = vmatprep.mubr.bf16.mxu0 0
      %551 = vmatmul.mubr.bf16.gmra.mrb[0].mxu0 %v392
      %v552 = vpop.f32.mrb[0].mxu0
      %v553 = vadd.f32 %v260, %v552
      %v554 = vpop.f32.mrb[0].mxu0
      %v555 = vpop.f32.mrb[0].mxu0
      %v556 = vadd.f32 %v260, %v555
      %v557 = vpop.f32.mrb[0].mxu0
      %558 = vmatprep.mubr.bf16.mxu0 0
      %559 = vmatmul.mubr.bf16.gmra.mrb[0].mxu0 %v393
      %v560 = vpop.f32.mrb[0].mxu0
      %v561 = vadd.f32 %v260, %v560
      %v562 = vpop.f32.mrb[0].mxu0
      %v563 = vpop.f32.mrb[0].mxu0
      %v564 = vadd.f32 %v260, %v563
      %v565 = vpop.f32.mrb[0].mxu0
      %566 = vmatprep.mubr.bf16.mxu0 0
      %567 = vmatmul.mubr.bf16.gmra.mrb[0].mxu0 %v394
      %v568 = vpop.f32.mrb[0].mxu0
      %v569 = vadd.f32 %v260, %v568
      %v570 = vpop.f32.mrb[0].mxu0
      %v571 = vpop.f32.mrb[0].mxu0
      %v572 = vadd.f32 %v260, %v571
      %v573 = vpop.f32.mrb[0].mxu0
      %574 = vmatprep.mubr.bf16.mxu0 0
      %575 = vmatmul.mubr.bf16.gmra.mrb[0].mxu0 %v395
      %v576 = vpop.f32.mrb[0].mxu0
      %v577 = vadd.f32 %v260, %v576
      %v578 = vpop.f32.mrb[0].mxu0
      %v579 = vpop.f32.mrb[0].mxu0
      %v580 = vadd.f32 %v260, %v579
      %v581 = vpop.f32.mrb[0].mxu0
      %582 = vmatprep.mubr.bf16.mxu0 0
      %583 = vmatmul.mubr.bf16.gmra.mrb[0].mxu0 %v396
      %v584 = vpop.f32.mrb[0].mxu0
      %v585 = vadd.f32 %v260, %v584
      %v586 = vpop.f32.mrb[0].mxu0
      %v587 = vpop.f32.mrb[0].mxu0
      %v588 = vadd.f32 %v260, %v587
      %v589 = vpop.f32.mrb[0].mxu0
      %590 = vmatprep.mubr.bf16.mxu0 0
      %591 = vmatmul.mubr.bf16.gmra.mrb[0].mxu0 %v397
      %v592 = vpop.f32.mrb[0].mxu0
      %v593 = vadd.f32 %v260, %v592
      %v594 = vpop.f32.mrb[0].mxu0
      %v595 = vpop.f32.mrb[0].mxu0
      %v596 = vadd.f32 %v260, %v595
      %v597 = vpop.f32.mrb[0].mxu0
      %598 = vmatprep.mubr.bf16.mxu0 0
      %599 = vmatmul.mubr.bf16.gmra.mrb[0].mxu0 %v398
      %v600 = vpop.f32.mrb[0].mxu0
      %v601 = vadd.f32 %v260, %v600
      %v602 = vpop.f32.mrb[0].mxu0
      %v603 = vpop.f32.mrb[0].mxu0
      %v604 = vadd.f32 %v260, %v603
      %v605 = vpop.f32.mrb[0].mxu0
      %606 = vmatprep.mubr.bf16.mxu0 0
      %607 = vmatmul.mubr.bf16.gmra.mrb[0].mxu0 %v399
      %v608 = vpop.f32.mrb[0].mxu0
      %v609 = vadd.f32 %v260, %v608
      %v610 = vpop.f32.mrb[0].mxu0
      %v611 = vpop.f32.mrb[0].mxu0
      %v612 = vadd.f32 %v260, %v611
      %v613 = vpop.f32.mrb[0].mxu0
      %614 = vmatprep.mubr.bf16.mxu0 0
      %615 = vmatmul.mubr.bf16.gmra.mrb[0].mxu0 %v400
      %v616 = vpop.f32.mrb[0].mxu0
      %v617 = vadd.f32 %v260, %v616
      %v618 = vpop.f32.mrb[0].mxu0
      %v619 = vpop.f32.mrb[0].mxu0
      %v620 = vadd.f32 %v260, %v619
      %v621 = vpop.f32.mrb[0].mxu0
      %622 = vmatprep.mubr.bf16.mxu0 0
      %623 = vmatmul.mubr.bf16.gmra.mrb[0].mxu0 %v401
      %v624 = vpop.f32.mrb[0].mxu0
      %v625 = vadd.f32 %v260, %v624
      %v626 = vpop.f32.mrb[0].mxu0
      %v627 = vpop.f32.mrb[0].mxu0
      %v628 = vadd.f32 %v260, %v627
      %v629 = vpop.f32.mrb[0].mxu0
      %630 = vmatprep.mubr.bf16.mxu0 0
      %631 = vmatmul.mubr.bf16.gmra.mrb[0].mxu0 %v402
      %v632 = vpop.f32.mrb[0].mxu0
      %v633 = vadd.f32 %v260, %v632
      %v634 = vpop.f32.mrb[0].mxu0
      %v635 = vpop.f32.mrb[0].mxu0
      %v636 = vadd.f32 %v260, %v635
      %v637 = vpop.f32.mrb[0].mxu0
      %638 = vmatprep.mubr.bf16.mxu0 0
      %639 = vmatmul.mubr.bf16.gmra.mrb[0].mxu0 %v403
      %v640 = vpop.f32.mrb[0].mxu0
      %v641 = vadd.f32 %v260, %v640
      %v642 = vpop.f32.mrb[0].mxu0
      %v643 = vpop.f32.mrb[0].mxu0
      %v644 = vadd.f32 %v260, %v643
      %v645 = vpop.f32.mrb[0].mxu0
      %646 = vmatprep.mubr.bf16.mxu0 0
      %647 = vmatmul.mubr.bf16.gmra.mrb[0].mxu0 %v404
      %v648 = vpop.f32.mrb[0].mxu0
      %v649 = vadd.f32 %v260, %v648
      %v650 = vpop.f32.mrb[0].mxu0
      %v651 = vpop.f32.mrb[0].mxu0
      %v652 = vadd.f32 %v260, %v651
      %v653 = vpop.f32.mrb[0].mxu0
      %654 = vmatprep.mubr.bf16.mxu0 0
      %655 = vmatmul.mubr.bf16.gmra.mrb[0].mxu0 %v405
      %v656 = vpop.f32.mrb[0].mxu0
      %v657 = vadd.f32 %v260, %v656
      %v658 = vpop.f32.mrb[0].mxu0
      %v659 = vpop.f32.mrb[0].mxu0
      %v660 = vadd.f32 %v260, %v659
      %v661 = vpop.f32.mrb[0].mxu0
      %662 = vmatprep.mubr.bf16.mxu0 0
      %663 = vmatmul.mubr.bf16.gmra.mrb[0].mxu0 %v406
      %v664 = vpop.f32.mrb[0].mxu0
      %v665 = vadd.f32 %v260, %v664
      %v666 = vpop.f32.mrb[0].mxu0
      %v667 = vpop.f32.mrb[0].mxu0
      %v668 = vadd.f32 %v260, %v667
      %v669 = vpop.f32.mrb[0].mxu0
      %670 = vmatprep.mubr.bf16.mxu0 0
      %671 = vmatmul.mubr.bf16.gmra.mrb[0].mxu0 %v407
      %v672 = vpop.f32.mrb[0].mxu0
      %v673 = vadd.f32 %v260, %v672
      %v674 = vpop.f32.mrb[0].mxu0
      %v675 = vpop.f32.mrb[0].mxu0
      %v676 = vadd.f32 %v260, %v675
      %v677 = vpop.f32.mrb[0].mxu0
      %678 = vmatprep.mubr.bf16.mxu0 0
      %679 = vmatmul.mubr.bf16.gmra.mrb[0].mxu0 %v408
      %v680 = vpop.f32.mrb[0].mxu0
      %v681 = vadd.f32 %v260, %v680
      %v682 = vpop.f32.mrb[0].mxu0
      %v683 = vpop.f32.mrb[0].mxu0
      %v684 = vadd.f32 %v260, %v683
      %v685 = vpop.f32.mrb[0].mxu0
      %686 = vmatprep.mubr.bf16.mxu0 0
      %687 = vmatmul.mubr.bf16.gmra.mrb[0].mxu0 %v409
      %v688 = vpop.f32.mrb[0].mxu0
      %v689 = vadd.f32 %v260, %v688
      %v690 = vpop.f32.mrb[0].mxu0
      %v691 = vpop.f32.mrb[0].mxu0
      %v692 = vadd.f32 %v260, %v691
      %v693 = vpop.f32.mrb[0].mxu0
      %694 = vmatprep.mubr.bf16.mxu0 0
      %695 = vmatmul.mubr.bf16.gmra.mrb[0].mxu0 %v410
      %v696 = vpop.f32.mrb[0].mxu0
      %v697 = vadd.f32 %v260, %v696
      %v698 = vpop.f32.mrb[0].mxu0
      %v699 = vpop.f32.mrb[0].mxu0
      %v700 = vadd.f32 %v260, %v699
      %v701 = vpop.f32.mrb[0].mxu0
      %702 = vmatprep.mubr.bf16.mxu0 0
      %703 = vmatmul.mubr.bf16.gmra.mrb[0].mxu0 %v411
      %v704 = vpop.f32.mrb[0].mxu0
      %v705 = vadd.f32 %v260, %v704
      %v706 = vpop.f32.mrb[0].mxu0
      %v707 = vpop.f32.mrb[0].mxu0
      %v708 = vadd.f32 %v260, %v707
      %v709 = vpop.f32.mrb[0].mxu0
      %710 = vmatprep.mubr.bf16.mxu0 0
      %711 = vmatmul.mubr.bf16.gmra.mrb[0].mxu0 %v412
      %v712 = vpop.f32.mrb[0].mxu0
      %v713 = vadd.f32 %v260, %v712
      %v714 = vpop.f32.mrb[0].mxu0
      %v715 = vpop.f32.mrb[0].mxu0
      %v716 = vadd.f32 %v260, %v715
      %v717 = vpop.f32.mrb[0].mxu0
      %718 = vmatprep.mubr.bf16.mxu0 0
      %719 = vmatmul.mubr.bf16.gmra.mrb[0].mxu0 %v413
      %v720 = vpop.f32.mrb[0].mxu0
      %v721 = vadd.f32 %v260, %v720
      %v722 = vpop.f32.mrb[0].mxu0
      %v723 = vpop.f32.mrb[0].mxu0
      %v724 = vadd.f32 %v260, %v723
      %v725 = vpop.f32.mrb[0].mxu0
      %726 = vmatprep.mubr.bf16.mxu0 0
      %727 = vmatmul.mubr.bf16.gmra.mrb[0].mxu0 %v414
      %v728 = vpop.f32.mrb[0].mxu0
      %v729 = vadd.f32 %v260, %v728
      %v730 = vpop.f32.mrb[0].mxu0
      %v731 = vpop.f32.mrb[0].mxu0
      %v732 = vadd.f32 %v260, %v731
      %v733 = vpop.f32.mrb[0].mxu0
      %734 = vmatprep.mubr.bf16.mxu0 0
      %735 = vmatmul.mubr.bf16.gmra.mrb[0].mxu0 %v415
      %v736 = vpop.f32.mrb[0].mxu0
      %v737 = vadd.f32 %v260, %v736
      %v738 = vpop.f32.mrb[0].mxu0
      %v739 = vpop.f32.mrb[0].mxu0
      %v740 = vadd.f32 %v260, %v739
      %v741 = vpop.f32.mrb[0].mxu0
      %742 = vmatprep.mubr.bf16.mxu0 0
      %743 = vmatmul.mubr.bf16.gmra.mrb[0].mxu0 %v416
      %v744 = vpop.f32.mrb[0].mxu0
      %v745 = vadd.f32 %v260, %v744
      %v746 = vpop.f32.mrb[0].mxu0
      %v747 = vpop.f32.mrb[0].mxu0
      %v748 = vadd.f32 %v260, %v747
      %v749 = vpop.f32.mrb[0].mxu0
      %750 = vmatprep.mubr.bf16.mxu0 0
      %751 = vmatmul.mubr.bf16.gmra.mrb[0].mxu0 %v417
      %v752 = vpop.f32.mrb[0].mxu0
      %v753 = vadd.f32 %v260, %v752
      %v754 = vpop.f32.mrb[0].mxu0
      %v755 = vpop.f32.mrb[0].mxu0
      %v756 = vadd.f32 %v260, %v755
      %v757 = vpop.f32.mrb[0].mxu0
      %758 = vmatprep.mubr.bf16.mxu0 0
      %759 = vmatmul.mubr.bf16.gmra.mrb[0].mxu0 %v418
      %v760 = vpop.f32.mrb[0].mxu0
      %v761 = vadd.f32 %v260, %v760
      %v762 = vpop.f32.mrb[0].mxu0
      %v763 = vpop.f32.mrb[0].mxu0
      %v764 = vadd.f32 %v260, %v763
      %v765 = vpop.f32.mrb[0].mxu0
      %766 = vmatprep.mubr.bf16.mxu0 0
      %767 = vmatmul.mubr.bf16.gmra.mrb[0].mxu0 %v419
      %v768 = vpop.f32.mrb[0].mxu0
      %v769 = vadd.f32 %v260, %v768
      %v770 = vpop.f32.mrb[0].mxu0
      %v771 = vpop.f32.mrb[0].mxu0
      %v772 = vadd.f32 %v260, %v771
      %v773 = vpop.f32.mrb[0].mxu0
      %774 = vmatprep.mubr.bf16.mxu0 0
      %775 = vmatmul.mubr.bf16.gmra.mrb[0].mxu0 %v420
      %v776 = vpop.f32.mrb[0].mxu0
      %v777 = vadd.f32 %v260, %v776
      %v778 = vpop.f32.mrb[0].mxu0
      %v779 = vpop.f32.mrb[0].mxu0
      %v780 = vadd.f32 %v260, %v779
      %v781 = vpop.f32.mrb[0].mxu0
      %782 = vmatprep.mubr.bf16.mxu0 0
      %783 = vmatmul.mubr.bf16.gmra.mrb[0].mxu0 %v421
      %v784 = vpop.f32.mrb[0].mxu0
      %v785 = vadd.f32 %v260, %v784
      %v786 = vpop.f32.mrb[0].mxu0
      %v787 = vpop.f32.mrb[0].mxu0
      %v788 = vadd.f32 %v260, %v787
      %v789 = vpop.f32.mrb[0].mxu0
      %790 = vdwg.mxu0
      %v791 = vpack.c.bf16 %v540, %v537
      %v792 = vpack.c.bf16 %v548, %v545
      %v793 = vpack.c.bf16 %v556, %v553
      %v794 = vpack.c.bf16 %v564, %v561
      %v795 = vpack.c.bf16 %v572, %v569
      %v796 = vpack.c.bf16 %v580, %v577
      %v797 = vpack.c.bf16 %v588, %v585
      %v798 = vpack.c.bf16 %v596, %v593
      %v799 = vpack.c.bf16 %v604, %v601
      %v800 = vpack.c.bf16 %v612, %v609
      %v801 = vpack.c.bf16 %v620, %v617
      %v802 = vpack.c.bf16 %v628, %v625
      %v803 = vpack.c.bf16 %v636, %v633
      %v804 = vpack.c.bf16 %v644, %v641
      %v805 = vpack.c.bf16 %v652, %v649
      %v806 = vpack.c.bf16 %v660, %v657
      %v807 = vpack.c.bf16 %v668, %v665
      %v808 = vpack.c.bf16 %v676, %v673
      %v809 = vpack.c.bf16 %v684, %v681
      %v810 = vpack.c.bf16 %v692, %v689
      %v811 = vpack.c.bf16 %v700, %v697
      %v812 = vpack.c.bf16 %v708, %v705
      %v813 = vpack.c.bf16 %v716, %v713
      %v814 = vpack.c.bf16 %v724, %v721
      %v815 = vpack.c.bf16 %v732, %v729
      %v816 = vpack.c.bf16 %v740, %v737
      %v817 = vpack.c.bf16 %v748, %v745
      %v818 = vpack.c.bf16 %v756, %v753
      %v819 = vpack.c.bf16 %v764, %v761
      %v820 = vpack.c.bf16 %v772, %v769
      %v821 = vpack.c.bf16 %v780, %v777
      %v822 = vpack.c.bf16 %v788, %v785
      %v855 = vunpack.c.l.b16 %v791
      %v856 = vunpack.c.h.b16 %v791
      %v857 = vunpack.c.l.b16 %v792
      %v858 = vunpack.c.h.b16 %v792
      %v859 = vunpack.c.l.b16 %v793
      %v860 = vunpack.c.h.b16 %v793
      %v861 = vunpack.c.l.b16 %v794
      %v862 = vunpack.c.h.b16 %v794
      %v863 = vunpack.c.l.b16 %v795
      %v864 = vunpack.c.h.b16 %v795
      %v865 = vunpack.c.l.b16 %v796
      %v866 = vunpack.c.h.b16 %v796
      %v867 = vunpack.c.l.b16 %v797
      %v868 = vunpack.c.h.b16 %v797
      %v869 = vunpack.c.l.b16 %v798
      %v870 = vunpack.c.h.b16 %v798
      %v871 = vunpack.c.l.b16 %v799
      %v872 = vunpack.c.h.b16 %v799
      %v873 = vunpack.c.l.b16 %v800
      %v874 = vunpack.c.h.b16 %v800
      %v875 = vunpack.c.l.b16 %v801
      %v876 = vunpack.c.h.b16 %v801
      %v877 = vunpack.c.l.b16 %v802
      %v878 = vunpack.c.h.b16 %v802
      %v879 = vunpack.c.l.b16 %v803
      %v880 = vunpack.c.h.b16 %v803
      %v881 = vunpack.c.l.b16 %v804
      %v882 = vunpack.c.h.b16 %v804
      %v883 = vunpack.c.l.b16 %v805
      %v884 = vunpack.c.h.b16 %v805
      %v885 = vunpack.c.l.b16 %v806
      %v886 = vunpack.c.h.b16 %v806
      %v887 = vunpack.c.l.b16 %v807
      %v888 = vunpack.c.h.b16 %v807
      %v889 = vunpack.c.l.b16 %v808
      %v890 = vunpack.c.h.b16 %v808
      %v891 = vunpack.c.l.b16 %v809
      %v892 = vunpack.c.h.b16 %v809
      %v893 = vunpack.c.l.b16 %v810
      %v894 = vunpack.c.h.b16 %v810
      %v895 = vunpack.c.l.b16 %v811
      %v896 = vunpack.c.h.b16 %v811
      %v897 = vunpack.c.l.b16 %v812
      %v898 = vunpack.c.h.b16 %v812
      %v899 = vunpack.c.l.b16 %v813
      %v900 = vunpack.c.h.b16 %v813
      %v901 = vunpack.c.l.b16 %v814
      %v902 = vunpack.c.h.b16 %v814
      %v903 = vunpack.c.l.b16 %v815
      %v904 = vunpack.c.h.b16 %v815
      %v905 = vunpack.c.l.b16 %v816
      %v906 = vunpack.c.h.b16 %v816
      %v907 = vunpack.c.l.b16 %v817
      %v908 = vunpack.c.h.b16 %v817
      %v909 = vunpack.c.l.b16 %v818
      %v910 = vunpack.c.h.b16 %v818
      %v911 = vunpack.c.l.b16 %v819
      %v912 = vunpack.c.h.b16 %v819
      %v913 = vunpack.c.l.b16 %v820
      %v914 = vunpack.c.h.b16 %v820
      %v915 = vunpack.c.l.b16 %v821
      %v916 = vunpack.c.h.b16 %v821
      %v917 = vunpack.c.l.b16 %v822
      %v918 = vunpack.c.h.b16 %v822
      %v919 = vpack.c.b16 %v855, %v855
      %v920 = vpack.c.b16 %v856, %v856
      %v921 = vpack.c.b16 %v857, %v857
      %v922 = vpack.c.b16 %v858, %v858
      %v923 = vpack.c.b16 %v859, %v859
      %v924 = vpack.c.b16 %v860, %v860
      %v925 = vpack.c.b16 %v861, %v861
      %v926 = vpack.c.b16 %v862, %v862
      %v927 = vpack.c.b16 %v863, %v863
      %v928 = vpack.c.b16 %v864, %v864
      %v929 = vpack.c.b16 %v865, %v865
      %v930 = vpack.c.b16 %v866, %v866
      %v931 = vpack.c.b16 %v867, %v867
      %v932 = vpack.c.b16 %v868, %v868
      %v933 = vpack.c.b16 %v869, %v869
      %v934 = vpack.c.b16 %v870, %v870
      %v935 = vpack.c.b16 %v871, %v871
      %v936 = vpack.c.b16 %v872, %v872
      %v937 = vpack.c.b16 %v873, %v873
      %v938 = vpack.c.b16 %v874, %v874
      %v939 = vpack.c.b16 %v875, %v875
      %v940 = vpack.c.b16 %v876, %v876
      %v941 = vpack.c.b16 %v877, %v877
      %v942 = vpack.c.b16 %v878, %v878
      %v943 = vpack.c.b16 %v879, %v879
      %v944 = vpack.c.b16 %v880, %v880
      %v945 = vpack.c.b16 %v881, %v881
      %v946 = vpack.c.b16 %v882, %v882
      %v947 = vpack.c.b16 %v883, %v883
      %v948 = vpack.c.b16 %v884, %v884
      %v949 = vpack.c.b16 %v885, %v885
      %v950 = vpack.c.b16 %v886, %v886
      %v951 = vpack.c.b16 %v887, %v887
      %v952 = vpack.c.b16 %v888, %v888
      %v953 = vpack.c.b16 %v889, %v889
      %v954 = vpack.c.b16 %v890, %v890
      %v955 = vpack.c.b16 %v891, %v891
      %v956 = vpack.c.b16 %v892, %v892
      %v957 = vpack.c.b16 %v893, %v893
      %v958 = vpack.c.b16 %v894, %v894
      %v959 = vpack.c.b16 %v895, %v895
      %v960 = vpack.c.b16 %v896, %v896
      %v961 = vpack.c.b16 %v897, %v897
      %v962 = vpack.c.b16 %v898, %v898
      %v963 = vpack.c.b16 %v899, %v899
      %v964 = vpack.c.b16 %v900, %v900
      %v965 = vpack.c.b16 %v901, %v901
      %v966 = vpack.c.b16 %v902, %v902
      %v967 = vpack.c.b16 %v903, %v903
      %v968 = vpack.c.b16 %v904, %v904
      %v969 = vpack.c.b16 %v905, %v905
      %v970 = vpack.c.b16 %v906, %v906
      %v971 = vpack.c.b16 %v907, %v907
      %v972 = vpack.c.b16 %v908, %v908
      %v973 = vpack.c.b16 %v909, %v909
      %v974 = vpack.c.b16 %v910, %v910
      %v975 = vpack.c.b16 %v911, %v911
      %v976 = vpack.c.b16 %v912, %v912
      %v977 = vpack.c.b16 %v913, %v913
      %v978 = vpack.c.b16 %v914, %v914
      %v979 = vpack.c.b16 %v915, %v915
      %v980 = vpack.c.b16 %v916, %v916
      %v981 = vpack.c.b16 %v917, %v917
      %v982 = vpack.c.b16 %v918, %v918
      %1047 = vst [vmem:[%s172] sm:$0xf] %v919
      %1048 = vst [vmem:[%s172 + $0x4] sm:$0xf] %v920
      %1049 = vst [vmem:[%s172 + $0x8] sm:$0xf] %v921
      %1050 = vst [vmem:[%s172 + $0xc] sm:$0xf] %v922
      %1051 = vst [vmem:[%s172 + $0x10] sm:$0xf] %v923
      %1052 = vst [vmem:[%s172 + $0x14] sm:$0xf] %v924
      %1053 = vst [vmem:[%s172 + $0x18] sm:$0xf] %v925
      %1054 = vst [vmem:[%s172 + $0x1c] sm:$0xf] %v926
      %1055 = vst [vmem:[%s172 + $0x20] sm:$0xf] %v927
      %1056 = vst [vmem:[%s172 + $0x24] sm:$0xf] %v928
      %1057 = vst [vmem:[%s172 + $0x28] sm:$0xf] %v929
      %1058 = vst [vmem:[%s172 + $0x2c] sm:$0xf] %v930
      %1059 = vst [vmem:[%s172 + $0x30] sm:$0xf] %v931
      %1060 = vst [vmem:[%s172 + $0x34] sm:$0xf] %v932
      %1061 = vst [vmem:[%s172 + $0x38] sm:$0xf] %v933
      %1062 = vst [vmem:[%s172 + $0x3c] sm:$0xf] %v934
      %1063 = vst [vmem:[%s172 + $0x40] sm:$0xf] %v935
      %1064 = vst [vmem:[%s172 + $0x44] sm:$0xf] %v936
      %1065 = vst [vmem:[%s172 + $0x48] sm:$0xf] %v937
      %1066 = vst [vmem:[%s172 + $0x4c] sm:$0xf] %v938
      %1067 = vst [vmem:[%s172 + $0x50] sm:$0xf] %v939
      %1068 = vst [vmem:[%s172 + $0x54] sm:$0xf] %v940
      %1069 = vst [vmem:[%s172 + $0x58] sm:$0xf] %v941
      %1070 = vst [vmem:[%s172 + $0x5c] sm:$0xf] %v942
      %1071 = vst [vmem:[%s172 + $0x60] sm:$0xf] %v943
      %1072 = vst [vmem:[%s172 + $0x64] sm:$0xf] %v944
      %1073 = vst [vmem:[%s172 + $0x68] sm:$0xf] %v945
      %1074 = vst [vmem:[%s172 + $0x6c] sm:$0xf] %v946
      %1075 = vst [vmem:[%s172 + $0x70] sm:$0xf] %v947
      %1076 = vst [vmem:[%s172 + $0x74] sm:$0xf] %v948
      %1077 = vst [vmem:[%s172 + $0x78] sm:$0xf] %v949
      %1078 = vst [vmem:[%s172 + $0x7c] sm:$0xf] %v950
      %1079 = vst [vmem:[%s172 + $0x80] sm:$0xf] %v951
      %1080 = vst [vmem:[%s172 + $0x84] sm:$0xf] %v952
      %1081 = vst [vmem:[%s172 + $0x88] sm:$0xf] %v953
      %1082 = vst [vmem:[%s172 + $0x8c] sm:$0xf] %v954
      %1083 = vst [vmem:[%s172 + $0x90] sm:$0xf] %v955
      %1084 = vst [vmem:[%s172 + $0x94] sm:$0xf] %v956
      %1085 = vst [vmem:[%s172 + $0x98] sm:$0xf] %v957
      %1086 = vst [vmem:[%s172 + $0x9c] sm:$0xf] %v958
      %1087 = vst [vmem:[%s172 + $0xa0] sm:$0xf] %v959
      %1088 = vst [vmem:[%s172 + $0xa4] sm:$0xf] %v960
      %1089 = vst [vmem:[%s172 + $0xa8] sm:$0xf] %v961
      %1090 = vst [vmem:[%s172 + $0xac] sm:$0xf] %v962
      %1091 = vst [vmem:[%s172 + $0xb0] sm:$0xf] %v963
      %1092 = vst [vmem:[%s172 + $0xb4] sm:$0xf] %v964
      %1093 = vst [vmem:[%s172 + $0xb8] sm:$0xf] %v965
      %1094 = vst [vmem:[%s172 + $0xbc] sm:$0xf] %v966
      %1095 = vst [vmem:[%s172 + $0xc0] sm:$0xf] %v967
      %1096 = vst [vmem:[%s172 + $0xc4] sm:$0xf] %v968
      %1097 = vst [vmem:[%s172 + $0xc8] sm:$0xf] %v969
      %1098 = vst [vmem:[%s172 + $0xcc] sm:$0xf] %v970
      %1099 = vst [vmem:[%s172 + $0xd0] sm:$0xf] %v971
      %1100 = vst [vmem:[%s172 + $0xd4] sm:$0xf] %v972
      %1101 = vst [vmem:[%s172 + $0xd8] sm:$0xf] %v973
      %1102 = vst [vmem:[%s172 + $0xdc] sm:$0xf] %v974
      %1103 = vst [vmem:[%s172 + $0xe0] sm:$0xf] %v975
      %1104 = vst [vmem:[%s172 + $0xe4] sm:$0xf] %v976
      %1105 = vst [vmem:[%s172 + $0xe8] sm:$0xf] %v977
      %1106 = vst [vmem:[%s172 + $0xec] sm:$0xf] %v978
      %1107 = vst [vmem:[%s172 + $0xf0] sm:$0xf] %v979
      %1108 = vst [vmem:[%s172 + $0xf4] sm:$0xf] %v980
      %1109 = vst [vmem:[%s172 + $0xf8] sm:$0xf] %v981
      %1110 = vst [vmem:[%s172 + $0xfc] sm:$0xf] %v982
      %s1111 = smul.u32 64, %s14
      %p1112 = scmp.lt.s32.totalorder %s1111, 127
      %s1113 = scalar_select %p1112, %s1111, 127
      %s1114 = smul.addr %s1113, 4
      %s1115 = scalar_lea.vmem %s3, %s1114
      // Predicated region
      $region33: #{gcn_res_forward.8} parent=31 // pred_check
        %p1116 = pneg %p100
      $region34: #{gcn_res_forward.8} parent=31 // pred_check_branch
        %1118 = sbr.rel (%p1116) target = $region36
      $region35: #{gcn_res_forward.8} parent=31 // pred_region
        %s1119 = smul.u32 64, %s14
      $region36: #{gcn_res_forward.8} parent=31 // pred_fallthru
        _
    $region32: #{gcn_res_forward.8} parent=5 // pred_fallthru
      _
    %p1120 = scmp.le.s32.totalorder 2, %s9
    // Predicated region
    $region37: #{gcn_res_forward.8} parent=5 // pred_check
      %p1121 = pneg %p1120
    $region38: #{gcn_res_forward.8} parent=5 // pred_check_branch
      %1123 = sbr.rel (%p1121) target = $region40
    $region39: #{gcn_res_forward.8} parent=5 // pred_region
      %s1124 = ssub.s32 %s9, 2
      // Predicated region
      $region41: #{gcn_res_forward.8} parent=39 // pred_check
        %p1125 = pneg %p106
      $region42: #{gcn_res_forward.8} parent=39 // pred_check_branch
        %1127 = sbr.rel (%p1125) target = $region44
      $region43: #{gcn_res_forward.8} parent=39 // pred_region
        %s1128 = smul.u32 64, %s15
        %p1129 = scmp.lt.s32.totalorder %s1128, 127
        %s1130 = scalar_select %p1129, %s1128, 127
        %s1131 = smul.addr %s1130, 4
        %s1132 = scalar_lea.vmem %s3, %s1131
      $region44: #{gcn_res_forward.8} parent=39 // pred_fallthru
        _
    $region40: #{gcn_res_forward.8} parent=5 // pred_fallthru
      _
  $region6: #{gcn_res_forward.8} parent=0 // loop_footer
    %s13 = sadd.s32 1, %s9
  $region7: #{gcn_res_forward.8} parent=0 // loop_footer_branch
    %8 = sbr.rel target = $region3
  $region8: #{gcn_res_forward.8} parent=0 // loop_exit
    _

// kernel: gcn_res_forward.14
$region0: #{gcn_res_forward.14}
  #allocation0 [shape = 'u32[]', space=smem, size = 0x4, offset = 0x4, fixed_abs, tag = 'smem constant byte address 0x4 - core index']
  #allocation1 [shape = 'u32[144,128]{1,0:T(1,128)}', space=vmem, size = 0x12000, scoped, tag = 'internal scratch']
  #allocation2 [shape = 'f32[256,128]{1,0:T(8,128)}', space=vmem, size = 0x20000, scoped, tag = 'scratch operand']
  %s0 = inlined_call_operand.vmem [shape: f32[2], index: 0, kind: input, shape index: {}]
  %s1 = inlined_call_operand.vmem [shape: s8[1024,1024], index: 1, kind: input, shape index: {}]
  %s2 = inlined_call_operand.vmem [shape: f32[1024,1], index: 2, kind: input, shape index: {}, may-alias: {2,6}]
  %s3 = inlined_call_operand.vmem [shape: bf16[1024,128], index: 3, kind: input, shape index: {}, may-alias: {3,8}]
  %s4 = inlined_call_operand.vmem [shape: bf16[128,128], index: 4, kind: input, shape index: {}]
  %s5 = inlined_call_operand.vmem [shape: f32[1,128], index: 5, kind: input, shape index: {}]
  %s6 = inlined_call_operand.vmem [shape: f32[1024,1], index: 6, kind: input, shape index: {}, may-alias: {2,6}]
  %s7 = inlined_call_operand.vmem [shape: bf16[1024,128], index: 7, kind: input, shape index: {}]
  %s8 = inlined_call_operand.vmem [shape: bf16[1024,128], index: 8, kind: input, shape index: {}, may-alias: {3,8}]
  %s9 = inlined_call_operand.vmem [shape: f32[1024,128], index: 9, kind: input, shape index: {}, may-alias: {9,11}]
  %s10 = inlined_call_operand.hbm [shape: bf16[1024,128], index: 10, kind: output, shape index: {0}]
  %s11 = inlined_call_operand.vmem [shape: f32[1024,128], index: 11, kind: output, shape index: {1}, may-alias: {9,11}]
  %12 = xla_tuple %s10, %s11
  %s13 = sld [smem:[#allocation0]]
  $region116: #{gcn_res_forward.14} parent=0
    _
  %s15 = ssub.s32 1, %s13
  %s16 = scalar_select 0, %s15, %s13
  $region1: #{gcn_res_forward.14} parent=0
    #allocation3 [shape = 'u8[512]{0}', space=smem, size = 0x200, scoped, tag = 'input window, operand 0, single buffered']
    #allocation4 [shape = 's32[2]{0}', space=sflag, size = 0x8, scoped, tag = 'scoped memory for gcn_res_forward.14']
    #allocation5 [shape = 's32[2]{0}', space=sflag, size = 0x8, scoped, tag = 'scoped memory for gcn_res_forward.14']
    #allocation6 [shape = 'u8[262144]{0}', space=vmem, size = 0x40000, scoped, tag = 'input window, operand 1']
    #allocation7 [shape = 'u8[131072]{0}', space=vmem, size = 0x20000, scoped, tag = 'output window, operand 0']
    %17 = vsyncpa [#allocation5], 0
    %18 = vsyncpa [#allocation4], 0
    %s19 = scalar_lea.sflag [#allocation4], 1
    %20 = vsyncpa %s19, 0
    loop: start=0, step=1, limit=10
    $region2: #{gcn_res_forward.14} parent=1 // loop_pre_header
      _
    $region3: #{gcn_res_forward.14} parent=1 // loop_header
      %s22 = sphi 0, %s26
      %p23 = scmp.ge.s32.totalorder %s22, 10
      %s29 = sphi 0, %s41
      %s30 = sphi 0, %s37
      %s31 = sphi 0, %s29
      %s32 = sphi 0, %s30
      %s33 = sphi 0, %s31
      %s34 = sphi 0, %s32
      %s42 = sphi 0, %s42
      %s44 = sphi 0, %s42
      %s45 = sphi 0, %s44
      %s59 = sphi 0, %s45
      %s67 = sphi 0, %s69
      %s70 = sphi 0, %s67
      %s71 = sphi 0, %s70
      %s87 = sphi 0, %s71
      %s93 = sphi 0, %s95
      %s96 = sphi 0, %s93
      %s97 = sphi 0, %s96
      %s113 = sphi 0, %s97
      %s119 = sphi 0, %s121
      %s122 = sphi 0, %s119
      %s123 = sphi 0, %s122
      %s139 = sphi 0, %s123
      %s143 = sphi 0, %s143
      %s145 = sphi 0, %s143
      %s146 = sphi 0, %s145
      %s160 = sphi 0, %s146
      %s164 = sphi 0, %s164
      %s166 = sphi 0, %s164
      %s167 = sphi 0, %s166
      %s181 = sphi 0, %s167
      %s187 = sphi 0, %s189
      %s190 = sphi 0, %s187
      %s191 = sphi 0, %s190
      %s207 = sphi 0, %s191
      %s213 = sphi 0, %s215
      %s216 = sphi 0, %s213
      %s217 = sphi 0, %s216
      %s233 = sphi 0, %s217
      %s239 = sphi 0, %s241
      %s242 = sphi 0, %s239
      %s243 = sphi 0, %s242
      %s259 = sphi 0, %s243
      %s265 = sphi 0, %s267
      %s268 = sphi 0, %s265
      %s269 = sphi 0, %s268
      %s285 = sphi 0, %s269
      %s291 = sphi 0, %s293
      %s294 = sphi 0, %s291
      %s295 = sphi 0, %s294
      %s311 = sphi 0, %s295
      %s317 = sphi 0, %s319
      %s320 = sphi 0, %s317
      %s321 = sphi 0, %s320
      %s337 = sphi 0, %s321
    $region4: #{gcn_res_forward.14} parent=1 // loop_header_branch
      %25 = sbr.rel (%p23) target = $region8
    $region5: #{gcn_res_forward.14} parent=1 // loop_body
      %s27 = ssub.s32 %s22, 1
      %s28 = ssub.s32 %s22, 2
      %s35 = sadd.s32 1, %s30
      %p36 = scmp.ge.s32.totalorder %s35, 2
      %s37 = scalar_select %p36, 0, %s35
      %s38 = sadd.s32 1, %s29
      %s39 = scalar_select %p36, %s38, %s29
      %p40 = scmp.ge.s32.totalorder %s39, 4
      %s41 = scalar_select %p40, 0, %s39
      %s43 = sadd.s32 %s42, 1
      %p46 = scmp.eq.s32.totalorder %s22, 7
      %p47 = scmp.ne.s32.totalorder %s42, %s44
      %p48 = scmp.eq.s32.totalorder %s22, 0
      %p49 = por %p47, %p48
      %p50 = scmp.ne.s32.totalorder %s42, %s44
      %p51 = scmp.eq.s32.totalorder %s27, 7
      %p52 = por %p50, %p51
      %p53 = scmp.ne.s32.totalorder %s44, %s45
      %p54 = scmp.eq.s32.totalorder %s27, 0
      %p55 = por %p53, %p54
      %p56 = scmp.ne.s32.totalorder %s44, %s45
      %p57 = scmp.eq.s32.totalorder %s28, 7
      %p58 = por %p56, %p57
      %p60 = scmp.ne.s32.totalorder %s45, %s59
      %p61 = scmp.eq.s32.totalorder %s28, 0
      %p62 = por %p60, %p61
      %s63 = ssub.s32 %s29, %s41
      %s64 = ssub.s32 %s30, %s37
      %s65 = sor.u32 %s63, %s64
      %p66 = scmp.eq.s32.totalorder %s65, 0
      %s68 = sadd.s32 %s67, 1
      %s69 = scalar_select %p66, %s67, %s68
      %p72 = pneg %p66
      %p73 = scmp.eq.s32.totalorder %s22, 7
      %p74 = por %p72, %p73
      %p75 = scmp.ne.s32.totalorder %s67, %s70
      %p76 = scmp.eq.s32.totalorder %s22, 0
      %p77 = por %p75, %p76
      %p78 = scmp.ne.s32.totalorder %s67, %s70
      %p79 = scmp.eq.s32.totalorder %s27, 7
      %p80 = por %p78, %p79
      %p81 = scmp.ne.s32.totalorder %s70, %s71
      %p82 = scmp.eq.s32.totalorder %s27, 0
      %p83 = por %p81, %p82
      %p84 = scmp.ne.s32.totalorder %s70, %s71
      %p85 = scmp.eq.s32.totalorder %s28, 7
      %p86 = por %p84, %p85
      %p88 = scmp.ne.s32.totalorder %s71, %s87
      %p89 = scmp.eq.s32.totalorder %s28, 0
      %p90 = por %p88, %p89
      %s91 = ssub.s32 %s30, %s37
      %p92 = scmp.eq.s32.totalorder %s91, 0
      %s94 = sadd.s32 %s93, 1
      %s95 = scalar_select %p92, %s93, %s94
      %p98 = pneg %p92
      %p99 = scmp.eq.s32.totalorder %s22, 7
      %p100 = por %p98, %p99
      %p101 = scmp.ne.s32.totalorder %s93, %s96
      %p102 = scmp.eq.s32.totalorder %s22, 0
      %p103 = por %p101, %p102
      %p104 = scmp.ne.s32.totalorder %s93, %s96
      %p105 = scmp.eq.s32.totalorder %s27, 7
      %p106 = por %p104, %p105
      %p107 = scmp.ne.s32.totalorder %s96, %s97
      %p108 = scmp.eq.s32.totalorder %s27, 0
      %p109 = por %p107, %p108
      %p110 = scmp.ne.s32.totalorder %s96, %s97
      %p111 = scmp.eq.s32.totalorder %s28, 7
      %p112 = por %p110, %p111
      %p114 = scmp.ne.s32.totalorder %s97, %s113
      %p115 = scmp.eq.s32.totalorder %s28, 0
      %p116 = por %p114, %p115
      %s117 = ssub.s32 %s30, %s37
      %p118 = scmp.eq.s32.totalorder %s117, 0
      %s120 = sadd.s32 %s119, 1
      %s121 = scalar_select %p118, %s119, %s120
      %p124 = pneg %p118
      %p125 = scmp.eq.s32.totalorder %s22, 7
      %p126 = por %p124, %p125
      %p127 = scmp.ne.s32.totalorder %s119, %s122
      %p128 = scmp.eq.s32.totalorder %s22, 0
      %p129 = por %p127, %p128
      %p130 = scmp.ne.s32.totalorder %s119, %s122
      %p131 = scmp.eq.s32.totalorder %s27, 7
      %p132 = por %p130, %p131
      %p133 = scmp.ne.s32.totalorder %s122, %s123
      %p134 = scmp.eq.s32.totalorder %s27, 0
      %p135 = por %p133, %p134
      %p136 = scmp.ne.s32.totalorder %s122, %s123
      %p137 = scmp.eq.s32.totalorder %s28, 7
      %p138 = por %p136, %p137
      %p140 = scmp.ne.s32.totalorder %s123, %s139
      %p141 = scmp.eq.s32.totalorder %s28, 0
      %p142 = por %p140, %p141
      %s144 = sadd.s32 %s143, 1
      %p147 = scmp.eq.s32.totalorder %s22, 7
      %p148 = scmp.ne.s32.totalorder %s143, %s145
      %p149 = scmp.eq.s32.totalorder %s22, 0
      %p150 = por %p148, %p149
      %p151 = scmp.ne.s32.totalorder %s143, %s145
      %p152 = scmp.eq.s32.totalorder %s27, 7
      %p153 = por %p151, %p152
      %p154 = scmp.ne.s32.totalorder %s145, %s146
      %p155 = scmp.eq.s32.totalorder %s27, 0
      %p156 = por %p154, %p155
      %p157 = scmp.ne.s32.totalorder %s145, %s146
      %p158 = scmp.eq.s32.totalorder %s28, 7
      %p159 = por %p157, %p158
      %p161 = scmp.ne.s32.totalorder %s146, %s160
      %p162 = scmp.eq.s32.totalorder %s28, 0
      %p163 = por %p161, %p162
      %s165 = sadd.s32 %s164, 1
      %p168 = scmp.eq.s32.totalorder %s22, 7
      %p169 = scmp.ne.s32.totalorder %s164, %s166
      %p170 = scmp.eq.s32.totalorder %s22, 0
      %p171 = por %p169, %p170
      %p172 = scmp.ne.s32.totalorder %s164, %s166
      %p173 = scmp.eq.s32.totalorder %s27, 7
      %p174 = por %p172, %p173
      %p175 = scmp.ne.s32.totalorder %s166, %s167
      %p176 = scmp.eq.s32.totalorder %s27, 0
      %p177 = por %p175, %p176
      %p178 = scmp.ne.s32.totalorder %s166, %s167
      %p179 = scmp.eq.s32.totalorder %s28, 7
      %p180 = por %p178, %p179
      %p182 = scmp.ne.s32.totalorder %s167, %s181
      %p183 = scmp.eq.s32.totalorder %s28, 0
      %p184 = por %p182, %p183
      %s185 = ssub.s32 %s29, %s41
      %p186 = scmp.eq.s32.totalorder %s185, 0
      %s188 = sadd.s32 %s187, 1
      %s189 = scalar_select %p186, %s187, %s188
      %p192 = pneg %p186
      %p193 = scmp.eq.s32.totalorder %s22, 7
      %p194 = por %p192, %p193
      %p195 = scmp.ne.s32.totalorder %s187, %s190
      %p196 = scmp.eq.s32.totalorder %s22, 0
      %p197 = por %p195, %p196
      %p198 = scmp.ne.s32.totalorder %s187, %s190
      %p199 = scmp.eq.s32.totalorder %s27, 7
      %p200 = por %p198, %p199
      %p201 = scmp.ne.s32.totalorder %s190, %s191
      %p202 = scmp.eq.s32.totalorder %s27, 0
      %p203 = por %p201, %p202
      %p204 = scmp.ne.s32.totalorder %s190, %s191
      %p205 = scmp.eq.s32.totalorder %s28, 7
      %p206 = por %p204, %p205
      %p208 = scmp.ne.s32.totalorder %s191, %s207
      %p209 = scmp.eq.s32.totalorder %s28, 0
      %p210 = por %p208, %p209
      %s211 = ssub.s32 %s29, %s41
      %p212 = scmp.eq.s32.totalorder %s211, 0
      %s214 = sadd.s32 %s213, 1
      %s215 = scalar_select %p212, %s213, %s214
      %p218 = pneg %p212
      %p219 = scmp.eq.s32.totalorder %s22, 7
      %p220 = por %p218, %p219
      %p221 = scmp.ne.s32.totalorder %s213, %s216
      %p222 = scmp.eq.s32.totalorder %s22, 0
      %p223 = por %p221, %p222
      %p224 = scmp.ne.s32.totalorder %s213, %s216
      %p225 = scmp.eq.s32.totalorder %s27, 7
      %p226 = por %p224, %p225
      %p227 = scmp.ne.s32.totalorder %s216, %s217
      %p228 = scmp.eq.s32.totalorder %s27, 0
      %p229 = por %p227, %p228
      %p230 = scmp.ne.s32.totalorder %s216, %s217
      %p231 = scmp.eq.s32.totalorder %s28, 7
      %p232 = por %p230, %p231
      %p234 = scmp.ne.s32.totalorder %s217, %s233
      %p235 = scmp.eq.s32.totalorder %s28, 0
      %p236 = por %p234, %p235
      %s237 = ssub.s32 %s29, %s41
      %p238 = scmp.eq.s32.totalorder %s237, 0
      %s240 = sadd.s32 %s239, 1
      %s241 = scalar_select %p238, %s239, %s240
      %p244 = pneg %p238
      %p245 = scmp.eq.s32.totalorder %s22, 7
      %p246 = por %p244, %p245
      %p247 = scmp.ne.s32.totalorder %s239, %s242
      %p248 = scmp.eq.s32.totalorder %s22, 0
      %p249 = por %p247, %p248
      %p250 = scmp.ne.s32.totalorder %s239, %s242
      %p251 = scmp.eq.s32.totalorder %s27, 7
      %p252 = por %p250, %p251
      %p253 = scmp.ne.s32.totalorder %s242, %s243
      %p254 = scmp.eq.s32.totalorder %s27, 0
      %p255 = por %p253, %p254
      %p256 = scmp.ne.s32.totalorder %s242, %s243
      %p257 = scmp.eq.s32.totalorder %s28, 7
      %p258 = por %p256, %p257
      %p260 = scmp.ne.s32.totalorder %s243, %s259
      %p261 = scmp.eq.s32.totalorder %s28, 0
      %p262 = por %p260, %p261
      %s263 = ssub.s32 %s29, %s41
      %p264 = scmp.eq.s32.totalorder %s263, 0
      %s266 = sadd.s32 %s265, 1
      %s267 = scalar_select %p264, %s265, %s266
      %p270 = pneg %p264
      %p271 = scmp.eq.s32.totalorder %s22, 7
      %p272 = por %p270, %p271
      %p273 = scmp.ne.s32.totalorder %s265, %s268
      %p274 = scmp.eq.s32.totalorder %s22, 0
      %p275 = por %p273, %p274
      %p276 = scmp.ne.s32.totalorder %s265, %s268
      %p277 = scmp.eq.s32.totalorder %s27, 7
      %p278 = por %p276, %p277
      %p279 = scmp.ne.s32.totalorder %s268, %s269
      %p280 = scmp.eq.s32.totalorder %s27, 0
      %p281 = por %p279, %p280
      %p282 = scmp.ne.s32.totalorder %s268, %s269
      %p283 = scmp.eq.s32.totalorder %s28, 7
      %p284 = por %p282, %p283
      %p286 = scmp.ne.s32.totalorder %s269, %s285
      %p287 = scmp.eq.s32.totalorder %s28, 0
      %p288 = por %p286, %p287
      %s289 = ssub.s32 %s29, %s41
      %p290 = scmp.eq.s32.totalorder %s289, 0
      %s292 = sadd.s32 %s291, 1
      %s293 = scalar_select %p290, %s291, %s292
      %p296 = pneg %p290
      %p297 = scmp.eq.s32.totalorder %s22, 7
      %p298 = por %p296, %p297
      %p299 = scmp.ne.s32.totalorder %s291, %s294
      %p300 = scmp.eq.s32.totalorder %s22, 0
      %p301 = por %p299, %p300
      %p302 = scmp.ne.s32.totalorder %s291, %s294
      %p303 = scmp.eq.s32.totalorder %s27, 7
      %p304 = por %p302, %p303
      %p305 = scmp.ne.s32.totalorder %s294, %s295
      %p306 = scmp.eq.s32.totalorder %s27, 0
      %p307 = por %p305, %p306
      %p308 = scmp.ne.s32.totalorder %s294, %s295
      %p309 = scmp.eq.s32.totalorder %s28, 7
      %p310 = por %p308, %p309
      %p312 = scmp.ne.s32.totalorder %s295, %s311
      %p313 = scmp.eq.s32.totalorder %s28, 0
      %p314 = por %p312, %p313
      %s315 = ssub.s32 %s29, %s41
      %p316 = scmp.eq.s32.totalorder %s315, 0
      %s318 = sadd.s32 %s317, 1
      %s319 = scalar_select %p316, %s317, %s318
      %p322 = pneg %p316
      %p323 = scmp.eq.s32.totalorder %s22, 7
      %p324 = por %p322, %p323
      %p325 = scmp.ne.s32.totalorder %s317, %s320
      %p326 = scmp.eq.s32.totalorder %s22, 0
      %p327 = por %p325, %p326
      %p328 = scmp.ne.s32.totalorder %s317, %s320
      %p329 = scmp.eq.s32.totalorder %s27, 7
      %p330 = por %p328, %p329
      %p331 = scmp.ne.s32.totalorder %s320, %s321
      %p332 = scmp.eq.s32.totalorder %s27, 0
      %p333 = por %p331, %p332
      %p334 = scmp.ne.s32.totalorder %s320, %s321
      %p335 = scmp.eq.s32.totalorder %s28, 7
      %p336 = por %p334, %p335
      %p338 = scmp.ne.s32.totalorder %s321, %s337
      %p339 = scmp.eq.s32.totalorder %s28, 0
      %p340 = por %p338, %p339
      %p341 = scmp.le.s32.totalorder 1, %s22
      %p342 = scmp.lt.s32.totalorder %s22, 9
      %p343 = pnand %p341, %p342
      %p344 = pneg %p343
      // Predicated region
      $region9: #{gcn_res_forward.14} parent=5 // pred_check
        _
      $region10: #{gcn_res_forward.14} parent=5 // pred_check_branch
        %346 = sbr.rel (%p343) target = $region12
      $region11: #{gcn_res_forward.14} parent=5 // pred_region
        %s347 = ssub.s32 %s22, 1
        // Predicated region
        $region13: #{gcn_res_forward.14} parent=11 // pred_check
          %p348 = pneg %p55
        $region14: #{gcn_res_forward.14} parent=11 // pred_check_branch
          %350 = sbr.rel (%p348) target = $region16
        $region15: #{gcn_res_forward.14} parent=11 // pred_region
          %s352 = ssub.s32 16, 16
          %353 = vsyncadd [#allocation5], %s352
          %s355 = sshll.u32 %s0, 4
          %s356 = int_to_ptr.vmem [resolvable:$true] %s355
          %358 = dma.vmem_to_smem %s356, 16, [#allocation3], [#allocation5]
        $region16: #{gcn_res_forward.14} parent=11 // pred_fallthru
          _
        // Predicated region
        $region17: #{gcn_res_forward.14} parent=11 // pred_check
          %p359 = pneg %p156
        $region18: #{gcn_res_forward.14} parent=11 // pred_check_branch
          %361 = sbr.rel (%p359) target = $region20
        $region19: #{gcn_res_forward.14} parent=11 // pred_region
          _
        $region20: #{gcn_res_forward.14} parent=11 // pred_fallthru
          _
        // Predicated region
        $region21: #{gcn_res_forward.14} parent=11 // pred_check
          %p362 = pneg %p177
        $region22: #{gcn_res_forward.14} parent=11 // pred_check_branch
          %364 = sbr.rel (%p362) target = $region24
        $region23: #{gcn_res_forward.14} parent=11 // pred_region
          _
        $region24: #{gcn_res_forward.14} parent=11 // pred_fallthru
          _
      $region12: #{gcn_res_forward.14} parent=5 // pred_fallthru
        _
      %p365 = scmp.lt.s32.totalorder %s22, 8
      // Predicated region
      $region25: #{gcn_res_forward.14} parent=5 // pred_check
        %p366 = pneg %p365
      $region26: #{gcn_res_forward.14} parent=5 // pred_check_branch
        %368 = sbr.rel (%p366) target = $region28
      $region27: #{gcn_res_forward.14} parent=5 // pred_region
        // Predicated region
        $region29: #{gcn_res_forward.14} parent=27 // pred_check
          %p369 = pneg %p77
        $region30: #{gcn_res_forward.14} parent=27 // pred_check_branch
          %371 = sbr.rel (%p369) target = $region32
        $region31: #{gcn_res_forward.14} parent=27 // pred_region
          %s372 = sand.u32 %s67, 1
          %s373 = sand.u32 %s67, 1
          %s374 = smul.addr %s373, 256
          %s375 = scalar_lea.vmem [#allocation6], %s374
          %s376 = smul.u32 8, %s29
          %s377 = smul.u32 4, %s30
          %s378 = smul.addr %s376, 8
          %s379 = sadd.s32 %s377, %s378
          %s380 = smul.addr %s379, 8
          %s381 = scalar_lea.vmem %s1, %s380
          // Predicated region
          $region33: #{gcn_res_forward.14} parent=31 // pred_check
            _
          $region34: #{gcn_res_forward.14} parent=31 // pred_check_branch
            %383 = sbr.rel (0) target = $region36
          $region35: #{gcn_res_forward.14} parent=31 // pred_region
            // Predicated region
            $region37: #{gcn_res_forward.14} parent=35 // pred_check
              _
            $region38: #{gcn_res_forward.14} parent=35 // pred_check_branch
              %385 = sbr.rel (0) target = $region40
            $region39: #{gcn_res_forward.14} parent=35 // pred_region
              loop: start=0, step=1, limit=1
              $region41: #{gcn_res_forward.14} parent=39 // loop_pre_header
                _
              $region42: #{gcn_res_forward.14} parent=39 // loop_header
                %s387 = sphi 0, %s391
                %p388 = scmp.ge.s32.totalorder %s387, 1
                %s392 = sphi %s381, %s381
                %s393 = sphi %s375, %s375
              $region43: #{gcn_res_forward.14} parent=39 // loop_header_branch
                %390 = sbr.rel (%p388) target = $region47
              $region44: #{gcn_res_forward.14} parent=39 // loop_body
                %v394 = vld [vmem:[%s392] sm:$0xff]
                %395 = vst [vmem:[%s393] sm:$0xff] %v394
                %v396 = vld [vmem:[%s392 + $0x8] sm:$0xff]
                %397 = vst [vmem:[%s393 + $0x8] sm:$0xff] %v396
                %v398 = vld [vmem:[%s392 + $0x10] sm:$0xff]
                %399 = vst [vmem:[%s393 + $0x10] sm:$0xff] %v398
                %v400 = vld [vmem:[%s392 + $0x18] sm:$0xff]
                %401 = vst [vmem:[%s393 + $0x18] sm:$0xff] %v400
                %v402 = vld [vmem:[%s392 + $0x40] sm:$0xff]
                %403 = vst [vmem:[%s393 + $0x20] sm:$0xff] %v402
                %v404 = vld [vmem:[%s392 + $0x48] sm:$0xff]
                %405 = vst [vmem:[%s393 + $0x28] sm:$0xff] %v404
                %v406 = vld [vmem:[%s392 + $0x50] sm:$0xff]
                %407 = vst [vmem:[%s393 + $0x30] sm:$0xff] %v406
                %v408 = vld [vmem:[%s392 + $0x58] sm:$0xff]
                %409 = vst [vmem:[%s393 + $0x38] sm:$0xff] %v408
                %v410 = vld [vmem:[%s392 + $0x80] sm:$0xff]
                %411 = vst [vmem:[%s393 + $0x40] sm:$0xff] %v410
                %v412 = vld [vmem:[%s392 + $0x88] sm:$0xff]
                %413 = vst [vmem:[%s393 + $0x48] sm:$0xff] %v412
                %v414 = vld [vmem:[%s392 + $0x90] sm:$0xff]
                %415 = vst [vmem:[%s393 + $0x50] sm:$0xff] %v414
                %v416 = vld [vmem:[%s392 + $0x98] sm:$0xff]
                %417 = vst [vmem:[%s393 + $0x58] sm:$0xff] %v416
                %v418 = vld [vmem:[%s392 + $0xc0] sm:$0xff]
                %419 = vst [vmem:[%s393 + $0x60] sm:$0xff] %v418
                %v420 = vld [vmem:[%s392 + $0xc8] sm:$0xff]
                %421 = vst [vmem:[%s393 + $0x68] sm:$0xff] %v420
                %v422 = vld [vmem:[%s392 + $0xd0] sm:$0xff]
                %423 = vst [vmem:[%s393 + $0x70] sm:$0xff] %v422
                %v424 = vld [vmem:[%s392 + $0xd8] sm:$0xff]
                %425 = vst [vmem:[%s393 + $0x78] sm:$0xff] %v424
                %v426 = vld [vmem:[%s392 + $0x100] sm:$0xff]
                %427 = vst [vmem:[%s393 + $0x80] sm:$0xff] %v426
                %v428 = vld [vmem:[%s392 + $0x108] sm:$0xff]
                %429 = vst [vmem:[%s393 + $0x88] sm:$0xff] %v428
                %v430 = vld [vmem:[%s392 + $0x110] sm:$0xff]
                %431 = vst [vmem:[%s393 + $0x90] sm:$0xff] %v430
                %v432 = vld [vmem:[%s392 + $0x118] sm:$0xff]
                %433 = vst [vmem:[%s393 + $0x98] sm:$0xff] %v432
                %v434 = vld [vmem:[%s392 + $0x140] sm:$0xff]
                %435 = vst [vmem:[%s393 + $0xa0] sm:$0xff] %v434
                %v436 = vld [vmem:[%s392 + $0x148] sm:$0xff]
                %437 = vst [vmem:[%s393 + $0xa8] sm:$0xff] %v436
                %v438 = vld [vmem:[%s392 + $0x150] sm:$0xff]
                %439 = vst [vmem:[%s393 + $0xb0] sm:$0xff] %v438
                %v440 = vld [vmem:[%s392 + $0x158] sm:$0xff]
                %441 = vst [vmem:[%s393 + $0xb8] sm:$0xff] %v440
                %v442 = vld [vmem:[%s392 + $0x180] sm:$0xff]
                %443 = vst [vmem:[%s393 + $0xc0] sm:$0xff] %v442
                %v444 = vld [vmem:[%s392 + $0x188] sm:$0xff]
                %445 = vst [vmem:[%s393 + $0xc8] sm:$0xff] %v444
                %v446 = vld [vmem:[%s392 + $0x190] sm:$0xff]
                %447 = vst [vmem:[%s393 + $0xd0] sm:$0xff] %v446
                %v448 = vld [vmem:[%s392 + $0x198] sm:$0xff]
                %449 = vst [vmem:[%s393 + $0xd8] sm:$0xff] %v448
                %v450 = vld [vmem:[%s392 + $0x1c0] sm:$0xff]
                %451 = vst [vmem:[%s393 + $0xe0] sm:$0xff] %v450
                %v452 = vld [vmem:[%s392 + $0x1c8] sm:$0xff]
                %453 = vst [vmem:[%s393 + $0xe8] sm:$0xff] %v452
                %v454 = vld [vmem:[%s392 + $0x1d0] sm:$0xff]
                %455 = vst [vmem:[%s393 + $0xf0] sm:$0xff] %v454
                %v456 = vld [vmem:[%s392 + $0x1d8] sm:$0xff]
                %457 = vst [vmem:[%s393 + $0xf8] sm:$0xff] %v456
              $region45: #{gcn_res_forward.14} parent=39 // loop_footer
                %s391 = sadd.s32 1, %s387
              $region46: #{gcn_res_forward.14} parent=39 // loop_footer_branch
                %386 = sbr.rel target = $region42
              $region47: #{gcn_res_forward.14} parent=39 // loop_exit
                _
            $region40: #{gcn_res_forward.14} parent=35 // pred_fallthru
              _
            // Predicated region
            $region48: #{gcn_res_forward.14} parent=35 // pred_check
              _
            $region49: #{gcn_res_forward.14} parent=35 // pred_check_branch
              %459 = sbr.rel target = $region51
            $region50: #{gcn_res_forward.14} parent=35 // pred_region
              _
            $region51: #{gcn_res_forward.14} parent=35 // pred_fallthru
              _
          $region36: #{gcn_res_forward.14} parent=31 // pred_fallthru
            _
          %460 = vnop
        $region32: #{gcn_res_forward.14} parent=27 // pred_fallthru
          _
        // Predicated region
        $region52: #{gcn_res_forward.14} parent=27 // pred_check
          %p461 = pneg %p103
        $region53: #{gcn_res_forward.14} parent=27 // pred_check_branch
          %463 = sbr.rel (%p461) target = $region55
        $region54: #{gcn_res_forward.14} parent=27 // pred_region
          %s464 = smul.u32 64, %s30
          %p465 = scmp.lt.s32.totalorder %s464, 127
          %s466 = scalar_select %p465, %s464, 127
          %s467 = smul.addr %s466, 8
          %s468 = scalar_lea.vmem %s2, %s467
          %s469 = smul.u32 64, %s30
        $region55: #{gcn_res_forward.14} parent=27 // pred_fallthru
          _
        // Predicated region
        $region56: #{gcn_res_forward.14} parent=27 // pred_check
          %p470 = pneg %p129
        $region57: #{gcn_res_forward.14} parent=27 // pred_check_branch
          %472 = sbr.rel (%p470) target = $region59
        $region58: #{gcn_res_forward.14} parent=27 // pred_region
          %s473 = smul.u32 64, %s30
          %p474 = scmp.lt.s32.totalorder %s473, 127
          %s475 = scalar_select %p474, %s473, 127
          %s476 = smul.addr %s475, 4
          %s477 = scalar_lea.vmem %s3, %s476
          %s478 = smul.u32 64, %s30
        $region59: #{gcn_res_forward.14} parent=27 // pred_fallthru
          _
        // Predicated region
        $region60: #{gcn_res_forward.14} parent=27 // pred_check
          %p479 = pneg %p197
        $region61: #{gcn_res_forward.14} parent=27 // pred_check_branch
          %481 = sbr.rel (%p479) target = $region63
        $region62: #{gcn_res_forward.14} parent=27 // pred_region
          %s482 = smul.u32 32, %s29
          %p483 = scmp.lt.s32.totalorder %s482, 127
          %s484 = scalar_select %p483, %s482, 127
          %s485 = smul.addr %s484, 8
          %s486 = scalar_lea.vmem %s6, %s485
          %s487 = smul.u32 32, %s29
        $region63: #{gcn_res_forward.14} parent=27 // pred_fallthru
          _
        // Predicated region
        $region64: #{gcn_res_forward.14} parent=27 // pred_check
          %p488 = pneg %p223
        $region65: #{gcn_res_forward.14} parent=27 // pred_check_branch
          %490 = sbr.rel (%p488) target = $region67
        $region66: #{gcn_res_forward.14} parent=27 // pred_region
          %s491 = smul.u32 32, %s29
          %p492 = scmp.lt.s32.totalorder %s491, 127
          %s493 = scalar_select %p492, %s491, 127
          %s494 = smul.addr %s493, 4
          %s495 = scalar_lea.vmem %s7, %s494
          %s496 = smul.u32 32, %s29
        $region67: #{gcn_res_forward.14} parent=27 // pred_fallthru
          _
        // Predicated region
        $region68: #{gcn_res_forward.14} parent=27 // pred_check
          %p497 = pneg %p249
        $region69: #{gcn_res_forward.14} parent=27 // pred_check_branch
          %499 = sbr.rel (%p497) target = $region71
        $region70: #{gcn_res_forward.14} parent=27 // pred_region
          %s500 = smul.u32 32, %s29
          %p501 = scmp.lt.s32.totalorder %s500, 127
          %s502 = scalar_select %p501, %s500, 127
          %s503 = smul.addr %s502, 4
          %s504 = scalar_lea.vmem %s8, %s503
          %s505 = smul.u32 32, %s29
        $region71: #{gcn_res_forward.14} parent=27 // pred_fallthru
          _
        // Predicated region
        $region72: #{gcn_res_forward.14} parent=27 // pred_check
          %p506 = pneg %p275
        $region73: #{gcn_res_forward.14} parent=27 // pred_check_branch
          %508 = sbr.rel (%p506) target = $region75
        $region74: #{gcn_res_forward.14} parent=27 // pred_region
          %s509 = smul.u32 32, %s29
          %p510 = scmp.lt.s32.totalorder %s509, 127
          %s511 = scalar_select %p510, %s509, 127
          %s512 = smul.addr %s511, 8
          %s513 = scalar_lea.vmem %s9, %s512
          %s514 = smul.u32 32, %s29
        $region75: #{gcn_res_forward.14} parent=27 // pred_fallthru
          _
      $region28: #{gcn_res_forward.14} parent=5 // pred_fallthru
        _
      %p515 = scmp.le.s32.totalorder 1, %s22
      %p516 = scmp.lt.s32.totalorder %s22, 9
      %p517 = pnand %p515, %p516
      %p518 = pneg %p517
      // Predicated region
      $region76: #{gcn_res_forward.14} parent=5 // pred_check
        _
      $region77: #{gcn_res_forward.14} parent=5 // pred_check_branch
        %520 = sbr.rel (%p517) target = $region79
      $region78: #{gcn_res_forward.14} parent=5 // pred_region
        %s521 = ssub.s32 %s22, 1
        // Predicated region
        $region80: #{gcn_res_forward.14} parent=78 // pred_check
          %p522 = pneg %p55
        $region81: #{gcn_res_forward.14} parent=78 // pred_check_branch
          %524 = sbr.rel (%p522) target = $region83
        $region82: #{gcn_res_forward.14} parent=78 // pred_region
          %525 = dma.done [#allocation5], 16
        $region83: #{gcn_res_forward.14} parent=78 // pred_fallthru
          _
        %s526 = sand.u32 %s70, 1
        %s527 = sand.u32 %s70, 1
        %s528 = smul.addr %s527, 256
        %s529 = scalar_lea.vmem [#allocation6], %s528
        // Predicated region
        $region84: #{gcn_res_forward.14} parent=78 // pred_check
          %p530 = pneg %p83
        $region85: #{gcn_res_forward.14} parent=78 // pred_check_branch
          %532 = sbr.rel (%p530) target = $region87
        $region86: #{gcn_res_forward.14} parent=78 // pred_region
          _
        $region87: #{gcn_res_forward.14} parent=78 // pred_fallthru
          _
        %533 = sfence
        %p534 = pneg %p55
        %p535 = pneg %p52
        %s536 = sand.u32 %s70, 1
        %s537 = sand.u32 %s70, 1
        %s538 = smul.addr %s537, 256
        %s539 = scalar_lea.vmem [#allocation6], %s538
        %p540 = pneg %p83
        %p541 = pneg %p80
        %s542 = smul.u32 64, %s32
        %p543 = scmp.lt.s32.totalorder %s542, 127
        %s544 = scalar_select %p543, %s542, 127
        %s545 = smul.addr %s544, 8
        %s546 = scalar_lea.vmem %s2, %s545
        %p547 = pneg %p109
        %p548 = pneg %p106
        %s549 = smul.u32 64, %s32
        %p550 = scmp.lt.s32.totalorder %s549, 127
        %s551 = scalar_select %p550, %s549, 127
        %s552 = smul.addr %s551, 4
        %s553 = scalar_lea.vmem %s3, %s552
        %p554 = pneg %p135
        %p555 = pneg %p132
        %p556 = pneg %p156
        %p557 = pneg %p153
        %p558 = pneg %p177
        %p559 = pneg %p174
        %s560 = smul.u32 32, %s31
        %p561 = scmp.lt.s32.totalorder %s560, 127
        %s562 = scalar_select %p561, %s560, 127
        %s563 = smul.addr %s562, 8
        %s564 = scalar_lea.vmem %s6, %s563
        %p565 = pneg %p203
        %p566 = pneg %p200
        %s567 = smul.u32 32, %s31
        %p568 = scmp.lt.s32.totalorder %s567, 127
        %s569 = scalar_select %p568, %s567, 127
        %s570 = smul.addr %s569, 4
        %s571 = scalar_lea.vmem %s7, %s570
        %p572 = pneg %p229
        %p573 = pneg %p226
        %s574 = smul.u32 32, %s31
        %p575 = scmp.lt.s32.totalorder %s574, 127
        %s576 = scalar_select %p575, %s574, 127
        %s577 = smul.addr %s576, 4
        %s578 = scalar_lea.vmem %s8, %s577
        %p579 = pneg %p255
        %p580 = pneg %p252
        %s581 = smul.u32 32, %s31
        %p582 = scmp.lt.s32.totalorder %s581, 127
        %s583 = scalar_select %p582, %s581, 127
        %s584 = smul.addr %s583, 8
        %s585 = scalar_lea.vmem %s9, %s584
        %p586 = pneg %p281
        %p587 = pneg %p278
        %p588 = pneg %p307
        %p589 = pneg %p304
        %s590 = sand.u32 %s294, 1
        %s591 = scalar_lea.sflag [#allocation4], %s590
        %s592 = sand.u32 %s294, 1
        %s593 = smul.addr %s592, 128
        %s594 = scalar_lea.vmem [#allocation7], %s593
        %p595 = pneg %p333
        %p596 = pneg %p330
        %s597 = smul.u32 32, %s31
        %p598 = scmp.lt.s32.totalorder %s597, 127
        %s599 = scalar_select %p598, %s597, 127
        %s600 = smul.addr %s599, 8
        %s601 = scalar_lea.vmem %s11, %s600
        %s602 = smul.u32 8, %s31
        %s603 = smul.u32 4, %s32
        %s604 = smul.u32 64, %s32
        %p605 = scmp.lt.s32.totalorder %s604, 127
        %s606 = scalar_select %p605, %s604, 127
        %s607 = smul.addr %s606, 8
        %s608 = scalar_lea.vmem %s2, %s607
        %s609 = smul.u32 64, %s32
        %s610 = smul.u32 64, %s32
        %p611 = scmp.lt.s32.totalorder %s610, 127
        %s612 = scalar_select %p611, %s610, 127
        %s613 = smul.addr %s612, 4
        %s614 = scalar_lea.vmem %s3, %s613
        %s615 = smul.u32 64, %s32
        %s616 = smul.u32 32, %s31
        %p617 = scmp.lt.s32.totalorder %s616, 127
        %s618 = scalar_select %p617, %s616, 127
        %s619 = smul.addr %s618, 8
        %s620 = scalar_lea.vmem %s6, %s619
        %s621 = smul.u32 32, %s31
        %s622 = smul.u32 32, %s31
        %p623 = scmp.lt.s32.totalorder %s622, 127
        %s624 = scalar_select %p623, %s622, 127
        %s625 = smul.addr %s624, 4
        %s626 = scalar_lea.vmem %s7, %s625
        %s627 = smul.u32 32, %s31
        %s628 = smul.u32 32, %s31
        %p629 = scmp.lt.s32.totalorder %s628, 127
        %s630 = scalar_select %p629, %s628, 127
        %s631 = smul.addr %s630, 4
        %s632 = scalar_lea.vmem %s8, %s631
        %s633 = smul.u32 32, %s31
        %s634 = smul.u32 32, %s31
        %p635 = scmp.lt.s32.totalorder %s634, 127
        %s636 = scalar_select %p635, %s634, 127
        %s637 = smul.addr %s636, 8
        %s638 = scalar_lea.vmem %s9, %s637
        %s639 = smul.u32 32, %s31
        %s640 = smul.u32 32, %s31
        %s641 = smul.u32 32, %s31
        %p642 = scmp.lt.s32.totalorder %s641, 127
        %s643 = scalar_select %p642, %s641, 127
        %s644 = smul.addr %s643, 8
        %s645 = scalar_lea.vmem %s11, %s644
        %s646 = smul.u32 32, %s31
        %p648 = scmp.eq.s32.totalorder %s32, 0
        // Predicated region
        $region88: #{gcn_res_forward.14} parent=78 // pred_check
          %p649 = pneg %p648
        $region89: #{gcn_res_forward.14} parent=78 // pred_check_branch
          %651 = sbr.rel (%p649) target = $region91
        $region90: #{gcn_res_forward.14} parent=78 // pred_region
          %652 = vst [vmem:[#allocation2] sm:$0xff] 0.0
          %653 = vst [vmem:[#allocation2 + $0x8] sm:$0xff] 0.0
          %654 = vst [vmem:[#allocation2 + $0x10] sm:$0xff] 0.0
          %655 = vst [vmem:[#allocation2 + $0x18] sm:$0xff] 0.0
          %656 = vst [vmem:[#allocation2 + $0x20] sm:$0xff] 0.0
          %657 = vst [vmem:[#allocation2 + $0x28] sm:$0xff] 0.0
          %658 = vst [vmem:[#allocation2 + $0x30] sm:$0xff] 0.0
          %659 = vst [vmem:[#allocation2 + $0x38] sm:$0xff] 0.0
          %660 = vst [vmem:[#allocation2 + $0x40] sm:$0xff] 0.0
          %661 = vst [vmem:[#allocation2 + $0x48] sm:$0xff] 0.0
          %662 = vst [vmem:[#allocation2 + $0x50] sm:$0xff] 0.0
          %663 = vst [vmem:[#allocation2 + $0x58] sm:$0xff] 0.0
          %664 = vst [vmem:[#allocation2 + $0x60] sm:$0xff] 0.0
          %665 = vst [vmem:[#allocation2 + $0x68] sm:$0xff] 0.0
          %666 = vst [vmem:[#allocation2 + $0x70] sm:$0xff] 0.0
          %667 = vst [vmem:[#allocation2 + $0x78] sm:$0xff] 0.0
          %668 = vst [vmem:[#allocation2 + $0x80] sm:$0xff] 0.0
          %669 = vst [vmem:[#allocation2 + $0x88] sm:$0xff] 0.0
          %670 = vst [vmem:[#allocation2 + $0x90] sm:$0xff] 0.0
          %671 = vst [vmem:[#allocation2 + $0x98] sm:$0xff] 0.0
          %672 = vst [vmem:[#allocation2 + $0xa0] sm:$0xff] 0.0
          %673 = vst [vmem:[#allocation2 + $0xa8] sm:$0xff] 0.0
          %674 = vst [vmem:[#allocation2 + $0xb0] sm:$0xff] 0.0
          %675 = vst [vmem:[#allocation2 + $0xb8] sm:$0xff] 0.0
          %676 = vst [vmem:[#allocation2 + $0xc0] sm:$0xff] 0.0
          %677 = vst [vmem:[#allocation2 + $0xc8] sm:$0xff] 0.0
          %678 = vst [vmem:[#allocation2 + $0xd0] sm:$0xff] 0.0
          %679 = vst [vmem:[#allocation2 + $0xd8] sm:$0xff] 0.0
          %680 = vst [vmem:[#allocation2 + $0xe0] sm:$0xff] 0.0
          %681 = vst [vmem:[#allocation2 + $0xe8] sm:$0xff] 0.0
          %682 = vst [vmem:[#allocation2 + $0xf0] sm:$0xff] 0.0
          %683 = vst [vmem:[#allocation2 + $0xf8] sm:$0xff] 0.0
        $region91: #{gcn_res_forward.14} parent=78 // pred_fallthru
          _
        %v684 = vld [vmem:[%s529] sm:$0xff]
        %v685 = vld [vmem:[%s529 + $0x8] sm:$0xff]
        %v686 = vld [vmem:[%s529 + $0x10] sm:$0xff]
        %v687 = vld [vmem:[%s529 + $0x18] sm:$0xff]
        %v688 = vld [vmem:[%s529 + $0x20] sm:$0xff]
        %v689 = vld [vmem:[%s529 + $0x28] sm:$0xff]
        %v690 = vld [vmem:[%s529 + $0x30] sm:$0xff]
        %v691 = vld [vmem:[%s529 + $0x38] sm:$0xff]
        %v692 = vld [vmem:[%s529 + $0x40] sm:$0xff]
        %v693 = vld [vmem:[%s529 + $0x48] sm:$0xff]
        %v694 = vld [vmem:[%s529 + $0x50] sm:$0xff]
        %v695 = vld [vmem:[%s529 + $0x58] sm:$0xff]
        %v696 = vld [vmem:[%s529 + $0x60] sm:$0xff]
        %v697 = vld [vmem:[%s529 + $0x68] sm:$0xff]
        %v698 = vld [vmem:[%s529 + $0x70] sm:$0xff]
        %v699 = vld [vmem:[%s529 + $0x78] sm:$0xff]
        %v700 = vld [vmem:[%s529 + $0x80] sm:$0xff]
        %v701 = vld [vmem:[%s529 + $0x88] sm:$0xff]
        %v702 = vld [vmem:[%s529 + $0x90] sm:$0xff]
        %v703 = vld [vmem:[%s529 + $0x98] sm:$0xff]
        %v704 = vld [vmem:[%s529 + $0xa0] sm:$0xff]
        %v705 = vld [vmem:[%s529 + $0xa8] sm:$0xff]
        %v706 = vld [vmem:[%s529 + $0xb0] sm:$0xff]
        %v707 = vld [vmem:[%s529 + $0xb8] sm:$0xff]
        %v708 = vld [vmem:[%s529 + $0xc0] sm:$0xff]
        %v709 = vld [vmem:[%s529 + $0xc8] sm:$0xff]
        %v710 = vld [vmem:[%s529 + $0xd0] sm:$0xff]
        %v711 = vld [vmem:[%s529 + $0xd8] sm:$0xff]
        %v712 = vld [vmem:[%s529 + $0xe0] sm:$0xff]
        %v713 = vld [vmem:[%s529 + $0xe8] sm:$0xff]
        %v714 = vld [vmem:[%s529 + $0xf0] sm:$0xff]
        %v715 = vld [vmem:[%s529 + $0xf8] sm:$0xff]
        %v716 = vunpack.c.l.s8.bf16 %v684
        %v717 = vunpack.c.l.s8.bf16 %v685
        %v718 = vunpack.c.l.s8.bf16 %v686
        %v719 = vunpack.c.l.s8.bf16 %v687
        %v720 = vunpack.c.h.s8.bf16 %v684
        %v721 = vunpack.c.h.s8.bf16 %v685
        %v722 = vunpack.c.h.s8.bf16 %v686
        %v723 = vunpack.c.h.s8.bf16 %v687
        %v724 = vunpack.c.l.s8.bf16 %v688
        %v725 = vunpack.c.l.s8.bf16 %v689
        %v726 = vunpack.c.l.s8.bf16 %v690
        %v727 = vunpack.c.l.s8.bf16 %v691
        %v728 = vunpack.c.h.s8.bf16 %v688
        %v729 = vunpack.c.h.s8.bf16 %v689
        %v730 = vunpack.c.h.s8.bf16 %v690
        %v731 = vunpack.c.h.s8.bf16 %v691
        %v732 = vunpack.c.l.s8.bf16 %v692
        %v733 = vunpack.c.l.s8.bf16 %v693
        %v734 = vunpack.c.l.s8.bf16 %v694
        %v735 = vunpack.c.l.s8.bf16 %v695
        %v736 = vunpack.c.h.s8.bf16 %v692
        %v737 = vunpack.c.h.s8.bf16 %v693
        %v738 = vunpack.c.h.s8.bf16 %v694
        %v739 = vunpack.c.h.s8.bf16 %v695
        %v740 = vunpack.c.l.s8.bf16 %v696
        %v741 = vunpack.c.l.s8.bf16 %v697
        %v742 = vunpack.c.l.s8.bf16 %v698
        %v743 = vunpack.c.l.s8.bf16 %v699
        %v744 = vunpack.c.h.s8.bf16 %v696
        %v745 = vunpack.c.h.s8.bf16 %v697
        %v746 = vunpack.c.h.s8.bf16 %v698
        %v747 = vunpack.c.h.s8.bf16 %v699
        %v748 = vunpack.c.l.s8.bf16 %v700
        %v749 = vunpack.c.l.s8.bf16 %v701
        %v750 = vunpack.c.l.s8.bf16 %v702
        %v751 = vunpack.c.l.s8.bf16 %v703
        %v752 = vunpack.c.h.s8.bf16 %v700
        %v753 = vunpack.c.h.s8.bf16 %v701
        %v754 = vunpack.c.h.s8.bf16 %v702
        %v755 = vunpack.c.h.s8.bf16 %v703
        %v756 = vunpack.c.l.s8.bf16 %v704
        %v757 = vunpack.c.l.s8.bf16 %v705
        %v758 = vunpack.c.l.s8.bf16 %v706
        %v759 = vunpack.c.l.s8.bf16 %v707
        %v760 = vunpack.c.h.s8.bf16 %v704
        %v761 = vunpack.c.h.s8.bf16 %v705
        %v762 = vunpack.c.h.s8.bf16 %v706
        %v763 = vunpack.c.h.s8.bf16 %v707
        %v764 = vunpack.c.l.s8.bf16 %v708
        %v765 = vunpack.c.l.s8.bf16 %v709
        %v766 = vunpack.c.l.s8.bf16 %v710
        %v767 = vunpack.c.l.s8.bf16 %v711
        %v768 = vunpack.c.h.s8.bf16 %v708
        %v769 = vunpack.c.h.s8.bf16 %v709
        %v770 = vunpack.c.h.s8.bf16 %v710
        %v771 = vunpack.c.h.s8.bf16 %v711
        %v772 = vunpack.c.l.s8.bf16 %v712
        %v773 = vunpack.c.l.s8.bf16 %v713
        %v774 = vunpack.c.l.s8.bf16 %v714
        %v775 = vunpack.c.l.s8.bf16 %v715
        %v776 = vunpack.c.h.s8.bf16 %v712
        %v777 = vunpack.c.h.s8.bf16 %v713
        %v778 = vunpack.c.h.s8.bf16 %v714
        %v779 = vunpack.c.h.s8.bf16 %v715
        %v780 = vld [vmem:[%s614] sm:$0xf]
        %v781 = vld [vmem:[%s614 + $0x4] sm:$0xf]
        %v782 = vld [vmem:[%s614 + $0x8] sm:$0xf]
        %v783 = vld [vmem:[%s614 + $0xc] sm:$0xf]
        %v784 = vld [vmem:[%s614 + $0x10] sm:$0xf]
        %v785 = vld [vmem:[%s614 + $0x14] sm:$0xf]
        %v786 = vld [vmem:[%s614 + $0x18] sm:$0xf]
        %v787 = vld [vmem:[%s614 + $0x1c] sm:$0xf]
        %v788 = vld [vmem:[%s614 + $0x20] sm:$0xf]
        %v789 = vld [vmem:[%s614 + $0x24] sm:$0xf]
        %v790 = vld [vmem:[%s614 + $0x28] sm:$0xf]
        %v791 = vld [vmem:[%s614 + $0x2c] sm:$0xf]
        %v792 = vld [vmem:[%s614 + $0x30] sm:$0xf]
        %v793 = vld [vmem:[%s614 + $0x34] sm:$0xf]
        %v794 = vld [vmem:[%s614 + $0x38] sm:$0xf]
        %v795 = vld [vmem:[%s614 + $0x3c] sm:$0xf]
        %v796 = vld [vmem:[%s614 + $0x40] sm:$0xf]
        %v797 = vld [vmem:[%s614 + $0x44] sm:$0xf]
        %v798 = vld [vmem:[%s614 + $0x48] sm:$0xf]
        %v799 = vld [vmem:[%s614 + $0x4c] sm:$0xf]
        %v800 = vld [vmem:[%s614 + $0x50] sm:$0xf]
        %v801 = vld [vmem:[%s614 + $0x54] sm:$0xf]
        %v802 = vld [vmem:[%s614 + $0x58] sm:$0xf]
        %v803 = vld [vmem:[%s614 + $0x5c] sm:$0xf]
        %v804 = vld [vmem:[%s614 + $0x60] sm:$0xf]
        %v805 = vld [vmem:[%s614 + $0x64] sm:$0xf]
        %v806 = vld [vmem:[%s614 + $0x68] sm:$0xf]
        %v807 = vld [vmem:[%s614 + $0x6c] sm:$0xf]
        %v808 = vld [vmem:[%s614 + $0x70] sm:$0xf]
        %v809 = vld [vmem:[%s614 + $0x74] sm:$0xf]
        %v810 = vld [vmem:[%s614 + $0x78] sm:$0xf]
        %v811 = vld [vmem:[%s614 + $0x7c] sm:$0xf]
        %v812 = vld [vmem:[%s614 + $0x80] sm:$0xf]
        %v813 = vld [vmem:[%s614 + $0x84] sm:$0xf]
        %v814 = vld [vmem:[%s614 + $0x88] sm:$0xf]
        %v815 = vld [vmem:[%s614 + $0x8c] sm:$0xf]
        %v816 = vld [vmem:[%s614 + $0x90] sm:$0xf]
        %v817 = vld [vmem:[%s614 + $0x94] sm:$0xf]
        %v818 = vld [vmem:[%s614 + $0x98] sm:$0xf]
        %v819 = vld [vmem:[%s614 + $0x9c] sm:$0xf]
        %v820 = vld [vmem:[%s614 + $0xa0] sm:$0xf]
        %v821 = vld [vmem:[%s614 + $0xa4] sm:$0xf]
        %v822 = vld [vmem:[%s614 + $0xa8] sm:$0xf]
        %v823 = vld [vmem:[%s614 + $0xac] sm:$0xf]
        %v824 = vld [vmem:[%s614 + $0xb0] sm:$0xf]
        %v825 = vld [vmem:[%s614 + $0xb4] sm:$0xf]
        %v826 = vld [vmem:[%s614 + $0xb8] sm:$0xf]
        %v827 = vld [vmem:[%s614 + $0xbc] sm:$0xf]
        %v828 = vld [vmem:[%s614 + $0xc0] sm:$0xf]
        %v829 = vld [vmem:[%s614 + $0xc4] sm:$0xf]
        %v830 = vld [vmem:[%s614 + $0xc8] sm:$0xf]
        %v831 = vld [vmem:[%s614 + $0xcc] sm:$0xf]
        %v832 = vld [vmem:[%s614 + $0xd0] sm:$0xf]
        %v833 = vld [vmem:[%s614 + $0xd4] sm:$0xf]
        %v834 = vld [vmem:[%s614 + $0xd8] sm:$0xf]
        %v835 = vld [vmem:[%s614 + $0xdc] sm:$0xf]
        %v836 = vld [vmem:[%s614 + $0xe0] sm:$0xf]
        %v837 = vld [vmem:[%s614 + $0xe4] sm:$0xf]
        %v838 = vld [vmem:[%s614 + $0xe8] sm:$0xf]
        %v839 = vld [vmem:[%s614 + $0xec] sm:$0xf]
        %v840 = vld [vmem:[%s614 + $0xf0] sm:$0xf]
        %v841 = vld [vmem:[%s614 + $0xf4] sm:$0xf]
        %v842 = vld [vmem:[%s614 + $0xf8] sm:$0xf]
        %v843 = vld [vmem:[%s614 + $0xfc] sm:$0xf]
        %v844 = vunpack.c.l.bf16 %v780
        %v845 = vunpack.c.l.bf16 %v781
        %v846 = vunpack.c.l.bf16 %v782
        %v847 = vunpack.c.l.bf16 %v783
        %v848 = vunpack.c.l.bf16 %v784
        %v849 = vunpack.c.l.bf16 %v785
        %v850 = vunpack.c.l.bf16 %v786
        %v851 = vunpack.c.l.bf16 %v787
        %v852 = vunpack.c.l.bf16 %v788
        %v853 = vunpack.c.l.bf16 %v789
        %v854 = vunpack.c.l.bf16 %v790
        %v855 = vunpack.c.l.bf16 %v791
        %v856 = vunpack.c.l.bf16 %v792
        %v857 = vunpack.c.l.bf16 %v793
        %v858 = vunpack.c.l.bf16 %v794
        %v859 = vunpack.c.l.bf16 %v795
        %v860 = vunpack.c.l.bf16 %v796
        %v861 = vunpack.c.l.bf16 %v797
        %v862 = vunpack.c.l.bf16 %v798
        %v863 = vunpack.c.l.bf16 %v799
        %v864 = vunpack.c.l.bf16 %v800
        %v865 = vunpack.c.l.bf16 %v801
        %v866 = vunpack.c.l.bf16 %v802
        %v867 = vunpack.c.l.bf16 %v803
        %v868 = vunpack.c.l.bf16 %v804
        %v869 = vunpack.c.l.bf16 %v805
        %v870 = vunpack.c.l.bf16 %v806
        %v871 = vunpack.c.l.bf16 %v807
        %v872 = vunpack.c.l.bf16 %v808
        %v873 = vunpack.c.l.bf16 %v809
        %v874 = vunpack.c.l.bf16 %v810
        %v875 = vunpack.c.l.bf16 %v811
        %v876 = vunpack.c.l.bf16 %v812
        %v877 = vunpack.c.l.bf16 %v813
        %v878 = vunpack.c.l.bf16 %v814
        %v879 = vunpack.c.l.bf16 %v815
        %v880 = vunpack.c.l.bf16 %v816
        %v881 = vunpack.c.l.bf16 %v817
        %v882 = vunpack.c.l.bf16 %v818
        %v883 = vunpack.c.l.bf16 %v819
        %v884 = vunpack.c.l.bf16 %v820
        %v885 = vunpack.c.l.bf16 %v821
        %v886 = vunpack.c.l.bf16 %v822
        %v887 = vunpack.c.l.bf16 %v823
        %v888 = vunpack.c.l.bf16 %v824
        %v889 = vunpack.c.l.bf16 %v825
        %v890 = vunpack.c.l.bf16 %v826
        %v891 = vunpack.c.l.bf16 %v827
        %v892 = vunpack.c.l.bf16 %v828
        %v893 = vunpack.c.l.bf16 %v829
        %v894 = vunpack.c.l.bf16 %v830
        %v895 = vunpack.c.l.bf16 %v831
        %v896 = vunpack.c.l.bf16 %v832
        %v897 = vunpack.c.l.bf16 %v833
        %v898 = vunpack.c.l.bf16 %v834
        %v899 = vunpack.c.l.bf16 %v835
        %v900 = vunpack.c.l.bf16 %v836
        %v901 = vunpack.c.l.bf16 %v837
        %v902 = vunpack.c.l.bf16 %v838
        %v903 = vunpack.c.l.bf16 %v839
        %v904 = vunpack.c.l.bf16 %v840
        %v905 = vunpack.c.l.bf16 %v841
        %v906 = vunpack.c.l.bf16 %v842
        %v907 = vunpack.c.l.bf16 %v843
        %v908 = vld [vmem:[%s608] sm:$0xff]
        %v909 = vld [vmem:[%s608 + $0x8] sm:$0xff]
        %v910 = vld [vmem:[%s608 + $0x10] sm:$0xff]
        %v911 = vld [vmem:[%s608 + $0x18] sm:$0xff]
        %v912 = vld [vmem:[%s608 + $0x20] sm:$0xff]
        %v913 = vld [vmem:[%s608 + $0x28] sm:$0xff]
        %v914 = vld [vmem:[%s608 + $0x30] sm:$0xff]
        %v915 = vld [vmem:[%s608 + $0x38] sm:$0xff]
        %v916 = vld [vmem:[%s608 + $0x40] sm:$0xff]
        %v917 = vld [vmem:[%s608 + $0x48] sm:$0xff]
        %v918 = vld [vmem:[%s608 + $0x50] sm:$0xff]
        %v919 = vld [vmem:[%s608 + $0x58] sm:$0xff]
        %v920 = vld [vmem:[%s608 + $0x60] sm:$0xff]
        %v921 = vld [vmem:[%s608 + $0x68] sm:$0xff]
        %v922 = vld [vmem:[%s608 + $0x70] sm:$0xff]
        %v923 = vld [vmem:[%s608 + $0x78] sm:$0xff]
        %v924 = vld [vmem:[%s608 + $0x80] sm:$0xff]
        %v925 = vld [vmem:[%s608 + $0x88] sm:$0xff]
        %v926 = vld [vmem:[%s608 + $0x90] sm:$0xff]
        %v927 = vld [vmem:[%s608 + $0x98] sm:$0xff]
        %v928 = vld [vmem:[%s608 + $0xa0] sm:$0xff]
        %v929 = vld [vmem:[%s608 + $0xa8] sm:$0xff]
        %v930 = vld [vmem:[%s608 + $0xb0] sm:$0xff]
        %v931 = vld [vmem:[%s608 + $0xb8] sm:$0xff]
        %v932 = vld [vmem:[%s608 + $0xc0] sm:$0xff]
        %v933 = vld [vmem:[%s608 + $0xc8] sm:$0xff]
        %v934 = vld [vmem:[%s608 + $0xd0] sm:$0xff]
        %v935 = vld [vmem:[%s608 + $0xd8] sm:$0xff]
        %v936 = vld [vmem:[%s608 + $0xe0] sm:$0xff]
        %v937 = vld [vmem:[%s608 + $0xe8] sm:$0xff]
        %v938 = vld [vmem:[%s608 + $0xf0] sm:$0xff]
        %v939 = vld [vmem:[%s608 + $0xf8] sm:$0xff]
        %v940 = vld [vmem:[%s608 + $0x100] sm:$0xff]
        %v941 = vld [vmem:[%s608 + $0x108] sm:$0xff]
        %v942 = vld [vmem:[%s608 + $0x110] sm:$0xff]
        %v943 = vld [vmem:[%s608 + $0x118] sm:$0xff]
        %v944 = vld [vmem:[%s608 + $0x120] sm:$0xff]
        %v945 = vld [vmem:[%s608 + $0x128] sm:$0xff]
        %v946 = vld [vmem:[%s608 + $0x130] sm:$0xff]
        %v947 = vld [vmem:[%s608 + $0x138] sm:$0xff]
        %v948 = vld [vmem:[%s608 + $0x140] sm:$0xff]
        %v949 = vld [vmem:[%s608 + $0x148] sm:$0xff]
        %v950 = vld [vmem:[%s608 + $0x150] sm:$0xff]
        %v951 = vld [vmem:[%s608 + $0x158] sm:$0xff]
        %v952 = vld [vmem:[%s608 + $0x160] sm:$0xff]
        %v953 = vld [vmem:[%s608 + $0x168] sm:$0xff]
        %v954 = vld [vmem:[%s608 + $0x170] sm:$0xff]
        %v955 = vld [vmem:[%s608 + $0x178] sm:$0xff]
        %v956 = vld [vmem:[%s608 + $0x180] sm:$0xff]
        %v957 = vld [vmem:[%s608 + $0x188] sm:$0xff]
        %v958 = vld [vmem:[%s608 + $0x190] sm:$0xff]
        %v959 = vld [vmem:[%s608 + $0x198] sm:$0xff]
        %v960 = vld [vmem:[%s608 + $0x1a0] sm:$0xff]
        %v961 = vld [vmem:[%s608 + $0x1a8] sm:$0xff]
        %v962 = vld [vmem:[%s608 + $0x1b0] sm:$0xff]
        %v963 = vld [vmem:[%s608 + $0x1b8] sm:$0xff]
        %v964 = vld [vmem:[%s608 + $0x1c0] sm:$0xff]
        %v965 = vld [vmem:[%s608 + $0x1c8] sm:$0xff]
        %v966 = vld [vmem:[%s608 + $0x1d0] sm:$0xff]
        %v967 = vld [vmem:[%s608 + $0x1d8] sm:$0xff]
        %v968 = vld [vmem:[%s608 + $0x1e0] sm:$0xff]
        %v969 = vld [vmem:[%s608 + $0x1e8] sm:$0xff]
        %v970 = vld [vmem:[%s608 + $0x1f0] sm:$0xff]
        %v971 = vld [vmem:[%s608 + $0x1f8] sm:$0xff]
        %973 = vset.pattern.permute.xlu0 0
        %974 = vperm.xlu0 %973, %v908
        %v975 = vpop.permute.xlu0 %974
        %978 = vset.pattern.permute.xlu0 0
        %979 = vperm.xlu0 %978, %v909
        %v980 = vpop.permute.xlu0 %979
        %983 = vset.pattern.permute.xlu0 0
        %984 = vperm.xlu0 %983, %v910
        %v985 = vpop.permute.xlu0 %984
        %988 = vset.pattern.permute.xlu0 0
        %989 = vperm.xlu0 %988, %v911
        %v990 = vpop.permute.xlu0 %989
        %993 = vset.pattern.permute.xlu0 0
        %994 = vperm.xlu0 %993, %v912
        %v995 = vpop.permute.xlu0 %994
        %998 = vset.pattern.permute.xlu0 0
        %999 = vperm.xlu0 %998, %v913
        %v1000 = vpop.permute.xlu0 %999
        %1003 = vset.pattern.permute.xlu0 0
        %1004 = vperm.xlu0 %1003, %v914
        %v1005 = vpop.permute.xlu0 %1004
        %1008 = vset.pattern.permute.xlu0 0
        %1009 = vperm.xlu0 %1008, %v915
        %v1010 = vpop.permute.xlu0 %1009
        %1013 = vset.pattern.permute.xlu0 0
        %1014 = vperm.xlu0 %1013, %v916
        %v1015 = vpop.permute.xlu0 %1014
        %1018 = vset.pattern.permute.xlu0 0
        %1019 = vperm.xlu0 %1018, %v917
        %v1020 = vpop.permute.xlu0 %1019
        %1023 = vset.pattern.permute.xlu0 0
        %1024 = vperm.xlu0 %1023, %v918
        %v1025 = vpop.permute.xlu0 %1024
        %1028 = vset.pattern.permute.xlu0 0
        %1029 = vperm.xlu0 %1028, %v919
        %v1030 = vpop.permute.xlu0 %1029
        %1033 = vset.pattern.permute.xlu0 0
        %1034 = vperm.xlu0 %1033, %v920
        %v1035 = vpop.permute.xlu0 %1034
        %1038 = vset.pattern.permute.xlu0 0
        %1039 = vperm.xlu0 %1038, %v921
        %v1040 = vpop.permute.xlu0 %1039
        %1043 = vset.pattern.permute.xlu0 0
        %1044 = vperm.xlu0 %1043, %v922
        %v1045 = vpop.permute.xlu0 %1044
        %1048 = vset.pattern.permute.xlu0 0
        %1049 = vperm.xlu0 %1048, %v923
        %v1050 = vpop.permute.xlu0 %1049
        %1053 = vset.pattern.permute.xlu0 0
        %1054 = vperm.xlu0 %1053, %v924
        %v1055 = vpop.permute.xlu0 %1054
        %1058 = vset.pattern.permute.xlu0 0
        %1059 = vperm.xlu0 %1058, %v925
        %v1060 = vpop.permute.xlu0 %1059
        %1063 = vset.pattern.permute.xlu0 0
        %1064 = vperm.xlu0 %1063, %v926
        %v1065 = vpop.permute.xlu0 %1064
        %1068 = vset.pattern.permute.xlu0 0
        %1069 = vperm.xlu0 %1068, %v927
        %v1070 = vpop.permute.xlu0 %1069
        %1073 = vset.pattern.permute.xlu0 0
        %1074 = vperm.xlu0 %1073, %v928
        %v1075 = vpop.permute.xlu0 %1074
        %1078 = vset.pattern.permute.xlu0 0
        %1079 = vperm.xlu0 %1078, %v929
        %v1080 = vpop.permute.xlu0 %1079
        %1083 = vset.pattern.permute.xlu0 0
        %1084 = vperm.xlu0 %1083, %v930
        %v1085 = vpop.permute.xlu0 %1084
        %1088 = vset.pattern.permute.xlu0 0
        %1089 = vperm.xlu0 %1088, %v931
        %v1090 = vpop.permute.xlu0 %1089
        %1093 = vset.pattern.permute.xlu0 0
        %1094 = vperm.xlu0 %1093, %v932
        %v1095 = vpop.permute.xlu0 %1094
        %1098 = vset.pattern.permute.xlu0 0
        %1099 = vperm.xlu0 %1098, %v933
        %v1100 = vpop.permute.xlu0 %1099
        %1103 = vset.pattern.permute.xlu0 0
        %1104 = vperm.xlu0 %1103, %v934
        %v1105 = vpop.permute.xlu0 %1104
        %1108 = vset.pattern.permute.xlu0 0
        %1109 = vperm.xlu0 %1108, %v935
        %v1110 = vpop.permute.xlu0 %1109
        %1113 = vset.pattern.permute.xlu0 0
        %1114 = vperm.xlu0 %1113, %v936
        %v1115 = vpop.permute.xlu0 %1114
        %1118 = vset.pattern.permute.xlu0 0
        %1119 = vperm.xlu0 %1118, %v937
        %v1120 = vpop.permute.xlu0 %1119
        %1123 = vset.pattern.permute.xlu0 0
        %1124 = vperm.xlu0 %1123, %v938
        %v1125 = vpop.permute.xlu0 %1124
        %1128 = vset.pattern.permute.xlu0 0
        %1129 = vperm.xlu0 %1128, %v939
        %v1130 = vpop.permute.xlu0 %1129
        %1133 = vset.pattern.permute.xlu0 0
        %1134 = vperm.xlu0 %1133, %v940
        %v1135 = vpop.permute.xlu0 %1134
        %1138 = vset.pattern.permute.xlu0 0
        %1139 = vperm.xlu0 %1138, %v941
        %v1140 = vpop.permute.xlu0 %1139
        %1143 = vset.pattern.permute.xlu0 0
        %1144 = vperm.xlu0 %1143, %v942
        %v1145 = vpop.permute.xlu0 %1144
        %1148 = vset.pattern.permute.xlu0 0
        %1149 = vperm.xlu0 %1148, %v943
        %v1150 = vpop.permute.xlu0 %1149
        %1153 = vset.pattern.permute.xlu0 0
        %1154 = vperm.xlu0 %1153, %v944
        %v1155 = vpop.permute.xlu0 %1154
        %1158 = vset.pattern.permute.xlu0 0
        %1159 = vperm.xlu0 %1158, %v945
        %v1160 = vpop.permute.xlu0 %1159
        %1163 = vset.pattern.permute.xlu0 0
        %1164 = vperm.xlu0 %1163, %v946
        %v1165 = vpop.permute.xlu0 %1164
        %1168 = vset.pattern.permute.xlu0 0
        %1169 = vperm.xlu0 %1168, %v947
        %v1170 = vpop.permute.xlu0 %1169
        %1173 = vset.pattern.permute.xlu0 0
        %1174 = vperm.xlu0 %1173, %v948
        %v1175 = vpop.permute.xlu0 %1174
        %1178 = vset.pattern.permute.xlu0 0
        %1179 = vperm.xlu0 %1178, %v949
        %v1180 = vpop.permute.xlu0 %1179
        %1183 = vset.pattern.permute.xlu0 0
        %1184 = vperm.xlu0 %1183, %v950
        %v1185 = vpop.permute.xlu0 %1184
        %1188 = vset.pattern.permute.xlu0 0
        %1189 = vperm.xlu0 %1188, %v951
        %v1190 = vpop.permute.xlu0 %1189
        %1193 = vset.pattern.permute.xlu0 0
        %1194 = vperm.xlu0 %1193, %v952
        %v1195 = vpop.permute.xlu0 %1194
        %1198 = vset.pattern.permute.xlu0 0
        %1199 = vperm.xlu0 %1198, %v953
        %v1200 = vpop.permute.xlu0 %1199
        %1203 = vset.pattern.permute.xlu0 0
        %1204 = vperm.xlu0 %1203, %v954
        %v1205 = vpop.permute.xlu0 %1204
        %1208 = vset.pattern.permute.xlu0 0
        %1209 = vperm.xlu0 %1208, %v955
        %v1210 = vpop.permute.xlu0 %1209
        %1213 = vset.pattern.permute.xlu0 0
        %1214 = vperm.xlu0 %1213, %v956
        %v1215 = vpop.permute.xlu0 %1214
        %1218 = vset.pattern.permute.xlu0 0
        %1219 = vperm.xlu0 %1218, %v957
        %v1220 = vpop.permute.xlu0 %1219
        %1223 = vset.pattern.permute.xlu0 0
        %1224 = vperm.xlu0 %1223, %v958
        %v1225 = vpop.permute.xlu0 %1224
        %1228 = vset.pattern.permute.xlu0 0
        %1229 = vperm.xlu0 %1228, %v959
        %v1230 = vpop.permute.xlu0 %1229
        %1233 = vset.pattern.permute.xlu0 0
        %1234 = vperm.xlu0 %1233, %v960
        %v1235 = vpop.permute.xlu0 %1234
        %1238 = vset.pattern.permute.xlu0 0
        %1239 = vperm.xlu0 %1238, %v961
        %v1240 = vpop.permute.xlu0 %1239
        %1243 = vset.pattern.permute.xlu0 0
        %1244 = vperm.xlu0 %1243, %v962
        %v1245 = vpop.permute.xlu0 %1244
        %1248 = vset.pattern.permute.xlu0 0
        %1249 = vperm.xlu0 %1248, %v963
        %v1250 = vpop.permute.xlu0 %1249
        %1253 = vset.pattern.permute.xlu0 0
        %1254 = vperm.xlu0 %1253, %v964
        %v1255 = vpop.permute.xlu0 %1254
        %1258 = vset.pattern.permute.xlu0 0
        %1259 = vperm.xlu0 %1258, %v965
        %v1260 = vpop.permute.xlu0 %1259
        %1263 = vset.pattern.permute.xlu0 0
        %1264 = vperm.xlu0 %1263, %v966
        %v1265 = vpop.permute.xlu0 %1264
        %1268 = vset.pattern.permute.xlu0 0
        %1269 = vperm.xlu0 %1268, %v967
        %v1270 = vpop.permute.xlu0 %1269
        %1273 = vset.pattern.permute.xlu0 0
        %1274 = vperm.xlu0 %1273, %v968
        %v1275 = vpop.permute.xlu0 %1274
        %1278 = vset.pattern.permute.xlu0 0
        %1279 = vperm.xlu0 %1278, %v969
        %v1280 = vpop.permute.xlu0 %1279
        %1283 = vset.pattern.permute.xlu0 0
        %1284 = vperm.xlu0 %1283, %v970
        %v1285 = vpop.permute.xlu0 %1284
        %1288 = vset.pattern.permute.xlu0 0
        %1289 = vperm.xlu0 %1288, %v971
        %v1290 = vpop.permute.xlu0 %1289
        %v1292 = vmul.f32 %v844, %v975
        %v1293 = vmul.f32 %v845, %v980
        %v1294 = vmul.f32 %v846, %v985
        %v1295 = vmul.f32 %v847, %v990
        %v1296 = vmul.f32 %v848, %v995
        %v1297 = vmul.f32 %v849, %v1000
        %v1298 = vmul.f32 %v850, %v1005
        %v1299 = vmul.f32 %v851, %v1010
        %v1300 = vmul.f32 %v852, %v1015
        %v1301 = vmul.f32 %v853, %v1020
        %v1302 = vmul.f32 %v854, %v1025
        %v1303 = vmul.f32 %v855, %v1030
        %v1304 = vmul.f32 %v856, %v1035
        %v1305 = vmul.f32 %v857, %v1040
        %v1306 = vmul.f32 %v858, %v1045
        %v1307 = vmul.f32 %v859, %v1050
        %v1308 = vmul.f32 %v860, %v1055
        %v1309 = vmul.f32 %v861, %v1060
        %v1310 = vmul.f32 %v862, %v1065
        %v1311 = vmul.f32 %v863, %v1070
        %v1312 = vmul.f32 %v864, %v1075
        %v1313 = vmul.f32 %v865, %v1080
        %v1314 = vmul.f32 %v866, %v1085
        %v1315 = vmul.f32 %v867, %v1090
        %v1316 = vmul.f32 %v868, %v1095
        %v1317 = vmul.f32 %v869, %v1100
        %v1318 = vmul.f32 %v870, %v1105
        %v1319 = vmul.f32 %v871, %v1110
        %v1320 = vmul.f32 %v872, %v1115
        %v1321 = vmul.f32 %v873, %v1120
        %v1322 = vmul.f32 %v874, %v1125
        %v1323 = vmul.f32 %v875, %v1130
        %v1324 = vmul.f32 %v876, %v1135
        %v1325 = vmul.f32 %v877, %v1140
        %v1326 = vmul.f32 %v878, %v1145
        %v1327 = vmul.f32 %v879, %v1150
        %v1328 = vmul.f32 %v880, %v1155
        %v1329 = vmul.f32 %v881, %v1160
        %v1330 = vmul.f32 %v882, %v1165
        %v1331 = vmul.f32 %v883, %v1170
        %v1332 = vmul.f32 %v884, %v1175
        %v1333 = vmul.f32 %v885, %v1180
        %v1334 = vmul.f32 %v886, %v1185
        %v1335 = vmul.f32 %v887, %v1190
        %v1336 = vmul.f32 %v888, %v1195
        %v1337 = vmul.f32 %v889, %v1200
        %v1338 = vmul.f32 %v890, %v1205
        %v1339 = vmul.f32 %v891, %v1210
        %v1340 = vmul.f32 %v892, %v1215
        %v1341 = vmul.f32 %v893, %v1220
        %v1342 = vmul.f32 %v894, %v1225
        %v1343 = vmul.f32 %v895, %v1230
        %v1344 = vmul.f32 %v896, %v1235
        %v1345 = vmul.f32 %v897, %v1240
        %v1346 = vmul.f32 %v898, %v1245
        %v1347 = vmul.f32 %v899, %v1250
        %v1348 = vmul.f32 %v900, %v1255
        %v1349 = vmul.f32 %v901, %v1260
        %v1350 = vmul.f32 %v902, %v1265
        %v1351 = vmul.f32 %v903, %v1270
        %v1352 = vmul.f32 %v904, %v1275
        %v1353 = vmul.f32 %v905, %v1280
        %v1354 = vmul.f32 %v906, %v1285
        %v1355 = vmul.f32 %v907, %v1290
        %v1356 = vpack.c.bf16 %v1293, %v1292
        %v1357 = vpack.c.bf16 %v1295, %v1294
        %v1358 = vpack.c.bf16 %v1297, %v1296
        %v1359 = vpack.c.bf16 %v1299, %v1298
        %v1360 = vpack.c.bf16 %v1301, %v1300
        %v1361 = vpack.c.bf16 %v1303, %v1302
        %v1362 = vpack.c.bf16 %v1305, %v1304
        %v1363 = vpack.c.bf16 %v1307, %v1306
        %v1364 = vpack.c.bf16 %v1309, %v1308
        %v1365 = vpack.c.bf16 %v1311, %v1310
        %v1366 = vpack.c.bf16 %v1313, %v1312
        %v1367 = vpack.c.bf16 %v1315, %v1314
        %v1368 = vpack.c.bf16 %v1317, %v1316
        %v1369 = vpack.c.bf16 %v1319, %v1318
        %v1370 = vpack.c.bf16 %v1321, %v1320
        %v1371 = vpack.c.bf16 %v1323, %v1322
        %v1372 = vpack.c.bf16 %v1325, %v1324
        %v1373 = vpack.c.bf16 %v1327, %v1326
        %v1374 = vpack.c.bf16 %v1329, %v1328
        %v1375 = vpack.c.bf16 %v1331, %v1330
        %v1376 = vpack.c.bf16 %v1333, %v1332
        %v1377 = vpack.c.bf16 %v1335, %v1334
        %v1378 = vpack.c.bf16 %v1337, %v1336
        %v1379 = vpack.c.bf16 %v1339, %v1338
        %v1380 = vpack.c.bf16 %v1341, %v1340
        %v1381 = vpack.c.bf16 %v1343, %v1342
        %v1382 = vpack.c.bf16 %v1345, %v1344
        %v1383 = vpack.c.bf16 %v1347, %v1346
        %v1384 = vpack.c.bf16 %v1349, %v1348
        %v1385 = vpack.c.bf16 %v1351, %v1350
        %v1386 = vpack.c.bf16 %v1353, %v1352
        %v1387 = vpack.c.bf16 %v1355, %v1354
        %v1388 = vld [vmem:[#allocation2] sm:$0xff]
        %v1389 = vld [vmem:[#allocation2 + $0x8] sm:$0xff]
        %v1390 = vld [vmem:[#allocation2 + $0x10] sm:$0xff]
        %v1391 = vld [vmem:[#allocation2 + $0x18] sm:$0xff]
        %v1392 = vld [vmem:[#allocation2 + $0x20] sm:$0xff]
        %v1393 = vld [vmem:[#allocation2 + $0x28] sm:$0xff]
        %v1394 = vld [vmem:[#allocation2 + $0x30] sm:$0xff]
        %v1395 = vld [vmem:[#allocation2 + $0x38] sm:$0xff]
        %v1396 = vld [vmem:[#allocation2 + $0x40] sm:$0xff]
        %v1397 = vld [vmem:[#allocation2 + $0x48] sm:$0xff]
        %v1398 = vld [vmem:[#allocation2 + $0x50] sm:$0xff]
        %v1399 = vld [vmem:[#allocation2 + $0x58] sm:$0xff]
        %v1400 = vld [vmem:[#allocation2 + $0x60] sm:$0xff]
        %v1401 = vld [vmem:[#allocation2 + $0x68] sm:$0xff]
        %v1402 = vld [vmem:[#allocation2 + $0x70] sm:$0xff]
        %v1403 = vld [vmem:[#allocation2 + $0x78] sm:$0xff]
        %v1404 = vld [vmem:[#allocation2 + $0x80] sm:$0xff]
        %v1405 = vld [vmem:[#allocation2 + $0x88] sm:$0xff]
        %v1406 = vld [vmem:[#allocation2 + $0x90] sm:$0xff]
        %v1407 = vld [vmem:[#allocation2 + $0x98] sm:$0xff]
        %v1408 = vld [vmem:[#allocation2 + $0xa0] sm:$0xff]
        %v1409 = vld [vmem:[#allocation2 + $0xa8] sm:$0xff]
        %v1410 = vld [vmem:[#allocation2 + $0xb0] sm:$0xff]
        %v1411 = vld [vmem:[#allocation2 + $0xb8] sm:$0xff]
        %v1412 = vld [vmem:[#allocation2 + $0xc0] sm:$0xff]
        %v1413 = vld [vmem:[#allocation2 + $0xc8] sm:$0xff]
        %v1414 = vld [vmem:[#allocation2 + $0xd0] sm:$0xff]
        %v1415 = vld [vmem:[#allocation2 + $0xd8] sm:$0xff]
        %v1416 = vld [vmem:[#allocation2 + $0xe0] sm:$0xff]
        %v1417 = vld [vmem:[#allocation2 + $0xe8] sm:$0xff]
        %v1418 = vld [vmem:[#allocation2 + $0xf0] sm:$0xff]
        %v1419 = vld [vmem:[#allocation2 + $0xf8] sm:$0xff]
        %1420 = vmatprep.subr.bf16.mxu0 0
        %1421 = vmatpush1.bf16.msra.mxu0 %v1356
        %1422 = vmatprep.subr.bf16.mxu0 0
        %1423 = vmatpush1.bf16.msra.mxu0 %v1357
        %1424 = vmatprep.subr.bf16.mxu0 0
        %1425 = vmatpush1.bf16.msra.mxu0 %v1358
        %1426 = vmatprep.subr.bf16.mxu0 0
        %1427 = vmatpush1.bf16.msra.mxu0 %v1359
        %1428 = vmatprep.subr.bf16.mxu0 0
        %1429 = vmatpush1.bf16.msra.mxu0 %v1360
        %1430 = vmatprep.subr.bf16.mxu0 0
        %1431 = vmatpush1.bf16.msra.mxu0 %v1361
        %1432 = vmatprep.subr.bf16.mxu0 0
        %1433 = vmatpush1.bf16.msra.mxu0 %v1362
        %1434 = vmatprep.subr.bf16.mxu0 0
        %1435 = vmatpush1.bf16.msra.mxu0 %v1363
        %1436 = vmatprep.subr.bf16.mxu0 0
        %1437 = vmatpush1.bf16.msra.mxu0 %v1364
        %1438 = vmatprep.subr.bf16.mxu0 0
        %1439 = vmatpush1.bf16.msra.mxu0 %v1365
        %1440 = vmatprep.subr.bf16.mxu0 0
        %1441 = vmatpush1.bf16.msra.mxu0 %v1366
        %1442 = vmatprep.subr.bf16.mxu0 0
        %1443 = vmatpush1.bf16.msra.mxu0 %v1367
        %1444 = vmatprep.subr.bf16.mxu0 0
        %1445 = vmatpush1.bf16.msra.mxu0 %v1368
        %1446 = vmatprep.subr.bf16.mxu0 0
        %1447 = vmatpush1.bf16.msra.mxu0 %v1369
        %1448 = vmatprep.subr.bf16.mxu0 0
        %1449 = vmatpush1.bf16.msra.mxu0 %v1370
        %1450 = vmatprep.subr.bf16.mxu0 0
        %1451 = vmatpush1.bf16.msra.mxu0 %v1371
        %1452 = vmatprep.mubr.bf16.mxu0 %v717
        %1453 = vmatmul.mubr.bf16.gmra.mrb[0].mxu0 %v716
        %v1454 = vpop.f32.mrb[0].mxu0
        %v1455 = vadd.f32 0.0, %v1454
        %v1456 = vpop.f32.mrb[0].mxu0
        %v1457 = vpop.f32.mrb[0].mxu0
        %v1458 = vadd.f32 0.0, %v1457
        %v1459 = vpop.f32.mrb[0].mxu0
        %1460 = vmatprep.mubr.bf16.mxu0 %v721
        %1461 = vmatmul.mubr.bf16.gmra.mrb[0].mxu0 %v720
        %v1462 = vpop.f32.mrb[0].mxu0
        %v1463 = vadd.f32 0.0, %v1462
        %v1464 = vpop.f32.mrb[0].mxu0
        %v1465 = vpop.f32.mrb[0].mxu0
        %v1466 = vadd.f32 0.0, %v1465
        %v1467 = vpop.f32.mrb[0].mxu0
        %1468 = vmatprep.mubr.bf16.mxu0 %v725
        %1469 = vmatmul.mubr.bf16.gmra.mrb[0].mxu0 %v724
        %v1470 = vpop.f32.mrb[0].mxu0
        %v1471 = vadd.f32 0.0, %v1470
        %v1472 = vpop.f32.mrb[0].mxu0
        %v1473 = vpop.f32.mrb[0].mxu0
        %v1474 = vadd.f32 0.0, %v1473
        %v1475 = vpop.f32.mrb[0].mxu0
        %1476 = vmatprep.mubr.bf16.mxu0 %v729
        %1477 = vmatmul.mubr.bf16.gmra.mrb[0].mxu0 %v728
        %v1478 = vpop.f32.mrb[0].mxu0
        %v1479 = vadd.f32 0.0, %v1478
        %v1480 = vpop.f32.mrb[0].mxu0
        %v1481 = vpop.f32.mrb[0].mxu0
        %v1482 = vadd.f32 0.0, %v1481
        %v1483 = vpop.f32.mrb[0].mxu0
        %1484 = vmatprep.mubr.bf16.mxu0 %v733
        %1485 = vmatmul.mubr.bf16.gmra.mrb[0].mxu0 %v732
        %v1486 = vpop.f32.mrb[0].mxu0
        %v1487 = vadd.f32 0.0, %v1486
        %v1488 = vpop.f32.mrb[0].mxu0
        %v1489 = vpop.f32.mrb[0].mxu0
        %v1490 = vadd.f32 0.0, %v1489
        %v1491 = vpop.f32.mrb[0].mxu0
        %1492 = vmatprep.mubr.bf16.mxu0 %v737
        %1493 = vmatmul.mubr.bf16.gmra.mrb[0].mxu0 %v736
        %v1494 = vpop.f32.mrb[0].mxu0
        %v1495 = vadd.f32 0.0, %v1494
        %v1496 = vpop.f32.mrb[0].mxu0
        %v1497 = vpop.f32.mrb[0].mxu0
        %v1498 = vadd.f32 0.0, %v1497
        %v1499 = vpop.f32.mrb[0].mxu0
        %1500 = vmatprep.mubr.bf16.mxu0 %v741
        %1501 = vmatmul.mubr.bf16.gmra.mrb[0].mxu0 %v740
        %v1502 = vpop.f32.mrb[0].mxu0
        %v1503 = vadd.f32 0.0, %v1502
        %v1504 = vpop.f32.mrb[0].mxu0
        %v1505 = vpop.f32.mrb[0].mxu0
        %v1506 = vadd.f32 0.0, %v1505
        %v1507 = vpop.f32.mrb[0].mxu0
        %1508 = vmatprep.mubr.bf16.mxu0 %v745
        %1509 = vmatmul.mubr.bf16.gmra.mrb[0].mxu0 %v744
        %v1510 = vpop.f32.mrb[0].mxu0
        %v1511 = vadd.f32 0.0, %v1510
        %v1512 = vpop.f32.mrb[0].mxu0
        %v1513 = vpop.f32.mrb[0].mxu0
        %v1514 = vadd.f32 0.0, %v1513
        %v1515 = vpop.f32.mrb[0].mxu0
        %1516 = vmatprep.mubr.bf16.mxu0 %v749
        %1517 = vmatmul.mubr.bf16.gmra.mrb[0].mxu0 %v748
        %v1518 = vpop.f32.mrb[0].mxu0
        %v1519 = vadd.f32 0.0, %v1518
        %v1520 = vpop.f32.mrb[0].mxu0
        %v1521 = vpop.f32.mrb[0].mxu0
        %v1522 = vadd.f32 0.0, %v1521
        %v1523 = vpop.f32.mrb[0].mxu0
        %1524 = vmatprep.mubr.bf16.mxu0 %v753
        %1525 = vmatmul.mubr.bf16.gmra.mrb[0].mxu0 %v752
        %v1526 = vpop.f32.mrb[0].mxu0
        %v1527 = vadd.f32 0.0, %v1526
        %v1528 = vpop.f32.mrb[0].mxu0
        %v1529 = vpop.f32.mrb[0].mxu0
        %v1530 = vadd.f32 0.0, %v1529
        %v1531 = vpop.f32.mrb[0].mxu0
        %1532 = vmatprep.mubr.bf16.mxu0 %v757
        %1533 = vmatmul.mubr.bf16.gmra.mrb[0].mxu0 %v756
        %v1534 = vpop.f32.mrb[0].mxu0
        %v1535 = vadd.f32 0.0, %v1534
        %v1536 = vpop.f32.mrb[0].mxu0
        %v1537 = vpop.f32.mrb[0].mxu0
        %v1538 = vadd.f32 0.0, %v1537
        %v1539 = vpop.f32.mrb[0].mxu0
        %1540 = vmatprep.mubr.bf16.mxu0 %v761
        %1541 = vmatmul.mubr.bf16.gmra.mrb[0].mxu0 %v760
        %v1542 = vpop.f32.mrb[0].mxu0
        %v1543 = vadd.f32 0.0, %v1542
        %v1544 = vpop.f32.mrb[0].mxu0
        %v1545 = vpop.f32.mrb[0].mxu0
        %v1546 = vadd.f32 0.0, %v1545
        %v1547 = vpop.f32.mrb[0].mxu0
        %1548 = vmatprep.mubr.bf16.mxu0 %v765
        %1549 = vmatmul.mubr.bf16.gmra.mrb[0].mxu0 %v764
        %v1550 = vpop.f32.mrb[0].mxu0
        %v1551 = vadd.f32 0.0, %v1550
        %v1552 = vpop.f32.mrb[0].mxu0
        %v1553 = vpop.f32.mrb[0].mxu0
        %v1554 = vadd.f32 0.0, %v1553
        %v1555 = vpop.f32.mrb[0].mxu0
        %1556 = vmatprep.mubr.bf16.mxu0 %v769
        %1557 = vmatmul.mubr.bf16.gmra.mrb[0].mxu0 %v768
        %v1558 = vpop.f32.mrb[0].mxu0
        %v1559 = vadd.f32 0.0, %v1558
        %v1560 = vpop.f32.mrb[0].mxu0
        %v1561 = vpop.f32.mrb[0].mxu0
        %v1562 = vadd.f32 0.0, %v1561
        %v1563 = vpop.f32.mrb[0].mxu0
        %1564 = vmatprep.mubr.bf16.mxu0 %v773
        %1565 = vmatmul.mubr.bf16.gmra.mrb[0].mxu0 %v772
        %v1566 = vpop.f32.mrb[0].mxu0
        %v1567 = vadd.f32 0.0, %v1566
        %v1568 = vpop.f32.mrb[0].mxu0
        %v1569 = vpop.f32.mrb[0].mxu0
        %v1570 = vadd.f32 0.0, %v1569
        %v1571 = vpop.f32.mrb[0].mxu0
        %1572 = vmatprep.mubr.bf16.mxu0 %v777
        %1573 = vmatmul.mubr.bf16.gmra.mrb[0].mxu0 %v776
        %v1574 = vpop.f32.mrb[0].mxu0
        %v1575 = vadd.f32 0.0, %v1574
        %v1576 = vpop.f32.mrb[0].mxu0
        %v1577 = vpop.f32.mrb[0].mxu0
        %v1578 = vadd.f32 0.0, %v1577
        %v1579 = vpop.f32.mrb[0].mxu0
        %1580 = vdwg.mxu0
        %1581 = vmatprep.subr.bf16.mxu0 0
        %1582 = vmatpush1.bf16.msra.mxu0 %v1372
        %1583 = vmatprep.subr.bf16.mxu0 0
        %1584 = vmatpush1.bf16.msra.mxu0 %v1373
        %1585 = vmatprep.subr.bf16.mxu0 0
        %1586 = vmatpush1.bf16.msra.mxu0 %v1374
        %1587 = vmatprep.subr.bf16.mxu0 0
        %1588 = vmatpush1.bf16.msra.mxu0 %v1375
        %1589 = vmatprep.subr.bf16.mxu0 0
        %1590 = vmatpush1.bf16.msra.mxu0 %v1376
        %1591 = vmatprep.subr.bf16.mxu0 0
        %1592 = vmatpush1.bf16.msra.mxu0 %v1377
        %1593 = vmatprep.subr.bf16.mxu0 0
        %1594 = vmatpush1.bf16.msra.mxu0 %v1378
        %1595 = vmatprep.subr.bf16.mxu0 0
        %1596 = vmatpush1.bf16.msra.mxu0 %v1379
        %1597 = vmatprep.subr.bf16.mxu0 0
        %1598 = vmatpush1.bf16.msra.mxu0 %v1380
        %1599 = vmatprep.subr.bf16.mxu0 0
        %1600 = vmatpush1.bf16.msra.mxu0 %v1381
        %1601 = vmatprep.subr.bf16.mxu0 0
        %1602 = vmatpush1.bf16.msra.mxu0 %v1382
        %1603 = vmatprep.subr.bf16.mxu0 0
        %1604 = vmatpush1.bf16.msra.mxu0 %v1383
        %1605 = vmatprep.subr.bf16.mxu0 0
        %1606 = vmatpush1.bf16.msra.mxu0 %v1384
        %1607 = vmatprep.subr.bf16.mxu0 0
        %1608 = vmatpush1.bf16.msra.mxu0 %v1385
        %1609 = vmatprep.subr.bf16.mxu0 0
        %1610 = vmatpush1.bf16.msra.mxu0 %v1386
        %1611 = vmatprep.subr.bf16.mxu0 0
        %1612 = vmatpush1.bf16.msra.mxu0 %v1387
        %1613 = vmatprep.mubr.bf16.mxu0 %v719
        %1614 = vmatmul.mubr.bf16.gmra.mrb[0].mxu0 %v718
        %v1615 = vpop.f32.mrb[0].mxu0
        %v1616 = vadd.f32 %v1455, %v1615
        %v1617 = vpop.f32.mrb[0].mxu0
        %v1618 = vpop.f32.mrb[0].mxu0
        %v1619 = vadd.f32 %v1458, %v1618
        %v1620 = vpop.f32.mrb[0].mxu0
        %1621 = vmatprep.mubr.bf16.mxu0 %v723
        %1622 = vmatmul.mubr.bf16.gmra.mrb[0].mxu0 %v722
        %v1623 = vpop.f32.mrb[0].mxu0
        %v1624 = vadd.f32 %v1463, %v1623
        %v1625 = vpop.f32.mrb[0].mxu0
        %v1626 = vpop.f32.mrb[0].mxu0
        %v1627 = vadd.f32 %v1466, %v1626
        %v1628 = vpop.f32.mrb[0].mxu0
        %1629 = vmatprep.mubr.bf16.mxu0 %v727
        %1630 = vmatmul.mubr.bf16.gmra.mrb[0].mxu0 %v726
        %v1631 = vpop.f32.mrb[0].mxu0
        %v1632 = vadd.f32 %v1471, %v1631
        %v1633 = vpop.f32.mrb[0].mxu0
        %v1634 = vpop.f32.mrb[0].mxu0
        %v1635 = vadd.f32 %v1474, %v1634
        %v1636 = vpop.f32.mrb[0].mxu0
        %1637 = vmatprep.mubr.bf16.mxu0 %v731
        %1638 = vmatmul.mubr.bf16.gmra.mrb[0].mxu0 %v730
        %v1639 = vpop.f32.mrb[0].mxu0
        %v1640 = vadd.f32 %v1479, %v1639
        %v1641 = vpop.f32.mrb[0].mxu0
        %v1642 = vpop.f32.mrb[0].mxu0
        %v1643 = vadd.f32 %v1482, %v1642
        %v1644 = vpop.f32.mrb[0].mxu0
        %1645 = vmatprep.mubr.bf16.mxu0 %v735
        %1646 = vmatmul.mubr.bf16.gmra.mrb[0].mxu0 %v734
        %v1647 = vpop.f32.mrb[0].mxu0
        %v1648 = vadd.f32 %v1487, %v1647
        %v1649 = vpop.f32.mrb[0].mxu0
        %v1650 = vpop.f32.mrb[0].mxu0
        %v1651 = vadd.f32 %v1490, %v1650
        %v1652 = vpop.f32.mrb[0].mxu0
        %1653 = vmatprep.mubr.bf16.mxu0 %v739
        %1654 = vmatmul.mubr.bf16.gmra.mrb[0].mxu0 %v738
        %v1655 = vpop.f32.mrb[0].mxu0
        %v1656 = vadd.f32 %v1495, %v1655
        %v1657 = vpop.f32.mrb[0].mxu0
        %v1658 = vpop.f32.mrb[0].mxu0
        %v1659 = vadd.f32 %v1498, %v1658
        %v1660 = vpop.f32.mrb[0].mxu0
        %1661 = vmatprep.mubr.bf16.mxu0 %v743
        %1662 = vmatmul.mubr.bf16.gmra.mrb[0].mxu0 %v742
        %v1663 = vpop.f32.mrb[0].mxu0
        %v1664 = vadd.f32 %v1503, %v1663
        %v1665 = vpop.f32.mrb[0].mxu0
        %v1666 = vpop.f32.mrb[0].mxu0
        %v1667 = vadd.f32 %v1506, %v1666
        %v1668 = vpop.f32.mrb[0].mxu0
        %1669 = vmatprep.mubr.bf16.mxu0 %v747
        %1670 = vmatmul.mubr.bf16.gmra.mrb[0].mxu0 %v746
        %v1671 = vpop.f32.mrb[0].mxu0
        %v1672 = vadd.f32 %v1511, %v1671
        %v1673 = vpop.f32.mrb[0].mxu0
        %v1674 = vpop.f32.mrb[0].mxu0
        %v1675 = vadd.f32 %v1514, %v1674
        %v1676 = vpop.f32.mrb[0].mxu0
        %1677 = vmatprep.mubr.bf16.mxu0 %v751
        %1678 = vmatmul.mubr.bf16.gmra.mrb[0].mxu0 %v750
        %v1679 = vpop.f32.mrb[0].mxu0
        %v1680 = vadd.f32 %v1519, %v1679
        %v1681 = vpop.f32.mrb[0].mxu0
        %v1682 = vpop.f32.mrb[0].mxu0
        %v1683 = vadd.f32 %v1522, %v1682
        %v1684 = vpop.f32.mrb[0].mxu0
        %1685 = vmatprep.mubr.bf16.mxu0 %v755
        %1686 = vmatmul.mubr.bf16.gmra.mrb[0].mxu0 %v754
        %v1687 = vpop.f32.mrb[0].mxu0
        %v1688 = vadd.f32 %v1527, %v1687
        %v1689 = vpop.f32.mrb[0].mxu0
        %v1690 = vpop.f32.mrb[0].mxu0
        %v1691 = vadd.f32 %v1530, %v1690
        %v1692 = vpop.f32.mrb[0].mxu0
        %1693 = vmatprep.mubr.bf16.mxu0 %v759
        %1694 = vmatmul.mubr.bf16.gmra.mrb[0].mxu0 %v758
        %v1695 = vpop.f32.mrb[0].mxu0
        %v1696 = vadd.f32 %v1535, %v1695
        %v1697 = vpop.f32.mrb[0].mxu0
        %v1698 = vpop.f32.mrb[0].mxu0
        %v1699 = vadd.f32 %v1538, %v1698
        %v1700 = vpop.f32.mrb[0].mxu0
        %1701 = vmatprep.mubr.bf16.mxu0 %v763
        %1702 = vmatmul.mubr.bf16.gmra.mrb[0].mxu0 %v762
        %v1703 = vpop.f32.mrb[0].mxu0
        %v1704 = vadd.f32 %v1543, %v1703
        %v1705 = vpop.f32.mrb[0].mxu0
        %v1706 = vpop.f32.mrb[0].mxu0
        %v1707 = vadd.f32 %v1546, %v1706
        %v1708 = vpop.f32.mrb[0].mxu0
        %1709 = vmatprep.mubr.bf16.mxu0 %v767
        %1710 = vmatmul.mubr.bf16.gmra.mrb[0].mxu0 %v766
        %v1711 = vpop.f32.mrb[0].mxu0
        %v1712 = vadd.f32 %v1551, %v1711
        %v1713 = vpop.f32.mrb[0].mxu0
        %v1714 = vpop.f32.mrb[0].mxu0
        %v1715 = vadd.f32 %v1554, %v1714
        %v1716 = vpop.f32.mrb[0].mxu0
        %1717 = vmatprep.mubr.bf16.mxu0 %v771
        %1718 = vmatmul.mubr.bf16.gmra.mrb[0].mxu0 %v770
        %v1719 = vpop.f32.mrb[0].mxu0
        %v1720 = vadd.f32 %v1559, %v1719
        %v1721 = vpop.f32.mrb[0].mxu0
        %v1722 = vpop.f32.mrb[0].mxu0
        %v1723 = vadd.f32 %v1562, %v1722
        %v1724 = vpop.f32.mrb[0].mxu0
        %1725 = vmatprep.mubr.bf16.mxu0 %v775
        %1726 = vmatmul.mubr.bf16.gmra.mrb[0].mxu0 %v774
        %v1727 = vpop.f32.mrb[0].mxu0
        %v1728 = vadd.f32 %v1567, %v1727
        %v1729 = vpop.f32.mrb[0].mxu0
        %v1730 = vpop.f32.mrb[0].mxu0
        %v1731 = vadd.f32 %v1570, %v1730
        %v1732 = vpop.f32.mrb[0].mxu0
        %1733 = vmatprep.mubr.bf16.mxu0 %v779
        %1734 = vmatmul.mubr.bf16.gmra.mrb[0].mxu0 %v778
        %v1735 = vpop.f32.mrb[0].mxu0
        %v1736 = vadd.f32 %v1575, %v1735
        %v1737 = vpop.f32.mrb[0].mxu0
        %v1738 = vpop.f32.mrb[0].mxu0
        %v1739 = vadd.f32 %v1578, %v1738
        %v1740 = vpop.f32.mrb[0].mxu0
        %1741 = vdwg.mxu0
        %v1742 = vadd.f32 %v1388, %v1616
        %v1743 = vadd.f32 %v1389, %v1619
        %v1744 = vadd.f32 %v1390, %v1624
        %v1745 = vadd.f32 %v1391, %v1627
        %v1746 = vadd.f32 %v1392, %v1632
        %v1747 = vadd.f32 %v1393, %v1635
        %v1748 = vadd.f32 %v1394, %v1640
        %v1749 = vadd.f32 %v1395, %v1643
        %v1750 = vadd.f32 %v1396, %v1648
        %v1751 = vadd.f32 %v1397, %v1651
        %v1752 = vadd.f32 %v1398, %v1656
        %v1753 = vadd.f32 %v1399, %v1659
        %v1754 = vadd.f32 %v1400, %v1664
        %v1755 = vadd.f32 %v1401, %v1667
        %v1756 = vadd.f32 %v1402, %v1672
        %v1757 = vadd.f32 %v1403, %v1675
        %v1758 = vadd.f32 %v1404, %v1680
        %v1759 = vadd.f32 %v1405, %v1683
        %v1760 = vadd.f32 %v1406, %v1688
        %v1761 = vadd.f32 %v1407, %v1691
        %v1762 = vadd.f32 %v1408, %v1696
        %v1763 = vadd.f32 %v1409, %v1699
        %v1764 = vadd.f32 %v1410, %v1704
        %v1765 = vadd.f32 %v1411, %v1707
        %v1766 = vadd.f32 %v1412, %v1712
        %v1767 = vadd.f32 %v1413, %v1715
        %v1768 = vadd.f32 %v1414, %v1720
        %v1769 = vadd.f32 %v1415, %v1723
        %v1770 = vadd.f32 %v1416, %v1728
        %v1771 = vadd.f32 %v1417, %v1731
        %v1772 = vadd.f32 %v1418, %v1736
        %v1773 = vadd.f32 %v1419, %v1739
        %1774 = vst [vmem:[#allocation2] sm:$0xff] %v1742
        %1775 = vst [vmem:[#allocation2 + $0x8] sm:$0xff] %v1743
        %1776 = vst [vmem:[#allocation2 + $0x10] sm:$0xff] %v1744
        %1777 = vst [vmem:[#allocation2 + $0x18] sm:$0xff] %v1745
        %1778 = vst [vmem:[#allocation2 + $0x20] sm:$0xff] %v1746
        %1779 = vst [vmem:[#allocation2 + $0x28] sm:$0xff] %v1747
        %1780 = vst [vmem:[#allocation2 + $0x30] sm:$0xff] %v1748
        %1781 = vst [vmem:[#allocation2 + $0x38] sm:$0xff] %v1749
        %1782 = vst [vmem:[#allocation2 + $0x40] sm:$0xff] %v1750
        %1783 = vst [vmem:[#allocation2 + $0x48] sm:$0xff] %v1751
        %1784 = vst [vmem:[#allocation2 + $0x50] sm:$0xff] %v1752
        %1785 = vst [vmem:[#allocation2 + $0x58] sm:$0xff] %v1753
        %1786 = vst [vmem:[#allocation2 + $0x60] sm:$0xff] %v1754
        %1787 = vst [vmem:[#allocation2 + $0x68] sm:$0xff] %v1755
        %1788 = vst [vmem:[#allocation2 + $0x70] sm:$0xff] %v1756
        %1789 = vst [vmem:[#allocation2 + $0x78] sm:$0xff] %v1757
        %1790 = vst [vmem:[#allocation2 + $0x80] sm:$0xff] %v1758
        %1791 = vst [vmem:[#allocation2 + $0x88] sm:$0xff] %v1759
        %1792 = vst [vmem:[#allocation2 + $0x90] sm:$0xff] %v1760
        %1793 = vst [vmem:[#allocation2 + $0x98] sm:$0xff] %v1761
        %1794 = vst [vmem:[#allocation2 + $0xa0] sm:$0xff] %v1762
        %1795 = vst [vmem:[#allocation2 + $0xa8] sm:$0xff] %v1763
        %1796 = vst [vmem:[#allocation2 + $0xb0] sm:$0xff] %v1764
        %1797 = vst [vmem:[#allocation2 + $0xb8] sm:$0xff] %v1765
        %1798 = vst [vmem:[#allocation2 + $0xc0] sm:$0xff] %v1766
        %1799 = vst [vmem:[#allocation2 + $0xc8] sm:$0xff] %v1767
        %1800 = vst [vmem:[#allocation2 + $0xd0] sm:$0xff] %v1768
        %1801 = vst [vmem:[#allocation2 + $0xd8] sm:$0xff] %v1769
        %1802 = vst [vmem:[#allocation2 + $0xe0] sm:$0xff] %v1770
        %1803 = vst [vmem:[#allocation2 + $0xe8] sm:$0xff] %v1771
        %1804 = vst [vmem:[#allocation2 + $0xf0] sm:$0xff] %v1772
        %1805 = vst [vmem:[#allocation2 + $0xf8] sm:$0xff] %v1773
        %p1806 = scmp.eq.s32.totalorder %s32, 1
        // Predicated region
        $region92: #{gcn_res_forward.14} parent=78 // pred_check
          %p1807 = pneg %p1806
        $region93: #{gcn_res_forward.14} parent=78 // pred_check_branch
          %1809 = sbr.rel (%p1807) target = $region95
        $region94: #{gcn_res_forward.14} parent=78 // pred_region
          %v1810 = vld [vmem:[#allocation2] sm:$0xff]
          %v1811 = vld [vmem:[#allocation2 + $0x8] sm:$0xff]
          %v1812 = vld [vmem:[#allocation2 + $0x10] sm:$0xff]
          %v1813 = vld [vmem:[#allocation2 + $0x18] sm:$0xff]
          %v1814 = vld [vmem:[#allocation2 + $0x20] sm:$0xff]
          %v1815 = vld [vmem:[#allocation2 + $0x28] sm:$0xff]
          %v1816 = vld [vmem:[#allocation2 + $0x30] sm:$0xff]
          %v1817 = vld [vmem:[#allocation2 + $0x38] sm:$0xff]
          %v1818 = vld [vmem:[#allocation2 + $0x40] sm:$0xff]
          %v1819 = vld [vmem:[#allocation2 + $0x48] sm:$0xff]
          %v1820 = vld [vmem:[#allocation2 + $0x50] sm:$0xff]
          %v1821 = vld [vmem:[#allocation2 + $0x58] sm:$0xff]
          %v1822 = vld [vmem:[#allocation2 + $0x60] sm:$0xff]
          %v1823 = vld [vmem:[#allocation2 + $0x68] sm:$0xff]
          %v1824 = vld [vmem:[#allocation2 + $0x70] sm:$0xff]
          %v1825 = vld [vmem:[#allocation2 + $0x78] sm:$0xff]
          %v1826 = vld [vmem:[#allocation2 + $0x80] sm:$0xff]
          %v1827 = vld [vmem:[#allocation2 + $0x88] sm:$0xff]
          %v1828 = vld [vmem:[#allocation2 + $0x90] sm:$0xff]
          %v1829 = vld [vmem:[#allocation2 + $0x98] sm:$0xff]
          %v1830 = vld [vmem:[#allocation2 + $0xa0] sm:$0xff]
          %v1831 = vld [vmem:[#allocation2 + $0xa8] sm:$0xff]
          %v1832 = vld [vmem:[#allocation2 + $0xb0] sm:$0xff]
          %v1833 = vld [vmem:[#allocation2 + $0xb8] sm:$0xff]
          %v1834 = vld [vmem:[#allocation2 + $0xc0] sm:$0xff]
          %v1835 = vld [vmem:[#allocation2 + $0xc8] sm:$0xff]
          %v1836 = vld [vmem:[#allocation2 + $0xd0] sm:$0xff]
          %v1837 = vld [vmem:[#allocation2 + $0xd8] sm:$0xff]
          %v1838 = vld [vmem:[#allocation2 + $0xe0] sm:$0xff]
          %v1839 = vld [vmem:[#allocation2 + $0xe8] sm:$0xff]
          %v1840 = vld [vmem:[#allocation2 + $0xf0] sm:$0xff]
          %v1841 = vld [vmem:[#allocation2 + $0xf8] sm:$0xff]
          %v1842 = vld [vmem:[%s620] sm:$0xff]
          %v1843 = vld [vmem:[%s620 + $0x8] sm:$0xff]
          %v1844 = vld [vmem:[%s620 + $0x10] sm:$0xff]
          %v1845 = vld [vmem:[%s620 + $0x18] sm:$0xff]
          %v1846 = vld [vmem:[%s620 + $0x20] sm:$0xff]
          %v1847 = vld [vmem:[%s620 + $0x28] sm:$0xff]
          %v1848 = vld [vmem:[%s620 + $0x30] sm:$0xff]
          %v1849 = vld [vmem:[%s620 + $0x38] sm:$0xff]
          %v1850 = vld [vmem:[%s620 + $0x40] sm:$0xff]
          %v1851 = vld [vmem:[%s620 + $0x48] sm:$0xff]
          %v1852 = vld [vmem:[%s620 + $0x50] sm:$0xff]
          %v1853 = vld [vmem:[%s620 + $0x58] sm:$0xff]
          %v1854 = vld [vmem:[%s620 + $0x60] sm:$0xff]
          %v1855 = vld [vmem:[%s620 + $0x68] sm:$0xff]
          %v1856 = vld [vmem:[%s620 + $0x70] sm:$0xff]
          %v1857 = vld [vmem:[%s620 + $0x78] sm:$0xff]
          %v1858 = vld [vmem:[%s620 + $0x80] sm:$0xff]
          %v1859 = vld [vmem:[%s620 + $0x88] sm:$0xff]
          %v1860 = vld [vmem:[%s620 + $0x90] sm:$0xff]
          %v1861 = vld [vmem:[%s620 + $0x98] sm:$0xff]
          %v1862 = vld [vmem:[%s620 + $0xa0] sm:$0xff]
          %v1863 = vld [vmem:[%s620 + $0xa8] sm:$0xff]
          %v1864 = vld [vmem:[%s620 + $0xb0] sm:$0xff]
          %v1865 = vld [vmem:[%s620 + $0xb8] sm:$0xff]
          %v1866 = vld [vmem:[%s620 + $0xc0] sm:$0xff]
          %v1867 = vld [vmem:[%s620 + $0xc8] sm:$0xff]
          %v1868 = vld [vmem:[%s620 + $0xd0] sm:$0xff]
          %v1869 = vld [vmem:[%s620 + $0xd8] sm:$0xff]
          %v1870 = vld [vmem:[%s620 + $0xe0] sm:$0xff]
          %v1871 = vld [vmem:[%s620 + $0xe8] sm:$0xff]
          %v1872 = vld [vmem:[%s620 + $0xf0] sm:$0xff]
          %v1873 = vld [vmem:[%s620 + $0xf8] sm:$0xff]
          %1875 = vset.pattern.permute.xlu0 0
          %1876 = vperm.xlu0 %1875, %v1842
          %v1877 = vpop.permute.xlu0 %1876
          %1880 = vset.pattern.permute.xlu0 0
          %1881 = vperm.xlu0 %1880, %v1843
          %v1882 = vpop.permute.xlu0 %1881
          %1885 = vset.pattern.permute.xlu0 0
          %1886 = vperm.xlu0 %1885, %v1844
          %v1887 = vpop.permute.xlu0 %1886
          %1890 = vset.pattern.permute.xlu0 0
          %1891 = vperm.xlu0 %1890, %v1845
          %v1892 = vpop.permute.xlu0 %1891
          %1895 = vset.pattern.permute.xlu0 0
          %1896 = vperm.xlu0 %1895, %v1846
          %v1897 = vpop.permute.xlu0 %1896
          %1900 = vset.pattern.permute.xlu0 0
          %1901 = vperm.xlu0 %1900, %v1847
          %v1902 = vpop.permute.xlu0 %1901
          %1905 = vset.pattern.permute.xlu0 0
          %1906 = vperm.xlu0 %1905, %v1848
          %v1907 = vpop.permute.xlu0 %1906
          %1910 = vset.pattern.permute.xlu0 0
          %1911 = vperm.xlu0 %1910, %v1849
          %v1912 = vpop.permute.xlu0 %1911
          %1915 = vset.pattern.permute.xlu0 0
          %1916 = vperm.xlu0 %1915, %v1850
          %v1917 = vpop.permute.xlu0 %1916
          %1920 = vset.pattern.permute.xlu0 0
          %1921 = vperm.xlu0 %1920, %v1851
          %v1922 = vpop.permute.xlu0 %1921
          %1925 = vset.pattern.permute.xlu0 0
          %1926 = vperm.xlu0 %1925, %v1852
          %v1927 = vpop.permute.xlu0 %1926
          %1930 = vset.pattern.permute.xlu0 0
          %1931 = vperm.xlu0 %1930, %v1853
          %v1932 = vpop.permute.xlu0 %1931
          %1935 = vset.pattern.permute.xlu0 0
          %1936 = vperm.xlu0 %1935, %v1854
          %v1937 = vpop.permute.xlu0 %1936
          %1940 = vset.pattern.permute.xlu0 0
          %1941 = vperm.xlu0 %1940, %v1855
          %v1942 = vpop.permute.xlu0 %1941
          %1945 = vset.pattern.permute.xlu0 0
          %1946 = vperm.xlu0 %1945, %v1856
          %v1947 = vpop.permute.xlu0 %1946
          %1950 = vset.pattern.permute.xlu0 0
          %1951 = vperm.xlu0 %1950, %v1857
          %v1952 = vpop.permute.xlu0 %1951
          %1955 = vset.pattern.permute.xlu0 0
          %1956 = vperm.xlu0 %1955, %v1858
          %v1957 = vpop.permute.xlu0 %1956
          %1960 = vset.pattern.permute.xlu0 0
          %1961 = vperm.xlu0 %1960, %v1859
          %v1962 = vpop.permute.xlu0 %1961
          %1965 = vset.pattern.permute.xlu0 0
          %1966 = vperm.xlu0 %1965, %v1860
          %v1967 = vpop.permute.xlu0 %1966
          %1970 = vset.pattern.permute.xlu0 0
          %1971 = vperm.xlu0 %1970, %v1861
          %v1972 = vpop.permute.xlu0 %1971
          %1975 = vset.pattern.permute.xlu0 0
          %1976 = vperm.xlu0 %1975, %v1862
          %v1977 = vpop.permute.xlu0 %1976
          %1980 = vset.pattern.permute.xlu0 0
          %1981 = vperm.xlu0 %1980, %v1863
          %v1982 = vpop.permute.xlu0 %1981
          %1985 = vset.pattern.permute.xlu0 0
          %1986 = vperm.xlu0 %1985, %v1864
          %v1987 = vpop.permute.xlu0 %1986
          %1990 = vset.pattern.permute.xlu0 0
          %1991 = vperm.xlu0 %1990, %v1865
          %v1992 = vpop.permute.xlu0 %1991
          %1995 = vset.pattern.permute.xlu0 0
          %1996 = vperm.xlu0 %1995, %v1866
          %v1997 = vpop.permute.xlu0 %1996
          %2000 = vset.pattern.permute.xlu0 0
          %2001 = vperm.xlu0 %2000, %v1867
          %v2002 = vpop.permute.xlu0 %2001
          %2005 = vset.pattern.permute.xlu0 0
          %2006 = vperm.xlu0 %2005, %v1868
          %v2007 = vpop.permute.xlu0 %2006
          %2010 = vset.pattern.permute.xlu0 0
          %2011 = vperm.xlu0 %2010, %v1869
          %v2012 = vpop.permute.xlu0 %2011
          %2015 = vset.pattern.permute.xlu0 0
          %2016 = vperm.xlu0 %2015, %v1870
          %v2017 = vpop.permute.xlu0 %2016
          %2020 = vset.pattern.permute.xlu0 0
          %2021 = vperm.xlu0 %2020, %v1871
          %v2022 = vpop.permute.xlu0 %2021
          %2025 = vset.pattern.permute.xlu0 0
          %2026 = vperm.xlu0 %2025, %v1872
          %v2027 = vpop.permute.xlu0 %2026
          %2030 = vset.pattern.permute.xlu0 0
          %2031 = vperm.xlu0 %2030, %v1873
          %v2032 = vpop.permute.xlu0 %2031
          %v2034 = vmul.f32 %v1810, %v1877
          %v2035 = vmul.f32 %v1811, %v1882
          %v2036 = vmul.f32 %v1812, %v1887
          %v2037 = vmul.f32 %v1813, %v1892
          %v2038 = vmul.f32 %v1814, %v1897
          %v2039 = vmul.f32 %v1815, %v1902
          %v2040 = vmul.f32 %v1816, %v1907
          %v2041 = vmul.f32 %v1817, %v1912
          %v2042 = vmul.f32 %v1818, %v1917
          %v2043 = vmul.f32 %v1819, %v1922
          %v2044 = vmul.f32 %v1820, %v1927
          %v2045 = vmul.f32 %v1821, %v1932
          %v2046 = vmul.f32 %v1822, %v1937
          %v2047 = vmul.f32 %v1823, %v1942
          %v2048 = vmul.f32 %v1824, %v1947
          %v2049 = vmul.f32 %v1825, %v1952
          %v2050 = vmul.f32 %v1826, %v1957
          %v2051 = vmul.f32 %v1827, %v1962
          %v2052 = vmul.f32 %v1828, %v1967
          %v2053 = vmul.f32 %v1829, %v1972
          %v2054 = vmul.f32 %v1830, %v1977
          %v2055 = vmul.f32 %v1831, %v1982
          %v2056 = vmul.f32 %v1832, %v1987
          %v2057 = vmul.f32 %v1833, %v1992
          %v2058 = vmul.f32 %v1834, %v1997
          %v2059 = vmul.f32 %v1835, %v2002
          %v2060 = vmul.f32 %v1836, %v2007
          %v2061 = vmul.f32 %v1837, %v2012
          %v2062 = vmul.f32 %v1838, %v2017
          %v2063 = vmul.f32 %v1839, %v2022
          %v2064 = vmul.f32 %v1840, %v2027
          %v2065 = vmul.f32 %v1841, %v2032
          %v2066 = vpack.c.bf16 %v2035, %v2034
          %v2067 = vpack.c.bf16 %v2037, %v2036
          %v2068 = vpack.c.bf16 %v2039, %v2038
          %v2069 = vpack.c.bf16 %v2041, %v2040
          %v2070 = vpack.c.bf16 %v2043, %v2042
          %v2071 = vpack.c.bf16 %v2045, %v2044
          %v2072 = vpack.c.bf16 %v2047, %v2046
          %v2073 = vpack.c.bf16 %v2049, %v2048
          %v2074 = vpack.c.bf16 %v2051, %v2050
          %v2075 = vpack.c.bf16 %v2053, %v2052
          %v2076 = vpack.c.bf16 %v2055, %v2054
          %v2077 = vpack.c.bf16 %v2057, %v2056
          %v2078 = vpack.c.bf16 %v2059, %v2058
          %v2079 = vpack.c.bf16 %v2061, %v2060
          %v2080 = vpack.c.bf16 %v2063, %v2062
          %v2081 = vpack.c.bf16 %v2065, %v2064
          %v2082 = vld [vmem:[%s4] sm:$0xf]
          %v2083 = vld [vmem:[%s4 + $0x4] sm:$0xf]
          %v2084 = vld [vmem:[%s4 + $0x8] sm:$0xf]
          %v2085 = vld [vmem:[%s4 + $0xc] sm:$0xf]
          %v2086 = vld [vmem:[%s4 + $0x10] sm:$0xf]
          %v2087 = vld [vmem:[%s4 + $0x14] sm:$0xf]
          %v2088 = vld [vmem:[%s4 + $0x18] sm:$0xf]
          %v2089 = vld [vmem:[%s4 + $0x1c] sm:$0xf]
          %v2090 = vld [vmem:[%s4 + $0x20] sm:$0xf]
          %v2091 = vld [vmem:[%s4 + $0x24] sm:$0xf]
          %v2092 = vld [vmem:[%s4 + $0x28] sm:$0xf]
          %v2093 = vld [vmem:[%s4 + $0x2c] sm:$0xf]
          %v2094 = vld [vmem:[%s4 + $0x30] sm:$0xf]
          %v2095 = vld [vmem:[%s4 + $0x34] sm:$0xf]
          %v2096 = vld [vmem:[%s4 + $0x38] sm:$0xf]
          %v2097 = vld [vmem:[%s4 + $0x3c] sm:$0xf]
          %v2098 = vld [vmem:[%s5] sm:$0x1]
          %v2100 = vlaneseq
          %v2101 = vshrl.u32 %v2100, 7
          %v2102 = vsub.s32 0, %v2101
          %v2103 = vrot.slane %v2098, %v2102
          %v2121 = vunpack.c.l.b16 %v2082
          %v2122 = vunpack.c.l.b16 %v2083
          %v2123 = vunpack.c.l.b16 %v2084
          %v2124 = vunpack.c.l.b16 %v2085
          %v2125 = vunpack.c.l.b16 %v2086
          %v2126 = vunpack.c.l.b16 %v2087
          %v2127 = vunpack.c.l.b16 %v2088
          %v2128 = vunpack.c.l.b16 %v2089
          %v2129 = vunpack.c.l.b16 %v2090
          %v2130 = vunpack.c.l.b16 %v2091
          %v2131 = vunpack.c.l.b16 %v2092
          %v2132 = vunpack.c.l.b16 %v2093
          %v2133 = vunpack.c.l.b16 %v2094
          %v2134 = vunpack.c.l.b16 %v2095
          %v2135 = vunpack.c.l.b16 %v2096
          %v2136 = vunpack.c.l.b16 %v2097
          %v2137 = vpack.c.b16 %v2122, %v2121
          %v2138 = vpack.c.b16 %v2124, %v2123
          %v2139 = vpack.c.b16 %v2126, %v2125
          %v2140 = vpack.c.b16 %v2128, %v2127
          %v2141 = vpack.c.b16 %v2130, %v2129
          %v2142 = vpack.c.b16 %v2132, %v2131
          %v2143 = vpack.c.b16 %v2134, %v2133
          %v2144 = vpack.c.b16 %v2136, %v2135
          %2153 = vmatprep.subr.bf16.mxu0 0
          %2154 = vmatpush1.bf16.msra.mxu0 %v2137
          %2155 = vmatprep.subr.bf16.mxu0 0
          %2156 = vmatpush1.bf16.msra.mxu0 %v2138
          %2157 = vmatprep.subr.bf16.mxu0 0
          %2158 = vmatpush1.bf16.msra.mxu0 %v2139
          %2159 = vmatprep.subr.bf16.mxu0 0
          %2160 = vmatpush1.bf16.msra.mxu0 %v2140
          %2161 = vmatprep.subr.bf16.mxu0 0
          %2162 = vmatpush1.bf16.msra.mxu0 %v2141
          %2163 = vmatprep.subr.bf16.mxu0 0
          %2164 = vmatpush1.bf16.msra.mxu0 %v2142
          %2165 = vmatprep.subr.bf16.mxu0 0
          %2166 = vmatpush1.bf16.msra.mxu0 %v2143
          %2167 = vmatprep.subr.bf16.mxu0 0
          %2168 = vmatpush1.bf16.msra.mxu0 %v2144
          %2169 = vmatprep.subr.bf16.mxu0 0
          %2170 = vmatpush1.bf16.msra.mxu0 0
          %2171 = vmatprep.subr.bf16.mxu0 0
          %2172 = vmatpush1.bf16.msra.mxu0 0
          %2173 = vmatprep.subr.bf16.mxu0 0
          %2174 = vmatpush1.bf16.msra.mxu0 0
          %2175 = vmatprep.subr.bf16.mxu0 0
          %2176 = vmatpush1.bf16.msra.mxu0 0
          %2177 = vmatprep.subr.bf16.mxu0 0
          %2178 = vmatpush1.bf16.msra.mxu0 0
          %2179 = vmatprep.subr.bf16.mxu0 0
          %2180 = vmatpush1.bf16.msra.mxu0 0
          %2181 = vmatprep.subr.bf16.mxu0 0
          %2182 = vmatpush1.bf16.msra.mxu0 0
          %2183 = vmatprep.subr.bf16.mxu0 0
          %2184 = vmatpush1.bf16.msra.mxu0 0
          %2185 = vmatprep.mubr.bf16.mxu0 0
          %2186 = vmatmul.mubr.bf16.gmra.mrb[0].mxu0 %v2066
          %v2187 = vpop.f32.mrb[0].mxu0
          %v2188 = vadd.f32 %v2103, %v2187
          %v2189 = vpop.f32.mrb[0].mxu0
          %v2190 = vpop.f32.mrb[0].mxu0
          %v2191 = vadd.f32 %v2103, %v2190
          %v2192 = vpop.f32.mrb[0].mxu0
          %2193 = vmatprep.mubr.bf16.mxu0 0
          %2194 = vmatmul.mubr.bf16.gmra.mrb[0].mxu0 %v2067
          %v2195 = vpop.f32.mrb[0].mxu0
          %v2196 = vadd.f32 %v2103, %v2195
          %v2197 = vpop.f32.mrb[0].mxu0
          %v2198 = vpop.f32.mrb[0].mxu0
          %v2199 = vadd.f32 %v2103, %v2198
          %v2200 = vpop.f32.mrb[0].mxu0
          %2201 = vmatprep.mubr.bf16.mxu0 0
          %2202 = vmatmul.mubr.bf16.gmra.mrb[0].mxu0 %v2068
          %v2203 = vpop.f32.mrb[0].mxu0
          %v2204 = vadd.f32 %v2103, %v2203
          %v2205 = vpop.f32.mrb[0].mxu0
          %v2206 = vpop.f32.mrb[0].mxu0
          %v2207 = vadd.f32 %v2103, %v2206
          %v2208 = vpop.f32.mrb[0].mxu0
          %2209 = vmatprep.mubr.bf16.mxu0 0
          %2210 = vmatmul.mubr.bf16.gmra.mrb[0].mxu0 %v2069
          %v2211 = vpop.f32.mrb[0].mxu0
          %v2212 = vadd.f32 %v2103, %v2211
          %v2213 = vpop.f32.mrb[0].mxu0
          %v2214 = vpop.f32.mrb[0].mxu0
          %v2215 = vadd.f32 %v2103, %v2214
          %v2216 = vpop.f32.mrb[0].mxu0
          %2217 = vmatprep.mubr.bf16.mxu0 0
          %2218 = vmatmul.mubr.bf16.gmra.mrb[0].mxu0 %v2070
          %v2219 = vpop.f32.mrb[0].mxu0
          %v2220 = vadd.f32 %v2103, %v2219
          %v2221 = vpop.f32.mrb[0].mxu0
          %v2222 = vpop.f32.mrb[0].mxu0
          %v2223 = vadd.f32 %v2103, %v2222
          %v2224 = vpop.f32.mrb[0].mxu0
          %2225 = vmatprep.mubr.bf16.mxu0 0
          %2226 = vmatmul.mubr.bf16.gmra.mrb[0].mxu0 %v2071
          %v2227 = vpop.f32.mrb[0].mxu0
          %v2228 = vadd.f32 %v2103, %v2227
          %v2229 = vpop.f32.mrb[0].mxu0
          %v2230 = vpop.f32.mrb[0].mxu0
          %v2231 = vadd.f32 %v2103, %v2230
          %v2232 = vpop.f32.mrb[0].mxu0
          %2233 = vmatprep.mubr.bf16.mxu0 0
          %2234 = vmatmul.mubr.bf16.gmra.mrb[0].mxu0 %v2072
          %v2235 = vpop.f32.mrb[0].mxu0
          %v2236 = vadd.f32 %v2103, %v2235
          %v2237 = vpop.f32.mrb[0].mxu0
          %v2238 = vpop.f32.mrb[0].mxu0
          %v2239 = vadd.f32 %v2103, %v2238
          %v2240 = vpop.f32.mrb[0].mxu0
          %2241 = vmatprep.mubr.bf16.mxu0 0
          %2242 = vmatmul.mubr.bf16.gmra.mrb[0].mxu0 %v2073
          %v2243 = vpop.f32.mrb[0].mxu0
          %v2244 = vadd.f32 %v2103, %v2243
          %v2245 = vpop.f32.mrb[0].mxu0
          %v2246 = vpop.f32.mrb[0].mxu0
          %v2247 = vadd.f32 %v2103, %v2246
          %v2248 = vpop.f32.mrb[0].mxu0
          %2249 = vmatprep.mubr.bf16.mxu0 0
          %2250 = vmatmul.mubr.bf16.gmra.mrb[0].mxu0 %v2074
          %v2251 = vpop.f32.mrb[0].mxu0
          %v2252 = vadd.f32 %v2103, %v2251
          %v2253 = vpop.f32.mrb[0].mxu0
          %v2254 = vpop.f32.mrb[0].mxu0
          %v2255 = vadd.f32 %v2103, %v2254
          %v2256 = vpop.f32.mrb[0].mxu0
          %2257 = vmatprep.mubr.bf16.mxu0 0
          %2258 = vmatmul.mubr.bf16.gmra.mrb[0].mxu0 %v2075
          %v2259 = vpop.f32.mrb[0].mxu0
          %v2260 = vadd.f32 %v2103, %v2259
          %v2261 = vpop.f32.mrb[0].mxu0
          %v2262 = vpop.f32.mrb[0].mxu0
          %v2263 = vadd.f32 %v2103, %v2262
          %v2264 = vpop.f32.mrb[0].mxu0
          %2265 = vmatprep.mubr.bf16.mxu0 0
          %2266 = vmatmul.mubr.bf16.gmra.mrb[0].mxu0 %v2076
          %v2267 = vpop.f32.mrb[0].mxu0
          %v2268 = vadd.f32 %v2103, %v2267
          %v2269 = vpop.f32.mrb[0].mxu0
          %v2270 = vpop.f32.mrb[0].mxu0
          %v2271 = vadd.f32 %v2103, %v2270
          %v2272 = vpop.f32.mrb[0].mxu0
          %2273 = vmatprep.mubr.bf16.mxu0 0
          %2274 = vmatmul.mubr.bf16.gmra.mrb[0].mxu0 %v2077
          %v2275 = vpop.f32.mrb[0].mxu0
          %v2276 = vadd.f32 %v2103, %v2275
          %v2277 = vpop.f32.mrb[0].mxu0
          %v2278 = vpop.f32.mrb[0].mxu0
          %v2279 = vadd.f32 %v2103, %v2278
          %v2280 = vpop.f32.mrb[0].mxu0
          %2281 = vmatprep.mubr.bf16.mxu0 0
          %2282 = vmatmul.mubr.bf16.gmra.mrb[0].mxu0 %v2078
          %v2283 = vpop.f32.mrb[0].mxu0
          %v2284 = vadd.f32 %v2103, %v2283
          %v2285 = vpop.f32.mrb[0].mxu0
          %v2286 = vpop.f32.mrb[0].mxu0
          %v2287 = vadd.f32 %v2103, %v2286
          %v2288 = vpop.f32.mrb[0].mxu0
          %2289 = vmatprep.mubr.bf16.mxu0 0
          %2290 = vmatmul.mubr.bf16.gmra.mrb[0].mxu0 %v2079
          %v2291 = vpop.f32.mrb[0].mxu0
          %v2292 = vadd.f32 %v2103, %v2291
          %v2293 = vpop.f32.mrb[0].mxu0
          %v2294 = vpop.f32.mrb[0].mxu0
          %v2295 = vadd.f32 %v2103, %v2294
          %v2296 = vpop.f32.mrb[0].mxu0
          %2297 = vmatprep.mubr.bf16.mxu0 0
          %2298 = vmatmul.mubr.bf16.gmra.mrb[0].mxu0 %v2080
          %v2299 = vpop.f32.mrb[0].mxu0
          %v2300 = vadd.f32 %v2103, %v2299
          %v2301 = vpop.f32.mrb[0].mxu0
          %v2302 = vpop.f32.mrb[0].mxu0
          %v2303 = vadd.f32 %v2103, %v2302
          %v2304 = vpop.f32.mrb[0].mxu0
          %2305 = vmatprep.mubr.bf16.mxu0 0
          %2306 = vmatmul.mubr.bf16.gmra.mrb[0].mxu0 %v2081
          %v2307 = vpop.f32.mrb[0].mxu0
          %v2308 = vadd.f32 %v2103, %v2307
          %v2309 = vpop.f32.mrb[0].mxu0
          %v2310 = vpop.f32.mrb[0].mxu0
          %v2311 = vadd.f32 %v2103, %v2310
          %v2312 = vpop.f32.mrb[0].mxu0
          %2313 = vdwg.mxu0
          %v2314 = vmax.f32 %v2188, 0.0
          %v2315 = vmax.f32 %v2191, 0.0
          %v2316 = vmax.f32 %v2196, 0.0
          %v2317 = vmax.f32 %v2199, 0.0
          %v2318 = vmax.f32 %v2204, 0.0
          %v2319 = vmax.f32 %v2207, 0.0
          %v2320 = vmax.f32 %v2212, 0.0
          %v2321 = vmax.f32 %v2215, 0.0
          %v2322 = vmax.f32 %v2220, 0.0
          %v2323 = vmax.f32 %v2223, 0.0
          %v2324 = vmax.f32 %v2228, 0.0
          %v2325 = vmax.f32 %v2231, 0.0
          %v2326 = vmax.f32 %v2236, 0.0
          %v2327 = vmax.f32 %v2239, 0.0
          %v2328 = vmax.f32 %v2244, 0.0
          %v2329 = vmax.f32 %v2247, 0.0
          %v2330 = vmax.f32 %v2252, 0.0
          %v2331 = vmax.f32 %v2255, 0.0
          %v2332 = vmax.f32 %v2260, 0.0
          %v2333 = vmax.f32 %v2263, 0.0
          %v2334 = vmax.f32 %v2268, 0.0
          %v2335 = vmax.f32 %v2271, 0.0
          %v2336 = vmax.f32 %v2276, 0.0
          %v2337 = vmax.f32 %v2279, 0.0
          %v2338 = vmax.f32 %v2284, 0.0
          %v2339 = vmax.f32 %v2287, 0.0
          %v2340 = vmax.f32 %v2292, 0.0
          %v2341 = vmax.f32 %v2295, 0.0
          %v2342 = vmax.f32 %v2300, 0.0
          %v2343 = vmax.f32 %v2303, 0.0
          %v2344 = vmax.f32 %v2308, 0.0
          %v2345 = vmax.f32 %v2311, 0.0
          %v2346 = vld [vmem:[%s626] sm:$0xf]
          %v2347 = vld [vmem:[%s626 + $0x4] sm:$0xf]
          %v2348 = vld [vmem:[%s626 + $0x8] sm:$0xf]
          %v2349 = vld [vmem:[%s626 + $0xc] sm:$0xf]
          %v2350 = vld [vmem:[%s626 + $0x10] sm:$0xf]
          %v2351 = vld [vmem:[%s626 + $0x14] sm:$0xf]
          %v2352 = vld [vmem:[%s626 + $0x18] sm:$0xf]
          %v2353 = vld [vmem:[%s626 + $0x1c] sm:$0xf]
          %v2354 = vld [vmem:[%s626 + $0x20] sm:$0xf]
          %v2355 = vld [vmem:[%s626 + $0x24] sm:$0xf]
          %v2356 = vld [vmem:[%s626 + $0x28] sm:$0xf]
          %v2357 = vld [vmem:[%s626 + $0x2c] sm:$0xf]
          %v2358 = vld [vmem:[%s626 + $0x30] sm:$0xf]
          %v2359 = vld [vmem:[%s626 + $0x34] sm:$0xf]
          %v2360 = vld [vmem:[%s626 + $0x38] sm:$0xf]
          %v2361 = vld [vmem:[%s626 + $0x3c] sm:$0xf]
          %v2362 = vld [vmem:[%s626 + $0x40] sm:$0xf]
          %v2363 = vld [vmem:[%s626 + $0x44] sm:$0xf]
          %v2364 = vld [vmem:[%s626 + $0x48] sm:$0xf]
          %v2365 = vld [vmem:[%s626 + $0x4c] sm:$0xf]
          %v2366 = vld [vmem:[%s626 + $0x50] sm:$0xf]
          %v2367 = vld [vmem:[%s626 + $0x54] sm:$0xf]
          %v2368 = vld [vmem:[%s626 + $0x58] sm:$0xf]
          %v2369 = vld [vmem:[%s626 + $0x5c] sm:$0xf]
          %v2370 = vld [vmem:[%s626 + $0x60] sm:$0xf]
          %v2371 = vld [vmem:[%s626 + $0x64] sm:$0xf]
          %v2372 = vld [vmem:[%s626 + $0x68] sm:$0xf]
          %v2373 = vld [vmem:[%s626 + $0x6c] sm:$0xf]
          %v2374 = vld [vmem:[%s626 + $0x70] sm:$0xf]
          %v2375 = vld [vmem:[%s626 + $0x74] sm:$0xf]
          %v2376 = vld [vmem:[%s626 + $0x78] sm:$0xf]
          %v2377 = vld [vmem:[%s626 + $0x7c] sm:$0xf]
          %v2378 = vunpack.c.l.bf16 %v2346
          %v2379 = vunpack.c.l.bf16 %v2347
          %v2380 = vunpack.c.l.bf16 %v2348
          %v2381 = vunpack.c.l.bf16 %v2349
          %v2382 = vunpack.c.l.bf16 %v2350
          %v2383 = vunpack.c.l.bf16 %v2351
          %v2384 = vunpack.c.l.bf16 %v2352
          %v2385 = vunpack.c.l.bf16 %v2353
          %v2386 = vunpack.c.l.bf16 %v2354
          %v2387 = vunpack.c.l.bf16 %v2355
          %v2388 = vunpack.c.l.bf16 %v2356
          %v2389 = vunpack.c.l.bf16 %v2357
          %v2390 = vunpack.c.l.bf16 %v2358
          %v2391 = vunpack.c.l.bf16 %v2359
          %v2392 = vunpack.c.l.bf16 %v2360
          %v2393 = vunpack.c.l.bf16 %v2361
          %v2394 = vunpack.c.l.bf16 %v2362
          %v2395 = vunpack.c.l.bf16 %v2363
          %v2396 = vunpack.c.l.bf16 %v2364
          %v2397 = vunpack.c.l.bf16 %v2365
          %v2398 = vunpack.c.l.bf16 %v2366
          %v2399 = vunpack.c.l.bf16 %v2367
          %v2400 = vunpack.c.l.bf16 %v2368
          %v2401 = vunpack.c.l.bf16 %v2369
          %v2402 = vunpack.c.l.bf16 %v2370
          %v2403 = vunpack.c.l.bf16 %v2371
          %v2404 = vunpack.c.l.bf16 %v2372
          %v2405 = vunpack.c.l.bf16 %v2373
          %v2406 = vunpack.c.l.bf16 %v2374
          %v2407 = vunpack.c.l.bf16 %v2375
          %v2408 = vunpack.c.l.bf16 %v2376
          %v2409 = vunpack.c.l.bf16 %v2377
          %v2410 = vmul.f32 %v2378, 0.2
          %v2411 = vmul.f32 %v2379, 0.2
          %v2412 = vmul.f32 %v2380, 0.2
          %v2413 = vmul.f32 %v2381, 0.2
          %v2414 = vmul.f32 %v2382, 0.2
          %v2415 = vmul.f32 %v2383, 0.2
          %v2416 = vmul.f32 %v2384, 0.2
          %v2417 = vmul.f32 %v2385, 0.2
          %v2418 = vmul.f32 %v2386, 0.2
          %v2419 = vmul.f32 %v2387, 0.2
          %v2420 = vmul.f32 %v2388, 0.2
          %v2421 = vmul.f32 %v2389, 0.2
          %v2422 = vmul.f32 %v2390, 0.2
          %v2423 = vmul.f32 %v2391, 0.2
          %v2424 = vmul.f32 %v2392, 0.2
          %v2425 = vmul.f32 %v2393, 0.2
          %v2426 = vmul.f32 %v2394, 0.2
          %v2427 = vmul.f32 %v2395, 0.2
          %v2428 = vmul.f32 %v2396, 0.2
          %v2429 = vmul.f32 %v2397, 0.2
          %v2430 = vmul.f32 %v2398, 0.2
          %v2431 = vmul.f32 %v2399, 0.2
          %v2432 = vmul.f32 %v2400, 0.2
          %v2433 = vmul.f32 %v2401, 0.2
          %v2434 = vmul.f32 %v2402, 0.2
          %v2435 = vmul.f32 %v2403, 0.2
          %v2436 = vmul.f32 %v2404, 0.2
          %v2437 = vmul.f32 %v2405, 0.2
          %v2438 = vmul.f32 %v2406, 0.2
          %v2439 = vmul.f32 %v2407, 0.2
          %v2440 = vmul.f32 %v2408, 0.2
          %v2441 = vmul.f32 %v2409, 0.2
          %v2442 = vadd.f32 %v2314, %v2410
          %v2443 = vadd.f32 %v2315, %v2411
          %v2444 = vadd.f32 %v2316, %v2412
          %v2445 = vadd.f32 %v2317, %v2413
          %v2446 = vadd.f32 %v2318, %v2414
          %v2447 = vadd.f32 %v2319, %v2415
          %v2448 = vadd.f32 %v2320, %v2416
          %v2449 = vadd.f32 %v2321, %v2417
          %v2450 = vadd.f32 %v2322, %v2418
          %v2451 = vadd.f32 %v2323, %v2419
          %v2452 = vadd.f32 %v2324, %v2420
          %v2453 = vadd.f32 %v2325, %v2421
          %v2454 = vadd.f32 %v2326, %v2422
          %v2455 = vadd.f32 %v2327, %v2423
          %v2456 = vadd.f32 %v2328, %v2424
          %v2457 = vadd.f32 %v2329, %v2425
          %v2458 = vadd.f32 %v2330, %v2426
          %v2459 = vadd.f32 %v2331, %v2427
          %v2460 = vadd.f32 %v2332, %v2428
          %v2461 = vadd.f32 %v2333, %v2429
          %v2462 = vadd.f32 %v2334, %v2430
          %v2463 = vadd.f32 %v2335, %v2431
          %v2464 = vadd.f32 %v2336, %v2432
          %v2465 = vadd.f32 %v2337, %v2433
          %v2466 = vadd.f32 %v2338, %v2434
          %v2467 = vadd.f32 %v2339, %v2435
          %v2468 = vadd.f32 %v2340, %v2436
          %v2469 = vadd.f32 %v2341, %v2437
          %v2470 = vadd.f32 %v2342, %v2438
          %v2471 = vadd.f32 %v2343, %v2439
          %v2472 = vadd.f32 %v2344, %v2440
          %v2473 = vadd.f32 %v2345, %v2441
          %s2474 = sld [smem:[#allocation3 + $0x1]]
          %v2475 = vld [vmem:[%s632] sm:$0xf]
          %v2476 = vld [vmem:[%s632 + $0x4] sm:$0xf]
          %v2477 = vld [vmem:[%s632 + $0x8] sm:$0xf]
          %v2478 = vld [vmem:[%s632 + $0xc] sm:$0xf]
          %v2479 = vld [vmem:[%s632 + $0x10] sm:$0xf]
          %v2480 = vld [vmem:[%s632 + $0x14] sm:$0xf]
          %v2481 = vld [vmem:[%s632 + $0x18] sm:$0xf]
          %v2482 = vld [vmem:[%s632 + $0x1c] sm:$0xf]
          %v2483 = vld [vmem:[%s632 + $0x20] sm:$0xf]
          %v2484 = vld [vmem:[%s632 + $0x24] sm:$0xf]
          %v2485 = vld [vmem:[%s632 + $0x28] sm:$0xf]
          %v2486 = vld [vmem:[%s632 + $0x2c] sm:$0xf]
          %v2487 = vld [vmem:[%s632 + $0x30] sm:$0xf]
          %v2488 = vld [vmem:[%s632 + $0x34] sm:$0xf]
          %v2489 = vld [vmem:[%s632 + $0x38] sm:$0xf]
          %v2490 = vld [vmem:[%s632 + $0x3c] sm:$0xf]
          %v2491 = vld [vmem:[%s632 + $0x40] sm:$0xf]
          %v2492 = vld [vmem:[%s632 + $0x44] sm:$0xf]
          %v2493 = vld [vmem:[%s632 + $0x48] sm:$0xf]
          %v2494 = vld [vmem:[%s632 + $0x4c] sm:$0xf]
          %v2495 = vld [vmem:[%s632 + $0x50] sm:$0xf]
          %v2496 = vld [vmem:[%s632 + $0x54] sm:$0xf]
          %v2497 = vld [vmem:[%s632 + $0x58] sm:$0xf]
          %v2498 = vld [vmem:[%s632 + $0x5c] sm:$0xf]
          %v2499 = vld [vmem:[%s632 + $0x60] sm:$0xf]
          %v2500 = vld [vmem:[%s632 + $0x64] sm:$0xf]
          %v2501 = vld [vmem:[%s632 + $0x68] sm:$0xf]
          %v2502 = vld [vmem:[%s632 + $0x6c] sm:$0xf]
          %v2503 = vld [vmem:[%s632 + $0x70] sm:$0xf]
          %v2504 = vld [vmem:[%s632 + $0x74] sm:$0xf]
          %v2505 = vld [vmem:[%s632 + $0x78] sm:$0xf]
          %v2506 = vld [vmem:[%s632 + $0x7c] sm:$0xf]
          %v2507 = vunpack.c.l.bf16 %v2475
          %v2508 = vunpack.c.l.bf16 %v2476
          %v2509 = vunpack.c.l.bf16 %v2477
          %v2510 = vunpack.c.l.bf16 %v2478
          %v2511 = vunpack.c.l.bf16 %v2479
          %v2512 = vunpack.c.l.bf16 %v2480
          %v2513 = vunpack.c.l.bf16 %v2481
          %v2514 = vunpack.c.l.bf16 %v2482
          %v2515 = vunpack.c.l.bf16 %v2483
          %v2516 = vunpack.c.l.bf16 %v2484
          %v2517 = vunpack.c.l.bf16 %v2485
          %v2518 = vunpack.c.l.bf16 %v2486
          %v2519 = vunpack.c.l.bf16 %v2487
          %v2520 = vunpack.c.l.bf16 %v2488
          %v2521 = vunpack.c.l.bf16 %v2489
          %v2522 = vunpack.c.l.bf16 %v2490
          %v2523 = vunpack.c.l.bf16 %v2491
          %v2524 = vunpack.c.l.bf16 %v2492
          %v2525 = vunpack.c.l.bf16 %v2493
          %v2526 = vunpack.c.l.bf16 %v2494
          %v2527 = vunpack.c.l.bf16 %v2495
          %v2528 = vunpack.c.l.bf16 %v2496
          %v2529 = vunpack.c.l.bf16 %v2497
          %v2530 = vunpack.c.l.bf16 %v2498
          %v2531 = vunpack.c.l.bf16 %v2499
          %v2532 = vunpack.c.l.bf16 %v2500
          %v2533 = vunpack.c.l.bf16 %v2501
          %v2534 = vunpack.c.l.bf16 %v2502
          %v2535 = vunpack.c.l.bf16 %v2503
          %v2536 = vunpack.c.l.bf16 %v2504
          %v2537 = vunpack.c.l.bf16 %v2505
          %v2538 = vunpack.c.l.bf16 %v2506
          %v2539 = vstv %s2474
          %v2540 = vmul.f32 %v2539, %v2507
          %v2541 = vmul.f32 %v2539, %v2508
          %v2542 = vmul.f32 %v2539, %v2509
          %v2543 = vmul.f32 %v2539, %v2510
          %v2544 = vmul.f32 %v2539, %v2511
          %v2545 = vmul.f32 %v2539, %v2512
          %v2546 = vmul.f32 %v2539, %v2513
          %v2547 = vmul.f32 %v2539, %v2514
          %v2548 = vmul.f32 %v2539, %v2515
          %v2549 = vmul.f32 %v2539, %v2516
          %v2550 = vmul.f32 %v2539, %v2517
          %v2551 = vmul.f32 %v2539, %v2518
          %v2552 = vmul.f32 %v2539, %v2519
          %v2553 = vmul.f32 %v2539, %v2520
          %v2554 = vmul.f32 %v2539, %v2521
          %v2555 = vmul.f32 %v2539, %v2522
          %v2556 = vmul.f32 %v2539, %v2523
          %v2557 = vmul.f32 %v2539, %v2524
          %v2558 = vmul.f32 %v2539, %v2525
          %v2559 = vmul.f32 %v2539, %v2526
          %v2560 = vmul.f32 %v2539, %v2527
          %v2561 = vmul.f32 %v2539, %v2528
          %v2562 = vmul.f32 %v2539, %v2529
          %v2563 = vmul.f32 %v2539, %v2530
          %v2564 = vmul.f32 %v2539, %v2531
          %v2565 = vmul.f32 %v2539, %v2532
          %v2566 = vmul.f32 %v2539, %v2533
          %v2567 = vmul.f32 %v2539, %v2534
          %v2568 = vmul.f32 %v2539, %v2535
          %v2569 = vmul.f32 %v2539, %v2536
          %v2570 = vmul.f32 %v2539, %v2537
          %v2571 = vmul.f32 %v2539, %v2538
          %v2572 = vadd.f32 %v2442, %v2540
          %v2573 = vadd.f32 %v2443, %v2541
          %v2574 = vadd.f32 %v2444, %v2542
          %v2575 = vadd.f32 %v2445, %v2543
          %v2576 = vadd.f32 %v2446, %v2544
          %v2577 = vadd.f32 %v2447, %v2545
          %v2578 = vadd.f32 %v2448, %v2546
          %v2579 = vadd.f32 %v2449, %v2547
          %v2580 = vadd.f32 %v2450, %v2548
          %v2581 = vadd.f32 %v2451, %v2549
          %v2582 = vadd.f32 %v2452, %v2550
          %v2583 = vadd.f32 %v2453, %v2551
          %v2584 = vadd.f32 %v2454, %v2552
          %v2585 = vadd.f32 %v2455, %v2553
          %v2586 = vadd.f32 %v2456, %v2554
          %v2587 = vadd.f32 %v2457, %v2555
          %v2588 = vadd.f32 %v2458, %v2556
          %v2589 = vadd.f32 %v2459, %v2557
          %v2590 = vadd.f32 %v2460, %v2558
          %v2591 = vadd.f32 %v2461, %v2559
          %v2592 = vadd.f32 %v2462, %v2560
          %v2593 = vadd.f32 %v2463, %v2561
          %v2594 = vadd.f32 %v2464, %v2562
          %v2595 = vadd.f32 %v2465, %v2563
          %v2596 = vadd.f32 %v2466, %v2564
          %v2597 = vadd.f32 %v2467, %v2565
          %v2598 = vadd.f32 %v2468, %v2566
          %v2599 = vadd.f32 %v2469, %v2567
          %v2600 = vadd.f32 %v2470, %v2568
          %v2601 = vadd.f32 %v2471, %v2569
          %v2602 = vadd.f32 %v2472, %v2570
          %v2603 = vadd.f32 %v2473, %v2571
          %v2604 = vpack.c.bf16 %v2573, %v2572
          %v2605 = vpack.c.bf16 %v2575, %v2574
          %v2606 = vpack.c.bf16 %v2577, %v2576
          %v2607 = vpack.c.bf16 %v2579, %v2578
          %v2608 = vpack.c.bf16 %v2581, %v2580
          %v2609 = vpack.c.bf16 %v2583, %v2582
          %v2610 = vpack.c.bf16 %v2585, %v2584
          %v2611 = vpack.c.bf16 %v2587, %v2586
          %v2612 = vpack.c.bf16 %v2589, %v2588
          %v2613 = vpack.c.bf16 %v2591, %v2590
          %v2614 = vpack.c.bf16 %v2593, %v2592
          %v2615 = vpack.c.bf16 %v2595, %v2594
          %v2616 = vpack.c.bf16 %v2597, %v2596
          %v2617 = vpack.c.bf16 %v2599, %v2598
          %v2618 = vpack.c.bf16 %v2601, %v2600
          %v2619 = vpack.c.bf16 %v2603, %v2602
          %v2636 = vunpack.c.l.b16 %v2604
          %v2637 = vunpack.c.h.b16 %v2604
          %v2638 = vunpack.c.l.b16 %v2605
          %v2639 = vunpack.c.h.b16 %v2605
          %v2640 = vunpack.c.l.b16 %v2606
          %v2641 = vunpack.c.h.b16 %v2606
          %v2642 = vunpack.c.l.b16 %v2607
          %v2643 = vunpack.c.h.b16 %v2607
          %v2644 = vunpack.c.l.b16 %v2608
          %v2645 = vunpack.c.h.b16 %v2608
          %v2646 = vunpack.c.l.b16 %v2609
          %v2647 = vunpack.c.h.b16 %v2609
          %v2648 = vunpack.c.l.b16 %v2610
          %v2649 = vunpack.c.h.b16 %v2610
          %v2650 = vunpack.c.l.b16 %v2611
          %v2651 = vunpack.c.h.b16 %v2611
          %v2652 = vunpack.c.l.b16 %v2612
          %v2653 = vunpack.c.h.b16 %v2612
          %v2654 = vunpack.c.l.b16 %v2613
          %v2655 = vunpack.c.h.b16 %v2613
          %v2656 = vunpack.c.l.b16 %v2614
          %v2657 = vunpack.c.h.b16 %v2614
          %v2658 = vunpack.c.l.b16 %v2615
          %v2659 = vunpack.c.h.b16 %v2615
          %v2660 = vunpack.c.l.b16 %v2616
          %v2661 = vunpack.c.h.b16 %v2616
          %v2662 = vunpack.c.l.b16 %v2617
          %v2663 = vunpack.c.h.b16 %v2617
          %v2664 = vunpack.c.l.b16 %v2618
          %v2665 = vunpack.c.h.b16 %v2618
          %v2666 = vunpack.c.l.b16 %v2619
          %v2667 = vunpack.c.h.b16 %v2619
          %v2668 = vpack.c.b16 %v2636, %v2636
          %v2669 = vpack.c.b16 %v2637, %v2637
          %v2670 = vpack.c.b16 %v2638, %v2638
          %v2671 = vpack.c.b16 %v2639, %v2639
          %v2672 = vpack.c.b16 %v2640, %v2640
          %v2673 = vpack.c.b16 %v2641, %v2641
          %v2674 = vpack.c.b16 %v2642, %v2642
          %v2675 = vpack.c.b16 %v2643, %v2643
          %v2676 = vpack.c.b16 %v2644, %v2644
          %v2677 = vpack.c.b16 %v2645, %v2645
          %v2678 = vpack.c.b16 %v2646, %v2646
          %v2679 = vpack.c.b16 %v2647, %v2647
          %v2680 = vpack.c.b16 %v2648, %v2648
          %v2681 = vpack.c.b16 %v2649, %v2649
          %v2682 = vpack.c.b16 %v2650, %v2650
          %v2683 = vpack.c.b16 %v2651, %v2651
          %v2684 = vpack.c.b16 %v2652, %v2652
          %v2685 = vpack.c.b16 %v2653, %v2653
          %v2686 = vpack.c.b16 %v2654, %v2654
          %v2687 = vpack.c.b16 %v2655, %v2655
          %v2688 = vpack.c.b16 %v2656, %v2656
          %v2689 = vpack.c.b16 %v2657, %v2657
          %v2690 = vpack.c.b16 %v2658, %v2658
          %v2691 = vpack.c.b16 %v2659, %v2659
          %v2692 = vpack.c.b16 %v2660, %v2660
          %v2693 = vpack.c.b16 %v2661, %v2661
          %v2694 = vpack.c.b16 %v2662, %v2662
          %v2695 = vpack.c.b16 %v2663, %v2663
          %v2696 = vpack.c.b16 %v2664, %v2664
          %v2697 = vpack.c.b16 %v2665, %v2665
          %v2698 = vpack.c.b16 %v2666, %v2666
          %v2699 = vpack.c.b16 %v2667, %v2667
          %2732 = vst [vmem:[%s594] sm:$0xf] %v2668
          %2733 = vst [vmem:[%s594 + $0x4] sm:$0xf] %v2669
          %2734 = vst [vmem:[%s594 + $0x8] sm:$0xf] %v2670
          %2735 = vst [vmem:[%s594 + $0xc] sm:$0xf] %v2671
          %2736 = vst [vmem:[%s594 + $0x10] sm:$0xf] %v2672
          %2737 = vst [vmem:[%s594 + $0x14] sm:$0xf] %v2673
          %2738 = vst [vmem:[%s594 + $0x18] sm:$0xf] %v2674
          %2739 = vst [vmem:[%s594 + $0x1c] sm:$0xf] %v2675
          %2740 = vst [vmem:[%s594 + $0x20] sm:$0xf] %v2676
          %2741 = vst [vmem:[%s594 + $0x24] sm:$0xf] %v2677
          %2742 = vst [vmem:[%s594 + $0x28] sm:$0xf] %v2678
          %2743 = vst [vmem:[%s594 + $0x2c] sm:$0xf] %v2679
          %2744 = vst [vmem:[%s594 + $0x30] sm:$0xf] %v2680
          %2745 = vst [vmem:[%s594 + $0x34] sm:$0xf] %v2681
          %2746 = vst [vmem:[%s594 + $0x38] sm:$0xf] %v2682
          %2747 = vst [vmem:[%s594 + $0x3c] sm:$0xf] %v2683
          %2748 = vst [vmem:[%s594 + $0x40] sm:$0xf] %v2684
          %2749 = vst [vmem:[%s594 + $0x44] sm:$0xf] %v2685
          %2750 = vst [vmem:[%s594 + $0x48] sm:$0xf] %v2686
          %2751 = vst [vmem:[%s594 + $0x4c] sm:$0xf] %v2687
          %2752 = vst [vmem:[%s594 + $0x50] sm:$0xf] %v2688
          %2753 = vst [vmem:[%s594 + $0x54] sm:$0xf] %v2689
          %2754 = vst [vmem:[%s594 + $0x58] sm:$0xf] %v2690
          %2755 = vst [vmem:[%s594 + $0x5c] sm:$0xf] %v2691
          %2756 = vst [vmem:[%s594 + $0x60] sm:$0xf] %v2692
          %2757 = vst [vmem:[%s594 + $0x64] sm:$0xf] %v2693
          %2758 = vst [vmem:[%s594 + $0x68] sm:$0xf] %v2694
          %2759 = vst [vmem:[%s594 + $0x6c] sm:$0xf] %v2695
          %2760 = vst [vmem:[%s594 + $0x70] sm:$0xf] %v2696
          %2761 = vst [vmem:[%s594 + $0x74] sm:$0xf] %v2697
          %2762 = vst [vmem:[%s594 + $0x78] sm:$0xf] %v2698
          %2763 = vst [vmem:[%s594 + $0x7c] sm:$0xf] %v2699
          %v2764 = vld [vmem:[%s638] sm:$0xff]
          %v2765 = vld [vmem:[%s638 + $0x8] sm:$0xff]
          %v2766 = vld [vmem:[%s638 + $0x10] sm:$0xff]
          %v2767 = vld [vmem:[%s638 + $0x18] sm:$0xff]
          %v2768 = vld [vmem:[%s638 + $0x20] sm:$0xff]
          %v2769 = vld [vmem:[%s638 + $0x28] sm:$0xff]
          %v2770 = vld [vmem:[%s638 + $0x30] sm:$0xff]
          %v2771 = vld [vmem:[%s638 + $0x38] sm:$0xff]
          %v2772 = vld [vmem:[%s638 + $0x40] sm:$0xff]
          %v2773 = vld [vmem:[%s638 + $0x48] sm:$0xff]
          %v2774 = vld [vmem:[%s638 + $0x50] sm:$0xff]
          %v2775 = vld [vmem:[%s638 + $0x58] sm:$0xff]
          %v2776 = vld [vmem:[%s638 + $0x60] sm:$0xff]
          %v2777 = vld [vmem:[%s638 + $0x68] sm:$0xff]
          %v2778 = vld [vmem:[%s638 + $0x70] sm:$0xff]
          %v2779 = vld [vmem:[%s638 + $0x78] sm:$0xff]
          %v2780 = vld [vmem:[%s638 + $0x80] sm:$0xff]
          %v2781 = vld [vmem:[%s638 + $0x88] sm:$0xff]
          %v2782 = vld [vmem:[%s638 + $0x90] sm:$0xff]
          %v2783 = vld [vmem:[%s638 + $0x98] sm:$0xff]
          %v2784 = vld [vmem:[%s638 + $0xa0] sm:$0xff]
          %v2785 = vld [vmem:[%s638 + $0xa8] sm:$0xff]
          %v2786 = vld [vmem:[%s638 + $0xb0] sm:$0xff]
          %v2787 = vld [vmem:[%s638 + $0xb8] sm:$0xff]
          %v2788 = vld [vmem:[%s638 + $0xc0] sm:$0xff]
          %v2789 = vld [vmem:[%s638 + $0xc8] sm:$0xff]
          %v2790 = vld [vmem:[%s638 + $0xd0] sm:$0xff]
          %v2791 = vld [vmem:[%s638 + $0xd8] sm:$0xff]
          %v2792 = vld [vmem:[%s638 + $0xe0] sm:$0xff]
          %v2793 = vld [vmem:[%s638 + $0xe8] sm:$0xff]
          %v2794 = vld [vmem:[%s638 + $0xf0] sm:$0xff]
          %v2795 = vld [vmem:[%s638 + $0xf8] sm:$0xff]
          %s2796 = sld [smem:[#allocation3]]
          %v2797 = vstv %s2796
          %v2798 = vmul.f32 %v2797, %v2572
          %v2799 = vmul.f32 %v2797, %v2573
          %v2800 = vmul.f32 %v2797, %v2574
          %v2801 = vmul.f32 %v2797, %v2575
          %v2802 = vmul.f32 %v2797, %v2576
          %v2803 = vmul.f32 %v2797, %v2577
          %v2804 = vmul.f32 %v2797, %v2578
          %v2805 = vmul.f32 %v2797, %v2579
          %v2806 = vmul.f32 %v2797, %v2580
          %v2807 = vmul.f32 %v2797, %v2581
          %v2808 = vmul.f32 %v2797, %v2582
          %v2809 = vmul.f32 %v2797, %v2583
          %v2810 = vmul.f32 %v2797, %v2584
          %v2811 = vmul.f32 %v2797, %v2585
          %v2812 = vmul.f32 %v2797, %v2586
          %v2813 = vmul.f32 %v2797, %v2587
          %v2814 = vmul.f32 %v2797, %v2588
          %v2815 = vmul.f32 %v2797, %v2589
          %v2816 = vmul.f32 %v2797, %v2590
          %v2817 = vmul.f32 %v2797, %v2591
          %v2818 = vmul.f32 %v2797, %v2592
          %v2819 = vmul.f32 %v2797, %v2593
          %v2820 = vmul.f32 %v2797, %v2594
          %v2821 = vmul.f32 %v2797, %v2595
          %v2822 = vmul.f32 %v2797, %v2596
          %v2823 = vmul.f32 %v2797, %v2597
          %v2824 = vmul.f32 %v2797, %v2598
          %v2825 = vmul.f32 %v2797, %v2599
          %v2826 = vmul.f32 %v2797, %v2600
          %v2827 = vmul.f32 %v2797, %v2601
          %v2828 = vmul.f32 %v2797, %v2602
          %v2829 = vmul.f32 %v2797, %v2603
          %v2830 = vadd.f32 %v2764, %v2798
          %v2831 = vadd.f32 %v2765, %v2799
          %v2832 = vadd.f32 %v2766, %v2800
          %v2833 = vadd.f32 %v2767, %v2801
          %v2834 = vadd.f32 %v2768, %v2802
          %v2835 = vadd.f32 %v2769, %v2803
          %v2836 = vadd.f32 %v2770, %v2804
          %v2837 = vadd.f32 %v2771, %v2805
          %v2838 = vadd.f32 %v2772, %v2806
          %v2839 = vadd.f32 %v2773, %v2807
          %v2840 = vadd.f32 %v2774, %v2808
          %v2841 = vadd.f32 %v2775, %v2809
          %v2842 = vadd.f32 %v2776, %v2810
          %v2843 = vadd.f32 %v2777, %v2811
          %v2844 = vadd.f32 %v2778, %v2812
          %v2845 = vadd.f32 %v2779, %v2813
          %v2846 = vadd.f32 %v2780, %v2814
          %v2847 = vadd.f32 %v2781, %v2815
          %v2848 = vadd.f32 %v2782, %v2816
          %v2849 = vadd.f32 %v2783, %v2817
          %v2850 = vadd.f32 %v2784, %v2818
          %v2851 = vadd.f32 %v2785, %v2819
          %v2852 = vadd.f32 %v2786, %v2820
          %v2853 = vadd.f32 %v2787, %v2821
          %v2854 = vadd.f32 %v2788, %v2822
          %v2855 = vadd.f32 %v2789, %v2823
          %v2856 = vadd.f32 %v2790, %v2824
          %v2857 = vadd.f32 %v2791, %v2825
          %v2858 = vadd.f32 %v2792, %v2826
          %v2859 = vadd.f32 %v2793, %v2827
          %v2860 = vadd.f32 %v2794, %v2828
          %v2861 = vadd.f32 %v2795, %v2829
          %2862 = vst [vmem:[%s645] sm:$0xff] %v2830
          %2863 = vst [vmem:[%s645 + $0x8] sm:$0xff] %v2831
          %2864 = vst [vmem:[%s645 + $0x10] sm:$0xff] %v2832
          %2865 = vst [vmem:[%s645 + $0x18] sm:$0xff] %v2833
          %2866 = vst [vmem:[%s645 + $0x20] sm:$0xff] %v2834
          %2867 = vst [vmem:[%s645 + $0x28] sm:$0xff] %v2835
          %2868 = vst [vmem:[%s645 + $0x30] sm:$0xff] %v2836
          %2869 = vst [vmem:[%s645 + $0x38] sm:$0xff] %v2837
          %2870 = vst [vmem:[%s645 + $0x40] sm:$0xff] %v2838
          %2871 = vst [vmem:[%s645 + $0x48] sm:$0xff] %v2839
          %2872 = vst [vmem:[%s645 + $0x50] sm:$0xff] %v2840
          %2873 = vst [vmem:[%s645 + $0x58] sm:$0xff] %v2841
          %2874 = vst [vmem:[%s645 + $0x60] sm:$0xff] %v2842
          %2875 = vst [vmem:[%s645 + $0x68] sm:$0xff] %v2843
          %2876 = vst [vmem:[%s645 + $0x70] sm:$0xff] %v2844
          %2877 = vst [vmem:[%s645 + $0x78] sm:$0xff] %v2845
          %2878 = vst [vmem:[%s645 + $0x80] sm:$0xff] %v2846
          %2879 = vst [vmem:[%s645 + $0x88] sm:$0xff] %v2847
          %2880 = vst [vmem:[%s645 + $0x90] sm:$0xff] %v2848
          %2881 = vst [vmem:[%s645 + $0x98] sm:$0xff] %v2849
          %2882 = vst [vmem:[%s645 + $0xa0] sm:$0xff] %v2850
          %2883 = vst [vmem:[%s645 + $0xa8] sm:$0xff] %v2851
          %2884 = vst [vmem:[%s645 + $0xb0] sm:$0xff] %v2852
          %2885 = vst [vmem:[%s645 + $0xb8] sm:$0xff] %v2853
          %2886 = vst [vmem:[%s645 + $0xc0] sm:$0xff] %v2854
          %2887 = vst [vmem:[%s645 + $0xc8] sm:$0xff] %v2855
          %2888 = vst [vmem:[%s645 + $0xd0] sm:$0xff] %v2856
          %2889 = vst [vmem:[%s645 + $0xd8] sm:$0xff] %v2857
          %2890 = vst [vmem:[%s645 + $0xe0] sm:$0xff] %v2858
          %2891 = vst [vmem:[%s645 + $0xe8] sm:$0xff] %v2859
          %2892 = vst [vmem:[%s645 + $0xf0] sm:$0xff] %v2860
          %2893 = vst [vmem:[%s645 + $0xf8] sm:$0xff] %v2861
        $region95: #{gcn_res_forward.14} parent=78 // pred_fallthru
          _
        %s2894 = sand.u32 %s294, 1
        %s2895 = scalar_lea.sflag [#allocation4], %s2894
        %s2896 = sand.u32 %s294, 1
        %s2897 = smul.addr %s2896, 128
        %s2898 = scalar_lea.vmem [#allocation7], %s2897
        %s2899 = smul.u32 32, %s31
        %p2900 = scmp.lt.s32.totalorder %s2899, 127
        %s2901 = scalar_select %p2900, %s2899, 127
        %s2902 = smul.addr %s2901, 8
        %s2903 = scalar_lea.vmem %s11, %s2902
        // Predicated region
        $region96: #{gcn_res_forward.14} parent=78 // pred_check
          %p2904 = pneg %p304
        $region97: #{gcn_res_forward.14} parent=78 // pred_check_branch
          %2906 = sbr.rel (%p2904) target = $region99
        $region98: #{gcn_res_forward.14} parent=78 // pred_region
          %s2907 = smul.u32 32, %s31
          %s2909 = ssub.s32 2048, 2048
          %2910 = vsyncadd %s2895, %s2909
          %s2911 = smul.addr %s2907, 64
          %s2912 = scalar_lea.hbm %s10, %s2911
          %s2913 = sshll.u32 %s2898, 4
          %s2914 = int_to_ptr.vmem [resolvable:$true] %s2913
          %2919 = dma.vmem_to_hbm [thread:$0]  %s2914, 2048, %s2912, %s2895, 64, 64, 4
        $region99: #{gcn_res_forward.14} parent=78 // pred_fallthru
          _
        // Predicated region
        $region100: #{gcn_res_forward.14} parent=78 // pred_check
          %p2920 = pneg %p330
        $region101: #{gcn_res_forward.14} parent=78 // pred_check_branch
          %2922 = sbr.rel (%p2920) target = $region103
        $region102: #{gcn_res_forward.14} parent=78 // pred_region
          %s2923 = smul.u32 32, %s31
        $region103: #{gcn_res_forward.14} parent=78 // pred_fallthru
          _
      $region79: #{gcn_res_forward.14} parent=5 // pred_fallthru
        _
      %p2924 = scmp.le.s32.totalorder 2, %s22
      // Predicated region
      $region104: #{gcn_res_forward.14} parent=5 // pred_check
        %p2925 = pneg %p2924
      $region105: #{gcn_res_forward.14} parent=5 // pred_check_branch
        %2927 = sbr.rel (%p2925) target = $region107
      $region106: #{gcn_res_forward.14} parent=5 // pred_region
        %s2928 = ssub.s32 %s22, 2
        // Predicated region
        $region108: #{gcn_res_forward.14} parent=106 // pred_check
          %p2929 = pneg %p310
        $region109: #{gcn_res_forward.14} parent=106 // pred_check_branch
          %2931 = sbr.rel (%p2929) target = $region111
        $region110: #{gcn_res_forward.14} parent=106 // pred_region
          %s2932 = sand.u32 %s295, 1
          %s2933 = scalar_lea.sflag [#allocation4], %s2932
          %s2934 = sand.u32 %s295, 1
          %s2935 = smul.addr %s2934, 128
          %s2936 = scalar_lea.vmem [#allocation7], %s2935
          %2937 = dma.done %s2933, 2048
        $region111: #{gcn_res_forward.14} parent=106 // pred_fallthru
          _
        // Predicated region
        $region112: #{gcn_res_forward.14} parent=106 // pred_check
          %p2938 = pneg %p336
        $region113: #{gcn_res_forward.14} parent=106 // pred_check_branch
          %2940 = sbr.rel (%p2938) target = $region115
        $region114: #{gcn_res_forward.14} parent=106 // pred_region
          %s2941 = smul.u32 32, %s33
          %p2942 = scmp.lt.s32.totalorder %s2941, 127
          %s2943 = scalar_select %p2942, %s2941, 127
          %s2944 = smul.addr %s2943, 8
          %s2945 = scalar_lea.vmem %s11, %s2944
        $region115: #{gcn_res_forward.14} parent=106 // pred_fallthru
          _
      $region107: #{gcn_res_forward.14} parent=5 // pred_fallthru
        _
    $region6: #{gcn_res_forward.14} parent=1 // loop_footer
      %s26 = sadd.s32 1, %s22
    $region7: #{gcn_res_forward.14} parent=1 // loop_footer_branch
      %21 = sbr.rel target = $region3
    $region8: #{gcn_res_forward.14} parent=1 // loop_exit
      _
    %2946 = vsyncpa [#allocation4], 1
    %s2947 = scalar_lea.sflag [#allocation4], 1
    %2948 = vsyncpa %s2947, 1
    %2949 = vsyncpa [#allocation5], 1
    %s2950 = scalar_lea.sflag [#allocation5], 1
    %2951 = vsyncpa %s2950, 1

// kernel: gcn_res_forward.9
$region0: #{gcn_res_forward.9}
  #allocation0 [shape = 'u32[]', space=smem, size = 0x4, offset = 0x4, fixed_abs, tag = 'smem constant byte address 0x4 - core index']
  #allocation1 [shape = 'u32[144,128]{1,0:T(1,128)}', space=vmem, size = 0x12000, scoped, tag = 'internal scratch']
  #allocation2 [shape = 'f32[256,128]{1,0:T(8,128)}', space=vmem, size = 0x20000, scoped, tag = 'scratch operand']
  %s0 = inlined_call_operand.vmem [shape: f32[2], index: 0, kind: input, shape index: {}]
  %s1 = inlined_call_operand.vmem [shape: s8[1024,1024], index: 1, kind: input, shape index: {}]
  %s2 = inlined_call_operand.vmem [shape: f32[1024,1], index: 2, kind: input, shape index: {}, may-alias: {2,6}]
  %s3 = inlined_call_operand.vmem [shape: bf16[1024,128], index: 3, kind: input, shape index: {}, may-alias: {3,7,8}]
  %s4 = inlined_call_operand.vmem [shape: bf16[128,128], index: 4, kind: input, shape index: {}]
  %s5 = inlined_call_operand.vmem [shape: f32[1,128], index: 5, kind: input, shape index: {}]
  %s6 = inlined_call_operand.vmem [shape: f32[1024,1], index: 6, kind: input, shape index: {}, may-alias: {2,6}]
  %s7 = inlined_call_operand.vmem [shape: bf16[1024,128], index: 7, kind: input, shape index: {}, may-alias: {3,7,8}]
  %s8 = inlined_call_operand.vmem [shape: bf16[1024,128], index: 8, kind: input, shape index: {}, may-alias: {3,7,8}]
  %s9 = inlined_call_operand.vmem [shape: f32[1024,128], index: 9, kind: input, shape index: {}, may-alias: {9,11}]
  %s10 = inlined_call_operand.vmem [shape: bf16[1024,128], index: 10, kind: output, shape index: {0}]
  %s11 = inlined_call_operand.vmem [shape: f32[1024,128], index: 11, kind: output, shape index: {1}, may-alias: {9,11}]
  %12 = xla_tuple %s10, %s11
  %s13 = sld [smem:[#allocation0]]
  $region116: #{gcn_res_forward.9} parent=0
    _
  %s15 = ssub.s32 1, %s13
  %s16 = scalar_select 0, %s15, %s13
  $region1: #{gcn_res_forward.9} parent=0
    #allocation3 [shape = 'u8[512]{0}', space=smem, size = 0x200, scoped, tag = 'input window, operand 0, single buffered']
    #allocation4 [shape = 's32[2]{0}', space=sflag, size = 0x8, scoped, tag = 'scoped memory for gcn_res_forward.9']
    #allocation5 [shape = 'u8[262144]{0}', space=vmem, size = 0x40000, scoped, tag = 'input window, operand 1']
    %17 = vsyncpa [#allocation4], 0
    loop: start=0, step=1, limit=10
    $region2: #{gcn_res_forward.9} parent=1 // loop_pre_header
      _
    $region3: #{gcn_res_forward.9} parent=1 // loop_header
      %s19 = sphi 0, %s23
      %p20 = scmp.ge.s32.totalorder %s19, 10
      %s26 = sphi 0, %s38
      %s27 = sphi 0, %s34
      %s28 = sphi 0, %s26
      %s29 = sphi 0, %s27
      %s30 = sphi 0, %s28
      %s31 = sphi 0, %s29
      %s39 = sphi 0, %s39
      %s41 = sphi 0, %s39
      %s42 = sphi 0, %s41
      %s56 = sphi 0, %s42
      %s64 = sphi 0, %s66
      %s67 = sphi 0, %s64
      %s68 = sphi 0, %s67
      %s84 = sphi 0, %s68
      %s90 = sphi 0, %s92
      %s93 = sphi 0, %s90
      %s94 = sphi 0, %s93
      %s110 = sphi 0, %s94
      %s116 = sphi 0, %s118
      %s119 = sphi 0, %s116
      %s120 = sphi 0, %s119
      %s136 = sphi 0, %s120
      %s140 = sphi 0, %s140
      %s142 = sphi 0, %s140
      %s143 = sphi 0, %s142
      %s157 = sphi 0, %s143
      %s161 = sphi 0, %s161
      %s163 = sphi 0, %s161
      %s164 = sphi 0, %s163
      %s178 = sphi 0, %s164
      %s184 = sphi 0, %s186
      %s187 = sphi 0, %s184
      %s188 = sphi 0, %s187
      %s204 = sphi 0, %s188
      %s210 = sphi 0, %s212
      %s213 = sphi 0, %s210
      %s214 = sphi 0, %s213
      %s230 = sphi 0, %s214
      %s236 = sphi 0, %s238
      %s239 = sphi 0, %s236
      %s240 = sphi 0, %s239
      %s256 = sphi 0, %s240
      %s262 = sphi 0, %s264
      %s265 = sphi 0, %s262
      %s266 = sphi 0, %s265
      %s282 = sphi 0, %s266
      %s288 = sphi 0, %s290
      %s291 = sphi 0, %s288
      %s292 = sphi 0, %s291
      %s308 = sphi 0, %s292
      %s314 = sphi 0, %s316
      %s317 = sphi 0, %s314
      %s318 = sphi 0, %s317
      %s334 = sphi 0, %s318
    $region4: #{gcn_res_forward.9} parent=1 // loop_header_branch
      %22 = sbr.rel (%p20) target = $region8
    $region5: #{gcn_res_forward.9} parent=1 // loop_body
      %s24 = ssub.s32 %s19, 1
      %s25 = ssub.s32 %s19, 2
      %s32 = sadd.s32 1, %s27
      %p33 = scmp.ge.s32.totalorder %s32, 2
      %s34 = scalar_select %p33, 0, %s32
      %s35 = sadd.s32 1, %s26
      %s36 = scalar_select %p33, %s35, %s26
      %p37 = scmp.ge.s32.totalorder %s36, 4
      %s38 = scalar_select %p37, 0, %s36
      %s40 = sadd.s32 %s39, 1
      %p43 = scmp.eq.s32.totalorder %s19, 7
      %p44 = scmp.ne.s32.totalorder %s39, %s41
      %p45 = scmp.eq.s32.totalorder %s19, 0
      %p46 = por %p44, %p45
      %p47 = scmp.ne.s32.totalorder %s39, %s41
      %p48 = scmp.eq.s32.totalorder %s24, 7
      %p49 = por %p47, %p48
      %p50 = scmp.ne.s32.totalorder %s41, %s42
      %p51 = scmp.eq.s32.totalorder %s24, 0
      %p52 = por %p50, %p51
      %p53 = scmp.ne.s32.totalorder %s41, %s42
      %p54 = scmp.eq.s32.totalorder %s25, 7
      %p55 = por %p53, %p54
      %p57 = scmp.ne.s32.totalorder %s42, %s56
      %p58 = scmp.eq.s32.totalorder %s25, 0
      %p59 = por %p57, %p58
      %s60 = ssub.s32 %s26, %s38
      %s61 = ssub.s32 %s27, %s34
      %s62 = sor.u32 %s60, %s61
      %p63 = scmp.eq.s32.totalorder %s62, 0
      %s65 = sadd.s32 %s64, 1
      %s66 = scalar_select %p63, %s64, %s65
      %p69 = pneg %p63
      %p70 = scmp.eq.s32.totalorder %s19, 7
      %p71 = por %p69, %p70
      %p72 = scmp.ne.s32.totalorder %s64, %s67
      %p73 = scmp.eq.s32.totalorder %s19, 0
      %p74 = por %p72, %p73
      %p75 = scmp.ne.s32.totalorder %s64, %s67
      %p76 = scmp.eq.s32.totalorder %s24, 7
      %p77 = por %p75, %p76
      %p78 = scmp.ne.s32.totalorder %s67, %s68
      %p79 = scmp.eq.s32.totalorder %s24, 0
      %p80 = por %p78, %p79
      %p81 = scmp.ne.s32.totalorder %s67, %s68
      %p82 = scmp.eq.s32.totalorder %s25, 7
      %p83 = por %p81, %p82
      %p85 = scmp.ne.s32.totalorder %s68, %s84
      %p86 = scmp.eq.s32.totalorder %s25, 0
      %p87 = por %p85, %p86
      %s88 = ssub.s32 %s27, %s34
      %p89 = scmp.eq.s32.totalorder %s88, 0
      %s91 = sadd.s32 %s90, 1
      %s92 = scalar_select %p89, %s90, %s91
      %p95 = pneg %p89
      %p96 = scmp.eq.s32.totalorder %s19, 7
      %p97 = por %p95, %p96
      %p98 = scmp.ne.s32.totalorder %s90, %s93
      %p99 = scmp.eq.s32.totalorder %s19, 0
      %p100 = por %p98, %p99
      %p101 = scmp.ne.s32.totalorder %s90, %s93
      %p102 = scmp.eq.s32.totalorder %s24, 7
      %p103 = por %p101, %p102
      %p104 = scmp.ne.s32.totalorder %s93, %s94
      %p105 = scmp.eq.s32.totalorder %s24, 0
      %p106 = por %p104, %p105
      %p107 = scmp.ne.s32.totalorder %s93, %s94
      %p108 = scmp.eq.s32.totalorder %s25, 7
      %p109 = por %p107, %p108
      %p111 = scmp.ne.s32.totalorder %s94, %s110
      %p112 = scmp.eq.s32.totalorder %s25, 0
      %p113 = por %p111, %p112
      %s114 = ssub.s32 %s27, %s34
      %p115 = scmp.eq.s32.totalorder %s114, 0
      %s117 = sadd.s32 %s116, 1
      %s118 = scalar_select %p115, %s116, %s117
      %p121 = pneg %p115
      %p122 = scmp.eq.s32.totalorder %s19, 7
      %p123 = por %p121, %p122
      %p124 = scmp.ne.s32.totalorder %s116, %s119
      %p125 = scmp.eq.s32.totalorder %s19, 0
      %p126 = por %p124, %p125
      %p127 = scmp.ne.s32.totalorder %s116, %s119
      %p128 = scmp.eq.s32.totalorder %s24, 7
      %p129 = por %p127, %p128
      %p130 = scmp.ne.s32.totalorder %s119, %s120
      %p131 = scmp.eq.s32.totalorder %s24, 0
      %p132 = por %p130, %p131
      %p133 = scmp.ne.s32.totalorder %s119, %s120
      %p134 = scmp.eq.s32.totalorder %s25, 7
      %p135 = por %p133, %p134
      %p137 = scmp.ne.s32.totalorder %s120, %s136
      %p138 = scmp.eq.s32.totalorder %s25, 0
      %p139 = por %p137, %p138
      %s141 = sadd.s32 %s140, 1
      %p144 = scmp.eq.s32.totalorder %s19, 7
      %p145 = scmp.ne.s32.totalorder %s140, %s142
      %p146 = scmp.eq.s32.totalorder %s19, 0
      %p147 = por %p145, %p146
      %p148 = scmp.ne.s32.totalorder %s140, %s142
      %p149 = scmp.eq.s32.totalorder %s24, 7
      %p150 = por %p148, %p149
      %p151 = scmp.ne.s32.totalorder %s142, %s143
      %p152 = scmp.eq.s32.totalorder %s24, 0
      %p153 = por %p151, %p152
      %p154 = scmp.ne.s32.totalorder %s142, %s143
      %p155 = scmp.eq.s32.totalorder %s25, 7
      %p156 = por %p154, %p155
      %p158 = scmp.ne.s32.totalorder %s143, %s157
      %p159 = scmp.eq.s32.totalorder %s25, 0
      %p160 = por %p158, %p159
      %s162 = sadd.s32 %s161, 1
      %p165 = scmp.eq.s32.totalorder %s19, 7
      %p166 = scmp.ne.s32.totalorder %s161, %s163
      %p167 = scmp.eq.s32.totalorder %s19, 0
      %p168 = por %p166, %p167
      %p169 = scmp.ne.s32.totalorder %s161, %s163
      %p170 = scmp.eq.s32.totalorder %s24, 7
      %p171 = por %p169, %p170
      %p172 = scmp.ne.s32.totalorder %s163, %s164
      %p173 = scmp.eq.s32.totalorder %s24, 0
      %p174 = por %p172, %p173
      %p175 = scmp.ne.s32.totalorder %s163, %s164
      %p176 = scmp.eq.s32.totalorder %s25, 7
      %p177 = por %p175, %p176
      %p179 = scmp.ne.s32.totalorder %s164, %s178
      %p180 = scmp.eq.s32.totalorder %s25, 0
      %p181 = por %p179, %p180
      %s182 = ssub.s32 %s26, %s38
      %p183 = scmp.eq.s32.totalorder %s182, 0
      %s185 = sadd.s32 %s184, 1
      %s186 = scalar_select %p183, %s184, %s185
      %p189 = pneg %p183
      %p190 = scmp.eq.s32.totalorder %s19, 7
      %p191 = por %p189, %p190
      %p192 = scmp.ne.s32.totalorder %s184, %s187
      %p193 = scmp.eq.s32.totalorder %s19, 0
      %p194 = por %p192, %p193
      %p195 = scmp.ne.s32.totalorder %s184, %s187
      %p196 = scmp.eq.s32.totalorder %s24, 7
      %p197 = por %p195, %p196
      %p198 = scmp.ne.s32.totalorder %s187, %s188
      %p199 = scmp.eq.s32.totalorder %s24, 0
      %p200 = por %p198, %p199
      %p201 = scmp.ne.s32.totalorder %s187, %s188
      %p202 = scmp.eq.s32.totalorder %s25, 7
      %p203 = por %p201, %p202
      %p205 = scmp.ne.s32.totalorder %s188, %s204
      %p206 = scmp.eq.s32.totalorder %s25, 0
      %p207 = por %p205, %p206
      %s208 = ssub.s32 %s26, %s38
      %p209 = scmp.eq.s32.totalorder %s208, 0
      %s211 = sadd.s32 %s210, 1
      %s212 = scalar_select %p209, %s210, %s211
      %p215 = pneg %p209
      %p216 = scmp.eq.s32.totalorder %s19, 7
      %p217 = por %p215, %p216
      %p218 = scmp.ne.s32.totalorder %s210, %s213
      %p219 = scmp.eq.s32.totalorder %s19, 0
      %p220 = por %p218, %p219
      %p221 = scmp.ne.s32.totalorder %s210, %s213
      %p222 = scmp.eq.s32.totalorder %s24, 7
      %p223 = por %p221, %p222
      %p224 = scmp.ne.s32.totalorder %s213, %s214
      %p225 = scmp.eq.s32.totalorder %s24, 0
      %p226 = por %p224, %p225
      %p227 = scmp.ne.s32.totalorder %s213, %s214
      %p228 = scmp.eq.s32.totalorder %s25, 7
      %p229 = por %p227, %p228
      %p231 = scmp.ne.s32.totalorder %s214, %s230
      %p232 = scmp.eq.s32.totalorder %s25, 0
      %p233 = por %p231, %p232
      %s234 = ssub.s32 %s26, %s38
      %p235 = scmp.eq.s32.totalorder %s234, 0
      %s237 = sadd.s32 %s236, 1
      %s238 = scalar_select %p235, %s236, %s237
      %p241 = pneg %p235
      %p242 = scmp.eq.s32.totalorder %s19, 7
      %p243 = por %p241, %p242
      %p244 = scmp.ne.s32.totalorder %s236, %s239
      %p245 = scmp.eq.s32.totalorder %s19, 0
      %p246 = por %p244, %p245
      %p247 = scmp.ne.s32.totalorder %s236, %s239
      %p248 = scmp.eq.s32.totalorder %s24, 7
      %p249 = por %p247, %p248
      %p250 = scmp.ne.s32.totalorder %s239, %s240
      %p251 = scmp.eq.s32.totalorder %s24, 0
      %p252 = por %p250, %p251
      %p253 = scmp.ne.s32.totalorder %s239, %s240
      %p254 = scmp.eq.s32.totalorder %s25, 7
      %p255 = por %p253, %p254
      %p257 = scmp.ne.s32.totalorder %s240, %s256
      %p258 = scmp.eq.s32.totalorder %s25, 0
      %p259 = por %p257, %p258
      %s260 = ssub.s32 %s26, %s38
      %p261 = scmp.eq.s32.totalorder %s260, 0
      %s263 = sadd.s32 %s262, 1
      %s264 = scalar_select %p261, %s262, %s263
      %p267 = pneg %p261
      %p268 = scmp.eq.s32.totalorder %s19, 7
      %p269 = por %p267, %p268
      %p270 = scmp.ne.s32.totalorder %s262, %s265
      %p271 = scmp.eq.s32.totalorder %s19, 0
      %p272 = por %p270, %p271
      %p273 = scmp.ne.s32.totalorder %s262, %s265
      %p274 = scmp.eq.s32.totalorder %s24, 7
      %p275 = por %p273, %p274
      %p276 = scmp.ne.s32.totalorder %s265, %s266
      %p277 = scmp.eq.s32.totalorder %s24, 0
      %p278 = por %p276, %p277
      %p279 = scmp.ne.s32.totalorder %s265, %s266
      %p280 = scmp.eq.s32.totalorder %s25, 7
      %p281 = por %p279, %p280
      %p283 = scmp.ne.s32.totalorder %s266, %s282
      %p284 = scmp.eq.s32.totalorder %s25, 0
      %p285 = por %p283, %p284
      %s286 = ssub.s32 %s26, %s38
      %p287 = scmp.eq.s32.totalorder %s286, 0
      %s289 = sadd.s32 %s288, 1
      %s290 = scalar_select %p287, %s288, %s289
      %p293 = pneg %p287
      %p294 = scmp.eq.s32.totalorder %s19, 7
      %p295 = por %p293, %p294
      %p296 = scmp.ne.s32.totalorder %s288, %s291
      %p297 = scmp.eq.s32.totalorder %s19, 0
      %p298 = por %p296, %p297
      %p299 = scmp.ne.s32.totalorder %s288, %s291
      %p300 = scmp.eq.s32.totalorder %s24, 7
      %p301 = por %p299, %p300
      %p302 = scmp.ne.s32.totalorder %s291, %s292
      %p303 = scmp.eq.s32.totalorder %s24, 0
      %p304 = por %p302, %p303
      %p305 = scmp.ne.s32.totalorder %s291, %s292
      %p306 = scmp.eq.s32.totalorder %s25, 7
      %p307 = por %p305, %p306
      %p309 = scmp.ne.s32.totalorder %s292, %s308
      %p310 = scmp.eq.s32.totalorder %s25, 0
      %p311 = por %p309, %p310
      %s312 = ssub.s32 %s26, %s38
      %p313 = scmp.eq.s32.totalorder %s312, 0
      %s315 = sadd.s32 %s314, 1
      %s316 = scalar_select %p313, %s314, %s315
      %p319 = pneg %p313
      %p320 = scmp.eq.s32.totalorder %s19, 7
      %p321 = por %p319, %p320
      %p322 = scmp.ne.s32.totalorder %s314, %s317
      %p323 = scmp.eq.s32.totalorder %s19, 0
      %p324 = por %p322, %p323
      %p325 = scmp.ne.s32.totalorder %s314, %s317
      %p326 = scmp.eq.s32.totalorder %s24, 7
      %p327 = por %p325, %p326
      %p328 = scmp.ne.s32.totalorder %s317, %s318
      %p329 = scmp.eq.s32.totalorder %s24, 0
      %p330 = por %p328, %p329
      %p331 = scmp.ne.s32.totalorder %s317, %s318
      %p332 = scmp.eq.s32.totalorder %s25, 7
      %p333 = por %p331, %p332
      %p335 = scmp.ne.s32.totalorder %s318, %s334
      %p336 = scmp.eq.s32.totalorder %s25, 0
      %p337 = por %p335, %p336
      %p338 = scmp.le.s32.totalorder 1, %s19
      %p339 = scmp.lt.s32.totalorder %s19, 9
      %p340 = pnand %p338, %p339
      %p341 = pneg %p340
      // Predicated region
      $region9: #{gcn_res_forward.9} parent=5 // pred_check
        _
      $region10: #{gcn_res_forward.9} parent=5 // pred_check_branch
        %343 = sbr.rel (%p340) target = $region12
      $region11: #{gcn_res_forward.9} parent=5 // pred_region
        %s344 = ssub.s32 %s19, 1
        // Predicated region
        $region13: #{gcn_res_forward.9} parent=11 // pred_check
          %p345 = pneg %p52
        $region14: #{gcn_res_forward.9} parent=11 // pred_check_branch
          %347 = sbr.rel (%p345) target = $region16
        $region15: #{gcn_res_forward.9} parent=11 // pred_region
          %s349 = ssub.s32 16, 16
          %350 = vsyncadd [#allocation4], %s349
          %s352 = sshll.u32 %s0, 4
          %s353 = int_to_ptr.vmem [resolvable:$true] %s352
          %355 = dma.vmem_to_smem %s353, 16, [#allocation3], [#allocation4]
        $region16: #{gcn_res_forward.9} parent=11 // pred_fallthru
          _
        // Predicated region
        $region17: #{gcn_res_forward.9} parent=11 // pred_check
          %p356 = pneg %p153
        $region18: #{gcn_res_forward.9} parent=11 // pred_check_branch
          %358 = sbr.rel (%p356) target = $region20
        $region19: #{gcn_res_forward.9} parent=11 // pred_region
          _
        $region20: #{gcn_res_forward.9} parent=11 // pred_fallthru
          _
        // Predicated region
        $region21: #{gcn_res_forward.9} parent=11 // pred_check
          %p359 = pneg %p174
        $region22: #{gcn_res_forward.9} parent=11 // pred_check_branch
          %361 = sbr.rel (%p359) target = $region24
        $region23: #{gcn_res_forward.9} parent=11 // pred_region
          _
        $region24: #{gcn_res_forward.9} parent=11 // pred_fallthru
          _
      $region12: #{gcn_res_forward.9} parent=5 // pred_fallthru
        _
      %p362 = scmp.lt.s32.totalorder %s19, 8
      // Predicated region
      $region25: #{gcn_res_forward.9} parent=5 // pred_check
        %p363 = pneg %p362
      $region26: #{gcn_res_forward.9} parent=5 // pred_check_branch
        %365 = sbr.rel (%p363) target = $region28
      $region27: #{gcn_res_forward.9} parent=5 // pred_region
        // Predicated region
        $region29: #{gcn_res_forward.9} parent=27 // pred_check
          %p366 = pneg %p74
        $region30: #{gcn_res_forward.9} parent=27 // pred_check_branch
          %368 = sbr.rel (%p366) target = $region32
        $region31: #{gcn_res_forward.9} parent=27 // pred_region
          %s369 = sand.u32 %s64, 1
          %s370 = sand.u32 %s64, 1
          %s371 = smul.addr %s370, 256
          %s372 = scalar_lea.vmem [#allocation5], %s371
          %s373 = smul.u32 8, %s26
          %s374 = smul.u32 4, %s27
          %s375 = smul.addr %s373, 8
          %s376 = sadd.s32 %s374, %s375
          %s377 = smul.addr %s376, 8
          %s378 = scalar_lea.vmem %s1, %s377
          // Predicated region
          $region33: #{gcn_res_forward.9} parent=31 // pred_check
            _
          $region34: #{gcn_res_forward.9} parent=31 // pred_check_branch
            %380 = sbr.rel (0) target = $region36
          $region35: #{gcn_res_forward.9} parent=31 // pred_region
            // Predicated region
            $region37: #{gcn_res_forward.9} parent=35 // pred_check
              _
            $region38: #{gcn_res_forward.9} parent=35 // pred_check_branch
              %382 = sbr.rel (0) target = $region40
            $region39: #{gcn_res_forward.9} parent=35 // pred_region
              loop: start=0, step=1, limit=1
              $region41: #{gcn_res_forward.9} parent=39 // loop_pre_header
                _
              $region42: #{gcn_res_forward.9} parent=39 // loop_header
                %s384 = sphi 0, %s388
                %p385 = scmp.ge.s32.totalorder %s384, 1
                %s389 = sphi %s378, %s378
                %s390 = sphi %s372, %s372
              $region43: #{gcn_res_forward.9} parent=39 // loop_header_branch
                %387 = sbr.rel (%p385) target = $region47
              $region44: #{gcn_res_forward.9} parent=39 // loop_body
                %v391 = vld [vmem:[%s389] sm:$0xff]
                %392 = vst [vmem:[%s390] sm:$0xff] %v391
                %v393 = vld [vmem:[%s389 + $0x8] sm:$0xff]
                %394 = vst [vmem:[%s390 + $0x8] sm:$0xff] %v393
                %v395 = vld [vmem:[%s389 + $0x10] sm:$0xff]
                %396 = vst [vmem:[%s390 + $0x10] sm:$0xff] %v395
                %v397 = vld [vmem:[%s389 + $0x18] sm:$0xff]
                %398 = vst [vmem:[%s390 + $0x18] sm:$0xff] %v397
                %v399 = vld [vmem:[%s389 + $0x40] sm:$0xff]
                %400 = vst [vmem:[%s390 + $0x20] sm:$0xff] %v399
                %v401 = vld [vmem:[%s389 + $0x48] sm:$0xff]
                %402 = vst [vmem:[%s390 + $0x28] sm:$0xff] %v401
                %v403 = vld [vmem:[%s389 + $0x50] sm:$0xff]
                %404 = vst [vmem:[%s390 + $0x30] sm:$0xff] %v403
                %v405 = vld [vmem:[%s389 + $0x58] sm:$0xff]
                %406 = vst [vmem:[%s390 + $0x38] sm:$0xff] %v405
                %v407 = vld [vmem:[%s389 + $0x80] sm:$0xff]
                %408 = vst [vmem:[%s390 + $0x40] sm:$0xff] %v407
                %v409 = vld [vmem:[%s389 + $0x88] sm:$0xff]
                %410 = vst [vmem:[%s390 + $0x48] sm:$0xff] %v409
                %v411 = vld [vmem:[%s389 + $0x90] sm:$0xff]
                %412 = vst [vmem:[%s390 + $0x50] sm:$0xff] %v411
                %v413 = vld [vmem:[%s389 + $0x98] sm:$0xff]
                %414 = vst [vmem:[%s390 + $0x58] sm:$0xff] %v413
                %v415 = vld [vmem:[%s389 + $0xc0] sm:$0xff]
                %416 = vst [vmem:[%s390 + $0x60] sm:$0xff] %v415
                %v417 = vld [vmem:[%s389 + $0xc8] sm:$0xff]
                %418 = vst [vmem:[%s390 + $0x68] sm:$0xff] %v417
                %v419 = vld [vmem:[%s389 + $0xd0] sm:$0xff]
                %420 = vst [vmem:[%s390 + $0x70] sm:$0xff] %v419
                %v421 = vld [vmem:[%s389 + $0xd8] sm:$0xff]
                %422 = vst [vmem:[%s390 + $0x78] sm:$0xff] %v421
                %v423 = vld [vmem:[%s389 + $0x100] sm:$0xff]
                %424 = vst [vmem:[%s390 + $0x80] sm:$0xff] %v423
                %v425 = vld [vmem:[%s389 + $0x108] sm:$0xff]
                %426 = vst [vmem:[%s390 + $0x88] sm:$0xff] %v425
                %v427 = vld [vmem:[%s389 + $0x110] sm:$0xff]
                %428 = vst [vmem:[%s390 + $0x90] sm:$0xff] %v427
                %v429 = vld [vmem:[%s389 + $0x118] sm:$0xff]
                %430 = vst [vmem:[%s390 + $0x98] sm:$0xff] %v429
                %v431 = vld [vmem:[%s389 + $0x140] sm:$0xff]
                %432 = vst [vmem:[%s390 + $0xa0] sm:$0xff] %v431
                %v433 = vld [vmem:[%s389 + $0x148] sm:$0xff]
                %434 = vst [vmem:[%s390 + $0xa8] sm:$0xff] %v433
                %v435 = vld [vmem:[%s389 + $0x150] sm:$0xff]
                %436 = vst [vmem:[%s390 + $0xb0] sm:$0xff] %v435
                %v437 = vld [vmem:[%s389 + $0x158] sm:$0xff]
                %438 = vst [vmem:[%s390 + $0xb8] sm:$0xff] %v437
                %v439 = vld [vmem:[%s389 + $0x180] sm:$0xff]
                %440 = vst [vmem:[%s390 + $0xc0] sm:$0xff] %v439
                %v441 = vld [vmem:[%s389 + $0x188] sm:$0xff]
                %442 = vst [vmem:[%s390 + $0xc8] sm:$0xff] %v441
                %v443 = vld [vmem:[%s389 + $0x190] sm:$0xff]
                %444 = vst [vmem:[%s390 + $0xd0] sm:$0xff] %v443
                %v445 = vld [vmem:[%s389 + $0x198] sm:$0xff]
                %446 = vst [vmem:[%s390 + $0xd8] sm:$0xff] %v445
                %v447 = vld [vmem:[%s389 + $0x1c0] sm:$0xff]
                %448 = vst [vmem:[%s390 + $0xe0] sm:$0xff] %v447
                %v449 = vld [vmem:[%s389 + $0x1c8] sm:$0xff]
                %450 = vst [vmem:[%s390 + $0xe8] sm:$0xff] %v449
                %v451 = vld [vmem:[%s389 + $0x1d0] sm:$0xff]
                %452 = vst [vmem:[%s390 + $0xf0] sm:$0xff] %v451
                %v453 = vld [vmem:[%s389 + $0x1d8] sm:$0xff]
                %454 = vst [vmem:[%s390 + $0xf8] sm:$0xff] %v453
              $region45: #{gcn_res_forward.9} parent=39 // loop_footer
                %s388 = sadd.s32 1, %s384
              $region46: #{gcn_res_forward.9} parent=39 // loop_footer_branch
                %383 = sbr.rel target = $region42
              $region47: #{gcn_res_forward.9} parent=39 // loop_exit
                _
            $region40: #{gcn_res_forward.9} parent=35 // pred_fallthru
              _
            // Predicated region
            $region48: #{gcn_res_forward.9} parent=35 // pred_check
              _
            $region49: #{gcn_res_forward.9} parent=35 // pred_check_branch
              %456 = sbr.rel target = $region51
            $region50: #{gcn_res_forward.9} parent=35 // pred_region
              _
            $region51: #{gcn_res_forward.9} parent=35 // pred_fallthru
              _
          $region36: #{gcn_res_forward.9} parent=31 // pred_fallthru
            _
          %457 = vnop
        $region32: #{gcn_res_forward.9} parent=27 // pred_fallthru
          _
        // Predicated region
        $region52: #{gcn_res_forward.9} parent=27 // pred_check
          %p458 = pneg %p100
        $region53: #{gcn_res_forward.9} parent=27 // pred_check_branch
          %460 = sbr.rel (%p458) target = $region55
        $region54: #{gcn_res_forward.9} parent=27 // pred_region
          %s461 = smul.u32 64, %s27
          %p462 = scmp.lt.s32.totalorder %s461, 127
          %s463 = scalar_select %p462, %s461, 127
          %s464 = smul.addr %s463, 8
          %s465 = scalar_lea.vmem %s2, %s464
          %s466 = smul.u32 64, %s27
        $region55: #{gcn_res_forward.9} parent=27 // pred_fallthru
          _
        // Predicated region
        $region56: #{gcn_res_forward.9} parent=27 // pred_check
          %p467 = pneg %p126
        $region57: #{gcn_res_forward.9} parent=27 // pred_check_branch
          %469 = sbr.rel (%p467) target = $region59
        $region58: #{gcn_res_forward.9} parent=27 // pred_region
          %s470 = smul.u32 64, %s27
          %p471 = scmp.lt.s32.totalorder %s470, 127
          %s472 = scalar_select %p471, %s470, 127
          %s473 = smul.addr %s472, 4
          %s474 = scalar_lea.vmem %s3, %s473
          %s475 = smul.u32 64, %s27
        $region59: #{gcn_res_forward.9} parent=27 // pred_fallthru
          _
        // Predicated region
        $region60: #{gcn_res_forward.9} parent=27 // pred_check
          %p476 = pneg %p194
        $region61: #{gcn_res_forward.9} parent=27 // pred_check_branch
          %478 = sbr.rel (%p476) target = $region63
        $region62: #{gcn_res_forward.9} parent=27 // pred_region
          %s479 = smul.u32 32, %s26
          %p480 = scmp.lt.s32.totalorder %s479, 127
          %s481 = scalar_select %p480, %s479, 127
          %s482 = smul.addr %s481, 8
          %s483 = scalar_lea.vmem %s6, %s482
          %s484 = smul.u32 32, %s26
        $region63: #{gcn_res_forward.9} parent=27 // pred_fallthru
          _
        // Predicated region
        $region64: #{gcn_res_forward.9} parent=27 // pred_check
          %p485 = pneg %p220
        $region65: #{gcn_res_forward.9} parent=27 // pred_check_branch
          %487 = sbr.rel (%p485) target = $region67
        $region66: #{gcn_res_forward.9} parent=27 // pred_region
          %s488 = smul.u32 32, %s26
          %p489 = scmp.lt.s32.totalorder %s488, 127
          %s490 = scalar_select %p489, %s488, 127
          %s491 = smul.addr %s490, 4
          %s492 = scalar_lea.vmem %s7, %s491
          %s493 = smul.u32 32, %s26
        $region67: #{gcn_res_forward.9} parent=27 // pred_fallthru
          _
        // Predicated region
        $region68: #{gcn_res_forward.9} parent=27 // pred_check
          %p494 = pneg %p246
        $region69: #{gcn_res_forward.9} parent=27 // pred_check_branch
          %496 = sbr.rel (%p494) target = $region71
        $region70: #{gcn_res_forward.9} parent=27 // pred_region
          %s497 = smul.u32 32, %s26
          %p498 = scmp.lt.s32.totalorder %s497, 127
          %s499 = scalar_select %p498, %s497, 127
          %s500 = smul.addr %s499, 4
          %s501 = scalar_lea.vmem %s8, %s500
          %s502 = smul.u32 32, %s26
        $region71: #{gcn_res_forward.9} parent=27 // pred_fallthru
          _
        // Predicated region
        $region72: #{gcn_res_forward.9} parent=27 // pred_check
          %p503 = pneg %p272
        $region73: #{gcn_res_forward.9} parent=27 // pred_check_branch
          %505 = sbr.rel (%p503) target = $region75
        $region74: #{gcn_res_forward.9} parent=27 // pred_region
          %s506 = smul.u32 32, %s26
          %p507 = scmp.lt.s32.totalorder %s506, 127
          %s508 = scalar_select %p507, %s506, 127
          %s509 = smul.addr %s508, 8
          %s510 = scalar_lea.vmem %s9, %s509
          %s511 = smul.u32 32, %s26
        $region75: #{gcn_res_forward.9} parent=27 // pred_fallthru
          _
      $region28: #{gcn_res_forward.9} parent=5 // pred_fallthru
        _
      %p512 = scmp.le.s32.totalorder 1, %s19
      %p513 = scmp.lt.s32.totalorder %s19, 9
      %p514 = pnand %p512, %p513
      %p515 = pneg %p514
      // Predicated region
      $region76: #{gcn_res_forward.9} parent=5 // pred_check
        _
      $region77: #{gcn_res_forward.9} parent=5 // pred_check_branch
        %517 = sbr.rel (%p514) target = $region79
      $region78: #{gcn_res_forward.9} parent=5 // pred_region
        %s518 = ssub.s32 %s19, 1
        // Predicated region
        $region80: #{gcn_res_forward.9} parent=78 // pred_check
          %p519 = pneg %p52
        $region81: #{gcn_res_forward.9} parent=78 // pred_check_branch
          %521 = sbr.rel (%p519) target = $region83
        $region82: #{gcn_res_forward.9} parent=78 // pred_region
          %522 = dma.done [#allocation4], 16
        $region83: #{gcn_res_forward.9} parent=78 // pred_fallthru
          _
        %s523 = sand.u32 %s67, 1
        %s524 = sand.u32 %s67, 1
        %s525 = smul.addr %s524, 256
        %s526 = scalar_lea.vmem [#allocation5], %s525
        // Predicated region
        $region84: #{gcn_res_forward.9} parent=78 // pred_check
          %p527 = pneg %p80
        $region85: #{gcn_res_forward.9} parent=78 // pred_check_branch
          %529 = sbr.rel (%p527) target = $region87
        $region86: #{gcn_res_forward.9} parent=78 // pred_region
          _
        $region87: #{gcn_res_forward.9} parent=78 // pred_fallthru
          _
        %530 = sfence
        %p531 = pneg %p52
        %p532 = pneg %p49
        %s533 = sand.u32 %s67, 1
        %s534 = sand.u32 %s67, 1
        %s535 = smul.addr %s534, 256
        %s536 = scalar_lea.vmem [#allocation5], %s535
        %p537 = pneg %p80
        %p538 = pneg %p77
        %s539 = smul.u32 64, %s29
        %p540 = scmp.lt.s32.totalorder %s539, 127
        %s541 = scalar_select %p540, %s539, 127
        %s542 = smul.addr %s541, 8
        %s543 = scalar_lea.vmem %s2, %s542
        %p544 = pneg %p106
        %p545 = pneg %p103
        %s546 = smul.u32 64, %s29
        %p547 = scmp.lt.s32.totalorder %s546, 127
        %s548 = scalar_select %p547, %s546, 127
        %s549 = smul.addr %s548, 4
        %s550 = scalar_lea.vmem %s3, %s549
        %p551 = pneg %p132
        %p552 = pneg %p129
        %p553 = pneg %p153
        %p554 = pneg %p150
        %p555 = pneg %p174
        %p556 = pneg %p171
        %s557 = smul.u32 32, %s28
        %p558 = scmp.lt.s32.totalorder %s557, 127
        %s559 = scalar_select %p558, %s557, 127
        %s560 = smul.addr %s559, 8
        %s561 = scalar_lea.vmem %s6, %s560
        %p562 = pneg %p200
        %p563 = pneg %p197
        %s564 = smul.u32 32, %s28
        %p565 = scmp.lt.s32.totalorder %s564, 127
        %s566 = scalar_select %p565, %s564, 127
        %s567 = smul.addr %s566, 4
        %s568 = scalar_lea.vmem %s7, %s567
        %p569 = pneg %p226
        %p570 = pneg %p223
        %s571 = smul.u32 32, %s28
        %p572 = scmp.lt.s32.totalorder %s571, 127
        %s573 = scalar_select %p572, %s571, 127
        %s574 = smul.addr %s573, 4
        %s575 = scalar_lea.vmem %s8, %s574
        %p576 = pneg %p252
        %p577 = pneg %p249
        %s578 = smul.u32 32, %s28
        %p579 = scmp.lt.s32.totalorder %s578, 127
        %s580 = scalar_select %p579, %s578, 127
        %s581 = smul.addr %s580, 8
        %s582 = scalar_lea.vmem %s9, %s581
        %p583 = pneg %p278
        %p584 = pneg %p275
        %p585 = pneg %p304
        %p586 = pneg %p301
        %s587 = smul.u32 32, %s28
        %p588 = scmp.lt.s32.totalorder %s587, 127
        %s589 = scalar_select %p588, %s587, 127
        %s590 = smul.addr %s589, 4
        %s591 = scalar_lea.vmem %s10, %s590
        %p592 = pneg %p330
        %p593 = pneg %p327
        %s594 = smul.u32 32, %s28
        %p595 = scmp.lt.s32.totalorder %s594, 127
        %s596 = scalar_select %p595, %s594, 127
        %s597 = smul.addr %s596, 8
        %s598 = scalar_lea.vmem %s11, %s597
        %s599 = smul.u32 8, %s28
        %s600 = smul.u32 4, %s29
        %s601 = smul.u32 64, %s29
        %p602 = scmp.lt.s32.totalorder %s601, 127
        %s603 = scalar_select %p602, %s601, 127
        %s604 = smul.addr %s603, 8
        %s605 = scalar_lea.vmem %s2, %s604
        %s606 = smul.u32 64, %s29
        %s607 = smul.u32 64, %s29
        %p608 = scmp.lt.s32.totalorder %s607, 127
        %s609 = scalar_select %p608, %s607, 127
        %s610 = smul.addr %s609, 4
        %s611 = scalar_lea.vmem %s3, %s610
        %s612 = smul.u32 64, %s29
        %s613 = smul.u32 32, %s28
        %p614 = scmp.lt.s32.totalorder %s613, 127
        %s615 = scalar_select %p614, %s613, 127
        %s616 = smul.addr %s615, 8
        %s617 = scalar_lea.vmem %s6, %s616
        %s618 = smul.u32 32, %s28
        %s619 = smul.u32 32, %s28
        %p620 = scmp.lt.s32.totalorder %s619, 127
        %s621 = scalar_select %p620, %s619, 127
        %s622 = smul.addr %s621, 4
        %s623 = scalar_lea.vmem %s7, %s622
        %s624 = smul.u32 32, %s28
        %s625 = smul.u32 32, %s28
        %p626 = scmp.lt.s32.totalorder %s625, 127
        %s627 = scalar_select %p626, %s625, 127
        %s628 = smul.addr %s627, 4
        %s629 = scalar_lea.vmem %s8, %s628
        %s630 = smul.u32 32, %s28
        %s631 = smul.u32 32, %s28
        %p632 = scmp.lt.s32.totalorder %s631, 127
        %s633 = scalar_select %p632, %s631, 127
        %s634 = smul.addr %s633, 8
        %s635 = scalar_lea.vmem %s9, %s634
        %s636 = smul.u32 32, %s28
        %s637 = smul.u32 32, %s28
        %p638 = scmp.lt.s32.totalorder %s637, 127
        %s639 = scalar_select %p638, %s637, 127
        %s640 = smul.addr %s639, 4
        %s641 = scalar_lea.vmem %s10, %s640
        %s642 = smul.u32 32, %s28
        %s643 = smul.u32 32, %s28
        %p644 = scmp.lt.s32.totalorder %s643, 127
        %s645 = scalar_select %p644, %s643, 127
        %s646 = smul.addr %s645, 8
        %s647 = scalar_lea.vmem %s11, %s646
        %s648 = smul.u32 32, %s28
        %p650 = scmp.eq.s32.totalorder %s29, 0
        // Predicated region
        $region88: #{gcn_res_forward.9} parent=78 // pred_check
          %p651 = pneg %p650
        $region89: #{gcn_res_forward.9} parent=78 // pred_check_branch
          %653 = sbr.rel (%p651) target = $region91
        $region90: #{gcn_res_forward.9} parent=78 // pred_region
          %654 = vst [vmem:[#allocation2] sm:$0xff] 0.0
          %655 = vst [vmem:[#allocation2 + $0x8] sm:$0xff] 0.0
          %656 = vst [vmem:[#allocation2 + $0x10] sm:$0xff] 0.0
          %657 = vst [vmem:[#allocation2 + $0x18] sm:$0xff] 0.0
          %658 = vst [vmem:[#allocation2 + $0x20] sm:$0xff] 0.0
          %659 = vst [vmem:[#allocation2 + $0x28] sm:$0xff] 0.0
          %660 = vst [vmem:[#allocation2 + $0x30] sm:$0xff] 0.0
          %661 = vst [vmem:[#allocation2 + $0x38] sm:$0xff] 0.0
          %662 = vst [vmem:[#allocation2 + $0x40] sm:$0xff] 0.0
          %663 = vst [vmem:[#allocation2 + $0x48] sm:$0xff] 0.0
          %664 = vst [vmem:[#allocation2 + $0x50] sm:$0xff] 0.0
          %665 = vst [vmem:[#allocation2 + $0x58] sm:$0xff] 0.0
          %666 = vst [vmem:[#allocation2 + $0x60] sm:$0xff] 0.0
          %667 = vst [vmem:[#allocation2 + $0x68] sm:$0xff] 0.0
          %668 = vst [vmem:[#allocation2 + $0x70] sm:$0xff] 0.0
          %669 = vst [vmem:[#allocation2 + $0x78] sm:$0xff] 0.0
          %670 = vst [vmem:[#allocation2 + $0x80] sm:$0xff] 0.0
          %671 = vst [vmem:[#allocation2 + $0x88] sm:$0xff] 0.0
          %672 = vst [vmem:[#allocation2 + $0x90] sm:$0xff] 0.0
          %673 = vst [vmem:[#allocation2 + $0x98] sm:$0xff] 0.0
          %674 = vst [vmem:[#allocation2 + $0xa0] sm:$0xff] 0.0
          %675 = vst [vmem:[#allocation2 + $0xa8] sm:$0xff] 0.0
          %676 = vst [vmem:[#allocation2 + $0xb0] sm:$0xff] 0.0
          %677 = vst [vmem:[#allocation2 + $0xb8] sm:$0xff] 0.0
          %678 = vst [vmem:[#allocation2 + $0xc0] sm:$0xff] 0.0
          %679 = vst [vmem:[#allocation2 + $0xc8] sm:$0xff] 0.0
          %680 = vst [vmem:[#allocation2 + $0xd0] sm:$0xff] 0.0
          %681 = vst [vmem:[#allocation2 + $0xd8] sm:$0xff] 0.0
          %682 = vst [vmem:[#allocation2 + $0xe0] sm:$0xff] 0.0
          %683 = vst [vmem:[#allocation2 + $0xe8] sm:$0xff] 0.0
          %684 = vst [vmem:[#allocation2 + $0xf0] sm:$0xff] 0.0
          %685 = vst [vmem:[#allocation2 + $0xf8] sm:$0xff] 0.0
        $region91: #{gcn_res_forward.9} parent=78 // pred_fallthru
          _
        %v686 = vld [vmem:[%s526] sm:$0xff]
        %v687 = vld [vmem:[%s526 + $0x8] sm:$0xff]
        %v688 = vld [vmem:[%s526 + $0x10] sm:$0xff]
        %v689 = vld [vmem:[%s526 + $0x18] sm:$0xff]
        %v690 = vld [vmem:[%s526 + $0x20] sm:$0xff]
        %v691 = vld [vmem:[%s526 + $0x28] sm:$0xff]
        %v692 = vld [vmem:[%s526 + $0x30] sm:$0xff]
        %v693 = vld [vmem:[%s526 + $0x38] sm:$0xff]
        %v694 = vld [vmem:[%s526 + $0x40] sm:$0xff]
        %v695 = vld [vmem:[%s526 + $0x48] sm:$0xff]
        %v696 = vld [vmem:[%s526 + $0x50] sm:$0xff]
        %v697 = vld [vmem:[%s526 + $0x58] sm:$0xff]
        %v698 = vld [vmem:[%s526 + $0x60] sm:$0xff]
        %v699 = vld [vmem:[%s526 + $0x68] sm:$0xff]
        %v700 = vld [vmem:[%s526 + $0x70] sm:$0xff]
        %v701 = vld [vmem:[%s526 + $0x78] sm:$0xff]
        %v702 = vld [vmem:[%s526 + $0x80] sm:$0xff]
        %v703 = vld [vmem:[%s526 + $0x88] sm:$0xff]
        %v704 = vld [vmem:[%s526 + $0x90] sm:$0xff]
        %v705 = vld [vmem:[%s526 + $0x98] sm:$0xff]
        %v706 = vld [vmem:[%s526 + $0xa0] sm:$0xff]
        %v707 = vld [vmem:[%s526 + $0xa8] sm:$0xff]
        %v708 = vld [vmem:[%s526 + $0xb0] sm:$0xff]
        %v709 = vld [vmem:[%s526 + $0xb8] sm:$0xff]
        %v710 = vld [vmem:[%s526 + $0xc0] sm:$0xff]
        %v711 = vld [vmem:[%s526 + $0xc8] sm:$0xff]
        %v712 = vld [vmem:[%s526 + $0xd0] sm:$0xff]
        %v713 = vld [vmem:[%s526 + $0xd8] sm:$0xff]
        %v714 = vld [vmem:[%s526 + $0xe0] sm:$0xff]
        %v715 = vld [vmem:[%s526 + $0xe8] sm:$0xff]
        %v716 = vld [vmem:[%s526 + $0xf0] sm:$0xff]
        %v717 = vld [vmem:[%s526 + $0xf8] sm:$0xff]
        %v718 = vunpack.c.l.s8.bf16 %v686
        %v719 = vunpack.c.l.s8.bf16 %v687
        %v720 = vunpack.c.l.s8.bf16 %v688
        %v721 = vunpack.c.l.s8.bf16 %v689
        %v722 = vunpack.c.h.s8.bf16 %v686
        %v723 = vunpack.c.h.s8.bf16 %v687
        %v724 = vunpack.c.h.s8.bf16 %v688
        %v725 = vunpack.c.h.s8.bf16 %v689
        %v726 = vunpack.c.l.s8.bf16 %v690
        %v727 = vunpack.c.l.s8.bf16 %v691
        %v728 = vunpack.c.l.s8.bf16 %v692
        %v729 = vunpack.c.l.s8.bf16 %v693
        %v730 = vunpack.c.h.s8.bf16 %v690
        %v731 = vunpack.c.h.s8.bf16 %v691
        %v732 = vunpack.c.h.s8.bf16 %v692
        %v733 = vunpack.c.h.s8.bf16 %v693
        %v734 = vunpack.c.l.s8.bf16 %v694
        %v735 = vunpack.c.l.s8.bf16 %v695
        %v736 = vunpack.c.l.s8.bf16 %v696
        %v737 = vunpack.c.l.s8.bf16 %v697
        %v738 = vunpack.c.h.s8.bf16 %v694
        %v739 = vunpack.c.h.s8.bf16 %v695
        %v740 = vunpack.c.h.s8.bf16 %v696
        %v741 = vunpack.c.h.s8.bf16 %v697
        %v742 = vunpack.c.l.s8.bf16 %v698
        %v743 = vunpack.c.l.s8.bf16 %v699
        %v744 = vunpack.c.l.s8.bf16 %v700
        %v745 = vunpack.c.l.s8.bf16 %v701
        %v746 = vunpack.c.h.s8.bf16 %v698
        %v747 = vunpack.c.h.s8.bf16 %v699
        %v748 = vunpack.c.h.s8.bf16 %v700
        %v749 = vunpack.c.h.s8.bf16 %v701
        %v750 = vunpack.c.l.s8.bf16 %v702
        %v751 = vunpack.c.l.s8.bf16 %v703
        %v752 = vunpack.c.l.s8.bf16 %v704
        %v753 = vunpack.c.l.s8.bf16 %v705
        %v754 = vunpack.c.h.s8.bf16 %v702
        %v755 = vunpack.c.h.s8.bf16 %v703
        %v756 = vunpack.c.h.s8.bf16 %v704
        %v757 = vunpack.c.h.s8.bf16 %v705
        %v758 = vunpack.c.l.s8.bf16 %v706
        %v759 = vunpack.c.l.s8.bf16 %v707
        %v760 = vunpack.c.l.s8.bf16 %v708
        %v761 = vunpack.c.l.s8.bf16 %v709
        %v762 = vunpack.c.h.s8.bf16 %v706
        %v763 = vunpack.c.h.s8.bf16 %v707
        %v764 = vunpack.c.h.s8.bf16 %v708
        %v765 = vunpack.c.h.s8.bf16 %v709
        %v766 = vunpack.c.l.s8.bf16 %v710
        %v767 = vunpack.c.l.s8.bf16 %v711
        %v768 = vunpack.c.l.s8.bf16 %v712
        %v769 = vunpack.c.l.s8.bf16 %v713
        %v770 = vunpack.c.h.s8.bf16 %v710
        %v771 = vunpack.c.h.s8.bf16 %v711
        %v772 = vunpack.c.h.s8.bf16 %v712
        %v773 = vunpack.c.h.s8.bf16 %v713
        %v774 = vunpack.c.l.s8.bf16 %v714
        %v775 = vunpack.c.l.s8.bf16 %v715
        %v776 = vunpack.c.l.s8.bf16 %v716
        %v777 = vunpack.c.l.s8.bf16 %v717
        %v778 = vunpack.c.h.s8.bf16 %v714
        %v779 = vunpack.c.h.s8.bf16 %v715
        %v780 = vunpack.c.h.s8.bf16 %v716
        %v781 = vunpack.c.h.s8.bf16 %v717
        %v782 = vld [vmem:[%s611] sm:$0xf]
        %v783 = vld [vmem:[%s611 + $0x4] sm:$0xf]
        %v784 = vld [vmem:[%s611 + $0x8] sm:$0xf]
        %v785 = vld [vmem:[%s611 + $0xc] sm:$0xf]
        %v786 = vld [vmem:[%s611 + $0x10] sm:$0xf]
        %v787 = vld [vmem:[%s611 + $0x14] sm:$0xf]
        %v788 = vld [vmem:[%s611 + $0x18] sm:$0xf]
        %v789 = vld [vmem:[%s611 + $0x1c] sm:$0xf]
        %v790 = vld [vmem:[%s611 + $0x20] sm:$0xf]
        %v791 = vld [vmem:[%s611 + $0x24] sm:$0xf]
        %v792 = vld [vmem:[%s611 + $0x28] sm:$0xf]
        %v793 = vld [vmem:[%s611 + $0x2c] sm:$0xf]
        %v794 = vld [vmem:[%s611 + $0x30] sm:$0xf]
        %v795 = vld [vmem:[%s611 + $0x34] sm:$0xf]
        %v796 = vld [vmem:[%s611 + $0x38] sm:$0xf]
        %v797 = vld [vmem:[%s611 + $0x3c] sm:$0xf]
        %v798 = vld [vmem:[%s611 + $0x40] sm:$0xf]
        %v799 = vld [vmem:[%s611 + $0x44] sm:$0xf]
        %v800 = vld [vmem:[%s611 + $0x48] sm:$0xf]
        %v801 = vld [vmem:[%s611 + $0x4c] sm:$0xf]
        %v802 = vld [vmem:[%s611 + $0x50] sm:$0xf]
        %v803 = vld [vmem:[%s611 + $0x54] sm:$0xf]
        %v804 = vld [vmem:[%s611 + $0x58] sm:$0xf]
        %v805 = vld [vmem:[%s611 + $0x5c] sm:$0xf]
        %v806 = vld [vmem:[%s611 + $0x60] sm:$0xf]
        %v807 = vld [vmem:[%s611 + $0x64] sm:$0xf]
        %v808 = vld [vmem:[%s611 + $0x68] sm:$0xf]
        %v809 = vld [vmem:[%s611 + $0x6c] sm:$0xf]
        %v810 = vld [vmem:[%s611 + $0x70] sm:$0xf]
        %v811 = vld [vmem:[%s611 + $0x74] sm:$0xf]
        %v812 = vld [vmem:[%s611 + $0x78] sm:$0xf]
        %v813 = vld [vmem:[%s611 + $0x7c] sm:$0xf]
        %v814 = vld [vmem:[%s611 + $0x80] sm:$0xf]
        %v815 = vld [vmem:[%s611 + $0x84] sm:$0xf]
        %v816 = vld [vmem:[%s611 + $0x88] sm:$0xf]
        %v817 = vld [vmem:[%s611 + $0x8c] sm:$0xf]
        %v818 = vld [vmem:[%s611 + $0x90] sm:$0xf]
        %v819 = vld [vmem:[%s611 + $0x94] sm:$0xf]
        %v820 = vld [vmem:[%s611 + $0x98] sm:$0xf]
        %v821 = vld [vmem:[%s611 + $0x9c] sm:$0xf]
        %v822 = vld [vmem:[%s611 + $0xa0] sm:$0xf]
        %v823 = vld [vmem:[%s611 + $0xa4] sm:$0xf]
        %v824 = vld [vmem:[%s611 + $0xa8] sm:$0xf]
        %v825 = vld [vmem:[%s611 + $0xac] sm:$0xf]
        %v826 = vld [vmem:[%s611 + $0xb0] sm:$0xf]
        %v827 = vld [vmem:[%s611 + $0xb4] sm:$0xf]
        %v828 = vld [vmem:[%s611 + $0xb8] sm:$0xf]
        %v829 = vld [vmem:[%s611 + $0xbc] sm:$0xf]
        %v830 = vld [vmem:[%s611 + $0xc0] sm:$0xf]
        %v831 = vld [vmem:[%s611 + $0xc4] sm:$0xf]
        %v832 = vld [vmem:[%s611 + $0xc8] sm:$0xf]
        %v833 = vld [vmem:[%s611 + $0xcc] sm:$0xf]
        %v834 = vld [vmem:[%s611 + $0xd0] sm:$0xf]
        %v835 = vld [vmem:[%s611 + $0xd4] sm:$0xf]
        %v836 = vld [vmem:[%s611 + $0xd8] sm:$0xf]
        %v837 = vld [vmem:[%s611 + $0xdc] sm:$0xf]
        %v838 = vld [vmem:[%s611 + $0xe0] sm:$0xf]
        %v839 = vld [vmem:[%s611 + $0xe4] sm:$0xf]
        %v840 = vld [vmem:[%s611 + $0xe8] sm:$0xf]
        %v841 = vld [vmem:[%s611 + $0xec] sm:$0xf]
        %v842 = vld [vmem:[%s611 + $0xf0] sm:$0xf]
        %v843 = vld [vmem:[%s611 + $0xf4] sm:$0xf]
        %v844 = vld [vmem:[%s611 + $0xf8] sm:$0xf]
        %v845 = vld [vmem:[%s611 + $0xfc] sm:$0xf]
        %v846 = vunpack.c.l.bf16 %v782
        %v847 = vunpack.c.l.bf16 %v783
        %v848 = vunpack.c.l.bf16 %v784
        %v849 = vunpack.c.l.bf16 %v785
        %v850 = vunpack.c.l.bf16 %v786
        %v851 = vunpack.c.l.bf16 %v787
        %v852 = vunpack.c.l.bf16 %v788
        %v853 = vunpack.c.l.bf16 %v789
        %v854 = vunpack.c.l.bf16 %v790
        %v855 = vunpack.c.l.bf16 %v791
        %v856 = vunpack.c.l.bf16 %v792
        %v857 = vunpack.c.l.bf16 %v793
        %v858 = vunpack.c.l.bf16 %v794
        %v859 = vunpack.c.l.bf16 %v795
        %v860 = vunpack.c.l.bf16 %v796
        %v861 = vunpack.c.l.bf16 %v797
        %v862 = vunpack.c.l.bf16 %v798
        %v863 = vunpack.c.l.bf16 %v799
        %v864 = vunpack.c.l.bf16 %v800
        %v865 = vunpack.c.l.bf16 %v801
        %v866 = vunpack.c.l.bf16 %v802
        %v867 = vunpack.c.l.bf16 %v803
        %v868 = vunpack.c.l.bf16 %v804
        %v869 = vunpack.c.l.bf16 %v805
        %v870 = vunpack.c.l.bf16 %v806
        %v871 = vunpack.c.l.bf16 %v807
        %v872 = vunpack.c.l.bf16 %v808
        %v873 = vunpack.c.l.bf16 %v809
        %v874 = vunpack.c.l.bf16 %v810
        %v875 = vunpack.c.l.bf16 %v811
        %v876 = vunpack.c.l.bf16 %v812
        %v877 = vunpack.c.l.bf16 %v813
        %v878 = vunpack.c.l.bf16 %v814
        %v879 = vunpack.c.l.bf16 %v815
        %v880 = vunpack.c.l.bf16 %v816
        %v881 = vunpack.c.l.bf16 %v817
        %v882 = vunpack.c.l.bf16 %v818
        %v883 = vunpack.c.l.bf16 %v819
        %v884 = vunpack.c.l.bf16 %v820
        %v885 = vunpack.c.l.bf16 %v821
        %v886 = vunpack.c.l.bf16 %v822
        %v887 = vunpack.c.l.bf16 %v823
        %v888 = vunpack.c.l.bf16 %v824
        %v889 = vunpack.c.l.bf16 %v825
        %v890 = vunpack.c.l.bf16 %v826
        %v891 = vunpack.c.l.bf16 %v827
        %v892 = vunpack.c.l.bf16 %v828
        %v893 = vunpack.c.l.bf16 %v829
        %v894 = vunpack.c.l.bf16 %v830
        %v895 = vunpack.c.l.bf16 %v831
        %v896 = vunpack.c.l.bf16 %v832
        %v897 = vunpack.c.l.bf16 %v833
        %v898 = vunpack.c.l.bf16 %v834
        %v899 = vunpack.c.l.bf16 %v835
        %v900 = vunpack.c.l.bf16 %v836
        %v901 = vunpack.c.l.bf16 %v837
        %v902 = vunpack.c.l.bf16 %v838
        %v903 = vunpack.c.l.bf16 %v839
        %v904 = vunpack.c.l.bf16 %v840
        %v905 = vunpack.c.l.bf16 %v841
        %v906 = vunpack.c.l.bf16 %v842
        %v907 = vunpack.c.l.bf16 %v843
        %v908 = vunpack.c.l.bf16 %v844
        %v909 = vunpack.c.l.bf16 %v845
        %v910 = vld [vmem:[%s605] sm:$0xff]
        %v911 = vld [vmem:[%s605 + $0x8] sm:$0xff]
        %v912 = vld [vmem:[%s605 + $0x10] sm:$0xff]
        %v913 = vld [vmem:[%s605 + $0x18] sm:$0xff]
        %v914 = vld [vmem:[%s605 + $0x20] sm:$0xff]
        %v915 = vld [vmem:[%s605 + $0x28] sm:$0xff]
        %v916 = vld [vmem:[%s605 + $0x30] sm:$0xff]
        %v917 = vld [vmem:[%s605 + $0x38] sm:$0xff]
        %v918 = vld [vmem:[%s605 + $0x40] sm:$0xff]
        %v919 = vld [vmem:[%s605 + $0x48] sm:$0xff]
        %v920 = vld [vmem:[%s605 + $0x50] sm:$0xff]
        %v921 = vld [vmem:[%s605 + $0x58] sm:$0xff]
        %v922 = vld [vmem:[%s605 + $0x60] sm:$0xff]
        %v923 = vld [vmem:[%s605 + $0x68] sm:$0xff]
        %v924 = vld [vmem:[%s605 + $0x70] sm:$0xff]
        %v925 = vld [vmem:[%s605 + $0x78] sm:$0xff]
        %v926 = vld [vmem:[%s605 + $0x80] sm:$0xff]
        %v927 = vld [vmem:[%s605 + $0x88] sm:$0xff]
        %v928 = vld [vmem:[%s605 + $0x90] sm:$0xff]
        %v929 = vld [vmem:[%s605 + $0x98] sm:$0xff]
        %v930 = vld [vmem:[%s605 + $0xa0] sm:$0xff]
        %v931 = vld [vmem:[%s605 + $0xa8] sm:$0xff]
        %v932 = vld [vmem:[%s605 + $0xb0] sm:$0xff]
        %v933 = vld [vmem:[%s605 + $0xb8] sm:$0xff]
        %v934 = vld [vmem:[%s605 + $0xc0] sm:$0xff]
        %v935 = vld [vmem:[%s605 + $0xc8] sm:$0xff]
        %v936 = vld [vmem:[%s605 + $0xd0] sm:$0xff]
        %v937 = vld [vmem:[%s605 + $0xd8] sm:$0xff]
        %v938 = vld [vmem:[%s605 + $0xe0] sm:$0xff]
        %v939 = vld [vmem:[%s605 + $0xe8] sm:$0xff]
        %v940 = vld [vmem:[%s605 + $0xf0] sm:$0xff]
        %v941 = vld [vmem:[%s605 + $0xf8] sm:$0xff]
        %v942 = vld [vmem:[%s605 + $0x100] sm:$0xff]
        %v943 = vld [vmem:[%s605 + $0x108] sm:$0xff]
        %v944 = vld [vmem:[%s605 + $0x110] sm:$0xff]
        %v945 = vld [vmem:[%s605 + $0x118] sm:$0xff]
        %v946 = vld [vmem:[%s605 + $0x120] sm:$0xff]
        %v947 = vld [vmem:[%s605 + $0x128] sm:$0xff]
        %v948 = vld [vmem:[%s605 + $0x130] sm:$0xff]
        %v949 = vld [vmem:[%s605 + $0x138] sm:$0xff]
        %v950 = vld [vmem:[%s605 + $0x140] sm:$0xff]
        %v951 = vld [vmem:[%s605 + $0x148] sm:$0xff]
        %v952 = vld [vmem:[%s605 + $0x150] sm:$0xff]
        %v953 = vld [vmem:[%s605 + $0x158] sm:$0xff]
        %v954 = vld [vmem:[%s605 + $0x160] sm:$0xff]
        %v955 = vld [vmem:[%s605 + $0x168] sm:$0xff]
        %v956 = vld [vmem:[%s605 + $0x170] sm:$0xff]
        %v957 = vld [vmem:[%s605 + $0x178] sm:$0xff]
        %v958 = vld [vmem:[%s605 + $0x180] sm:$0xff]
        %v959 = vld [vmem:[%s605 + $0x188] sm:$0xff]
        %v960 = vld [vmem:[%s605 + $0x190] sm:$0xff]
        %v961 = vld [vmem:[%s605 + $0x198] sm:$0xff]
        %v962 = vld [vmem:[%s605 + $0x1a0] sm:$0xff]
        %v963 = vld [vmem:[%s605 + $0x1a8] sm:$0xff]
        %v964 = vld [vmem:[%s605 + $0x1b0] sm:$0xff]
        %v965 = vld [vmem:[%s605 + $0x1b8] sm:$0xff]
        %v966 = vld [vmem:[%s605 + $0x1c0] sm:$0xff]
        %v967 = vld [vmem:[%s605 + $0x1c8] sm:$0xff]
        %v968 = vld [vmem:[%s605 + $0x1d0] sm:$0xff]
        %v969 = vld [vmem:[%s605 + $0x1d8] sm:$0xff]
        %v970 = vld [vmem:[%s605 + $0x1e0] sm:$0xff]
        %v971 = vld [vmem:[%s605 + $0x1e8] sm:$0xff]
        %v972 = vld [vmem:[%s605 + $0x1f0] sm:$0xff]
        %v973 = vld [vmem:[%s605 + $0x1f8] sm:$0xff]
        %975 = vset.pattern.permute.xlu0 0
        %976 = vperm.xlu0 %975, %v910
        %v977 = vpop.permute.xlu0 %976
        %980 = vset.pattern.permute.xlu0 0
        %981 = vperm.xlu0 %980, %v911
        %v982 = vpop.permute.xlu0 %981
        %985 = vset.pattern.permute.xlu0 0
        %986 = vperm.xlu0 %985, %v912
        %v987 = vpop.permute.xlu0 %986
        %990 = vset.pattern.permute.xlu0 0
        %991 = vperm.xlu0 %990, %v913
        %v992 = vpop.permute.xlu0 %991
        %995 = vset.pattern.permute.xlu0 0
        %996 = vperm.xlu0 %995, %v914
        %v997 = vpop.permute.xlu0 %996
        %1000 = vset.pattern.permute.xlu0 0
        %1001 = vperm.xlu0 %1000, %v915
        %v1002 = vpop.permute.xlu0 %1001
        %1005 = vset.pattern.permute.xlu0 0
        %1006 = vperm.xlu0 %1005, %v916
        %v1007 = vpop.permute.xlu0 %1006
        %1010 = vset.pattern.permute.xlu0 0
        %1011 = vperm.xlu0 %1010, %v917
        %v1012 = vpop.permute.xlu0 %1011
        %1015 = vset.pattern.permute.xlu0 0
        %1016 = vperm.xlu0 %1015, %v918
        %v1017 = vpop.permute.xlu0 %1016
        %1020 = vset.pattern.permute.xlu0 0
        %1021 = vperm.xlu0 %1020, %v919
        %v1022 = vpop.permute.xlu0 %1021
        %1025 = vset.pattern.permute.xlu0 0
        %1026 = vperm.xlu0 %1025, %v920
        %v1027 = vpop.permute.xlu0 %1026
        %1030 = vset.pattern.permute.xlu0 0
        %1031 = vperm.xlu0 %1030, %v921
        %v1032 = vpop.permute.xlu0 %1031
        %1035 = vset.pattern.permute.xlu0 0
        %1036 = vperm.xlu0 %1035, %v922
        %v1037 = vpop.permute.xlu0 %1036
        %1040 = vset.pattern.permute.xlu0 0
        %1041 = vperm.xlu0 %1040, %v923
        %v1042 = vpop.permute.xlu0 %1041
        %1045 = vset.pattern.permute.xlu0 0
        %1046 = vperm.xlu0 %1045, %v924
        %v1047 = vpop.permute.xlu0 %1046
        %1050 = vset.pattern.permute.xlu0 0
        %1051 = vperm.xlu0 %1050, %v925
        %v1052 = vpop.permute.xlu0 %1051
        %1055 = vset.pattern.permute.xlu0 0
        %1056 = vperm.xlu0 %1055, %v926
        %v1057 = vpop.permute.xlu0 %1056
        %1060 = vset.pattern.permute.xlu0 0
        %1061 = vperm.xlu0 %1060, %v927
        %v1062 = vpop.permute.xlu0 %1061
        %1065 = vset.pattern.permute.xlu0 0
        %1066 = vperm.xlu0 %1065, %v928
        %v1067 = vpop.permute.xlu0 %1066
        %1070 = vset.pattern.permute.xlu0 0
        %1071 = vperm.xlu0 %1070, %v929
        %v1072 = vpop.permute.xlu0 %1071
        %1075 = vset.pattern.permute.xlu0 0
        %1076 = vperm.xlu0 %1075, %v930
        %v1077 = vpop.permute.xlu0 %1076
        %1080 = vset.pattern.permute.xlu0 0
        %1081 = vperm.xlu0 %1080, %v931
        %v1082 = vpop.permute.xlu0 %1081
        %1085 = vset.pattern.permute.xlu0 0
        %1086 = vperm.xlu0 %1085, %v932
        %v1087 = vpop.permute.xlu0 %1086
        %1090 = vset.pattern.permute.xlu0 0
        %1091 = vperm.xlu0 %1090, %v933
        %v1092 = vpop.permute.xlu0 %1091
        %1095 = vset.pattern.permute.xlu0 0
        %1096 = vperm.xlu0 %1095, %v934
        %v1097 = vpop.permute.xlu0 %1096
        %1100 = vset.pattern.permute.xlu0 0
        %1101 = vperm.xlu0 %1100, %v935
        %v1102 = vpop.permute.xlu0 %1101
        %1105 = vset.pattern.permute.xlu0 0
        %1106 = vperm.xlu0 %1105, %v936
        %v1107 = vpop.permute.xlu0 %1106
        %1110 = vset.pattern.permute.xlu0 0
        %1111 = vperm.xlu0 %1110, %v937
        %v1112 = vpop.permute.xlu0 %1111
        %1115 = vset.pattern.permute.xlu0 0
        %1116 = vperm.xlu0 %1115, %v938
        %v1117 = vpop.permute.xlu0 %1116
        %1120 = vset.pattern.permute.xlu0 0
        %1121 = vperm.xlu0 %1120, %v939
        %v1122 = vpop.permute.xlu0 %1121
        %1125 = vset.pattern.permute.xlu0 0
        %1126 = vperm.xlu0 %1125, %v940
        %v1127 = vpop.permute.xlu0 %1126
        %1130 = vset.pattern.permute.xlu0 0
        %1131 = vperm.xlu0 %1130, %v941
        %v1132 = vpop.permute.xlu0 %1131
        %1135 = vset.pattern.permute.xlu0 0
        %1136 = vperm.xlu0 %1135, %v942
        %v1137 = vpop.permute.xlu0 %1136
        %1140 = vset.pattern.permute.xlu0 0
        %1141 = vperm.xlu0 %1140, %v943
        %v1142 = vpop.permute.xlu0 %1141
        %1145 = vset.pattern.permute.xlu0 0
        %1146 = vperm.xlu0 %1145, %v944
        %v1147 = vpop.permute.xlu0 %1146
        %1150 = vset.pattern.permute.xlu0 0
        %1151 = vperm.xlu0 %1150, %v945
        %v1152 = vpop.permute.xlu0 %1151
        %1155 = vset.pattern.permute.xlu0 0
        %1156 = vperm.xlu0 %1155, %v946
        %v1157 = vpop.permute.xlu0 %1156
        %1160 = vset.pattern.permute.xlu0 0
        %1161 = vperm.xlu0 %1160, %v947
        %v1162 = vpop.permute.xlu0 %1161
        %1165 = vset.pattern.permute.xlu0 0
        %1166 = vperm.xlu0 %1165, %v948
        %v1167 = vpop.permute.xlu0 %1166
        %1170 = vset.pattern.permute.xlu0 0
        %1171 = vperm.xlu0 %1170, %v949
        %v1172 = vpop.permute.xlu0 %1171
        %1175 = vset.pattern.permute.xlu0 0
        %1176 = vperm.xlu0 %1175, %v950
        %v1177 = vpop.permute.xlu0 %1176
        %1180 = vset.pattern.permute.xlu0 0
        %1181 = vperm.xlu0 %1180, %v951
        %v1182 = vpop.permute.xlu0 %1181
        %1185 = vset.pattern.permute.xlu0 0
        %1186 = vperm.xlu0 %1185, %v952
        %v1187 = vpop.permute.xlu0 %1186
        %1190 = vset.pattern.permute.xlu0 0
        %1191 = vperm.xlu0 %1190, %v953
        %v1192 = vpop.permute.xlu0 %1191
        %1195 = vset.pattern.permute.xlu0 0
        %1196 = vperm.xlu0 %1195, %v954
        %v1197 = vpop.permute.xlu0 %1196
        %1200 = vset.pattern.permute.xlu0 0
        %1201 = vperm.xlu0 %1200, %v955
        %v1202 = vpop.permute.xlu0 %1201
        %1205 = vset.pattern.permute.xlu0 0
        %1206 = vperm.xlu0 %1205, %v956
        %v1207 = vpop.permute.xlu0 %1206
        %1210 = vset.pattern.permute.xlu0 0
        %1211 = vperm.xlu0 %1210, %v957
        %v1212 = vpop.permute.xlu0 %1211
        %1215 = vset.pattern.permute.xlu0 0
        %1216 = vperm.xlu0 %1215, %v958
        %v1217 = vpop.permute.xlu0 %1216
        %1220 = vset.pattern.permute.xlu0 0
        %1221 = vperm.xlu0 %1220, %v959
        %v1222 = vpop.permute.xlu0 %1221
        %1225 = vset.pattern.permute.xlu0 0
        %1226 = vperm.xlu0 %1225, %v960
        %v1227 = vpop.permute.xlu0 %1226
        %1230 = vset.pattern.permute.xlu0 0
        %1231 = vperm.xlu0 %1230, %v961
        %v1232 = vpop.permute.xlu0 %1231
        %1235 = vset.pattern.permute.xlu0 0
        %1236 = vperm.xlu0 %1235, %v962
        %v1237 = vpop.permute.xlu0 %1236
        %1240 = vset.pattern.permute.xlu0 0
        %1241 = vperm.xlu0 %1240, %v963
        %v1242 = vpop.permute.xlu0 %1241
        %1245 = vset.pattern.permute.xlu0 0
        %1246 = vperm.xlu0 %1245, %v964
        %v1247 = vpop.permute.xlu0 %1246
        %1250 = vset.pattern.permute.xlu0 0
        %1251 = vperm.xlu0 %1250, %v965
        %v1252 = vpop.permute.xlu0 %1251
        %1255 = vset.pattern.permute.xlu0 0
        %1256 = vperm.xlu0 %1255, %v966
        %v1257 = vpop.permute.xlu0 %1256
        %1260 = vset.pattern.permute.xlu0 0
        %1261 = vperm.xlu0 %1260, %v967
        %v1262 = vpop.permute.xlu0 %1261
        %1265 = vset.pattern.permute.xlu0 0
        %1266 = vperm.xlu0 %1265, %v968
        %v1267 = vpop.permute.xlu0 %1266
        %1270 = vset.pattern.permute.xlu0 0
        %1271 = vperm.xlu0 %1270, %v969
        %v1272 = vpop.permute.xlu0 %1271
        %1275 = vset.pattern.permute.xlu0 0
        %1276 = vperm.xlu0 %1275, %v970
        %v1277 = vpop.permute.xlu0 %1276
        %1280 = vset.pattern.permute.xlu0 0
        %1281 = vperm.xlu0 %1280, %v971
        %v1282 = vpop.permute.xlu0 %1281
        %1285 = vset.pattern.permute.xlu0 0
        %1286 = vperm.xlu0 %1285, %v972
        %v1287 = vpop.permute.xlu0 %1286
        %1290 = vset.pattern.permute.xlu0 0
        %1291 = vperm.xlu0 %1290, %v973
        %v1292 = vpop.permute.xlu0 %1291
        %v1294 = vmul.f32 %v846, %v977
        %v1295 = vmul.f32 %v847, %v982
        %v1296 = vmul.f32 %v848, %v987
        %v1297 = vmul.f32 %v849, %v992
        %v1298 = vmul.f32 %v850, %v997
        %v1299 = vmul.f32 %v851, %v1002
        %v1300 = vmul.f32 %v852, %v1007
        %v1301 = vmul.f32 %v853, %v1012
        %v1302 = vmul.f32 %v854, %v1017
        %v1303 = vmul.f32 %v855, %v1022
        %v1304 = vmul.f32 %v856, %v1027
        %v1305 = vmul.f32 %v857, %v1032
        %v1306 = vmul.f32 %v858, %v1037
        %v1307 = vmul.f32 %v859, %v1042
        %v1308 = vmul.f32 %v860, %v1047
        %v1309 = vmul.f32 %v861, %v1052
        %v1310 = vmul.f32 %v862, %v1057
        %v1311 = vmul.f32 %v863, %v1062
        %v1312 = vmul.f32 %v864, %v1067
        %v1313 = vmul.f32 %v865, %v1072
        %v1314 = vmul.f32 %v866, %v1077
        %v1315 = vmul.f32 %v867, %v1082
        %v1316 = vmul.f32 %v868, %v1087
        %v1317 = vmul.f32 %v869, %v1092
        %v1318 = vmul.f32 %v870, %v1097
        %v1319 = vmul.f32 %v871, %v1102
        %v1320 = vmul.f32 %v872, %v1107
        %v1321 = vmul.f32 %v873, %v1112
        %v1322 = vmul.f32 %v874, %v1117
        %v1323 = vmul.f32 %v875, %v1122
        %v1324 = vmul.f32 %v876, %v1127
        %v1325 = vmul.f32 %v877, %v1132
        %v1326 = vmul.f32 %v878, %v1137
        %v1327 = vmul.f32 %v879, %v1142
        %v1328 = vmul.f32 %v880, %v1147
        %v1329 = vmul.f32 %v881, %v1152
        %v1330 = vmul.f32 %v882, %v1157
        %v1331 = vmul.f32 %v883, %v1162
        %v1332 = vmul.f32 %v884, %v1167
        %v1333 = vmul.f32 %v885, %v1172
        %v1334 = vmul.f32 %v886, %v1177
        %v1335 = vmul.f32 %v887, %v1182
        %v1336 = vmul.f32 %v888, %v1187
        %v1337 = vmul.f32 %v889, %v1192
        %v1338 = vmul.f32 %v890, %v1197
        %v1339 = vmul.f32 %v891, %v1202
        %v1340 = vmul.f32 %v892, %v1207
        %v1341 = vmul.f32 %v893, %v1212
        %v1342 = vmul.f32 %v894, %v1217
        %v1343 = vmul.f32 %v895, %v1222
        %v1344 = vmul.f32 %v896, %v1227
        %v1345 = vmul.f32 %v897, %v1232
        %v1346 = vmul.f32 %v898, %v1237
        %v1347 = vmul.f32 %v899, %v1242
        %v1348 = vmul.f32 %v900, %v1247
        %v1349 = vmul.f32 %v901, %v1252
        %v1350 = vmul.f32 %v902, %v1257
        %v1351 = vmul.f32 %v903, %v1262
        %v1352 = vmul.f32 %v904, %v1267
        %v1353 = vmul.f32 %v905, %v1272
        %v1354 = vmul.f32 %v906, %v1277
        %v1355 = vmul.f32 %v907, %v1282
        %v1356 = vmul.f32 %v908, %v1287
        %v1357 = vmul.f32 %v909, %v1292
        %v1358 = vpack.c.bf16 %v1295, %v1294
        %v1359 = vpack.c.bf16 %v1297, %v1296
        %v1360 = vpack.c.bf16 %v1299, %v1298
        %v1361 = vpack.c.bf16 %v1301, %v1300
        %v1362 = vpack.c.bf16 %v1303, %v1302
        %v1363 = vpack.c.bf16 %v1305, %v1304
        %v1364 = vpack.c.bf16 %v1307, %v1306
        %v1365 = vpack.c.bf16 %v1309, %v1308
        %v1366 = vpack.c.bf16 %v1311, %v1310
        %v1367 = vpack.c.bf16 %v1313, %v1312
        %v1368 = vpack.c.bf16 %v1315, %v1314
        %v1369 = vpack.c.bf16 %v1317, %v1316
        %v1370 = vpack.c.bf16 %v1319, %v1318
        %v1371 = vpack.c.bf16 %v1321, %v1320
        %v1372 = vpack.c.bf16 %v1323, %v1322
        %v1373 = vpack.c.bf16 %v1325, %v1324
        %v1374 = vpack.c.bf16 %v1327, %v1326
        %v1375 = vpack.c.bf16 %v1329, %v1328
        %v1376 = vpack.c.bf16 %v1331, %v1330
        %v1377 = vpack.c.bf16 %v1333, %v1332
        %v1378 = vpack.c.bf16 %v1335, %v1334
        %v1379 = vpack.c.bf16 %v1337, %v1336
        %v1380 = vpack.c.bf16 %v1339, %v1338
        %v1381 = vpack.c.bf16 %v1341, %v1340
        %v1382 = vpack.c.bf16 %v1343, %v1342
        %v1383 = vpack.c.bf16 %v1345, %v1344
        %v1384 = vpack.c.bf16 %v1347, %v1346
        %v1385 = vpack.c.bf16 %v1349, %v1348
        %v1386 = vpack.c.bf16 %v1351, %v1350
        %v1387 = vpack.c.bf16 %v1353, %v1352
        %v1388 = vpack.c.bf16 %v1355, %v1354
        %v1389 = vpack.c.bf16 %v1357, %v1356
        %v1390 = vld [vmem:[#allocation2] sm:$0xff]
        %v1391 = vld [vmem:[#allocation2 + $0x8] sm:$0xff]
        %v1392 = vld [vmem:[#allocation2 + $0x10] sm:$0xff]
        %v1393 = vld [vmem:[#allocation2 + $0x18] sm:$0xff]
        %v1394 = vld [vmem:[#allocation2 + $0x20] sm:$0xff]
        %v1395 = vld [vmem:[#allocation2 + $0x28] sm:$0xff]
        %v1396 = vld [vmem:[#allocation2 + $0x30] sm:$0xff]
        %v1397 = vld [vmem:[#allocation2 + $0x38] sm:$0xff]
        %v1398 = vld [vmem:[#allocation2 + $0x40] sm:$0xff]
        %v1399 = vld [vmem:[#allocation2 + $0x48] sm:$0xff]
        %v1400 = vld [vmem:[#allocation2 + $0x50] sm:$0xff]
        %v1401 = vld [vmem:[#allocation2 + $0x58] sm:$0xff]
        %v1402 = vld [vmem:[#allocation2 + $0x60] sm:$0xff]
        %v1403 = vld [vmem:[#allocation2 + $0x68] sm:$0xff]
        %v1404 = vld [vmem:[#allocation2 + $0x70] sm:$0xff]
        %v1405 = vld [vmem:[#allocation2 + $0x78] sm:$0xff]
        %v1406 = vld [vmem:[#allocation2 + $0x80] sm:$0xff]
        %v1407 = vld [vmem:[#allocation2 + $0x88] sm:$0xff]
        %v1408 = vld [vmem:[#allocation2 + $0x90] sm:$0xff]
        %v1409 = vld [vmem:[#allocation2 + $0x98] sm:$0xff]
        %v1410 = vld [vmem:[#allocation2 + $0xa0] sm:$0xff]
        %v1411 = vld [vmem:[#allocation2 + $0xa8] sm:$0xff]
        %v1412 = vld [vmem:[#allocation2 + $0xb0] sm:$0xff]
        %v1413 = vld [vmem:[#allocation2 + $0xb8] sm:$0xff]
        %v1414 = vld [vmem:[#allocation2 + $0xc0] sm:$0xff]
        %v1415 = vld [vmem:[#allocation2 + $0xc8] sm:$0xff]
        %v1416 = vld [vmem:[#allocation2 + $0xd0] sm:$0xff]
        %v1417 = vld [vmem:[#allocation2 + $0xd8] sm:$0xff]
        %v1418 = vld [vmem:[#allocation2 + $0xe0] sm:$0xff]
        %v1419 = vld [vmem:[#allocation2 + $0xe8] sm:$0xff]
        %v1420 = vld [vmem:[#allocation2 + $0xf0] sm:$0xff]
        %v1421 = vld [vmem:[#allocation2 + $0xf8] sm:$0xff]
        %1422 = vmatprep.subr.bf16.mxu0 0
        %1423 = vmatpush1.bf16.msra.mxu0 %v1358
        %1424 = vmatprep.subr.bf16.mxu0 0
        %1425 = vmatpush1.bf16.msra.mxu0 %v1359
        %1426 = vmatprep.subr.bf16.mxu0 0
        %1427 = vmatpush1.bf16.msra.mxu0 %v1360
        %1428 = vmatprep.subr.bf16.mxu0 0
        %1429 = vmatpush1.bf16.msra.mxu0 %v1361
        %1430 = vmatprep.subr.bf16.mxu0 0
        %1431 = vmatpush1.bf16.msra.mxu0 %v1362
        %1432 = vmatprep.subr.bf16.mxu0 0
        %1433 = vmatpush1.bf16.msra.mxu0 %v1363
        %1434 = vmatprep.subr.bf16.mxu0 0
        %1435 = vmatpush1.bf16.msra.mxu0 %v1364
        %1436 = vmatprep.subr.bf16.mxu0 0
        %1437 = vmatpush1.bf16.msra.mxu0 %v1365
        %1438 = vmatprep.subr.bf16.mxu0 0
        %1439 = vmatpush1.bf16.msra.mxu0 %v1366
        %1440 = vmatprep.subr.bf16.mxu0 0
        %1441 = vmatpush1.bf16.msra.mxu0 %v1367
        %1442 = vmatprep.subr.bf16.mxu0 0
        %1443 = vmatpush1.bf16.msra.mxu0 %v1368
        %1444 = vmatprep.subr.bf16.mxu0 0
        %1445 = vmatpush1.bf16.msra.mxu0 %v1369
        %1446 = vmatprep.subr.bf16.mxu0 0
        %1447 = vmatpush1.bf16.msra.mxu0 %v1370
        %1448 = vmatprep.subr.bf16.mxu0 0
        %1449 = vmatpush1.bf16.msra.mxu0 %v1371
        %1450 = vmatprep.subr.bf16.mxu0 0
        %1451 = vmatpush1.bf16.msra.mxu0 %v1372
        %1452 = vmatprep.subr.bf16.mxu0 0
        %1453 = vmatpush1.bf16.msra.mxu0 %v1373
        %1454 = vmatprep.mubr.bf16.mxu0 %v719
        %1455 = vmatmul.mubr.bf16.gmra.mrb[0].mxu0 %v718
        %v1456 = vpop.f32.mrb[0].mxu0
        %v1457 = vadd.f32 0.0, %v1456
        %v1458 = vpop.f32.mrb[0].mxu0
        %v1459 = vpop.f32.mrb[0].mxu0
        %v1460 = vadd.f32 0.0, %v1459
        %v1461 = vpop.f32.mrb[0].mxu0
        %1462 = vmatprep.mubr.bf16.mxu0 %v723
        %1463 = vmatmul.mubr.bf16.gmra.mrb[0].mxu0 %v722
        %v1464 = vpop.f32.mrb[0].mxu0
        %v1465 = vadd.f32 0.0, %v1464
        %v1466 = vpop.f32.mrb[0].mxu0
        %v1467 = vpop.f32.mrb[0].mxu0
        %v1468 = vadd.f32 0.0, %v1467
        %v1469 = vpop.f32.mrb[0].mxu0
        %1470 = vmatprep.mubr.bf16.mxu0 %v727
        %1471 = vmatmul.mubr.bf16.gmra.mrb[0].mxu0 %v726
        %v1472 = vpop.f32.mrb[0].mxu0
        %v1473 = vadd.f32 0.0, %v1472
        %v1474 = vpop.f32.mrb[0].mxu0
        %v1475 = vpop.f32.mrb[0].mxu0
        %v1476 = vadd.f32 0.0, %v1475
        %v1477 = vpop.f32.mrb[0].mxu0
        %1478 = vmatprep.mubr.bf16.mxu0 %v731
        %1479 = vmatmul.mubr.bf16.gmra.mrb[0].mxu0 %v730
        %v1480 = vpop.f32.mrb[0].mxu0
        %v1481 = vadd.f32 0.0, %v1480
        %v1482 = vpop.f32.mrb[0].mxu0
        %v1483 = vpop.f32.mrb[0].mxu0
        %v1484 = vadd.f32 0.0, %v1483
        %v1485 = vpop.f32.mrb[0].mxu0
        %1486 = vmatprep.mubr.bf16.mxu0 %v735
        %1487 = vmatmul.mubr.bf16.gmra.mrb[0].mxu0 %v734
        %v1488 = vpop.f32.mrb[0].mxu0
        %v1489 = vadd.f32 0.0, %v1488
        %v1490 = vpop.f32.mrb[0].mxu0
        %v1491 = vpop.f32.mrb[0].mxu0
        %v1492 = vadd.f32 0.0, %v1491
        %v1493 = vpop.f32.mrb[0].mxu0
        %1494 = vmatprep.mubr.bf16.mxu0 %v739
        %1495 = vmatmul.mubr.bf16.gmra.mrb[0].mxu0 %v738
        %v1496 = vpop.f32.mrb[0].mxu0
        %v1497 = vadd.f32 0.0, %v1496
        %v1498 = vpop.f32.mrb[0].mxu0
        %v1499 = vpop.f32.mrb[0].mxu0
        %v1500 = vadd.f32 0.0, %v1499
        %v1501 = vpop.f32.mrb[0].mxu0
        %1502 = vmatprep.mubr.bf16.mxu0 %v743
        %1503 = vmatmul.mubr.bf16.gmra.mrb[0].mxu0 %v742
        %v1504 = vpop.f32.mrb[0].mxu0
        %v1505 = vadd.f32 0.0, %v1504
        %v1506 = vpop.f32.mrb[0].mxu0
        %v1507 = vpop.f32.mrb[0].mxu0
        %v1508 = vadd.f32 0.0, %v1507
        %v1509 = vpop.f32.mrb[0].mxu0
        %1510 = vmatprep.mubr.bf16.mxu0 %v747
        %1511 = vmatmul.mubr.bf16.gmra.mrb[0].mxu0 %v746
        %v1512 = vpop.f32.mrb[0].mxu0
        %v1513 = vadd.f32 0.0, %v1512
        %v1514 = vpop.f32.mrb[0].mxu0
        %v1515 = vpop.f32.mrb[0].mxu0
        %v1516 = vadd.f32 0.0, %v1515
        %v1517 = vpop.f32.mrb[0].mxu0
        %1518 = vmatprep.mubr.bf16.mxu0 %v751
        %1519 = vmatmul.mubr.bf16.gmra.mrb[0].mxu0 %v750
        %v1520 = vpop.f32.mrb[0].mxu0
        %v1521 = vadd.f32 0.0, %v1520
        %v1522 = vpop.f32.mrb[0].mxu0
        %v1523 = vpop.f32.mrb[0].mxu0
        %v1524 = vadd.f32 0.0, %v1523
        %v1525 = vpop.f32.mrb[0].mxu0
        %1526 = vmatprep.mubr.bf16.mxu0 %v755
        %1527 = vmatmul.mubr.bf16.gmra.mrb[0].mxu0 %v754
        %v1528 = vpop.f32.mrb[0].mxu0
        %v1529 = vadd.f32 0.0, %v1528
        %v1530 = vpop.f32.mrb[0].mxu0
        %v1531 = vpop.f32.mrb[0].mxu0
        %v1532 = vadd.f32 0.0, %v1531
        %v1533 = vpop.f32.mrb[0].mxu0
        %1534 = vmatprep.mubr.bf16.mxu0 %v759
        %1535 = vmatmul.mubr.bf16.gmra.mrb[0].mxu0 %v758
        %v1536 = vpop.f32.mrb[0].mxu0
        %v1537 = vadd.f32 0.0, %v1536
        %v1538 = vpop.f32.mrb[0].mxu0
        %v1539 = vpop.f32.mrb[0].mxu0
        %v1540 = vadd.f32 0.0, %v1539
        %v1541 = vpop.f32.mrb[0].mxu0
        %1542 = vmatprep.mubr.bf16.mxu0 %v763
        %1543 = vmatmul.mubr.bf16.gmra.mrb[0].mxu0 %v762
        %v1544 = vpop.f32.mrb[0].mxu0
        %v1545 = vadd.f32 0.0, %v1544
        %v1546 = vpop.f32.mrb[0].mxu0
        %v1547 = vpop.f32.mrb[0].mxu0
        %v1548 = vadd.f32 0.0, %v1547
        %v1549 = vpop.f32.mrb[0].mxu0
        %1550 = vmatprep.mubr.bf16.mxu0 %v767
        %1551 = vmatmul.mubr.bf16.gmra.mrb[0].mxu0 %v766
        %v1552 = vpop.f32.mrb[0].mxu0
        %v1553 = vadd.f32 0.0, %v1552
        %v1554 = vpop.f32.mrb[0].mxu0
        %v1555 = vpop.f32.mrb[0].mxu0
        %v1556 = vadd.f32 0.0, %v1555
        %v1557 = vpop.f32.mrb[0].mxu0
        %1558 = vmatprep.mubr.bf16.mxu0 %v771
        %1559 = vmatmul.mubr.bf16.gmra.mrb[0].mxu0 %v770
        %v1560 = vpop.f32.mrb[0].mxu0
        %v1561 = vadd.f32 0.0, %v1560
        %v1562 = vpop.f32.mrb[0].mxu0
        %v1563 = vpop.f32.mrb[0].mxu0
        %v1564 = vadd.f32 0.0, %v1563
        %v1565 = vpop.f32.mrb[0].mxu0
        %1566 = vmatprep.mubr.bf16.mxu0 %v775
        %1567 = vmatmul.mubr.bf16.gmra.mrb[0].mxu0 %v774
        %v1568 = vpop.f32.mrb[0].mxu0
        %v1569 = vadd.f32 0.0, %v1568
        %v1570 = vpop.f32.mrb[0].mxu0
        %v1571 = vpop.f32.mrb[0].mxu0
        %v1572 = vadd.f32 0.0, %v1571
        %v1573 = vpop.f32.mrb[0].mxu0
        %1574 = vmatprep.mubr.bf16.mxu0 %v779
        %1575 = vmatmul.mubr.bf16.gmra.mrb[0].mxu0 %v778
        %v1576 = vpop.f32.mrb[0].mxu0
        %v1577 = vadd.f32 0.0, %v1576
        %v1578 = vpop.f32.mrb[0].mxu0
        %v1579 = vpop.f32.mrb[0].mxu0
        %v1580 = vadd.f32 0.0, %v1579
        %v1581 = vpop.f32.mrb[0].mxu0
        %1582 = vdwg.mxu0
        %1583 = vmatprep.subr.bf16.mxu0 0
        %1584 = vmatpush1.bf16.msra.mxu0 %v1374
        %1585 = vmatprep.subr.bf16.mxu0 0
        %1586 = vmatpush1.bf16.msra.mxu0 %v1375
        %1587 = vmatprep.subr.bf16.mxu0 0
        %1588 = vmatpush1.bf16.msra.mxu0 %v1376
        %1589 = vmatprep.subr.bf16.mxu0 0
        %1590 = vmatpush1.bf16.msra.mxu0 %v1377
        %1591 = vmatprep.subr.bf16.mxu0 0
        %1592 = vmatpush1.bf16.msra.mxu0 %v1378
        %1593 = vmatprep.subr.bf16.mxu0 0
        %1594 = vmatpush1.bf16.msra.mxu0 %v1379
        %1595 = vmatprep.subr.bf16.mxu0 0
        %1596 = vmatpush1.bf16.msra.mxu0 %v1380
        %1597 = vmatprep.subr.bf16.mxu0 0
        %1598 = vmatpush1.bf16.msra.mxu0 %v1381
        %1599 = vmatprep.subr.bf16.mxu0 0
        %1600 = vmatpush1.bf16.msra.mxu0 %v1382
        %1601 = vmatprep.subr.bf16.mxu0 0
        %1602 = vmatpush1.bf16.msra.mxu0 %v1383
        %1603 = vmatprep.subr.bf16.mxu0 0
        %1604 = vmatpush1.bf16.msra.mxu0 %v1384
        %1605 = vmatprep.subr.bf16.mxu0 0
        %1606 = vmatpush1.bf16.msra.mxu0 %v1385
        %1607 = vmatprep.subr.bf16.mxu0 0
        %1608 = vmatpush1.bf16.msra.mxu0 %v1386
        %1609 = vmatprep.subr.bf16.mxu0 0
        %1610 = vmatpush1.bf16.msra.mxu0 %v1387
        %1611 = vmatprep.subr.bf16.mxu0 0
        %1612 = vmatpush1.bf16.msra.mxu0 %v1388
        %1613 = vmatprep.subr.bf16.mxu0 0
        %1614 = vmatpush1.bf16.msra.mxu0 %v1389
        %1615 = vmatprep.mubr.bf16.mxu0 %v721
        %1616 = vmatmul.mubr.bf16.gmra.mrb[0].mxu0 %v720
        %v1617 = vpop.f32.mrb[0].mxu0
        %v1618 = vadd.f32 %v1457, %v1617
        %v1619 = vpop.f32.mrb[0].mxu0
        %v1620 = vpop.f32.mrb[0].mxu0
        %v1621 = vadd.f32 %v1460, %v1620
        %v1622 = vpop.f32.mrb[0].mxu0
        %1623 = vmatprep.mubr.bf16.mxu0 %v725
        %1624 = vmatmul.mubr.bf16.gmra.mrb[0].mxu0 %v724
        %v1625 = vpop.f32.mrb[0].mxu0
        %v1626 = vadd.f32 %v1465, %v1625
        %v1627 = vpop.f32.mrb[0].mxu0
        %v1628 = vpop.f32.mrb[0].mxu0
        %v1629 = vadd.f32 %v1468, %v1628
        %v1630 = vpop.f32.mrb[0].mxu0
        %1631 = vmatprep.mubr.bf16.mxu0 %v729
        %1632 = vmatmul.mubr.bf16.gmra.mrb[0].mxu0 %v728
        %v1633 = vpop.f32.mrb[0].mxu0
        %v1634 = vadd.f32 %v1473, %v1633
        %v1635 = vpop.f32.mrb[0].mxu0
        %v1636 = vpop.f32.mrb[0].mxu0
        %v1637 = vadd.f32 %v1476, %v1636
        %v1638 = vpop.f32.mrb[0].mxu0
        %1639 = vmatprep.mubr.bf16.mxu0 %v733
        %1640 = vmatmul.mubr.bf16.gmra.mrb[0].mxu0 %v732
        %v1641 = vpop.f32.mrb[0].mxu0
        %v1642 = vadd.f32 %v1481, %v1641
        %v1643 = vpop.f32.mrb[0].mxu0
        %v1644 = vpop.f32.mrb[0].mxu0
        %v1645 = vadd.f32 %v1484, %v1644
        %v1646 = vpop.f32.mrb[0].mxu0
        %1647 = vmatprep.mubr.bf16.mxu0 %v737
        %1648 = vmatmul.mubr.bf16.gmra.mrb[0].mxu0 %v736
        %v1649 = vpop.f32.mrb[0].mxu0
        %v1650 = vadd.f32 %v1489, %v1649
        %v1651 = vpop.f32.mrb[0].mxu0
        %v1652 = vpop.f32.mrb[0].mxu0
        %v1653 = vadd.f32 %v1492, %v1652
        %v1654 = vpop.f32.mrb[0].mxu0
        %1655 = vmatprep.mubr.bf16.mxu0 %v741
        %1656 = vmatmul.mubr.bf16.gmra.mrb[0].mxu0 %v740
        %v1657 = vpop.f32.mrb[0].mxu0
        %v1658 = vadd.f32 %v1497, %v1657
        %v1659 = vpop.f32.mrb[0].mxu0
        %v1660 = vpop.f32.mrb[0].mxu0
        %v1661 = vadd.f32 %v1500, %v1660
        %v1662 = vpop.f32.mrb[0].mxu0
        %1663 = vmatprep.mubr.bf16.mxu0 %v745
        %1664 = vmatmul.mubr.bf16.gmra.mrb[0].mxu0 %v744
        %v1665 = vpop.f32.mrb[0].mxu0
        %v1666 = vadd.f32 %v1505, %v1665
        %v1667 = vpop.f32.mrb[0].mxu0
        %v1668 = vpop.f32.mrb[0].mxu0
        %v1669 = vadd.f32 %v1508, %v1668
        %v1670 = vpop.f32.mrb[0].mxu0
        %1671 = vmatprep.mubr.bf16.mxu0 %v749
        %1672 = vmatmul.mubr.bf16.gmra.mrb[0].mxu0 %v748
        %v1673 = vpop.f32.mrb[0].mxu0
        %v1674 = vadd.f32 %v1513, %v1673
        %v1675 = vpop.f32.mrb[0].mxu0
        %v1676 = vpop.f32.mrb[0].mxu0
        %v1677 = vadd.f32 %v1516, %v1676
        %v1678 = vpop.f32.mrb[0].mxu0
        %1679 = vmatprep.mubr.bf16.mxu0 %v753
        %1680 = vmatmul.mubr.bf16.gmra.mrb[0].mxu0 %v752
        %v1681 = vpop.f32.mrb[0].mxu0
        %v1682 = vadd.f32 %v1521, %v1681
        %v1683 = vpop.f32.mrb[0].mxu0
        %v1684 = vpop.f32.mrb[0].mxu0
        %v1685 = vadd.f32 %v1524, %v1684
        %v1686 = vpop.f32.mrb[0].mxu0
        %1687 = vmatprep.mubr.bf16.mxu0 %v757
        %1688 = vmatmul.mubr.bf16.gmra.mrb[0].mxu0 %v756
        %v1689 = vpop.f32.mrb[0].mxu0
        %v1690 = vadd.f32 %v1529, %v1689
        %v1691 = vpop.f32.mrb[0].mxu0
        %v1692 = vpop.f32.mrb[0].mxu0
        %v1693 = vadd.f32 %v1532, %v1692
        %v1694 = vpop.f32.mrb[0].mxu0
        %1695 = vmatprep.mubr.bf16.mxu0 %v761
        %1696 = vmatmul.mubr.bf16.gmra.mrb[0].mxu0 %v760
        %v1697 = vpop.f32.mrb[0].mxu0
        %v1698 = vadd.f32 %v1537, %v1697
        %v1699 = vpop.f32.mrb[0].mxu0
        %v1700 = vpop.f32.mrb[0].mxu0
        %v1701 = vadd.f32 %v1540, %v1700
        %v1702 = vpop.f32.mrb[0].mxu0
        %1703 = vmatprep.mubr.bf16.mxu0 %v765
        %1704 = vmatmul.mubr.bf16.gmra.mrb[0].mxu0 %v764
        %v1705 = vpop.f32.mrb[0].mxu0
        %v1706 = vadd.f32 %v1545, %v1705
        %v1707 = vpop.f32.mrb[0].mxu0
        %v1708 = vpop.f32.mrb[0].mxu0
        %v1709 = vadd.f32 %v1548, %v1708
        %v1710 = vpop.f32.mrb[0].mxu0
        %1711 = vmatprep.mubr.bf16.mxu0 %v769
        %1712 = vmatmul.mubr.bf16.gmra.mrb[0].mxu0 %v768
        %v1713 = vpop.f32.mrb[0].mxu0
        %v1714 = vadd.f32 %v1553, %v1713
        %v1715 = vpop.f32.mrb[0].mxu0
        %v1716 = vpop.f32.mrb[0].mxu0
        %v1717 = vadd.f32 %v1556, %v1716
        %v1718 = vpop.f32.mrb[0].mxu0
        %1719 = vmatprep.mubr.bf16.mxu0 %v773
        %1720 = vmatmul.mubr.bf16.gmra.mrb[0].mxu0 %v772
        %v1721 = vpop.f32.mrb[0].mxu0
        %v1722 = vadd.f32 %v1561, %v1721
        %v1723 = vpop.f32.mrb[0].mxu0
        %v1724 = vpop.f32.mrb[0].mxu0
        %v1725 = vadd.f32 %v1564, %v1724
        %v1726 = vpop.f32.mrb[0].mxu0
        %1727 = vmatprep.mubr.bf16.mxu0 %v777
        %1728 = vmatmul.mubr.bf16.gmra.mrb[0].mxu0 %v776
        %v1729 = vpop.f32.mrb[0].mxu0
        %v1730 = vadd.f32 %v1569, %v1729
        %v1731 = vpop.f32.mrb[0].mxu0
        %v1732 = vpop.f32.mrb[0].mxu0
        %v1733 = vadd.f32 %v1572, %v1732
        %v1734 = vpop.f32.mrb[0].mxu0
        %1735 = vmatprep.mubr.bf16.mxu0 %v781
        %1736 = vmatmul.mubr.bf16.gmra.mrb[0].mxu0 %v780
        %v1737 = vpop.f32.mrb[0].mxu0
        %v1738 = vadd.f32 %v1577, %v1737
        %v1739 = vpop.f32.mrb[0].mxu0
        %v1740 = vpop.f32.mrb[0].mxu0
        %v1741 = vadd.f32 %v1580, %v1740
        %v1742 = vpop.f32.mrb[0].mxu0
        %1743 = vdwg.mxu0
        %v1744 = vadd.f32 %v1390, %v1618
        %v1745 = vadd.f32 %v1391, %v1621
        %v1746 = vadd.f32 %v1392, %v1626
        %v1747 = vadd.f32 %v1393, %v1629
        %v1748 = vadd.f32 %v1394, %v1634
        %v1749 = vadd.f32 %v1395, %v1637
        %v1750 = vadd.f32 %v1396, %v1642
        %v1751 = vadd.f32 %v1397, %v1645
        %v1752 = vadd.f32 %v1398, %v1650
        %v1753 = vadd.f32 %v1399, %v1653
        %v1754 = vadd.f32 %v1400, %v1658
        %v1755 = vadd.f32 %v1401, %v1661
        %v1756 = vadd.f32 %v1402, %v1666
        %v1757 = vadd.f32 %v1403, %v1669
        %v1758 = vadd.f32 %v1404, %v1674
        %v1759 = vadd.f32 %v1405, %v1677
        %v1760 = vadd.f32 %v1406, %v1682
        %v1761 = vadd.f32 %v1407, %v1685
        %v1762 = vadd.f32 %v1408, %v1690
        %v1763 = vadd.f32 %v1409, %v1693
        %v1764 = vadd.f32 %v1410, %v1698
        %v1765 = vadd.f32 %v1411, %v1701
        %v1766 = vadd.f32 %v1412, %v1706
        %v1767 = vadd.f32 %v1413, %v1709
        %v1768 = vadd.f32 %v1414, %v1714
        %v1769 = vadd.f32 %v1415, %v1717
        %v1770 = vadd.f32 %v1416, %v1722
        %v1771 = vadd.f32 %v1417, %v1725
        %v1772 = vadd.f32 %v1418, %v1730
        %v1773 = vadd.f32 %v1419, %v1733
        %v1774 = vadd.f32 %v1420, %v1738
        %v1775 = vadd.f32 %v1421, %v1741
        %1776 = vst [vmem:[#allocation2] sm:$0xff] %v1744
        %1777 = vst [vmem:[#allocation2 + $0x8] sm:$0xff] %v1745
        %1778 = vst [vmem:[#allocation2 + $0x10] sm:$0xff] %v1746
        %1779 = vst [vmem:[#allocation2 + $0x18] sm:$0xff] %v1747
        %1780 = vst [vmem:[#allocation2 + $0x20] sm:$0xff] %v1748
        %1781 = vst [vmem:[#allocation2 + $0x28] sm:$0xff] %v1749
        %1782 = vst [vmem:[#allocation2 + $0x30] sm:$0xff] %v1750
        %1783 = vst [vmem:[#allocation2 + $0x38] sm:$0xff] %v1751
        %1784 = vst [vmem:[#allocation2 + $0x40] sm:$0xff] %v1752
        %1785 = vst [vmem:[#allocation2 + $0x48] sm:$0xff] %v1753
        %1786 = vst [vmem:[#allocation2 + $0x50] sm:$0xff] %v1754
        %1787 = vst [vmem:[#allocation2 + $0x58] sm:$0xff] %v1755
        %1788 = vst [vmem:[#allocation2 + $0x60] sm:$0xff] %v1756
        %1789 = vst [vmem:[#allocation2 + $0x68] sm:$0xff] %v1757
        %1790 = vst [vmem:[#allocation2 + $0x70] sm:$0xff] %v1758
        %1791 = vst [vmem:[#allocation2 + $0x78] sm:$0xff] %v1759
        %1792 = vst [vmem:[#allocation2 + $0x80] sm:$0xff] %v1760
        %1793 = vst [vmem:[#allocation2 + $0x88] sm:$0xff] %v1761
        %1794 = vst [vmem:[#allocation2 + $0x90] sm:$0xff] %v1762
        %1795 = vst [vmem:[#allocation2 + $0x98] sm:$0xff] %v1763
        %1796 = vst [vmem:[#allocation2 + $0xa0] sm:$0xff] %v1764
        %1797 = vst [vmem:[#allocation2 + $0xa8] sm:$0xff] %v1765
        %1798 = vst [vmem:[#allocation2 + $0xb0] sm:$0xff] %v1766
        %1799 = vst [vmem:[#allocation2 + $0xb8] sm:$0xff] %v1767
        %1800 = vst [vmem:[#allocation2 + $0xc0] sm:$0xff] %v1768
        %1801 = vst [vmem:[#allocation2 + $0xc8] sm:$0xff] %v1769
        %1802 = vst [vmem:[#allocation2 + $0xd0] sm:$0xff] %v1770
        %1803 = vst [vmem:[#allocation2 + $0xd8] sm:$0xff] %v1771
        %1804 = vst [vmem:[#allocation2 + $0xe0] sm:$0xff] %v1772
        %1805 = vst [vmem:[#allocation2 + $0xe8] sm:$0xff] %v1773
        %1806 = vst [vmem:[#allocation2 + $0xf0] sm:$0xff] %v1774
        %1807 = vst [vmem:[#allocation2 + $0xf8] sm:$0xff] %v1775
        %p1808 = scmp.eq.s32.totalorder %s29, 1
        // Predicated region
        $region92: #{gcn_res_forward.9} parent=78 // pred_check
          %p1809 = pneg %p1808
        $region93: #{gcn_res_forward.9} parent=78 // pred_check_branch
          %1811 = sbr.rel (%p1809) target = $region95
        $region94: #{gcn_res_forward.9} parent=78 // pred_region
          %v1812 = vld [vmem:[#allocation2] sm:$0xff]
          %v1813 = vld [vmem:[#allocation2 + $0x8] sm:$0xff]
          %v1814 = vld [vmem:[#allocation2 + $0x10] sm:$0xff]
          %v1815 = vld [vmem:[#allocation2 + $0x18] sm:$0xff]
          %v1816 = vld [vmem:[#allocation2 + $0x20] sm:$0xff]
          %v1817 = vld [vmem:[#allocation2 + $0x28] sm:$0xff]
          %v1818 = vld [vmem:[#allocation2 + $0x30] sm:$0xff]
          %v1819 = vld [vmem:[#allocation2 + $0x38] sm:$0xff]
          %v1820 = vld [vmem:[#allocation2 + $0x40] sm:$0xff]
          %v1821 = vld [vmem:[#allocation2 + $0x48] sm:$0xff]
          %v1822 = vld [vmem:[#allocation2 + $0x50] sm:$0xff]
          %v1823 = vld [vmem:[#allocation2 + $0x58] sm:$0xff]
          %v1824 = vld [vmem:[#allocation2 + $0x60] sm:$0xff]
          %v1825 = vld [vmem:[#allocation2 + $0x68] sm:$0xff]
          %v1826 = vld [vmem:[#allocation2 + $0x70] sm:$0xff]
          %v1827 = vld [vmem:[#allocation2 + $0x78] sm:$0xff]
          %v1828 = vld [vmem:[#allocation2 + $0x80] sm:$0xff]
          %v1829 = vld [vmem:[#allocation2 + $0x88] sm:$0xff]
          %v1830 = vld [vmem:[#allocation2 + $0x90] sm:$0xff]
          %v1831 = vld [vmem:[#allocation2 + $0x98] sm:$0xff]
          %v1832 = vld [vmem:[#allocation2 + $0xa0] sm:$0xff]
          %v1833 = vld [vmem:[#allocation2 + $0xa8] sm:$0xff]
          %v1834 = vld [vmem:[#allocation2 + $0xb0] sm:$0xff]
          %v1835 = vld [vmem:[#allocation2 + $0xb8] sm:$0xff]
          %v1836 = vld [vmem:[#allocation2 + $0xc0] sm:$0xff]
          %v1837 = vld [vmem:[#allocation2 + $0xc8] sm:$0xff]
          %v1838 = vld [vmem:[#allocation2 + $0xd0] sm:$0xff]
          %v1839 = vld [vmem:[#allocation2 + $0xd8] sm:$0xff]
          %v1840 = vld [vmem:[#allocation2 + $0xe0] sm:$0xff]
          %v1841 = vld [vmem:[#allocation2 + $0xe8] sm:$0xff]
          %v1842 = vld [vmem:[#allocation2 + $0xf0] sm:$0xff]
          %v1843 = vld [vmem:[#allocation2 + $0xf8] sm:$0xff]
          %v1844 = vld [vmem:[%s617] sm:$0xff]
          %v1845 = vld [vmem:[%s617 + $0x8] sm:$0xff]
          %v1846 = vld [vmem:[%s617 + $0x10] sm:$0xff]
          %v1847 = vld [vmem:[%s617 + $0x18] sm:$0xff]
          %v1848 = vld [vmem:[%s617 + $0x20] sm:$0xff]
          %v1849 = vld [vmem:[%s617 + $0x28] sm:$0xff]
          %v1850 = vld [vmem:[%s617 + $0x30] sm:$0xff]
          %v1851 = vld [vmem:[%s617 + $0x38] sm:$0xff]
          %v1852 = vld [vmem:[%s617 + $0x40] sm:$0xff]
          %v1853 = vld [vmem:[%s617 + $0x48] sm:$0xff]
          %v1854 = vld [vmem:[%s617 + $0x50] sm:$0xff]
          %v1855 = vld [vmem:[%s617 + $0x58] sm:$0xff]
          %v1856 = vld [vmem:[%s617 + $0x60] sm:$0xff]
          %v1857 = vld [vmem:[%s617 + $0x68] sm:$0xff]
          %v1858 = vld [vmem:[%s617 + $0x70] sm:$0xff]
          %v1859 = vld [vmem:[%s617 + $0x78] sm:$0xff]
          %v1860 = vld [vmem:[%s617 + $0x80] sm:$0xff]
          %v1861 = vld [vmem:[%s617 + $0x88] sm:$0xff]
          %v1862 = vld [vmem:[%s617 + $0x90] sm:$0xff]
          %v1863 = vld [vmem:[%s617 + $0x98] sm:$0xff]
          %v1864 = vld [vmem:[%s617 + $0xa0] sm:$0xff]
          %v1865 = vld [vmem:[%s617 + $0xa8] sm:$0xff]
          %v1866 = vld [vmem:[%s617 + $0xb0] sm:$0xff]
          %v1867 = vld [vmem:[%s617 + $0xb8] sm:$0xff]
          %v1868 = vld [vmem:[%s617 + $0xc0] sm:$0xff]
          %v1869 = vld [vmem:[%s617 + $0xc8] sm:$0xff]
          %v1870 = vld [vmem:[%s617 + $0xd0] sm:$0xff]
          %v1871 = vld [vmem:[%s617 + $0xd8] sm:$0xff]
          %v1872 = vld [vmem:[%s617 + $0xe0] sm:$0xff]
          %v1873 = vld [vmem:[%s617 + $0xe8] sm:$0xff]
          %v1874 = vld [vmem:[%s617 + $0xf0] sm:$0xff]
          %v1875 = vld [vmem:[%s617 + $0xf8] sm:$0xff]
          %1877 = vset.pattern.permute.xlu0 0
          %1878 = vperm.xlu0 %1877, %v1844
          %v1879 = vpop.permute.xlu0 %1878
          %1882 = vset.pattern.permute.xlu0 0
          %1883 = vperm.xlu0 %1882, %v1845
          %v1884 = vpop.permute.xlu0 %1883
          %1887 = vset.pattern.permute.xlu0 0
          %1888 = vperm.xlu0 %1887, %v1846
          %v1889 = vpop.permute.xlu0 %1888
          %1892 = vset.pattern.permute.xlu0 0
          %1893 = vperm.xlu0 %1892, %v1847
          %v1894 = vpop.permute.xlu0 %1893
          %1897 = vset.pattern.permute.xlu0 0
          %1898 = vperm.xlu0 %1897, %v1848
          %v1899 = vpop.permute.xlu0 %1898
          %1902 = vset.pattern.permute.xlu0 0
          %1903 = vperm.xlu0 %1902, %v1849
          %v1904 = vpop.permute.xlu0 %1903
          %1907 = vset.pattern.permute.xlu0 0
          %1908 = vperm.xlu0 %1907, %v1850
          %v1909 = vpop.permute.xlu0 %1908
          %1912 = vset.pattern.permute.xlu0 0
          %1913 = vperm.xlu0 %1912, %v1851
          %v1914 = vpop.permute.xlu0 %1913
          %1917 = vset.pattern.permute.xlu0 0
          %1918 = vperm.xlu0 %1917, %v1852
          %v1919 = vpop.permute.xlu0 %1918
          %1922 = vset.pattern.permute.xlu0 0
          %1923 = vperm.xlu0 %1922, %v1853
          %v1924 = vpop.permute.xlu0 %1923
          %1927 = vset.pattern.permute.xlu0 0
          %1928 = vperm.xlu0 %1927, %v1854
          %v1929 = vpop.permute.xlu0 %1928
          %1932 = vset.pattern.permute.xlu0 0
          %1933 = vperm.xlu0 %1932, %v1855
          %v1934 = vpop.permute.xlu0 %1933
          %1937 = vset.pattern.permute.xlu0 0
          %1938 = vperm.xlu0 %1937, %v1856
          %v1939 = vpop.permute.xlu0 %1938
          %1942 = vset.pattern.permute.xlu0 0
          %1943 = vperm.xlu0 %1942, %v1857
          %v1944 = vpop.permute.xlu0 %1943
          %1947 = vset.pattern.permute.xlu0 0
          %1948 = vperm.xlu0 %1947, %v1858
          %v1949 = vpop.permute.xlu0 %1948
          %1952 = vset.pattern.permute.xlu0 0
          %1953 = vperm.xlu0 %1952, %v1859
          %v1954 = vpop.permute.xlu0 %1953
          %1957 = vset.pattern.permute.xlu0 0
          %1958 = vperm.xlu0 %1957, %v1860
          %v1959 = vpop.permute.xlu0 %1958
          %1962 = vset.pattern.permute.xlu0 0
          %1963 = vperm.xlu0 %1962, %v1861
          %v1964 = vpop.permute.xlu0 %1963
          %1967 = vset.pattern.permute.xlu0 0
          %1968 = vperm.xlu0 %1967, %v1862
          %v1969 = vpop.permute.xlu0 %1968
          %1972 = vset.pattern.permute.xlu0 0
          %1973 = vperm.xlu0 %1972, %v1863
          %v1974 = vpop.permute.xlu0 %1973
          %1977 = vset.pattern.permute.xlu0 0
          %1978 = vperm.xlu0 %1977, %v1864
          %v1979 = vpop.permute.xlu0 %1978
          %1982 = vset.pattern.permute.xlu0 0
          %1983 = vperm.xlu0 %1982, %v1865
          %v1984 = vpop.permute.xlu0 %1983
          %1987 = vset.pattern.permute.xlu0 0
          %1988 = vperm.xlu0 %1987, %v1866
          %v1989 = vpop.permute.xlu0 %1988
          %1992 = vset.pattern.permute.xlu0 0
          %1993 = vperm.xlu0 %1992, %v1867
          %v1994 = vpop.permute.xlu0 %1993
          %1997 = vset.pattern.permute.xlu0 0
          %1998 = vperm.xlu0 %1997, %v1868
          %v1999 = vpop.permute.xlu0 %1998
          %2002 = vset.pattern.permute.xlu0 0
          %2003 = vperm.xlu0 %2002, %v1869
          %v2004 = vpop.permute.xlu0 %2003
          %2007 = vset.pattern.permute.xlu0 0
          %2008 = vperm.xlu0 %2007, %v1870
          %v2009 = vpop.permute.xlu0 %2008
          %2012 = vset.pattern.permute.xlu0 0
          %2013 = vperm.xlu0 %2012, %v1871
          %v2014 = vpop.permute.xlu0 %2013
          %2017 = vset.pattern.permute.xlu0 0
          %2018 = vperm.xlu0 %2017, %v1872
          %v2019 = vpop.permute.xlu0 %2018
          %2022 = vset.pattern.permute.xlu0 0
          %2023 = vperm.xlu0 %2022, %v1873
          %v2024 = vpop.permute.xlu0 %2023
          %2027 = vset.pattern.permute.xlu0 0
          %2028 = vperm.xlu0 %2027, %v1874
          %v2029 = vpop.permute.xlu0 %2028
          %2032 = vset.pattern.permute.xlu0 0
          %2033 = vperm.xlu0 %2032, %v1875
          %v2034 = vpop.permute.xlu0 %2033
          %v2036 = vmul.f32 %v1812, %v1879
          %v2037 = vmul.f32 %v1813, %v1884
          %v2038 = vmul.f32 %v1814, %v1889
          %v2039 = vmul.f32 %v1815, %v1894
          %v2040 = vmul.f32 %v1816, %v1899
          %v2041 = vmul.f32 %v1817, %v1904
          %v2042 = vmul.f32 %v1818, %v1909
          %v2043 = vmul.f32 %v1819, %v1914
          %v2044 = vmul.f32 %v1820, %v1919
          %v2045 = vmul.f32 %v1821, %v1924
          %v2046 = vmul.f32 %v1822, %v1929
          %v2047 = vmul.f32 %v1823, %v1934
          %v2048 = vmul.f32 %v1824, %v1939
          %v2049 = vmul.f32 %v1825, %v1944
          %v2050 = vmul.f32 %v1826, %v1949
          %v2051 = vmul.f32 %v1827, %v1954
          %v2052 = vmul.f32 %v1828, %v1959
          %v2053 = vmul.f32 %v1829, %v1964
          %v2054 = vmul.f32 %v1830, %v1969
          %v2055 = vmul.f32 %v1831, %v1974
          %v2056 = vmul.f32 %v1832, %v1979
          %v2057 = vmul.f32 %v1833, %v1984
          %v2058 = vmul.f32 %v1834, %v1989
          %v2059 = vmul.f32 %v1835, %v1994
          %v2060 = vmul.f32 %v1836, %v1999
          %v2061 = vmul.f32 %v1837, %v2004
          %v2062 = vmul.f32 %v1838, %v2009
          %v2063 = vmul.f32 %v1839, %v2014
          %v2064 = vmul.f32 %v1840, %v2019
          %v2065 = vmul.f32 %v1841, %v2024
          %v2066 = vmul.f32 %v1842, %v2029
          %v2067 = vmul.f32 %v1843, %v2034
          %v2068 = vpack.c.bf16 %v2037, %v2036
          %v2069 = vpack.c.bf16 %v2039, %v2038
          %v2070 = vpack.c.bf16 %v2041, %v2040
          %v2071 = vpack.c.bf16 %v2043, %v2042
          %v2072 = vpack.c.bf16 %v2045, %v2044
          %v2073 = vpack.c.bf16 %v2047, %v2046
          %v2074 = vpack.c.bf16 %v2049, %v2048
          %v2075 = vpack.c.bf16 %v2051, %v2050
          %v2076 = vpack.c.bf16 %v2053, %v2052
          %v2077 = vpack.c.bf16 %v2055, %v2054
          %v2078 = vpack.c.bf16 %v2057, %v2056
          %v2079 = vpack.c.bf16 %v2059, %v2058
          %v2080 = vpack.c.bf16 %v2061, %v2060
          %v2081 = vpack.c.bf16 %v2063, %v2062
          %v2082 = vpack.c.bf16 %v2065, %v2064
          %v2083 = vpack.c.bf16 %v2067, %v2066
          %v2084 = vld [vmem:[%s4] sm:$0xf]
          %v2085 = vld [vmem:[%s4 + $0x4] sm:$0xf]
          %v2086 = vld [vmem:[%s4 + $0x8] sm:$0xf]
          %v2087 = vld [vmem:[%s4 + $0xc] sm:$0xf]
          %v2088 = vld [vmem:[%s4 + $0x10] sm:$0xf]
          %v2089 = vld [vmem:[%s4 + $0x14] sm:$0xf]
          %v2090 = vld [vmem:[%s4 + $0x18] sm:$0xf]
          %v2091 = vld [vmem:[%s4 + $0x1c] sm:$0xf]
          %v2092 = vld [vmem:[%s4 + $0x20] sm:$0xf]
          %v2093 = vld [vmem:[%s4 + $0x24] sm:$0xf]
          %v2094 = vld [vmem:[%s4 + $0x28] sm:$0xf]
          %v2095 = vld [vmem:[%s4 + $0x2c] sm:$0xf]
          %v2096 = vld [vmem:[%s4 + $0x30] sm:$0xf]
          %v2097 = vld [vmem:[%s4 + $0x34] sm:$0xf]
          %v2098 = vld [vmem:[%s4 + $0x38] sm:$0xf]
          %v2099 = vld [vmem:[%s4 + $0x3c] sm:$0xf]
          %v2100 = vld [vmem:[%s5] sm:$0x1]
          %v2102 = vlaneseq
          %v2103 = vshrl.u32 %v2102, 7
          %v2104 = vsub.s32 0, %v2103
          %v2105 = vrot.slane %v2100, %v2104
          %v2123 = vunpack.c.l.b16 %v2084
          %v2124 = vunpack.c.l.b16 %v2085
          %v2125 = vunpack.c.l.b16 %v2086
          %v2126 = vunpack.c.l.b16 %v2087
          %v2127 = vunpack.c.l.b16 %v2088
          %v2128 = vunpack.c.l.b16 %v2089
          %v2129 = vunpack.c.l.b16 %v2090
          %v2130 = vunpack.c.l.b16 %v2091
          %v2131 = vunpack.c.l.b16 %v2092
          %v2132 = vunpack.c.l.b16 %v2093
          %v2133 = vunpack.c.l.b16 %v2094
          %v2134 = vunpack.c.l.b16 %v2095
          %v2135 = vunpack.c.l.b16 %v2096
          %v2136 = vunpack.c.l.b16 %v2097
          %v2137 = vunpack.c.l.b16 %v2098
          %v2138 = vunpack.c.l.b16 %v2099
          %v2139 = vpack.c.b16 %v2124, %v2123
          %v2140 = vpack.c.b16 %v2126, %v2125
          %v2141 = vpack.c.b16 %v2128, %v2127
          %v2142 = vpack.c.b16 %v2130, %v2129
          %v2143 = vpack.c.b16 %v2132, %v2131
          %v2144 = vpack.c.b16 %v2134, %v2133
          %v2145 = vpack.c.b16 %v2136, %v2135
          %v2146 = vpack.c.b16 %v2138, %v2137
          %2155 = vmatprep.subr.bf16.mxu0 0
          %2156 = vmatpush1.bf16.msra.mxu0 %v2139
          %2157 = vmatprep.subr.bf16.mxu0 0
          %2158 = vmatpush1.bf16.msra.mxu0 %v2140
          %2159 = vmatprep.subr.bf16.mxu0 0
          %2160 = vmatpush1.bf16.msra.mxu0 %v2141
          %2161 = vmatprep.subr.bf16.mxu0 0
          %2162 = vmatpush1.bf16.msra.mxu0 %v2142
          %2163 = vmatprep.subr.bf16.mxu0 0
          %2164 = vmatpush1.bf16.msra.mxu0 %v2143
          %2165 = vmatprep.subr.bf16.mxu0 0
          %2166 = vmatpush1.bf16.msra.mxu0 %v2144
          %2167 = vmatprep.subr.bf16.mxu0 0
          %2168 = vmatpush1.bf16.msra.mxu0 %v2145
          %2169 = vmatprep.subr.bf16.mxu0 0
          %2170 = vmatpush1.bf16.msra.mxu0 %v2146
          %2171 = vmatprep.subr.bf16.mxu0 0
          %2172 = vmatpush1.bf16.msra.mxu0 0
          %2173 = vmatprep.subr.bf16.mxu0 0
          %2174 = vmatpush1.bf16.msra.mxu0 0
          %2175 = vmatprep.subr.bf16.mxu0 0
          %2176 = vmatpush1.bf16.msra.mxu0 0
          %2177 = vmatprep.subr.bf16.mxu0 0
          %2178 = vmatpush1.bf16.msra.mxu0 0
          %2179 = vmatprep.subr.bf16.mxu0 0
          %2180 = vmatpush1.bf16.msra.mxu0 0
          %2181 = vmatprep.subr.bf16.mxu0 0
          %2182 = vmatpush1.bf16.msra.mxu0 0
          %2183 = vmatprep.subr.bf16.mxu0 0
          %2184 = vmatpush1.bf16.msra.mxu0 0
          %2185 = vmatprep.subr.bf16.mxu0 0
          %2186 = vmatpush1.bf16.msra.mxu0 0
          %2187 = vmatprep.mubr.bf16.mxu0 0
          %2188 = vmatmul.mubr.bf16.gmra.mrb[0].mxu0 %v2068
          %v2189 = vpop.f32.mrb[0].mxu0
          %v2190 = vadd.f32 %v2105, %v2189
          %v2191 = vpop.f32.mrb[0].mxu0
          %v2192 = vpop.f32.mrb[0].mxu0
          %v2193 = vadd.f32 %v2105, %v2192
          %v2194 = vpop.f32.mrb[0].mxu0
          %2195 = vmatprep.mubr.bf16.mxu0 0
          %2196 = vmatmul.mubr.bf16.gmra.mrb[0].mxu0 %v2069
          %v2197 = vpop.f32.mrb[0].mxu0
          %v2198 = vadd.f32 %v2105, %v2197
          %v2199 = vpop.f32.mrb[0].mxu0
          %v2200 = vpop.f32.mrb[0].mxu0
          %v2201 = vadd.f32 %v2105, %v2200
          %v2202 = vpop.f32.mrb[0].mxu0
          %2203 = vmatprep.mubr.bf16.mxu0 0
          %2204 = vmatmul.mubr.bf16.gmra.mrb[0].mxu0 %v2070
          %v2205 = vpop.f32.mrb[0].mxu0
          %v2206 = vadd.f32 %v2105, %v2205
          %v2207 = vpop.f32.mrb[0].mxu0
          %v2208 = vpop.f32.mrb[0].mxu0
          %v2209 = vadd.f32 %v2105, %v2208
          %v2210 = vpop.f32.mrb[0].mxu0
          %2211 = vmatprep.mubr.bf16.mxu0 0
          %2212 = vmatmul.mubr.bf16.gmra.mrb[0].mxu0 %v2071
          %v2213 = vpop.f32.mrb[0].mxu0
          %v2214 = vadd.f32 %v2105, %v2213
          %v2215 = vpop.f32.mrb[0].mxu0
          %v2216 = vpop.f32.mrb[0].mxu0
          %v2217 = vadd.f32 %v2105, %v2216
          %v2218 = vpop.f32.mrb[0].mxu0
          %2219 = vmatprep.mubr.bf16.mxu0 0
          %2220 = vmatmul.mubr.bf16.gmra.mrb[0].mxu0 %v2072
          %v2221 = vpop.f32.mrb[0].mxu0
          %v2222 = vadd.f32 %v2105, %v2221
          %v2223 = vpop.f32.mrb[0].mxu0
          %v2224 = vpop.f32.mrb[0].mxu0
          %v2225 = vadd.f32 %v2105, %v2224
          %v2226 = vpop.f32.mrb[0].mxu0
          %2227 = vmatprep.mubr.bf16.mxu0 0
          %2228 = vmatmul.mubr.bf16.gmra.mrb[0].mxu0 %v2073
          %v2229 = vpop.f32.mrb[0].mxu0
          %v2230 = vadd.f32 %v2105, %v2229
          %v2231 = vpop.f32.mrb[0].mxu0
          %v2232 = vpop.f32.mrb[0].mxu0
          %v2233 = vadd.f32 %v2105, %v2232
          %v2234 = vpop.f32.mrb[0].mxu0
          %2235 = vmatprep.mubr.bf16.mxu0 0
          %2236 = vmatmul.mubr.bf16.gmra.mrb[0].mxu0 %v2074
          %v2237 = vpop.f32.mrb[0].mxu0
          %v2238 = vadd.f32 %v2105, %v2237
          %v2239 = vpop.f32.mrb[0].mxu0
          %v2240 = vpop.f32.mrb[0].mxu0
          %v2241 = vadd.f32 %v2105, %v2240
          %v2242 = vpop.f32.mrb[0].mxu0
          %2243 = vmatprep.mubr.bf16.mxu0 0
          %2244 = vmatmul.mubr.bf16.gmra.mrb[0].mxu0 %v2075
          %v2245 = vpop.f32.mrb[0].mxu0
          %v2246 = vadd.f32 %v2105, %v2245
          %v2247 = vpop.f32.mrb[0].mxu0
          %v2248 = vpop.f32.mrb[0].mxu0
          %v2249 = vadd.f32 %v2105, %v2248
          %v2250 = vpop.f32.mrb[0].mxu0
          %2251 = vmatprep.mubr.bf16.mxu0 0
          %2252 = vmatmul.mubr.bf16.gmra.mrb[0].mxu0 %v2076
          %v2253 = vpop.f32.mrb[0].mxu0
          %v2254 = vadd.f32 %v2105, %v2253
          %v2255 = vpop.f32.mrb[0].mxu0
          %v2256 = vpop.f32.mrb[0].mxu0
          %v2257 = vadd.f32 %v2105, %v2256
          %v2258 = vpop.f32.mrb[0].mxu0
          %2259 = vmatprep.mubr.bf16.mxu0 0
          %2260 = vmatmul.mubr.bf16.gmra.mrb[0].mxu0 %v2077
          %v2261 = vpop.f32.mrb[0].mxu0
          %v2262 = vadd.f32 %v2105, %v2261
          %v2263 = vpop.f32.mrb[0].mxu0
          %v2264 = vpop.f32.mrb[0].mxu0
          %v2265 = vadd.f32 %v2105, %v2264
          %v2266 = vpop.f32.mrb[0].mxu0
          %2267 = vmatprep.mubr.bf16.mxu0 0
          %2268 = vmatmul.mubr.bf16.gmra.mrb[0].mxu0 %v2078
          %v2269 = vpop.f32.mrb[0].mxu0
          %v2270 = vadd.f32 %v2105, %v2269
          %v2271 = vpop.f32.mrb[0].mxu0
          %v2272 = vpop.f32.mrb[0].mxu0
          %v2273 = vadd.f32 %v2105, %v2272
          %v2274 = vpop.f32.mrb[0].mxu0
          %2275 = vmatprep.mubr.bf16.mxu0 0
          %2276 = vmatmul.mubr.bf16.gmra.mrb[0].mxu0 %v2079
          %v2277 = vpop.f32.mrb[0].mxu0
          %v2278 = vadd.f32 %v2105, %v2277
          %v2279 = vpop.f32.mrb[0].mxu0
          %v2280 = vpop.f32.mrb[0].mxu0
          %v2281 = vadd.f32 %v2105, %v2280
          %v2282 = vpop.f32.mrb[0].mxu0
          %2283 = vmatprep.mubr.bf16.mxu0 0
          %2284 = vmatmul.mubr.bf16.gmra.mrb[0].mxu0 %v2080
          %v2285 = vpop.f32.mrb[0].mxu0
          %v2286 = vadd.f32 %v2105, %v2285
          %v2287 = vpop.f32.mrb[0].mxu0
          %v2288 = vpop.f32.mrb[0].mxu0
          %v2289 = vadd.f32 %v2105, %v2288
          %v2290 = vpop.f32.mrb[0].mxu0
          %2291 = vmatprep.mubr.bf16.mxu0 0
          %2292 = vmatmul.mubr.bf16.gmra.mrb[0].mxu0 %v2081
          %v2293 = vpop.f32.mrb[0].mxu0
          %v2294 = vadd.f32 %v2105, %v2293
          %v2295 = vpop.f32.mrb[0].mxu0
          %v2296 = vpop.f32.mrb[0].mxu0
          %v2297 = vadd.f32 %v2105, %v2296
          %v2298 = vpop.f32.mrb[0].mxu0
          %2299 = vmatprep.mubr.bf16.mxu0 0
          %2300 = vmatmul.mubr.bf16.gmra.mrb[0].mxu0 %v2082
          %v2301 = vpop.f32.mrb[0].mxu0
          %v2302 = vadd.f32 %v2105, %v2301
          %v2303 = vpop.f32.mrb[0].mxu0
          %v2304 = vpop.f32.mrb[0].mxu0
          %v2305 = vadd.f32 %v2105, %v2304
          %v2306 = vpop.f32.mrb[0].mxu0
          %2307 = vmatprep.mubr.bf16.mxu0 0
          %2308 = vmatmul.mubr.bf16.gmra.mrb[0].mxu0 %v2083
          %v2309 = vpop.f32.mrb[0].mxu0
          %v2310 = vadd.f32 %v2105, %v2309
          %v2311 = vpop.f32.mrb[0].mxu0
          %v2312 = vpop.f32.mrb[0].mxu0
          %v2313 = vadd.f32 %v2105, %v2312
          %v2314 = vpop.f32.mrb[0].mxu0
          %2315 = vdwg.mxu0
          %v2316 = vmax.f32 %v2190, 0.0
          %v2317 = vmax.f32 %v2193, 0.0
          %v2318 = vmax.f32 %v2198, 0.0
          %v2319 = vmax.f32 %v2201, 0.0
          %v2320 = vmax.f32 %v2206, 0.0
          %v2321 = vmax.f32 %v2209, 0.0
          %v2322 = vmax.f32 %v2214, 0.0
          %v2323 = vmax.f32 %v2217, 0.0
          %v2324 = vmax.f32 %v2222, 0.0
          %v2325 = vmax.f32 %v2225, 0.0
          %v2326 = vmax.f32 %v2230, 0.0
          %v2327 = vmax.f32 %v2233, 0.0
          %v2328 = vmax.f32 %v2238, 0.0
          %v2329 = vmax.f32 %v2241, 0.0
          %v2330 = vmax.f32 %v2246, 0.0
          %v2331 = vmax.f32 %v2249, 0.0
          %v2332 = vmax.f32 %v2254, 0.0
          %v2333 = vmax.f32 %v2257, 0.0
          %v2334 = vmax.f32 %v2262, 0.0
          %v2335 = vmax.f32 %v2265, 0.0
          %v2336 = vmax.f32 %v2270, 0.0
          %v2337 = vmax.f32 %v2273, 0.0
          %v2338 = vmax.f32 %v2278, 0.0
          %v2339 = vmax.f32 %v2281, 0.0
          %v2340 = vmax.f32 %v2286, 0.0
          %v2341 = vmax.f32 %v2289, 0.0
          %v2342 = vmax.f32 %v2294, 0.0
          %v2343 = vmax.f32 %v2297, 0.0
          %v2344 = vmax.f32 %v2302, 0.0
          %v2345 = vmax.f32 %v2305, 0.0
          %v2346 = vmax.f32 %v2310, 0.0
          %v2347 = vmax.f32 %v2313, 0.0
          %v2348 = vld [vmem:[%s623] sm:$0xf]
          %v2349 = vld [vmem:[%s623 + $0x4] sm:$0xf]
          %v2350 = vld [vmem:[%s623 + $0x8] sm:$0xf]
          %v2351 = vld [vmem:[%s623 + $0xc] sm:$0xf]
          %v2352 = vld [vmem:[%s623 + $0x10] sm:$0xf]
          %v2353 = vld [vmem:[%s623 + $0x14] sm:$0xf]
          %v2354 = vld [vmem:[%s623 + $0x18] sm:$0xf]
          %v2355 = vld [vmem:[%s623 + $0x1c] sm:$0xf]
          %v2356 = vld [vmem:[%s623 + $0x20] sm:$0xf]
          %v2357 = vld [vmem:[%s623 + $0x24] sm:$0xf]
          %v2358 = vld [vmem:[%s623 + $0x28] sm:$0xf]
          %v2359 = vld [vmem:[%s623 + $0x2c] sm:$0xf]
          %v2360 = vld [vmem:[%s623 + $0x30] sm:$0xf]
          %v2361 = vld [vmem:[%s623 + $0x34] sm:$0xf]
          %v2362 = vld [vmem:[%s623 + $0x38] sm:$0xf]
          %v2363 = vld [vmem:[%s623 + $0x3c] sm:$0xf]
          %v2364 = vld [vmem:[%s623 + $0x40] sm:$0xf]
          %v2365 = vld [vmem:[%s623 + $0x44] sm:$0xf]
          %v2366 = vld [vmem:[%s623 + $0x48] sm:$0xf]
          %v2367 = vld [vmem:[%s623 + $0x4c] sm:$0xf]
          %v2368 = vld [vmem:[%s623 + $0x50] sm:$0xf]
          %v2369 = vld [vmem:[%s623 + $0x54] sm:$0xf]
          %v2370 = vld [vmem:[%s623 + $0x58] sm:$0xf]
          %v2371 = vld [vmem:[%s623 + $0x5c] sm:$0xf]
          %v2372 = vld [vmem:[%s623 + $0x60] sm:$0xf]
          %v2373 = vld [vmem:[%s623 + $0x64] sm:$0xf]
          %v2374 = vld [vmem:[%s623 + $0x68] sm:$0xf]
          %v2375 = vld [vmem:[%s623 + $0x6c] sm:$0xf]
          %v2376 = vld [vmem:[%s623 + $0x70] sm:$0xf]
          %v2377 = vld [vmem:[%s623 + $0x74] sm:$0xf]
          %v2378 = vld [vmem:[%s623 + $0x78] sm:$0xf]
          %v2379 = vld [vmem:[%s623 + $0x7c] sm:$0xf]
          %v2380 = vunpack.c.l.bf16 %v2348
          %v2381 = vunpack.c.l.bf16 %v2349
          %v2382 = vunpack.c.l.bf16 %v2350
          %v2383 = vunpack.c.l.bf16 %v2351
          %v2384 = vunpack.c.l.bf16 %v2352
          %v2385 = vunpack.c.l.bf16 %v2353
          %v2386 = vunpack.c.l.bf16 %v2354
          %v2387 = vunpack.c.l.bf16 %v2355
          %v2388 = vunpack.c.l.bf16 %v2356
          %v2389 = vunpack.c.l.bf16 %v2357
          %v2390 = vunpack.c.l.bf16 %v2358
          %v2391 = vunpack.c.l.bf16 %v2359
          %v2392 = vunpack.c.l.bf16 %v2360
          %v2393 = vunpack.c.l.bf16 %v2361
          %v2394 = vunpack.c.l.bf16 %v2362
          %v2395 = vunpack.c.l.bf16 %v2363
          %v2396 = vunpack.c.l.bf16 %v2364
          %v2397 = vunpack.c.l.bf16 %v2365
          %v2398 = vunpack.c.l.bf16 %v2366
          %v2399 = vunpack.c.l.bf16 %v2367
          %v2400 = vunpack.c.l.bf16 %v2368
          %v2401 = vunpack.c.l.bf16 %v2369
          %v2402 = vunpack.c.l.bf16 %v2370
          %v2403 = vunpack.c.l.bf16 %v2371
          %v2404 = vunpack.c.l.bf16 %v2372
          %v2405 = vunpack.c.l.bf16 %v2373
          %v2406 = vunpack.c.l.bf16 %v2374
          %v2407 = vunpack.c.l.bf16 %v2375
          %v2408 = vunpack.c.l.bf16 %v2376
          %v2409 = vunpack.c.l.bf16 %v2377
          %v2410 = vunpack.c.l.bf16 %v2378
          %v2411 = vunpack.c.l.bf16 %v2379
          %v2412 = vmul.f32 %v2380, 0.2
          %v2413 = vmul.f32 %v2381, 0.2
          %v2414 = vmul.f32 %v2382, 0.2
          %v2415 = vmul.f32 %v2383, 0.2
          %v2416 = vmul.f32 %v2384, 0.2
          %v2417 = vmul.f32 %v2385, 0.2
          %v2418 = vmul.f32 %v2386, 0.2
          %v2419 = vmul.f32 %v2387, 0.2
          %v2420 = vmul.f32 %v2388, 0.2
          %v2421 = vmul.f32 %v2389, 0.2
          %v2422 = vmul.f32 %v2390, 0.2
          %v2423 = vmul.f32 %v2391, 0.2
          %v2424 = vmul.f32 %v2392, 0.2
          %v2425 = vmul.f32 %v2393, 0.2
          %v2426 = vmul.f32 %v2394, 0.2
          %v2427 = vmul.f32 %v2395, 0.2
          %v2428 = vmul.f32 %v2396, 0.2
          %v2429 = vmul.f32 %v2397, 0.2
          %v2430 = vmul.f32 %v2398, 0.2
          %v2431 = vmul.f32 %v2399, 0.2
          %v2432 = vmul.f32 %v2400, 0.2
          %v2433 = vmul.f32 %v2401, 0.2
          %v2434 = vmul.f32 %v2402, 0.2
          %v2435 = vmul.f32 %v2403, 0.2
          %v2436 = vmul.f32 %v2404, 0.2
          %v2437 = vmul.f32 %v2405, 0.2
          %v2438 = vmul.f32 %v2406, 0.2
          %v2439 = vmul.f32 %v2407, 0.2
          %v2440 = vmul.f32 %v2408, 0.2
          %v2441 = vmul.f32 %v2409, 0.2
          %v2442 = vmul.f32 %v2410, 0.2
          %v2443 = vmul.f32 %v2411, 0.2
          %v2444 = vadd.f32 %v2316, %v2412
          %v2445 = vadd.f32 %v2317, %v2413
          %v2446 = vadd.f32 %v2318, %v2414
          %v2447 = vadd.f32 %v2319, %v2415
          %v2448 = vadd.f32 %v2320, %v2416
          %v2449 = vadd.f32 %v2321, %v2417
          %v2450 = vadd.f32 %v2322, %v2418
          %v2451 = vadd.f32 %v2323, %v2419
          %v2452 = vadd.f32 %v2324, %v2420
          %v2453 = vadd.f32 %v2325, %v2421
          %v2454 = vadd.f32 %v2326, %v2422
          %v2455 = vadd.f32 %v2327, %v2423
          %v2456 = vadd.f32 %v2328, %v2424
          %v2457 = vadd.f32 %v2329, %v2425
          %v2458 = vadd.f32 %v2330, %v2426
          %v2459 = vadd.f32 %v2331, %v2427
          %v2460 = vadd.f32 %v2332, %v2428
          %v2461 = vadd.f32 %v2333, %v2429
          %v2462 = vadd.f32 %v2334, %v2430
          %v2463 = vadd.f32 %v2335, %v2431
          %v2464 = vadd.f32 %v2336, %v2432
          %v2465 = vadd.f32 %v2337, %v2433
          %v2466 = vadd.f32 %v2338, %v2434
          %v2467 = vadd.f32 %v2339, %v2435
          %v2468 = vadd.f32 %v2340, %v2436
          %v2469 = vadd.f32 %v2341, %v2437
          %v2470 = vadd.f32 %v2342, %v2438
          %v2471 = vadd.f32 %v2343, %v2439
          %v2472 = vadd.f32 %v2344, %v2440
          %v2473 = vadd.f32 %v2345, %v2441
          %v2474 = vadd.f32 %v2346, %v2442
          %v2475 = vadd.f32 %v2347, %v2443
          %s2476 = sld [smem:[#allocation3 + $0x1]]
          %v2477 = vld [vmem:[%s629] sm:$0xf]
          %v2478 = vld [vmem:[%s629 + $0x4] sm:$0xf]
          %v2479 = vld [vmem:[%s629 + $0x8] sm:$0xf]
          %v2480 = vld [vmem:[%s629 + $0xc] sm:$0xf]
          %v2481 = vld [vmem:[%s629 + $0x10] sm:$0xf]
          %v2482 = vld [vmem:[%s629 + $0x14] sm:$0xf]
          %v2483 = vld [vmem:[%s629 + $0x18] sm:$0xf]
          %v2484 = vld [vmem:[%s629 + $0x1c] sm:$0xf]
          %v2485 = vld [vmem:[%s629 + $0x20] sm:$0xf]
          %v2486 = vld [vmem:[%s629 + $0x24] sm:$0xf]
          %v2487 = vld [vmem:[%s629 + $0x28] sm:$0xf]
          %v2488 = vld [vmem:[%s629 + $0x2c] sm:$0xf]
          %v2489 = vld [vmem:[%s629 + $0x30] sm:$0xf]
          %v2490 = vld [vmem:[%s629 + $0x34] sm:$0xf]
          %v2491 = vld [vmem:[%s629 + $0x38] sm:$0xf]
          %v2492 = vld [vmem:[%s629 + $0x3c] sm:$0xf]
          %v2493 = vld [vmem:[%s629 + $0x40] sm:$0xf]
          %v2494 = vld [vmem:[%s629 + $0x44] sm:$0xf]
          %v2495 = vld [vmem:[%s629 + $0x48] sm:$0xf]
          %v2496 = vld [vmem:[%s629 + $0x4c] sm:$0xf]
          %v2497 = vld [vmem:[%s629 + $0x50] sm:$0xf]
          %v2498 = vld [vmem:[%s629 + $0x54] sm:$0xf]
          %v2499 = vld [vmem:[%s629 + $0x58] sm:$0xf]
          %v2500 = vld [vmem:[%s629 + $0x5c] sm:$0xf]
          %v2501 = vld [vmem:[%s629 + $0x60] sm:$0xf]
          %v2502 = vld [vmem:[%s629 + $0x64] sm:$0xf]
          %v2503 = vld [vmem:[%s629 + $0x68] sm:$0xf]
          %v2504 = vld [vmem:[%s629 + $0x6c] sm:$0xf]
          %v2505 = vld [vmem:[%s629 + $0x70] sm:$0xf]
          %v2506 = vld [vmem:[%s629 + $0x74] sm:$0xf]
          %v2507 = vld [vmem:[%s629 + $0x78] sm:$0xf]
          %v2508 = vld [vmem:[%s629 + $0x7c] sm:$0xf]
          %v2509 = vunpack.c.l.bf16 %v2477
          %v2510 = vunpack.c.l.bf16 %v2478
          %v2511 = vunpack.c.l.bf16 %v2479
          %v2512 = vunpack.c.l.bf16 %v2480
          %v2513 = vunpack.c.l.bf16 %v2481
          %v2514 = vunpack.c.l.bf16 %v2482
          %v2515 = vunpack.c.l.bf16 %v2483
          %v2516 = vunpack.c.l.bf16 %v2484
          %v2517 = vunpack.c.l.bf16 %v2485
          %v2518 = vunpack.c.l.bf16 %v2486
          %v2519 = vunpack.c.l.bf16 %v2487
          %v2520 = vunpack.c.l.bf16 %v2488
          %v2521 = vunpack.c.l.bf16 %v2489
          %v2522 = vunpack.c.l.bf16 %v2490
          %v2523 = vunpack.c.l.bf16 %v2491
          %v2524 = vunpack.c.l.bf16 %v2492
          %v2525 = vunpack.c.l.bf16 %v2493
          %v2526 = vunpack.c.l.bf16 %v2494
          %v2527 = vunpack.c.l.bf16 %v2495
          %v2528 = vunpack.c.l.bf16 %v2496
          %v2529 = vunpack.c.l.bf16 %v2497
          %v2530 = vunpack.c.l.bf16 %v2498
          %v2531 = vunpack.c.l.bf16 %v2499
          %v2532 = vunpack.c.l.bf16 %v2500
          %v2533 = vunpack.c.l.bf16 %v2501
          %v2534 = vunpack.c.l.bf16 %v2502
          %v2535 = vunpack.c.l.bf16 %v2503
          %v2536 = vunpack.c.l.bf16 %v2504
          %v2537 = vunpack.c.l.bf16 %v2505
          %v2538 = vunpack.c.l.bf16 %v2506
          %v2539 = vunpack.c.l.bf16 %v2507
          %v2540 = vunpack.c.l.bf16 %v2508
          %v2541 = vstv %s2476
          %v2542 = vmul.f32 %v2541, %v2509
          %v2543 = vmul.f32 %v2541, %v2510
          %v2544 = vmul.f32 %v2541, %v2511
          %v2545 = vmul.f32 %v2541, %v2512
          %v2546 = vmul.f32 %v2541, %v2513
          %v2547 = vmul.f32 %v2541, %v2514
          %v2548 = vmul.f32 %v2541, %v2515
          %v2549 = vmul.f32 %v2541, %v2516
          %v2550 = vmul.f32 %v2541, %v2517
          %v2551 = vmul.f32 %v2541, %v2518
          %v2552 = vmul.f32 %v2541, %v2519
          %v2553 = vmul.f32 %v2541, %v2520
          %v2554 = vmul.f32 %v2541, %v2521
          %v2555 = vmul.f32 %v2541, %v2522
          %v2556 = vmul.f32 %v2541, %v2523
          %v2557 = vmul.f32 %v2541, %v2524
          %v2558 = vmul.f32 %v2541, %v2525
          %v2559 = vmul.f32 %v2541, %v2526
          %v2560 = vmul.f32 %v2541, %v2527
          %v2561 = vmul.f32 %v2541, %v2528
          %v2562 = vmul.f32 %v2541, %v2529
          %v2563 = vmul.f32 %v2541, %v2530
          %v2564 = vmul.f32 %v2541, %v2531
          %v2565 = vmul.f32 %v2541, %v2532
          %v2566 = vmul.f32 %v2541, %v2533
          %v2567 = vmul.f32 %v2541, %v2534
          %v2568 = vmul.f32 %v2541, %v2535
          %v2569 = vmul.f32 %v2541, %v2536
          %v2570 = vmul.f32 %v2541, %v2537
          %v2571 = vmul.f32 %v2541, %v2538
          %v2572 = vmul.f32 %v2541, %v2539
          %v2573 = vmul.f32 %v2541, %v2540
          %v2574 = vadd.f32 %v2444, %v2542
          %v2575 = vadd.f32 %v2445, %v2543
          %v2576 = vadd.f32 %v2446, %v2544
          %v2577 = vadd.f32 %v2447, %v2545
          %v2578 = vadd.f32 %v2448, %v2546
          %v2579 = vadd.f32 %v2449, %v2547
          %v2580 = vadd.f32 %v2450, %v2548
          %v2581 = vadd.f32 %v2451, %v2549
          %v2582 = vadd.f32 %v2452, %v2550
          %v2583 = vadd.f32 %v2453, %v2551
          %v2584 = vadd.f32 %v2454, %v2552
          %v2585 = vadd.f32 %v2455, %v2553
          %v2586 = vadd.f32 %v2456, %v2554
          %v2587 = vadd.f32 %v2457, %v2555
          %v2588 = vadd.f32 %v2458, %v2556
          %v2589 = vadd.f32 %v2459, %v2557
          %v2590 = vadd.f32 %v2460, %v2558
          %v2591 = vadd.f32 %v2461, %v2559
          %v2592 = vadd.f32 %v2462, %v2560
          %v2593 = vadd.f32 %v2463, %v2561
          %v2594 = vadd.f32 %v2464, %v2562
          %v2595 = vadd.f32 %v2465, %v2563
          %v2596 = vadd.f32 %v2466, %v2564
          %v2597 = vadd.f32 %v2467, %v2565
          %v2598 = vadd.f32 %v2468, %v2566
          %v2599 = vadd.f32 %v2469, %v2567
          %v2600 = vadd.f32 %v2470, %v2568
          %v2601 = vadd.f32 %v2471, %v2569
          %v2602 = vadd.f32 %v2472, %v2570
          %v2603 = vadd.f32 %v2473, %v2571
          %v2604 = vadd.f32 %v2474, %v2572
          %v2605 = vadd.f32 %v2475, %v2573
          %v2606 = vpack.c.bf16 %v2575, %v2574
          %v2607 = vpack.c.bf16 %v2577, %v2576
          %v2608 = vpack.c.bf16 %v2579, %v2578
          %v2609 = vpack.c.bf16 %v2581, %v2580
          %v2610 = vpack.c.bf16 %v2583, %v2582
          %v2611 = vpack.c.bf16 %v2585, %v2584
          %v2612 = vpack.c.bf16 %v2587, %v2586
          %v2613 = vpack.c.bf16 %v2589, %v2588
          %v2614 = vpack.c.bf16 %v2591, %v2590
          %v2615 = vpack.c.bf16 %v2593, %v2592
          %v2616 = vpack.c.bf16 %v2595, %v2594
          %v2617 = vpack.c.bf16 %v2597, %v2596
          %v2618 = vpack.c.bf16 %v2599, %v2598
          %v2619 = vpack.c.bf16 %v2601, %v2600
          %v2620 = vpack.c.bf16 %v2603, %v2602
          %v2621 = vpack.c.bf16 %v2605, %v2604
          %v2638 = vunpack.c.l.b16 %v2606
          %v2639 = vunpack.c.h.b16 %v2606
          %v2640 = vunpack.c.l.b16 %v2607
          %v2641 = vunpack.c.h.b16 %v2607
          %v2642 = vunpack.c.l.b16 %v2608
          %v2643 = vunpack.c.h.b16 %v2608
          %v2644 = vunpack.c.l.b16 %v2609
          %v2645 = vunpack.c.h.b16 %v2609
          %v2646 = vunpack.c.l.b16 %v2610
          %v2647 = vunpack.c.h.b16 %v2610
          %v2648 = vunpack.c.l.b16 %v2611
          %v2649 = vunpack.c.h.b16 %v2611
          %v2650 = vunpack.c.l.b16 %v2612
          %v2651 = vunpack.c.h.b16 %v2612
          %v2652 = vunpack.c.l.b16 %v2613
          %v2653 = vunpack.c.h.b16 %v2613
          %v2654 = vunpack.c.l.b16 %v2614
          %v2655 = vunpack.c.h.b16 %v2614
          %v2656 = vunpack.c.l.b16 %v2615
          %v2657 = vunpack.c.h.b16 %v2615
          %v2658 = vunpack.c.l.b16 %v2616
          %v2659 = vunpack.c.h.b16 %v2616
          %v2660 = vunpack.c.l.b16 %v2617
          %v2661 = vunpack.c.h.b16 %v2617
          %v2662 = vunpack.c.l.b16 %v2618
          %v2663 = vunpack.c.h.b16 %v2618
          %v2664 = vunpack.c.l.b16 %v2619
          %v2665 = vunpack.c.h.b16 %v2619
          %v2666 = vunpack.c.l.b16 %v2620
          %v2667 = vunpack.c.h.b16 %v2620
          %v2668 = vunpack.c.l.b16 %v2621
          %v2669 = vunpack.c.h.b16 %v2621
          %v2670 = vpack.c.b16 %v2638, %v2638
          %v2671 = vpack.c.b16 %v2639, %v2639
          %v2672 = vpack.c.b16 %v2640, %v2640
          %v2673 = vpack.c.b16 %v2641, %v2641
          %v2674 = vpack.c.b16 %v2642, %v2642
          %v2675 = vpack.c.b16 %v2643, %v2643
          %v2676 = vpack.c.b16 %v2644, %v2644
          %v2677 = vpack.c.b16 %v2645, %v2645
          %v2678 = vpack.c.b16 %v2646, %v2646
          %v2679 = vpack.c.b16 %v2647, %v2647
          %v2680 = vpack.c.b16 %v2648, %v2648
          %v2681 = vpack.c.b16 %v2649, %v2649
          %v2682 = vpack.c.b16 %v2650, %v2650
          %v2683 = vpack.c.b16 %v2651, %v2651
          %v2684 = vpack.c.b16 %v2652, %v2652
          %v2685 = vpack.c.b16 %v2653, %v2653
          %v2686 = vpack.c.b16 %v2654, %v2654
          %v2687 = vpack.c.b16 %v2655, %v2655
          %v2688 = vpack.c.b16 %v2656, %v2656
          %v2689 = vpack.c.b16 %v2657, %v2657
          %v2690 = vpack.c.b16 %v2658, %v2658
          %v2691 = vpack.c.b16 %v2659, %v2659
          %v2692 = vpack.c.b16 %v2660, %v2660
          %v2693 = vpack.c.b16 %v2661, %v2661
          %v2694 = vpack.c.b16 %v2662, %v2662
          %v2695 = vpack.c.b16 %v2663, %v2663
          %v2696 = vpack.c.b16 %v2664, %v2664
          %v2697 = vpack.c.b16 %v2665, %v2665
          %v2698 = vpack.c.b16 %v2666, %v2666
          %v2699 = vpack.c.b16 %v2667, %v2667
          %v2700 = vpack.c.b16 %v2668, %v2668
          %v2701 = vpack.c.b16 %v2669, %v2669
          %2734 = vst [vmem:[%s641] sm:$0xf] %v2670
          %2735 = vst [vmem:[%s641 + $0x4] sm:$0xf] %v2671
          %2736 = vst [vmem:[%s641 + $0x8] sm:$0xf] %v2672
          %2737 = vst [vmem:[%s641 + $0xc] sm:$0xf] %v2673
          %2738 = vst [vmem:[%s641 + $0x10] sm:$0xf] %v2674
          %2739 = vst [vmem:[%s641 + $0x14] sm:$0xf] %v2675
          %2740 = vst [vmem:[%s641 + $0x18] sm:$0xf] %v2676
          %2741 = vst [vmem:[%s641 + $0x1c] sm:$0xf] %v2677
          %2742 = vst [vmem:[%s641 + $0x20] sm:$0xf] %v2678
          %2743 = vst [vmem:[%s641 + $0x24] sm:$0xf] %v2679
          %2744 = vst [vmem:[%s641 + $0x28] sm:$0xf] %v2680
          %2745 = vst [vmem:[%s641 + $0x2c] sm:$0xf] %v2681
          %2746 = vst [vmem:[%s641 + $0x30] sm:$0xf] %v2682
          %2747 = vst [vmem:[%s641 + $0x34] sm:$0xf] %v2683
          %2748 = vst [vmem:[%s641 + $0x38] sm:$0xf] %v2684
          %2749 = vst [vmem:[%s641 + $0x3c] sm:$0xf] %v2685
          %2750 = vst [vmem:[%s641 + $0x40] sm:$0xf] %v2686
          %2751 = vst [vmem:[%s641 + $0x44] sm:$0xf] %v2687
          %2752 = vst [vmem:[%s641 + $0x48] sm:$0xf] %v2688
          %2753 = vst [vmem:[%s641 + $0x4c] sm:$0xf] %v2689
          %2754 = vst [vmem:[%s641 + $0x50] sm:$0xf] %v2690
          %2755 = vst [vmem:[%s641 + $0x54] sm:$0xf] %v2691
          %2756 = vst [vmem:[%s641 + $0x58] sm:$0xf] %v2692
          %2757 = vst [vmem:[%s641 + $0x5c] sm:$0xf] %v2693
          %2758 = vst [vmem:[%s641 + $0x60] sm:$0xf] %v2694
          %2759 = vst [vmem:[%s641 + $0x64] sm:$0xf] %v2695
          %2760 = vst [vmem:[%s641 + $0x68] sm:$0xf] %v2696
          %2761 = vst [vmem:[%s641 + $0x6c] sm:$0xf] %v2697
          %2762 = vst [vmem:[%s641 + $0x70] sm:$0xf] %v2698
          %2763 = vst [vmem:[%s641 + $0x74] sm:$0xf] %v2699
          %2764 = vst [vmem:[%s641 + $0x78] sm:$0xf] %v2700
          %2765 = vst [vmem:[%s641 + $0x7c] sm:$0xf] %v2701
          %v2766 = vld [vmem:[%s635] sm:$0xff]
          %v2767 = vld [vmem:[%s635 + $0x8] sm:$0xff]
          %v2768 = vld [vmem:[%s635 + $0x10] sm:$0xff]
          %v2769 = vld [vmem:[%s635 + $0x18] sm:$0xff]
          %v2770 = vld [vmem:[%s635 + $0x20] sm:$0xff]
          %v2771 = vld [vmem:[%s635 + $0x28] sm:$0xff]
          %v2772 = vld [vmem:[%s635 + $0x30] sm:$0xff]
          %v2773 = vld [vmem:[%s635 + $0x38] sm:$0xff]
          %v2774 = vld [vmem:[%s635 + $0x40] sm:$0xff]
          %v2775 = vld [vmem:[%s635 + $0x48] sm:$0xff]
          %v2776 = vld [vmem:[%s635 + $0x50] sm:$0xff]
          %v2777 = vld [vmem:[%s635 + $0x58] sm:$0xff]
          %v2778 = vld [vmem:[%s635 + $0x60] sm:$0xff]
          %v2779 = vld [vmem:[%s635 + $0x68] sm:$0xff]
          %v2780 = vld [vmem:[%s635 + $0x70] sm:$0xff]
          %v2781 = vld [vmem:[%s635 + $0x78] sm:$0xff]
          %v2782 = vld [vmem:[%s635 + $0x80] sm:$0xff]
          %v2783 = vld [vmem:[%s635 + $0x88] sm:$0xff]
          %v2784 = vld [vmem:[%s635 + $0x90] sm:$0xff]
          %v2785 = vld [vmem:[%s635 + $0x98] sm:$0xff]
          %v2786 = vld [vmem:[%s635 + $0xa0] sm:$0xff]
          %v2787 = vld [vmem:[%s635 + $0xa8] sm:$0xff]
          %v2788 = vld [vmem:[%s635 + $0xb0] sm:$0xff]
          %v2789 = vld [vmem:[%s635 + $0xb8] sm:$0xff]
          %v2790 = vld [vmem:[%s635 + $0xc0] sm:$0xff]
          %v2791 = vld [vmem:[%s635 + $0xc8] sm:$0xff]
          %v2792 = vld [vmem:[%s635 + $0xd0] sm:$0xff]
          %v2793 = vld [vmem:[%s635 + $0xd8] sm:$0xff]
          %v2794 = vld [vmem:[%s635 + $0xe0] sm:$0xff]
          %v2795 = vld [vmem:[%s635 + $0xe8] sm:$0xff]
          %v2796 = vld [vmem:[%s635 + $0xf0] sm:$0xff]
          %v2797 = vld [vmem:[%s635 + $0xf8] sm:$0xff]
          %s2798 = sld [smem:[#allocation3]]
          %v2799 = vstv %s2798
          %v2800 = vmul.f32 %v2799, %v2574
          %v2801 = vmul.f32 %v2799, %v2575
          %v2802 = vmul.f32 %v2799, %v2576
          %v2803 = vmul.f32 %v2799, %v2577
          %v2804 = vmul.f32 %v2799, %v2578
          %v2805 = vmul.f32 %v2799, %v2579
          %v2806 = vmul.f32 %v2799, %v2580
          %v2807 = vmul.f32 %v2799, %v2581
          %v2808 = vmul.f32 %v2799, %v2582
          %v2809 = vmul.f32 %v2799, %v2583
          %v2810 = vmul.f32 %v2799, %v2584
          %v2811 = vmul.f32 %v2799, %v2585
          %v2812 = vmul.f32 %v2799, %v2586
          %v2813 = vmul.f32 %v2799, %v2587
          %v2814 = vmul.f32 %v2799, %v2588
          %v2815 = vmul.f32 %v2799, %v2589
          %v2816 = vmul.f32 %v2799, %v2590
          %v2817 = vmul.f32 %v2799, %v2591
          %v2818 = vmul.f32 %v2799, %v2592
          %v2819 = vmul.f32 %v2799, %v2593
          %v2820 = vmul.f32 %v2799, %v2594
          %v2821 = vmul.f32 %v2799, %v2595
          %v2822 = vmul.f32 %v2799, %v2596
          %v2823 = vmul.f32 %v2799, %v2597
          %v2824 = vmul.f32 %v2799, %v2598
          %v2825 = vmul.f32 %v2799, %v2599
          %v2826 = vmul.f32 %v2799, %v2600
          %v2827 = vmul.f32 %v2799, %v2601
          %v2828 = vmul.f32 %v2799, %v2602
          %v2829 = vmul.f32 %v2799, %v2603
          %v2830 = vmul.f32 %v2799, %v2604
          %v2831 = vmul.f32 %v2799, %v2605
          %v2832 = vadd.f32 %v2766, %v2800
          %v2833 = vadd.f32 %v2767, %v2801
          %v2834 = vadd.f32 %v2768, %v2802
          %v2835 = vadd.f32 %v2769, %v2803
          %v2836 = vadd.f32 %v2770, %v2804
          %v2837 = vadd.f32 %v2771, %v2805
          %v2838 = vadd.f32 %v2772, %v2806
          %v2839 = vadd.f32 %v2773, %v2807
          %v2840 = vadd.f32 %v2774, %v2808
          %v2841 = vadd.f32 %v2775, %v2809
          %v2842 = vadd.f32 %v2776, %v2810
          %v2843 = vadd.f32 %v2777, %v2811
          %v2844 = vadd.f32 %v2778, %v2812
          %v2845 = vadd.f32 %v2779, %v2813
          %v2846 = vadd.f32 %v2780, %v2814
          %v2847 = vadd.f32 %v2781, %v2815
          %v2848 = vadd.f32 %v2782, %v2816
          %v2849 = vadd.f32 %v2783, %v2817
          %v2850 = vadd.f32 %v2784, %v2818
          %v2851 = vadd.f32 %v2785, %v2819
          %v2852 = vadd.f32 %v2786, %v2820
          %v2853 = vadd.f32 %v2787, %v2821
          %v2854 = vadd.f32 %v2788, %v2822
          %v2855 = vadd.f32 %v2789, %v2823
          %v2856 = vadd.f32 %v2790, %v2824
          %v2857 = vadd.f32 %v2791, %v2825
          %v2858 = vadd.f32 %v2792, %v2826
          %v2859 = vadd.f32 %v2793, %v2827
          %v2860 = vadd.f32 %v2794, %v2828
          %v2861 = vadd.f32 %v2795, %v2829
          %v2862 = vadd.f32 %v2796, %v2830
          %v2863 = vadd.f32 %v2797, %v2831
          %2864 = vst [vmem:[%s647] sm:$0xff] %v2832
          %2865 = vst [vmem:[%s647 + $0x8] sm:$0xff] %v2833
          %2866 = vst [vmem:[%s647 + $0x10] sm:$0xff] %v2834
          %2867 = vst [vmem:[%s647 + $0x18] sm:$0xff] %v2835
          %2868 = vst [vmem:[%s647 + $0x20] sm:$0xff] %v2836
          %2869 = vst [vmem:[%s647 + $0x28] sm:$0xff] %v2837
          %2870 = vst [vmem:[%s647 + $0x30] sm:$0xff] %v2838
          %2871 = vst [vmem:[%s647 + $0x38] sm:$0xff] %v2839
          %2872 = vst [vmem:[%s647 + $0x40] sm:$0xff] %v2840
          %2873 = vst [vmem:[%s647 + $0x48] sm:$0xff] %v2841
          %2874 = vst [vmem:[%s647 + $0x50] sm:$0xff] %v2842
          %2875 = vst [vmem:[%s647 + $0x58] sm:$0xff] %v2843
          %2876 = vst [vmem:[%s647 + $0x60] sm:$0xff] %v2844
          %2877 = vst [vmem:[%s647 + $0x68] sm:$0xff] %v2845
          %2878 = vst [vmem:[%s647 + $0x70] sm:$0xff] %v2846
          %2879 = vst [vmem:[%s647 + $0x78] sm:$0xff] %v2847
          %2880 = vst [vmem:[%s647 + $0x80] sm:$0xff] %v2848
          %2881 = vst [vmem:[%s647 + $0x88] sm:$0xff] %v2849
          %2882 = vst [vmem:[%s647 + $0x90] sm:$0xff] %v2850
          %2883 = vst [vmem:[%s647 + $0x98] sm:$0xff] %v2851
          %2884 = vst [vmem:[%s647 + $0xa0] sm:$0xff] %v2852
          %2885 = vst [vmem:[%s647 + $0xa8] sm:$0xff] %v2853
          %2886 = vst [vmem:[%s647 + $0xb0] sm:$0xff] %v2854
          %2887 = vst [vmem:[%s647 + $0xb8] sm:$0xff] %v2855
          %2888 = vst [vmem:[%s647 + $0xc0] sm:$0xff] %v2856
          %2889 = vst [vmem:[%s647 + $0xc8] sm:$0xff] %v2857
          %2890 = vst [vmem:[%s647 + $0xd0] sm:$0xff] %v2858
          %2891 = vst [vmem:[%s647 + $0xd8] sm:$0xff] %v2859
          %2892 = vst [vmem:[%s647 + $0xe0] sm:$0xff] %v2860
          %2893 = vst [vmem:[%s647 + $0xe8] sm:$0xff] %v2861
          %2894 = vst [vmem:[%s647 + $0xf0] sm:$0xff] %v2862
          %2895 = vst [vmem:[%s647 + $0xf8] sm:$0xff] %v2863
        $region95: #{gcn_res_forward.9} parent=78 // pred_fallthru
          _
        %s2896 = smul.u32 32, %s28
        %p2897 = scmp.lt.s32.totalorder %s2896, 127
        %s2898 = scalar_select %p2897, %s2896, 127
        %s2899 = smul.addr %s2898, 4
        %s2900 = scalar_lea.vmem %s10, %s2899
        %s2901 = smul.u32 32, %s28
        %p2902 = scmp.lt.s32.totalorder %s2901, 127
        %s2903 = scalar_select %p2902, %s2901, 127
        %s2904 = smul.addr %s2903, 8
        %s2905 = scalar_lea.vmem %s11, %s2904
        // Predicated region
        $region96: #{gcn_res_forward.9} parent=78 // pred_check
          %p2906 = pneg %p301
        $region97: #{gcn_res_forward.9} parent=78 // pred_check_branch
          %2908 = sbr.rel (%p2906) target = $region99
        $region98: #{gcn_res_forward.9} parent=78 // pred_region
          %s2909 = smul.u32 32, %s28
        $region99: #{gcn_res_forward.9} parent=78 // pred_fallthru
          _
        // Predicated region
        $region100: #{gcn_res_forward.9} parent=78 // pred_check
          %p2910 = pneg %p327
        $region101: #{gcn_res_forward.9} parent=78 // pred_check_branch
          %2912 = sbr.rel (%p2910) target = $region103
        $region102: #{gcn_res_forward.9} parent=78 // pred_region
          %s2913 = smul.u32 32, %s28
        $region103: #{gcn_res_forward.9} parent=78 // pred_fallthru
          _
      $region79: #{gcn_res_forward.9} parent=5 // pred_fallthru
        _
      %p2914 = scmp.le.s32.totalorder 2, %s19
      // Predicated region
      $region104: #{gcn_res_forward.9} parent=5 // pred_check
        %p2915 = pneg %p2914
      $region105: #{gcn_res_forward.9} parent=5 // pred_check_branch
        %2917 = sbr.rel (%p2915) target = $region107
      $region106: #{gcn_res_forward.9} parent=5 // pred_region
        %s2918 = ssub.s32 %s19, 2
        // Predicated region
        $region108: #{gcn_res_forward.9} parent=106 // pred_check
          %p2919 = pneg %p307
        $region109: #{gcn_res_forward.9} parent=106 // pred_check_branch
          %2921 = sbr.rel (%p2919) target = $region111
        $region110: #{gcn_res_forward.9} parent=106 // pred_region
          %s2922 = smul.u32 32, %s30
          %p2923 = scmp.lt.s32.totalorder %s2922, 127
          %s2924 = scalar_select %p2923, %s2922, 127
          %s2925 = smul.addr %s2924, 4
          %s2926 = scalar_lea.vmem %s10, %s2925
        $region111: #{gcn_res_forward.9} parent=106 // pred_fallthru
          _
        // Predicated region
        $region112: #{gcn_res_forward.9} parent=106 // pred_check
          %p2927 = pneg %p333
        $region113: #{gcn_res_forward.9} parent=106 // pred_check_branch
          %2929 = sbr.rel (%p2927) target = $region115
        $region114: #{gcn_res_forward.9} parent=106 // pred_region
          %s2930 = smul.u32 32, %s30
          %p2931 = scmp.lt.s32.totalorder %s2930, 127
          %s2932 = scalar_select %p2931, %s2930, 127
          %s2933 = smul.addr %s2932, 8
          %s2934 = scalar_lea.vmem %s11, %s2933
        $region115: #{gcn_res_forward.9} parent=106 // pred_fallthru
          _
      $region107: #{gcn_res_forward.9} parent=5 // pred_fallthru
        _
    $region6: #{gcn_res_forward.9} parent=1 // loop_footer
      %s23 = sadd.s32 1, %s19
    $region7: #{gcn_res_forward.9} parent=1 // loop_footer_branch
      %18 = sbr.rel target = $region3
    $region8: #{gcn_res_forward.9} parent=1 // loop_exit
      _
    %2935 = vsyncpa [#allocation4], 1
    %s2936 = scalar_lea.sflag [#allocation4], 1
    %2937 = vsyncpa %s2936, 1

// kernel: gcn_res_forward.15
$region0: #{gcn_res_forward.15}
  #allocation0 [shape = 'u32[]', space=smem, size = 0x4, offset = 0x4, fixed_abs, tag = 'smem constant byte address 0x4 - core index']
  #allocation1 [shape = 'u32[144,128]{1,0:T(1,128)}', space=vmem, size = 0x12000, scoped, tag = 'internal scratch']
  %s0 = inlined_call_operand.vmem [shape: f32[1024,128], index: 0, kind: input, shape index: {}]
  %s1 = inlined_call_operand.vmem [shape: bf16[128,128], index: 1, kind: input, shape index: {}]
  %s2 = inlined_call_operand.vmem [shape: f32[1,128], index: 2, kind: input, shape index: {}]
  %s3 = inlined_call_operand.vmem [shape: f32[1024,128], index: 3, kind: output, shape index: {}]
  %s4 = sld [smem:[#allocation0]]
  $region45: #{gcn_res_forward.15} parent=0
    _
  %s6 = ssub.s32 1, %s4
  %s7 = scalar_select 0, %s6, %s4
  loop: start=0, step=1, limit=4
  $region2: #{gcn_res_forward.15} parent=0 // loop_pre_header
    _
  $region3: #{gcn_res_forward.15} parent=0 // loop_header
    %s9 = sphi 0, %s13
    %p10 = scmp.ge.s32.totalorder %s9, 4
    %s19 = sphi 0, %s21
    %s22 = sphi 0, %s19
    %s23 = sphi 0, %s22
    %s39 = sphi 0, %s23
    %s43 = sphi 0, %s43
    %s45 = sphi 0, %s43
    %s46 = sphi 0, %s45
    %s60 = sphi 0, %s46
    %s64 = sphi 0, %s64
    %s66 = sphi 0, %s64
    %s67 = sphi 0, %s66
    %s81 = sphi 0, %s67
    %s87 = sphi 0, %s89
    %s90 = sphi 0, %s87
    %s91 = sphi 0, %s90
    %s107 = sphi 0, %s91
  $region4: #{gcn_res_forward.15} parent=0 // loop_header_branch
    %12 = sbr.rel (%p10) target = $region8
  $region5: #{gcn_res_forward.15} parent=0 // loop_body
    %s14 = ssub.s32 %s9, 1
    %s15 = ssub.s32 %s9, 2
    %s16 = sadd.s32 %s9, 1
    %s17 = ssub.s32 %s9, %s16
    %p18 = scmp.eq.s32.totalorder %s17, 0
    %s20 = sadd.s32 %s19, 1
    %s21 = scalar_select %p18, %s19, %s20
    %p24 = pneg %p18
    %p25 = scmp.eq.s32.totalorder %s9, 1
    %p26 = por %p24, %p25
    %p27 = scmp.ne.s32.totalorder %s19, %s22
    %p28 = scmp.eq.s32.totalorder %s9, 0
    %p29 = por %p27, %p28
    %p30 = scmp.ne.s32.totalorder %s19, %s22
    %p31 = scmp.eq.s32.totalorder %s14, 1
    %p32 = por %p30, %p31
    %p33 = scmp.ne.s32.totalorder %s22, %s23
    %p34 = scmp.eq.s32.totalorder %s14, 0
    %p35 = por %p33, %p34
    %p36 = scmp.ne.s32.totalorder %s22, %s23
    %p37 = scmp.eq.s32.totalorder %s15, 1
    %p38 = por %p36, %p37
    %p40 = scmp.ne.s32.totalorder %s23, %s39
    %p41 = scmp.eq.s32.totalorder %s15, 0
    %p42 = por %p40, %p41
    %s44 = sadd.s32 %s43, 1
    %p47 = scmp.eq.s32.totalorder %s9, 1
    %p48 = scmp.ne.s32.totalorder %s43, %s45
    %p49 = scmp.eq.s32.totalorder %s9, 0
    %p50 = por %p48, %p49
    %p51 = scmp.ne.s32.totalorder %s43, %s45
    %p52 = scmp.eq.s32.totalorder %s14, 1
    %p53 = por %p51, %p52
    %p54 = scmp.ne.s32.totalorder %s45, %s46
    %p55 = scmp.eq.s32.totalorder %s14, 0
    %p56 = por %p54, %p55
    %p57 = scmp.ne.s32.totalorder %s45, %s46
    %p58 = scmp.eq.s32.totalorder %s15, 1
    %p59 = por %p57, %p58
    %p61 = scmp.ne.s32.totalorder %s46, %s60
    %p62 = scmp.eq.s32.totalorder %s15, 0
    %p63 = por %p61, %p62
    %s65 = sadd.s32 %s64, 1
    %p68 = scmp.eq.s32.totalorder %s9, 1
    %p69 = scmp.ne.s32.totalorder %s64, %s66
    %p70 = scmp.eq.s32.totalorder %s9, 0
    %p71 = por %p69, %p70
    %p72 = scmp.ne.s32.totalorder %s64, %s66
    %p73 = scmp.eq.s32.totalorder %s14, 1
    %p74 = por %p72, %p73
    %p75 = scmp.ne.s32.totalorder %s66, %s67
    %p76 = scmp.eq.s32.totalorder %s14, 0
    %p77 = por %p75, %p76
    %p78 = scmp.ne.s32.totalorder %s66, %s67
    %p79 = scmp.eq.s32.totalorder %s15, 1
    %p80 = por %p78, %p79
    %p82 = scmp.ne.s32.totalorder %s67, %s81
    %p83 = scmp.eq.s32.totalorder %s15, 0
    %p84 = por %p82, %p83
    %s85 = ssub.s32 %s9, %s16
    %p86 = scmp.eq.s32.totalorder %s85, 0
    %s88 = sadd.s32 %s87, 1
    %s89 = scalar_select %p86, %s87, %s88
    %p92 = pneg %p86
    %p93 = scmp.eq.s32.totalorder %s9, 1
    %p94 = por %p92, %p93
    %p95 = scmp.ne.s32.totalorder %s87, %s90
    %p96 = scmp.eq.s32.totalorder %s9, 0
    %p97 = por %p95, %p96
    %p98 = scmp.ne.s32.totalorder %s87, %s90
    %p99 = scmp.eq.s32.totalorder %s14, 1
    %p100 = por %p98, %p99
    %p101 = scmp.ne.s32.totalorder %s90, %s91
    %p102 = scmp.eq.s32.totalorder %s14, 0
    %p103 = por %p101, %p102
    %p104 = scmp.ne.s32.totalorder %s90, %s91
    %p105 = scmp.eq.s32.totalorder %s15, 1
    %p106 = por %p104, %p105
    %p108 = scmp.ne.s32.totalorder %s91, %s107
    %p109 = scmp.eq.s32.totalorder %s15, 0
    %p110 = por %p108, %p109
    %p111 = scmp.le.s32.totalorder 1, %s9
    %p112 = scmp.lt.s32.totalorder %s9, 3
    %p113 = pnand %p111, %p112
    %p114 = pneg %p113
    // Predicated region
    $region9: #{gcn_res_forward.15} parent=5 // pred_check
      _
    $region10: #{gcn_res_forward.15} parent=5 // pred_check_branch
      %116 = sbr.rel (%p113) target = $region12
    $region11: #{gcn_res_forward.15} parent=5 // pred_region
      %s117 = ssub.s32 %s9, 1
      // Predicated region
      $region13: #{gcn_res_forward.15} parent=11 // pred_check
        %p118 = pneg %p56
      $region14: #{gcn_res_forward.15} parent=11 // pred_check_branch
        %120 = sbr.rel (%p118) target = $region16
      $region15: #{gcn_res_forward.15} parent=11 // pred_region
        _
      $region16: #{gcn_res_forward.15} parent=11 // pred_fallthru
        _
      // Predicated region
      $region17: #{gcn_res_forward.15} parent=11 // pred_check
        %p121 = pneg %p77
      $region18: #{gcn_res_forward.15} parent=11 // pred_check_branch
        %123 = sbr.rel (%p121) target = $region20
      $region19: #{gcn_res_forward.15} parent=11 // pred_region
        _
      $region20: #{gcn_res_forward.15} parent=11 // pred_fallthru
        _
    $region12: #{gcn_res_forward.15} parent=5 // pred_fallthru
      _
    %p124 = scmp.lt.s32.totalorder %s9, 2
    // Predicated region
    $region21: #{gcn_res_forward.15} parent=5 // pred_check
      %p125 = pneg %p124
    $region22: #{gcn_res_forward.15} parent=5 // pred_check_branch
      %127 = sbr.rel (%p125) target = $region24
    $region23: #{gcn_res_forward.15} parent=5 // pred_region
      // Predicated region
      $region25: #{gcn_res_forward.15} parent=23 // pred_check
        %p128 = pneg %p29
      $region26: #{gcn_res_forward.15} parent=23 // pred_check_branch
        %130 = sbr.rel (%p128) target = $region28
      $region27: #{gcn_res_forward.15} parent=23 // pred_region
        %s131 = smul.u32 64, %s9
        %p132 = scmp.lt.s32.totalorder %s131, 127
        %s133 = scalar_select %p132, %s131, 127
        %s134 = smul.addr %s133, 8
        %s135 = scalar_lea.vmem %s0, %s134
        %s136 = smul.u32 64, %s9
      $region28: #{gcn_res_forward.15} parent=23 // pred_fallthru
        _
    $region24: #{gcn_res_forward.15} parent=5 // pred_fallthru
      _
    %p137 = scmp.le.s32.totalorder 1, %s9
    %p138 = scmp.lt.s32.totalorder %s9, 3
    %p139 = pnand %p137, %p138
    %p140 = pneg %p139
    // Predicated region
    $region29: #{gcn_res_forward.15} parent=5 // pred_check
      _
    $region30: #{gcn_res_forward.15} parent=5 // pred_check_branch
      %142 = sbr.rel (%p139) target = $region32
    $region31: #{gcn_res_forward.15} parent=5 // pred_region
      %s143 = ssub.s32 %s9, 1
      %s144 = smul.u32 64, %s14
      %p145 = scmp.lt.s32.totalorder %s144, 127
      %s146 = scalar_select %p145, %s144, 127
      %s147 = smul.addr %s146, 8
      %s148 = scalar_lea.vmem %s0, %s147
      %p149 = pneg %p35
      %p150 = pneg %p32
      %p151 = pneg %p56
      %p152 = pneg %p53
      %p153 = pneg %p77
      %p154 = pneg %p74
      %p155 = pneg %p103
      %p156 = pneg %p100
      %s157 = smul.u32 64, %s14
      %p158 = scmp.lt.s32.totalorder %s157, 127
      %s159 = scalar_select %p158, %s157, 127
      %s160 = smul.addr %s159, 8
      %s161 = scalar_lea.vmem %s3, %s160
      %s162 = smul.u32 64, %s14
      %p163 = scmp.lt.s32.totalorder %s162, 127
      %s164 = scalar_select %p163, %s162, 127
      %s165 = smul.addr %s164, 8
      %s166 = scalar_lea.vmem %s0, %s165
      %s167 = smul.u32 64, %s14
      %s168 = smul.u32 64, %s14
      %p169 = scmp.lt.s32.totalorder %s168, 127
      %s170 = scalar_select %p169, %s168, 127
      %s171 = smul.addr %s170, 8
      %s172 = scalar_lea.vmem %s3, %s171
      %s173 = smul.u32 64, %s14
      %v175 = vld [vmem:[%s166] sm:$0xff]
      %v176 = vld [vmem:[%s166 + $0x8] sm:$0xff]
      %v177 = vld [vmem:[%s166 + $0x10] sm:$0xff]
      %v178 = vld [vmem:[%s166 + $0x18] sm:$0xff]
      %v179 = vld [vmem:[%s166 + $0x20] sm:$0xff]
      %v180 = vld [vmem:[%s166 + $0x28] sm:$0xff]
      %v181 = vld [vmem:[%s166 + $0x30] sm:$0xff]
      %v182 = vld [vmem:[%s166 + $0x38] sm:$0xff]
      %v183 = vld [vmem:[%s166 + $0x40] sm:$0xff]
      %v184 = vld [vmem:[%s166 + $0x48] sm:$0xff]
      %v185 = vld [vmem:[%s166 + $0x50] sm:$0xff]
      %v186 = vld [vmem:[%s166 + $0x58] sm:$0xff]
      %v187 = vld [vmem:[%s166 + $0x60] sm:$0xff]
      %v188 = vld [vmem:[%s166 + $0x68] sm:$0xff]
      %v189 = vld [vmem:[%s166 + $0x70] sm:$0xff]
      %v190 = vld [vmem:[%s166 + $0x78] sm:$0xff]
      %v191 = vld [vmem:[%s166 + $0x80] sm:$0xff]
      %v192 = vld [vmem:[%s166 + $0x88] sm:$0xff]
      %v193 = vld [vmem:[%s166 + $0x90] sm:$0xff]
      %v194 = vld [vmem:[%s166 + $0x98] sm:$0xff]
      %v195 = vld [vmem:[%s166 + $0xa0] sm:$0xff]
      %v196 = vld [vmem:[%s166 + $0xa8] sm:$0xff]
      %v197 = vld [vmem:[%s166 + $0xb0] sm:$0xff]
      %v198 = vld [vmem:[%s166 + $0xb8] sm:$0xff]
      %v199 = vld [vmem:[%s166 + $0xc0] sm:$0xff]
      %v200 = vld [vmem:[%s166 + $0xc8] sm:$0xff]
      %v201 = vld [vmem:[%s166 + $0xd0] sm:$0xff]
      %v202 = vld [vmem:[%s166 + $0xd8] sm:$0xff]
      %v203 = vld [vmem:[%s166 + $0xe0] sm:$0xff]
      %v204 = vld [vmem:[%s166 + $0xe8] sm:$0xff]
      %v205 = vld [vmem:[%s166 + $0xf0] sm:$0xff]
      %v206 = vld [vmem:[%s166 + $0xf8] sm:$0xff]
      %v207 = vld [vmem:[%s166 + $0x100] sm:$0xff]
      %v208 = vld [vmem:[%s166 + $0x108] sm:$0xff]
      %v209 = vld [vmem:[%s166 + $0x110] sm:$0xff]
      %v210 = vld [vmem:[%s166 + $0x118] sm:$0xff]
      %v211 = vld [vmem:[%s166 + $0x120] sm:$0xff]
      %v212 = vld [vmem:[%s166 + $0x128] sm:$0xff]
      %v213 = vld [vmem:[%s166 + $0x130] sm:$0xff]
      %v214 = vld [vmem:[%s166 + $0x138] sm:$0xff]
      %v215 = vld [vmem:[%s166 + $0x140] sm:$0xff]
      %v216 = vld [vmem:[%s166 + $0x148] sm:$0xff]
      %v217 = vld [vmem:[%s166 + $0x150] sm:$0xff]
      %v218 = vld [vmem:[%s166 + $0x158] sm:$0xff]
      %v219 = vld [vmem:[%s166 + $0x160] sm:$0xff]
      %v220 = vld [vmem:[%s166 + $0x168] sm:$0xff]
      %v221 = vld [vmem:[%s166 + $0x170] sm:$0xff]
      %v222 = vld [vmem:[%s166 + $0x178] sm:$0xff]
      %v223 = vld [vmem:[%s166 + $0x180] sm:$0xff]
      %v224 = vld [vmem:[%s166 + $0x188] sm:$0xff]
      %v225 = vld [vmem:[%s166 + $0x190] sm:$0xff]
      %v226 = vld [vmem:[%s166 + $0x198] sm:$0xff]
      %v227 = vld [vmem:[%s166 + $0x1a0] sm:$0xff]
      %v228 = vld [vmem:[%s166 + $0x1a8] sm:$0xff]
      %v229 = vld [vmem:[%s166 + $0x1b0] sm:$0xff]
      %v230 = vld [vmem:[%s166 + $0x1b8] sm:$0xff]
      %v231 = vld [vmem:[%s166 + $0x1c0] sm:$0xff]
      %v232 = vld [vmem:[%s166 + $0x1c8] sm:$0xff]
      %v233 = vld [vmem:[%s166 + $0x1d0] sm:$0xff]
      %v234 = vld [vmem:[%s166 + $0x1d8] sm:$0xff]
      %v235 = vld [vmem:[%s166 + $0x1e0] sm:$0xff]
      %v236 = vld [vmem:[%s166 + $0x1e8] sm:$0xff]
      %v237 = vld [vmem:[%s166 + $0x1f0] sm:$0xff]
      %v238 = vld [vmem:[%s166 + $0x1f8] sm:$0xff]
      %v239 = vpack.c.bf16 %v176, %v175
      %v240 = vpack.c.bf16 %v178, %v177
      %v241 = vpack.c.bf16 %v180, %v179
      %v242 = vpack.c.bf16 %v182, %v181
      %v243 = vpack.c.bf16 %v184, %v183
      %v244 = vpack.c.bf16 %v186, %v185
      %v245 = vpack.c.bf16 %v188, %v187
      %v246 = vpack.c.bf16 %v190, %v189
      %v247 = vpack.c.bf16 %v192, %v191
      %v248 = vpack.c.bf16 %v194, %v193
      %v249 = vpack.c.bf16 %v196, %v195
      %v250 = vpack.c.bf16 %v198, %v197
      %v251 = vpack.c.bf16 %v200, %v199
      %v252 = vpack.c.bf16 %v202, %v201
      %v253 = vpack.c.bf16 %v204, %v203
      %v254 = vpack.c.bf16 %v206, %v205
      %v255 = vpack.c.bf16 %v208, %v207
      %v256 = vpack.c.bf16 %v210, %v209
      %v257 = vpack.c.bf16 %v212, %v211
      %v258 = vpack.c.bf16 %v214, %v213
      %v259 = vpack.c.bf16 %v216, %v215
      %v260 = vpack.c.bf16 %v218, %v217
      %v261 = vpack.c.bf16 %v220, %v219
      %v262 = vpack.c.bf16 %v222, %v221
      %v263 = vpack.c.bf16 %v224, %v223
      %v264 = vpack.c.bf16 %v226, %v225
      %v265 = vpack.c.bf16 %v228, %v227
      %v266 = vpack.c.bf16 %v230, %v229
      %v267 = vpack.c.bf16 %v232, %v231
      %v268 = vpack.c.bf16 %v234, %v233
      %v269 = vpack.c.bf16 %v236, %v235
      %v270 = vpack.c.bf16 %v238, %v237
      %v271 = vld [vmem:[%s1] sm:$0xf]
      %v272 = vld [vmem:[%s1 + $0x4] sm:$0xf]
      %v273 = vld [vmem:[%s1 + $0x8] sm:$0xf]
      %v274 = vld [vmem:[%s1 + $0xc] sm:$0xf]
      %v275 = vld [vmem:[%s1 + $0x10] sm:$0xf]
      %v276 = vld [vmem:[%s1 + $0x14] sm:$0xf]
      %v277 = vld [vmem:[%s1 + $0x18] sm:$0xf]
      %v278 = vld [vmem:[%s1 + $0x1c] sm:$0xf]
      %v279 = vld [vmem:[%s1 + $0x20] sm:$0xf]
      %v280 = vld [vmem:[%s1 + $0x24] sm:$0xf]
      %v281 = vld [vmem:[%s1 + $0x28] sm:$0xf]
      %v282 = vld [vmem:[%s1 + $0x2c] sm:$0xf]
      %v283 = vld [vmem:[%s1 + $0x30] sm:$0xf]
      %v284 = vld [vmem:[%s1 + $0x34] sm:$0xf]
      %v285 = vld [vmem:[%s1 + $0x38] sm:$0xf]
      %v286 = vld [vmem:[%s1 + $0x3c] sm:$0xf]
      %v287 = vld [vmem:[%s2] sm:$0x1]
      %v289 = vlaneseq
      %v290 = vshrl.u32 %v289, 7
      %v291 = vsub.s32 0, %v290
      %v292 = vrot.slane %v287, %v291
      %v310 = vunpack.c.l.b16 %v271
      %v311 = vunpack.c.l.b16 %v272
      %v312 = vunpack.c.l.b16 %v273
      %v313 = vunpack.c.l.b16 %v274
      %v314 = vunpack.c.l.b16 %v275
      %v315 = vunpack.c.l.b16 %v276
      %v316 = vunpack.c.l.b16 %v277
      %v317 = vunpack.c.l.b16 %v278
      %v318 = vunpack.c.l.b16 %v279
      %v319 = vunpack.c.l.b16 %v280
      %v320 = vunpack.c.l.b16 %v281
      %v321 = vunpack.c.l.b16 %v282
      %v322 = vunpack.c.l.b16 %v283
      %v323 = vunpack.c.l.b16 %v284
      %v324 = vunpack.c.l.b16 %v285
      %v325 = vunpack.c.l.b16 %v286
      %v326 = vpack.c.b16 %v311, %v310
      %v327 = vpack.c.b16 %v313, %v312
      %v328 = vpack.c.b16 %v315, %v314
      %v329 = vpack.c.b16 %v317, %v316
      %v330 = vpack.c.b16 %v319, %v318
      %v331 = vpack.c.b16 %v321, %v320
      %v332 = vpack.c.b16 %v323, %v322
      %v333 = vpack.c.b16 %v325, %v324
      %342 = vmatprep.subr.bf16.mxu0 0
      %343 = vmatpush1.bf16.msra.mxu0 %v326
      %344 = vmatprep.subr.bf16.mxu0 0
      %345 = vmatpush1.bf16.msra.mxu0 %v327
      %346 = vmatprep.subr.bf16.mxu0 0
      %347 = vmatpush1.bf16.msra.mxu0 %v328
      %348 = vmatprep.subr.bf16.mxu0 0
      %349 = vmatpush1.bf16.msra.mxu0 %v329
      %350 = vmatprep.subr.bf16.mxu0 0
      %351 = vmatpush1.bf16.msra.mxu0 %v330
      %352 = vmatprep.subr.bf16.mxu0 0
      %353 = vmatpush1.bf16.msra.mxu0 %v331
      %354 = vmatprep.subr.bf16.mxu0 0
      %355 = vmatpush1.bf16.msra.mxu0 %v332
      %356 = vmatprep.subr.bf16.mxu0 0
      %357 = vmatpush1.bf16.msra.mxu0 %v333
      %358 = vmatprep.subr.bf16.mxu0 0
      %359 = vmatpush1.bf16.msra.mxu0 0
      %360 = vmatprep.subr.bf16.mxu0 0
      %361 = vmatpush1.bf16.msra.mxu0 0
      %362 = vmatprep.subr.bf16.mxu0 0
      %363 = vmatpush1.bf16.msra.mxu0 0
      %364 = vmatprep.subr.bf16.mxu0 0
      %365 = vmatpush1.bf16.msra.mxu0 0
      %366 = vmatprep.subr.bf16.mxu0 0
      %367 = vmatpush1.bf16.msra.mxu0 0
      %368 = vmatprep.subr.bf16.mxu0 0
      %369 = vmatpush1.bf16.msra.mxu0 0
      %370 = vmatprep.subr.bf16.mxu0 0
      %371 = vmatpush1.bf16.msra.mxu0 0
      %372 = vmatprep.subr.bf16.mxu0 0
      %373 = vmatpush1.bf16.msra.mxu0 0
      %374 = vmatprep.mubr.bf16.mxu0 0
      %375 = vmatmul.mubr.bf16.gmra.mrb[0].mxu0 %v239
      %v376 = vpop.f32.mrb[0].mxu0
      %v377 = vadd.f32 %v292, %v376
      %v378 = vpop.f32.mrb[0].mxu0
      %v379 = vpop.f32.mrb[0].mxu0
      %v380 = vadd.f32 %v292, %v379
      %v381 = vpop.f32.mrb[0].mxu0
      %382 = vmatprep.mubr.bf16.mxu0 0
      %383 = vmatmul.mubr.bf16.gmra.mrb[0].mxu0 %v240
      %v384 = vpop.f32.mrb[0].mxu0
      %v385 = vadd.f32 %v292, %v384
      %v386 = vpop.f32.mrb[0].mxu0
      %v387 = vpop.f32.mrb[0].mxu0
      %v388 = vadd.f32 %v292, %v387
      %v389 = vpop.f32.mrb[0].mxu0
      %390 = vmatprep.mubr.bf16.mxu0 0
      %391 = vmatmul.mubr.bf16.gmra.mrb[0].mxu0 %v241
      %v392 = vpop.f32.mrb[0].mxu0
      %v393 = vadd.f32 %v292, %v392
      %v394 = vpop.f32.mrb[0].mxu0
      %v395 = vpop.f32.mrb[0].mxu0
      %v396 = vadd.f32 %v292, %v395
      %v397 = vpop.f32.mrb[0].mxu0
      %398 = vmatprep.mubr.bf16.mxu0 0
      %399 = vmatmul.mubr.bf16.gmra.mrb[0].mxu0 %v242
      %v400 = vpop.f32.mrb[0].mxu0
      %v401 = vadd.f32 %v292, %v400
      %v402 = vpop.f32.mrb[0].mxu0
      %v403 = vpop.f32.mrb[0].mxu0
      %v404 = vadd.f32 %v292, %v403
      %v405 = vpop.f32.mrb[0].mxu0
      %406 = vmatprep.mubr.bf16.mxu0 0
      %407 = vmatmul.mubr.bf16.gmra.mrb[0].mxu0 %v243
      %v408 = vpop.f32.mrb[0].mxu0
      %v409 = vadd.f32 %v292, %v408
      %v410 = vpop.f32.mrb[0].mxu0
      %v411 = vpop.f32.mrb[0].mxu0
      %v412 = vadd.f32 %v292, %v411
      %v413 = vpop.f32.mrb[0].mxu0
      %414 = vmatprep.mubr.bf16.mxu0 0
      %415 = vmatmul.mubr.bf16.gmra.mrb[0].mxu0 %v244
      %v416 = vpop.f32.mrb[0].mxu0
      %v417 = vadd.f32 %v292, %v416
      %v418 = vpop.f32.mrb[0].mxu0
      %v419 = vpop.f32.mrb[0].mxu0
      %v420 = vadd.f32 %v292, %v419
      %v421 = vpop.f32.mrb[0].mxu0
      %422 = vmatprep.mubr.bf16.mxu0 0
      %423 = vmatmul.mubr.bf16.gmra.mrb[0].mxu0 %v245
      %v424 = vpop.f32.mrb[0].mxu0
      %v425 = vadd.f32 %v292, %v424
      %v426 = vpop.f32.mrb[0].mxu0
      %v427 = vpop.f32.mrb[0].mxu0
      %v428 = vadd.f32 %v292, %v427
      %v429 = vpop.f32.mrb[0].mxu0
      %430 = vmatprep.mubr.bf16.mxu0 0
      %431 = vmatmul.mubr.bf16.gmra.mrb[0].mxu0 %v246
      %v432 = vpop.f32.mrb[0].mxu0
      %v433 = vadd.f32 %v292, %v432
      %v434 = vpop.f32.mrb[0].mxu0
      %v435 = vpop.f32.mrb[0].mxu0
      %v436 = vadd.f32 %v292, %v435
      %v437 = vpop.f32.mrb[0].mxu0
      %438 = vmatprep.mubr.bf16.mxu0 0
      %439 = vmatmul.mubr.bf16.gmra.mrb[0].mxu0 %v247
      %v440 = vpop.f32.mrb[0].mxu0
      %v441 = vadd.f32 %v292, %v440
      %v442 = vpop.f32.mrb[0].mxu0
      %v443 = vpop.f32.mrb[0].mxu0
      %v444 = vadd.f32 %v292, %v443
      %v445 = vpop.f32.mrb[0].mxu0
      %446 = vmatprep.mubr.bf16.mxu0 0
      %447 = vmatmul.mubr.bf16.gmra.mrb[0].mxu0 %v248
      %v448 = vpop.f32.mrb[0].mxu0
      %v449 = vadd.f32 %v292, %v448
      %v450 = vpop.f32.mrb[0].mxu0
      %v451 = vpop.f32.mrb[0].mxu0
      %v452 = vadd.f32 %v292, %v451
      %v453 = vpop.f32.mrb[0].mxu0
      %454 = vmatprep.mubr.bf16.mxu0 0
      %455 = vmatmul.mubr.bf16.gmra.mrb[0].mxu0 %v249
      %v456 = vpop.f32.mrb[0].mxu0
      %v457 = vadd.f32 %v292, %v456
      %v458 = vpop.f32.mrb[0].mxu0
      %v459 = vpop.f32.mrb[0].mxu0
      %v460 = vadd.f32 %v292, %v459
      %v461 = vpop.f32.mrb[0].mxu0
      %462 = vmatprep.mubr.bf16.mxu0 0
      %463 = vmatmul.mubr.bf16.gmra.mrb[0].mxu0 %v250
      %v464 = vpop.f32.mrb[0].mxu0
      %v465 = vadd.f32 %v292, %v464
      %v466 = vpop.f32.mrb[0].mxu0
      %v467 = vpop.f32.mrb[0].mxu0
      %v468 = vadd.f32 %v292, %v467
      %v469 = vpop.f32.mrb[0].mxu0
      %470 = vmatprep.mubr.bf16.mxu0 0
      %471 = vmatmul.mubr.bf16.gmra.mrb[0].mxu0 %v251
      %v472 = vpop.f32.mrb[0].mxu0
      %v473 = vadd.f32 %v292, %v472
      %v474 = vpop.f32.mrb[0].mxu0
      %v475 = vpop.f32.mrb[0].mxu0
      %v476 = vadd.f32 %v292, %v475
      %v477 = vpop.f32.mrb[0].mxu0
      %478 = vmatprep.mubr.bf16.mxu0 0
      %479 = vmatmul.mubr.bf16.gmra.mrb[0].mxu0 %v252
      %v480 = vpop.f32.mrb[0].mxu0
      %v481 = vadd.f32 %v292, %v480
      %v482 = vpop.f32.mrb[0].mxu0
      %v483 = vpop.f32.mrb[0].mxu0
      %v484 = vadd.f32 %v292, %v483
      %v485 = vpop.f32.mrb[0].mxu0
      %486 = vmatprep.mubr.bf16.mxu0 0
      %487 = vmatmul.mubr.bf16.gmra.mrb[0].mxu0 %v253
      %v488 = vpop.f32.mrb[0].mxu0
      %v489 = vadd.f32 %v292, %v488
      %v490 = vpop.f32.mrb[0].mxu0
      %v491 = vpop.f32.mrb[0].mxu0
      %v492 = vadd.f32 %v292, %v491
      %v493 = vpop.f32.mrb[0].mxu0
      %494 = vmatprep.mubr.bf16.mxu0 0
      %495 = vmatmul.mubr.bf16.gmra.mrb[0].mxu0 %v254
      %v496 = vpop.f32.mrb[0].mxu0
      %v497 = vadd.f32 %v292, %v496
      %v498 = vpop.f32.mrb[0].mxu0
      %v499 = vpop.f32.mrb[0].mxu0
      %v500 = vadd.f32 %v292, %v499
      %v501 = vpop.f32.mrb[0].mxu0
      %502 = vmatprep.mubr.bf16.mxu0 0
      %503 = vmatmul.mubr.bf16.gmra.mrb[0].mxu0 %v255
      %v504 = vpop.f32.mrb[0].mxu0
      %v505 = vadd.f32 %v292, %v504
      %v506 = vpop.f32.mrb[0].mxu0
      %v507 = vpop.f32.mrb[0].mxu0
      %v508 = vadd.f32 %v292, %v507
      %v509 = vpop.f32.mrb[0].mxu0
      %510 = vmatprep.mubr.bf16.mxu0 0
      %511 = vmatmul.mubr.bf16.gmra.mrb[0].mxu0 %v256
      %v512 = vpop.f32.mrb[0].mxu0
      %v513 = vadd.f32 %v292, %v512
      %v514 = vpop.f32.mrb[0].mxu0
      %v515 = vpop.f32.mrb[0].mxu0
      %v516 = vadd.f32 %v292, %v515
      %v517 = vpop.f32.mrb[0].mxu0
      %518 = vmatprep.mubr.bf16.mxu0 0
      %519 = vmatmul.mubr.bf16.gmra.mrb[0].mxu0 %v257
      %v520 = vpop.f32.mrb[0].mxu0
      %v521 = vadd.f32 %v292, %v520
      %v522 = vpop.f32.mrb[0].mxu0
      %v523 = vpop.f32.mrb[0].mxu0
      %v524 = vadd.f32 %v292, %v523
      %v525 = vpop.f32.mrb[0].mxu0
      %526 = vmatprep.mubr.bf16.mxu0 0
      %527 = vmatmul.mubr.bf16.gmra.mrb[0].mxu0 %v258
      %v528 = vpop.f32.mrb[0].mxu0
      %v529 = vadd.f32 %v292, %v528
      %v530 = vpop.f32.mrb[0].mxu0
      %v531 = vpop.f32.mrb[0].mxu0
      %v532 = vadd.f32 %v292, %v531
      %v533 = vpop.f32.mrb[0].mxu0
      %534 = vmatprep.mubr.bf16.mxu0 0
      %535 = vmatmul.mubr.bf16.gmra.mrb[0].mxu0 %v259
      %v536 = vpop.f32.mrb[0].mxu0
      %v537 = vadd.f32 %v292, %v536
      %v538 = vpop.f32.mrb[0].mxu0
      %v539 = vpop.f32.mrb[0].mxu0
      %v540 = vadd.f32 %v292, %v539
      %v541 = vpop.f32.mrb[0].mxu0
      %542 = vmatprep.mubr.bf16.mxu0 0
      %543 = vmatmul.mubr.bf16.gmra.mrb[0].mxu0 %v260
      %v544 = vpop.f32.mrb[0].mxu0
      %v545 = vadd.f32 %v292, %v544
      %v546 = vpop.f32.mrb[0].mxu0
      %v547 = vpop.f32.mrb[0].mxu0
      %v548 = vadd.f32 %v292, %v547
      %v549 = vpop.f32.mrb[0].mxu0
      %550 = vmatprep.mubr.bf16.mxu0 0
      %551 = vmatmul.mubr.bf16.gmra.mrb[0].mxu0 %v261
      %v552 = vpop.f32.mrb[0].mxu0
      %v553 = vadd.f32 %v292, %v552
      %v554 = vpop.f32.mrb[0].mxu0
      %v555 = vpop.f32.mrb[0].mxu0
      %v556 = vadd.f32 %v292, %v555
      %v557 = vpop.f32.mrb[0].mxu0
      %558 = vmatprep.mubr.bf16.mxu0 0
      %559 = vmatmul.mubr.bf16.gmra.mrb[0].mxu0 %v262
      %v560 = vpop.f32.mrb[0].mxu0
      %v561 = vadd.f32 %v292, %v560
      %v562 = vpop.f32.mrb[0].mxu0
      %v563 = vpop.f32.mrb[0].mxu0
      %v564 = vadd.f32 %v292, %v563
      %v565 = vpop.f32.mrb[0].mxu0
      %566 = vmatprep.mubr.bf16.mxu0 0
      %567 = vmatmul.mubr.bf16.gmra.mrb[0].mxu0 %v263
      %v568 = vpop.f32.mrb[0].mxu0
      %v569 = vadd.f32 %v292, %v568
      %v570 = vpop.f32.mrb[0].mxu0
      %v571 = vpop.f32.mrb[0].mxu0
      %v572 = vadd.f32 %v292, %v571
      %v573 = vpop.f32.mrb[0].mxu0
      %574 = vmatprep.mubr.bf16.mxu0 0
      %575 = vmatmul.mubr.bf16.gmra.mrb[0].mxu0 %v264
      %v576 = vpop.f32.mrb[0].mxu0
      %v577 = vadd.f32 %v292, %v576
      %v578 = vpop.f32.mrb[0].mxu0
      %v579 = vpop.f32.mrb[0].mxu0
      %v580 = vadd.f32 %v292, %v579
      %v581 = vpop.f32.mrb[0].mxu0
      %582 = vmatprep.mubr.bf16.mxu0 0
      %583 = vmatmul.mubr.bf16.gmra.mrb[0].mxu0 %v265
      %v584 = vpop.f32.mrb[0].mxu0
      %v585 = vadd.f32 %v292, %v584
      %v586 = vpop.f32.mrb[0].mxu0
      %v587 = vpop.f32.mrb[0].mxu0
      %v588 = vadd.f32 %v292, %v587
      %v589 = vpop.f32.mrb[0].mxu0
      %590 = vmatprep.mubr.bf16.mxu0 0
      %591 = vmatmul.mubr.bf16.gmra.mrb[0].mxu0 %v266
      %v592 = vpop.f32.mrb[0].mxu0
      %v593 = vadd.f32 %v292, %v592
      %v594 = vpop.f32.mrb[0].mxu0
      %v595 = vpop.f32.mrb[0].mxu0
      %v596 = vadd.f32 %v292, %v595
      %v597 = vpop.f32.mrb[0].mxu0
      %598 = vmatprep.mubr.bf16.mxu0 0
      %599 = vmatmul.mubr.bf16.gmra.mrb[0].mxu0 %v267
      %v600 = vpop.f32.mrb[0].mxu0
      %v601 = vadd.f32 %v292, %v600
      %v602 = vpop.f32.mrb[0].mxu0
      %v603 = vpop.f32.mrb[0].mxu0
      %v604 = vadd.f32 %v292, %v603
      %v605 = vpop.f32.mrb[0].mxu0
      %606 = vmatprep.mubr.bf16.mxu0 0
      %607 = vmatmul.mubr.bf16.gmra.mrb[0].mxu0 %v268
      %v608 = vpop.f32.mrb[0].mxu0
      %v609 = vadd.f32 %v292, %v608
      %v610 = vpop.f32.mrb[0].mxu0
      %v611 = vpop.f32.mrb[0].mxu0
      %v612 = vadd.f32 %v292, %v611
      %v613 = vpop.f32.mrb[0].mxu0
      %614 = vmatprep.mubr.bf16.mxu0 0
      %615 = vmatmul.mubr.bf16.gmra.mrb[0].mxu0 %v269
      %v616 = vpop.f32.mrb[0].mxu0
      %v617 = vadd.f32 %v292, %v616
      %v618 = vpop.f32.mrb[0].mxu0
      %v619 = vpop.f32.mrb[0].mxu0
      %v620 = vadd.f32 %v292, %v619
      %v621 = vpop.f32.mrb[0].mxu0
      %622 = vmatprep.mubr.bf16.mxu0 0
      %623 = vmatmul.mubr.bf16.gmra.mrb[0].mxu0 %v270
      %v624 = vpop.f32.mrb[0].mxu0
      %v625 = vadd.f32 %v292, %v624
      %v626 = vpop.f32.mrb[0].mxu0
      %v627 = vpop.f32.mrb[0].mxu0
      %v628 = vadd.f32 %v292, %v627
      %v629 = vpop.f32.mrb[0].mxu0
      %630 = vdwg.mxu0
      %631 = vmax.xlane.f32.xlu0 %v377
      %v632 = vpop.xlane.xlu0 %631
      %633 = vmax.xlane.f32.xlu0 %v380
      %v634 = vpop.xlane.xlu0 %633
      %635 = vmax.xlane.f32.xlu0 %v385
      %v636 = vpop.xlane.xlu0 %635
      %637 = vmax.xlane.f32.xlu0 %v388
      %v638 = vpop.xlane.xlu0 %637
      %639 = vmax.xlane.f32.xlu0 %v393
      %v640 = vpop.xlane.xlu0 %639
      %641 = vmax.xlane.f32.xlu0 %v396
      %v642 = vpop.xlane.xlu0 %641
      %643 = vmax.xlane.f32.xlu0 %v401
      %v644 = vpop.xlane.xlu0 %643
      %645 = vmax.xlane.f32.xlu0 %v404
      %v646 = vpop.xlane.xlu0 %645
      %647 = vmax.xlane.f32.xlu0 %v409
      %v648 = vpop.xlane.xlu0 %647
      %649 = vmax.xlane.f32.xlu0 %v412
      %v650 = vpop.xlane.xlu0 %649
      %651 = vmax.xlane.f32.xlu0 %v417
      %v652 = vpop.xlane.xlu0 %651
      %653 = vmax.xlane.f32.xlu0 %v420
      %v654 = vpop.xlane.xlu0 %653
      %655 = vmax.xlane.f32.xlu0 %v425
      %v656 = vpop.xlane.xlu0 %655
      %657 = vmax.xlane.f32.xlu0 %v428
      %v658 = vpop.xlane.xlu0 %657
      %659 = vmax.xlane.f32.xlu0 %v433
      %v660 = vpop.xlane.xlu0 %659
      %661 = vmax.xlane.f32.xlu0 %v436
      %v662 = vpop.xlane.xlu0 %661
      %663 = vmax.xlane.f32.xlu0 %v441
      %v664 = vpop.xlane.xlu0 %663
      %665 = vmax.xlane.f32.xlu0 %v444
      %v666 = vpop.xlane.xlu0 %665
      %667 = vmax.xlane.f32.xlu0 %v449
      %v668 = vpop.xlane.xlu0 %667
      %669 = vmax.xlane.f32.xlu0 %v452
      %v670 = vpop.xlane.xlu0 %669
      %671 = vmax.xlane.f32.xlu0 %v457
      %v672 = vpop.xlane.xlu0 %671
      %673 = vmax.xlane.f32.xlu0 %v460
      %v674 = vpop.xlane.xlu0 %673
      %675 = vmax.xlane.f32.xlu0 %v465
      %v676 = vpop.xlane.xlu0 %675
      %677 = vmax.xlane.f32.xlu0 %v468
      %v678 = vpop.xlane.xlu0 %677
      %679 = vmax.xlane.f32.xlu0 %v473
      %v680 = vpop.xlane.xlu0 %679
      %681 = vmax.xlane.f32.xlu0 %v476
      %v682 = vpop.xlane.xlu0 %681
      %683 = vmax.xlane.f32.xlu0 %v481
      %v684 = vpop.xlane.xlu0 %683
      %685 = vmax.xlane.f32.xlu0 %v484
      %v686 = vpop.xlane.xlu0 %685
      %687 = vmax.xlane.f32.xlu0 %v489
      %v688 = vpop.xlane.xlu0 %687
      %689 = vmax.xlane.f32.xlu0 %v492
      %v690 = vpop.xlane.xlu0 %689
      %691 = vmax.xlane.f32.xlu0 %v497
      %v692 = vpop.xlane.xlu0 %691
      %693 = vmax.xlane.f32.xlu0 %v500
      %v694 = vpop.xlane.xlu0 %693
      %695 = vmax.xlane.f32.xlu0 %v505
      %v696 = vpop.xlane.xlu0 %695
      %697 = vmax.xlane.f32.xlu0 %v508
      %v698 = vpop.xlane.xlu0 %697
      %699 = vmax.xlane.f32.xlu0 %v513
      %v700 = vpop.xlane.xlu0 %699
      %701 = vmax.xlane.f32.xlu0 %v516
      %v702 = vpop.xlane.xlu0 %701
      %703 = vmax.xlane.f32.xlu0 %v521
      %v704 = vpop.xlane.xlu0 %703
      %705 = vmax.xlane.f32.xlu0 %v524
      %v706 = vpop.xlane.xlu0 %705
      %707 = vmax.xlane.f32.xlu0 %v529
      %v708 = vpop.xlane.xlu0 %707
      %709 = vmax.xlane.f32.xlu0 %v532
      %v710 = vpop.xlane.xlu0 %709
      %711 = vmax.xlane.f32.xlu0 %v537
      %v712 = vpop.xlane.xlu0 %711
      %713 = vmax.xlane.f32.xlu0 %v540
      %v714 = vpop.xlane.xlu0 %713
      %715 = vmax.xlane.f32.xlu0 %v545
      %v716 = vpop.xlane.xlu0 %715
      %717 = vmax.xlane.f32.xlu0 %v548
      %v718 = vpop.xlane.xlu0 %717
      %719 = vmax.xlane.f32.xlu0 %v553
      %v720 = vpop.xlane.xlu0 %719
      %721 = vmax.xlane.f32.xlu0 %v556
      %v722 = vpop.xlane.xlu0 %721
      %723 = vmax.xlane.f32.xlu0 %v561
      %v724 = vpop.xlane.xlu0 %723
      %725 = vmax.xlane.f32.xlu0 %v564
      %v726 = vpop.xlane.xlu0 %725
      %727 = vmax.xlane.f32.xlu0 %v569
      %v728 = vpop.xlane.xlu0 %727
      %729 = vmax.xlane.f32.xlu0 %v572
      %v730 = vpop.xlane.xlu0 %729
      %731 = vmax.xlane.f32.xlu0 %v577
      %v732 = vpop.xlane.xlu0 %731
      %733 = vmax.xlane.f32.xlu0 %v580
      %v734 = vpop.xlane.xlu0 %733
      %735 = vmax.xlane.f32.xlu0 %v585
      %v736 = vpop.xlane.xlu0 %735
      %737 = vmax.xlane.f32.xlu0 %v588
      %v738 = vpop.xlane.xlu0 %737
      %739 = vmax.xlane.f32.xlu0 %v593
      %v740 = vpop.xlane.xlu0 %739
      %741 = vmax.xlane.f32.xlu0 %v596
      %v742 = vpop.xlane.xlu0 %741
      %743 = vmax.xlane.f32.xlu0 %v601
      %v744 = vpop.xlane.xlu0 %743
      %745 = vmax.xlane.f32.xlu0 %v604
      %v746 = vpop.xlane.xlu0 %745
      %747 = vmax.xlane.f32.xlu0 %v609
      %v748 = vpop.xlane.xlu0 %747
      %749 = vmax.xlane.f32.xlu0 %v612
      %v750 = vpop.xlane.xlu0 %749
      %751 = vmax.xlane.f32.xlu0 %v617
      %v752 = vpop.xlane.xlu0 %751
      %753 = vmax.xlane.f32.xlu0 %v620
      %v754 = vpop.xlane.xlu0 %753
      %755 = vmax.xlane.f32.xlu0 %v625
      %v756 = vpop.xlane.xlu0 %755
      %757 = vmax.xlane.f32.xlu0 %v628
      %v758 = vpop.xlane.xlu0 %757
      %v759 = vsub.f32 %v377, %v632
      %v760 = vsub.f32 %v380, %v634
      %v761 = vsub.f32 %v385, %v636
      %v762 = vsub.f32 %v388, %v638
      %v763 = vsub.f32 %v393, %v640
      %v764 = vsub.f32 %v396, %v642
      %v765 = vsub.f32 %v401, %v644
      %v766 = vsub.f32 %v404, %v646
      %v767 = vsub.f32 %v409, %v648
      %v768 = vsub.f32 %v412, %v650
      %v769 = vsub.f32 %v417, %v652
      %v770 = vsub.f32 %v420, %v654
      %v771 = vsub.f32 %v425, %v656
      %v772 = vsub.f32 %v428, %v658
      %v773 = vsub.f32 %v433, %v660
      %v774 = vsub.f32 %v436, %v662
      %v775 = vsub.f32 %v441, %v664
      %v776 = vsub.f32 %v444, %v666
      %v777 = vsub.f32 %v449, %v668
      %v778 = vsub.f32 %v452, %v670
      %v779 = vsub.f32 %v457, %v672
      %v780 = vsub.f32 %v460, %v674
      %v781 = vsub.f32 %v465, %v676
      %v782 = vsub.f32 %v468, %v678
      %v783 = vsub.f32 %v473, %v680
      %v784 = vsub.f32 %v476, %v682
      %v785 = vsub.f32 %v481, %v684
      %v786 = vsub.f32 %v484, %v686
      %v787 = vsub.f32 %v489, %v688
      %v788 = vsub.f32 %v492, %v690
      %v789 = vsub.f32 %v497, %v692
      %v790 = vsub.f32 %v500, %v694
      %v791 = vsub.f32 %v505, %v696
      %v792 = vsub.f32 %v508, %v698
      %v793 = vsub.f32 %v513, %v700
      %v794 = vsub.f32 %v516, %v702
      %v795 = vsub.f32 %v521, %v704
      %v796 = vsub.f32 %v524, %v706
      %v797 = vsub.f32 %v529, %v708
      %v798 = vsub.f32 %v532, %v710
      %v799 = vsub.f32 %v537, %v712
      %v800 = vsub.f32 %v540, %v714
      %v801 = vsub.f32 %v545, %v716
      %v802 = vsub.f32 %v548, %v718
      %v803 = vsub.f32 %v553, %v720
      %v804 = vsub.f32 %v556, %v722
      %v805 = vsub.f32 %v561, %v724
      %v806 = vsub.f32 %v564, %v726
      %v807 = vsub.f32 %v569, %v728
      %v808 = vsub.f32 %v572, %v730
      %v809 = vsub.f32 %v577, %v732
      %v810 = vsub.f32 %v580, %v734
      %v811 = vsub.f32 %v585, %v736
      %v812 = vsub.f32 %v588, %v738
      %v813 = vsub.f32 %v593, %v740
      %v814 = vsub.f32 %v596, %v742
      %v815 = vsub.f32 %v601, %v744
      %v816 = vsub.f32 %v604, %v746
      %v817 = vsub.f32 %v609, %v748
      %v818 = vsub.f32 %v612, %v750
      %v819 = vsub.f32 %v617, %v752
      %v820 = vsub.f32 %v620, %v754
      %v821 = vsub.f32 %v625, %v756
      %v822 = vsub.f32 %v628, %v758
      %v823 = vmul.f32 %v759, 1.442695
      %v824 = vpow.pop %v823
      %v825 = vmul.f32 %v760, 1.442695
      %v826 = vpow.pop %v825
      %v827 = vmul.f32 %v761, 1.442695
      %v828 = vpow.pop %v827
      %v829 = vmul.f32 %v762, 1.442695
      %v830 = vpow.pop %v829
      %v831 = vmul.f32 %v763, 1.442695
      %v832 = vpow.pop %v831
      %v833 = vmul.f32 %v764, 1.442695
      %v834 = vpow.pop %v833
      %v835 = vmul.f32 %v765, 1.442695
      %v836 = vpow.pop %v835
      %v837 = vmul.f32 %v766, 1.442695
      %v838 = vpow.pop %v837
      %v839 = vmul.f32 %v767, 1.442695
      %v840 = vpow.pop %v839
      %v841 = vmul.f32 %v768, 1.442695
      %v842 = vpow.pop %v841
      %v843 = vmul.f32 %v769, 1.442695
      %v844 = vpow.pop %v843
      %v845 = vmul.f32 %v770, 1.442695
      %v846 = vpow.pop %v845
      %v847 = vmul.f32 %v771, 1.442695
      %v848 = vpow.pop %v847
      %v849 = vmul.f32 %v772, 1.442695
      %v850 = vpow.pop %v849
      %v851 = vmul.f32 %v773, 1.442695
      %v852 = vpow.pop %v851
      %v853 = vmul.f32 %v774, 1.442695
      %v854 = vpow.pop %v853
      %v855 = vmul.f32 %v775, 1.442695
      %v856 = vpow.pop %v855
      %v857 = vmul.f32 %v776, 1.442695
      %v858 = vpow.pop %v857
      %v859 = vmul.f32 %v777, 1.442695
      %v860 = vpow.pop %v859
      %v861 = vmul.f32 %v778, 1.442695
      %v862 = vpow.pop %v861
      %v863 = vmul.f32 %v779, 1.442695
      %v864 = vpow.pop %v863
      %v865 = vmul.f32 %v780, 1.442695
      %v866 = vpow.pop %v865
      %v867 = vmul.f32 %v781, 1.442695
      %v868 = vpow.pop %v867
      %v869 = vmul.f32 %v782, 1.442695
      %v870 = vpow.pop %v869
      %v871 = vmul.f32 %v783, 1.442695
      %v872 = vpow.pop %v871
      %v873 = vmul.f32 %v784, 1.442695
      %v874 = vpow.pop %v873
      %v875 = vmul.f32 %v785, 1.442695
      %v876 = vpow.pop %v875
      %v877 = vmul.f32 %v786, 1.442695
      %v878 = vpow.pop %v877
      %v879 = vmul.f32 %v787, 1.442695
      %v880 = vpow.pop %v879
      %v881 = vmul.f32 %v788, 1.442695
      %v882 = vpow.pop %v881
      %v883 = vmul.f32 %v789, 1.442695
      %v884 = vpow.pop %v883
      %v885 = vmul.f32 %v790, 1.442695
      %v886 = vpow.pop %v885
      %v887 = vmul.f32 %v791, 1.442695
      %v888 = vpow.pop %v887
      %v889 = vmul.f32 %v792, 1.442695
      %v890 = vpow.pop %v889
      %v891 = vmul.f32 %v793, 1.442695
      %v892 = vpow.pop %v891
      %v893 = vmul.f32 %v794, 1.442695
      %v894 = vpow.pop %v893
      %v895 = vmul.f32 %v795, 1.442695
      %v896 = vpow.pop %v895
      %v897 = vmul.f32 %v796, 1.442695
      %v898 = vpow.pop %v897
      %v899 = vmul.f32 %v797, 1.442695
      %v900 = vpow.pop %v899
      %v901 = vmul.f32 %v798, 1.442695
      %v902 = vpow.pop %v901
      %v903 = vmul.f32 %v799, 1.442695
      %v904 = vpow.pop %v903
      %v905 = vmul.f32 %v800, 1.442695
      %v906 = vpow.pop %v905
      %v907 = vmul.f32 %v801, 1.442695
      %v908 = vpow.pop %v907
      %v909 = vmul.f32 %v802, 1.442695
      %v910 = vpow.pop %v909
      %v911 = vmul.f32 %v803, 1.442695
      %v912 = vpow.pop %v911
      %v913 = vmul.f32 %v804, 1.442695
      %v914 = vpow.pop %v913
      %v915 = vmul.f32 %v805, 1.442695
      %v916 = vpow.pop %v915
      %v917 = vmul.f32 %v806, 1.442695
      %v918 = vpow.pop %v917
      %v919 = vmul.f32 %v807, 1.442695
      %v920 = vpow.pop %v919
      %v921 = vmul.f32 %v808, 1.442695
      %v922 = vpow.pop %v921
      %v923 = vmul.f32 %v809, 1.442695
      %v924 = vpow.pop %v923
      %v925 = vmul.f32 %v810, 1.442695
      %v926 = vpow.pop %v925
      %v927 = vmul.f32 %v811, 1.442695
      %v928 = vpow.pop %v927
      %v929 = vmul.f32 %v812, 1.442695
      %v930 = vpow.pop %v929
      %v931 = vmul.f32 %v813, 1.442695
      %v932 = vpow.pop %v931
      %v933 = vmul.f32 %v814, 1.442695
      %v934 = vpow.pop %v933
      %v935 = vmul.f32 %v815, 1.442695
      %v936 = vpow.pop %v935
      %v937 = vmul.f32 %v816, 1.442695
      %v938 = vpow.pop %v937
      %v939 = vmul.f32 %v817, 1.442695
      %v940 = vpow.pop %v939
      %v941 = vmul.f32 %v818, 1.442695
      %v942 = vpow.pop %v941
      %v943 = vmul.f32 %v819, 1.442695
      %v944 = vpow.pop %v943
      %v945 = vmul.f32 %v820, 1.442695
      %v946 = vpow.pop %v945
      %v947 = vmul.f32 %v821, 1.442695
      %v948 = vpow.pop %v947
      %v949 = vmul.f32 %v822, 1.442695
      %v950 = vpow.pop %v949
      %951 = vadd.xlane.f32.xlu0 %v824
      %v952 = vpop.xlane.xlu0 %951
      %953 = vadd.xlane.f32.xlu0 %v826
      %v954 = vpop.xlane.xlu0 %953
      %955 = vadd.xlane.f32.xlu0 %v828
      %v956 = vpop.xlane.xlu0 %955
      %957 = vadd.xlane.f32.xlu0 %v830
      %v958 = vpop.xlane.xlu0 %957
      %959 = vadd.xlane.f32.xlu0 %v832
      %v960 = vpop.xlane.xlu0 %959
      %961 = vadd.xlane.f32.xlu0 %v834
      %v962 = vpop.xlane.xlu0 %961
      %963 = vadd.xlane.f32.xlu0 %v836
      %v964 = vpop.xlane.xlu0 %963
      %965 = vadd.xlane.f32.xlu0 %v838
      %v966 = vpop.xlane.xlu0 %965
      %967 = vadd.xlane.f32.xlu0 %v840
      %v968 = vpop.xlane.xlu0 %967
      %969 = vadd.xlane.f32.xlu0 %v842
      %v970 = vpop.xlane.xlu0 %969
      %971 = vadd.xlane.f32.xlu0 %v844
      %v972 = vpop.xlane.xlu0 %971
      %973 = vadd.xlane.f32.xlu0 %v846
      %v974 = vpop.xlane.xlu0 %973
      %975 = vadd.xlane.f32.xlu0 %v848
      %v976 = vpop.xlane.xlu0 %975
      %977 = vadd.xlane.f32.xlu0 %v850
      %v978 = vpop.xlane.xlu0 %977
      %979 = vadd.xlane.f32.xlu0 %v852
      %v980 = vpop.xlane.xlu0 %979
      %981 = vadd.xlane.f32.xlu0 %v854
      %v982 = vpop.xlane.xlu0 %981
      %983 = vadd.xlane.f32.xlu0 %v856
      %v984 = vpop.xlane.xlu0 %983
      %985 = vadd.xlane.f32.xlu0 %v858
      %v986 = vpop.xlane.xlu0 %985
      %987 = vadd.xlane.f32.xlu0 %v860
      %v988 = vpop.xlane.xlu0 %987
      %989 = vadd.xlane.f32.xlu0 %v862
      %v990 = vpop.xlane.xlu0 %989
      %991 = vadd.xlane.f32.xlu0 %v864
      %v992 = vpop.xlane.xlu0 %991
      %993 = vadd.xlane.f32.xlu0 %v866
      %v994 = vpop.xlane.xlu0 %993
      %995 = vadd.xlane.f32.xlu0 %v868
      %v996 = vpop.xlane.xlu0 %995
      %997 = vadd.xlane.f32.xlu0 %v870
      %v998 = vpop.xlane.xlu0 %997
      %999 = vadd.xlane.f32.xlu0 %v872
      %v1000 = vpop.xlane.xlu0 %999
      %1001 = vadd.xlane.f32.xlu0 %v874
      %v1002 = vpop.xlane.xlu0 %1001
      %1003 = vadd.xlane.f32.xlu0 %v876
      %v1004 = vpop.xlane.xlu0 %1003
      %1005 = vadd.xlane.f32.xlu0 %v878
      %v1006 = vpop.xlane.xlu0 %1005
      %1007 = vadd.xlane.f32.xlu0 %v880
      %v1008 = vpop.xlane.xlu0 %1007
      %1009 = vadd.xlane.f32.xlu0 %v882
      %v1010 = vpop.xlane.xlu0 %1009
      %1011 = vadd.xlane.f32.xlu0 %v884
      %v1012 = vpop.xlane.xlu0 %1011
      %1013 = vadd.xlane.f32.xlu0 %v886
      %v1014 = vpop.xlane.xlu0 %1013
      %1015 = vadd.xlane.f32.xlu0 %v888
      %v1016 = vpop.xlane.xlu0 %1015
      %1017 = vadd.xlane.f32.xlu0 %v890
      %v1018 = vpop.xlane.xlu0 %1017
      %1019 = vadd.xlane.f32.xlu0 %v892
      %v1020 = vpop.xlane.xlu0 %1019
      %1021 = vadd.xlane.f32.xlu0 %v894
      %v1022 = vpop.xlane.xlu0 %1021
      %1023 = vadd.xlane.f32.xlu0 %v896
      %v1024 = vpop.xlane.xlu0 %1023
      %1025 = vadd.xlane.f32.xlu0 %v898
      %v1026 = vpop.xlane.xlu0 %1025
      %1027 = vadd.xlane.f32.xlu0 %v900
      %v1028 = vpop.xlane.xlu0 %1027
      %1029 = vadd.xlane.f32.xlu0 %v902
      %v1030 = vpop.xlane.xlu0 %1029
      %1031 = vadd.xlane.f32.xlu0 %v904
      %v1032 = vpop.xlane.xlu0 %1031
      %1033 = vadd.xlane.f32.xlu0 %v906
      %v1034 = vpop.xlane.xlu0 %1033
      %1035 = vadd.xlane.f32.xlu0 %v908
      %v1036 = vpop.xlane.xlu0 %1035
      %1037 = vadd.xlane.f32.xlu0 %v910
      %v1038 = vpop.xlane.xlu0 %1037
      %1039 = vadd.xlane.f32.xlu0 %v912
      %v1040 = vpop.xlane.xlu0 %1039
      %1041 = vadd.xlane.f32.xlu0 %v914
      %v1042 = vpop.xlane.xlu0 %1041
      %1043 = vadd.xlane.f32.xlu0 %v916
      %v1044 = vpop.xlane.xlu0 %1043
      %1045 = vadd.xlane.f32.xlu0 %v918
      %v1046 = vpop.xlane.xlu0 %1045
      %1047 = vadd.xlane.f32.xlu0 %v920
      %v1048 = vpop.xlane.xlu0 %1047
      %1049 = vadd.xlane.f32.xlu0 %v922
      %v1050 = vpop.xlane.xlu0 %1049
      %1051 = vadd.xlane.f32.xlu0 %v924
      %v1052 = vpop.xlane.xlu0 %1051
      %1053 = vadd.xlane.f32.xlu0 %v926
      %v1054 = vpop.xlane.xlu0 %1053
      %1055 = vadd.xlane.f32.xlu0 %v928
      %v1056 = vpop.xlane.xlu0 %1055
      %1057 = vadd.xlane.f32.xlu0 %v930
      %v1058 = vpop.xlane.xlu0 %1057
      %1059 = vadd.xlane.f32.xlu0 %v932
      %v1060 = vpop.xlane.xlu0 %1059
      %1061 = vadd.xlane.f32.xlu0 %v934
      %v1062 = vpop.xlane.xlu0 %1061
      %1063 = vadd.xlane.f32.xlu0 %v936
      %v1064 = vpop.xlane.xlu0 %1063
      %1065 = vadd.xlane.f32.xlu0 %v938
      %v1066 = vpop.xlane.xlu0 %1065
      %1067 = vadd.xlane.f32.xlu0 %v940
      %v1068 = vpop.xlane.xlu0 %1067
      %1069 = vadd.xlane.f32.xlu0 %v942
      %v1070 = vpop.xlane.xlu0 %1069
      %1071 = vadd.xlane.f32.xlu0 %v944
      %v1072 = vpop.xlane.xlu0 %1071
      %1073 = vadd.xlane.f32.xlu0 %v946
      %v1074 = vpop.xlane.xlu0 %1073
      %1075 = vadd.xlane.f32.xlu0 %v948
      %v1076 = vpop.xlane.xlu0 %1075
      %1077 = vadd.xlane.f32.xlu0 %v950
      %v1078 = vpop.xlane.xlu0 %1077
      %v1079 = vlog2.pop %v952
      %v1080 = vmul.f32 %v1079, 0.6931472
      %v1081 = vlog2.pop %v954
      %v1082 = vmul.f32 %v1081, 0.6931472
      %v1083 = vlog2.pop %v956
      %v1084 = vmul.f32 %v1083, 0.6931472
      %v1085 = vlog2.pop %v958
      %v1086 = vmul.f32 %v1085, 0.6931472
      %v1087 = vlog2.pop %v960
      %v1088 = vmul.f32 %v1087, 0.6931472
      %v1089 = vlog2.pop %v962
      %v1090 = vmul.f32 %v1089, 0.6931472
      %v1091 = vlog2.pop %v964
      %v1092 = vmul.f32 %v1091, 0.6931472
      %v1093 = vlog2.pop %v966
      %v1094 = vmul.f32 %v1093, 0.6931472
      %v1095 = vlog2.pop %v968
      %v1096 = vmul.f32 %v1095, 0.6931472
      %v1097 = vlog2.pop %v970
      %v1098 = vmul.f32 %v1097, 0.6931472
      %v1099 = vlog2.pop %v972
      %v1100 = vmul.f32 %v1099, 0.6931472
      %v1101 = vlog2.pop %v974
      %v1102 = vmul.f32 %v1101, 0.6931472
      %v1103 = vlog2.pop %v976
      %v1104 = vmul.f32 %v1103, 0.6931472
      %v1105 = vlog2.pop %v978
      %v1106 = vmul.f32 %v1105, 0.6931472
      %v1107 = vlog2.pop %v980
      %v1108 = vmul.f32 %v1107, 0.6931472
      %v1109 = vlog2.pop %v982
      %v1110 = vmul.f32 %v1109, 0.6931472
      %v1111 = vlog2.pop %v984
      %v1112 = vmul.f32 %v1111, 0.6931472
      %v1113 = vlog2.pop %v986
      %v1114 = vmul.f32 %v1113, 0.6931472
      %v1115 = vlog2.pop %v988
      %v1116 = vmul.f32 %v1115, 0.6931472
      %v1117 = vlog2.pop %v990
      %v1118 = vmul.f32 %v1117, 0.6931472
      %v1119 = vlog2.pop %v992
      %v1120 = vmul.f32 %v1119, 0.6931472
      %v1121 = vlog2.pop %v994
      %v1122 = vmul.f32 %v1121, 0.6931472
      %v1123 = vlog2.pop %v996
      %v1124 = vmul.f32 %v1123, 0.6931472
      %v1125 = vlog2.pop %v998
      %v1126 = vmul.f32 %v1125, 0.6931472
      %v1127 = vlog2.pop %v1000
      %v1128 = vmul.f32 %v1127, 0.6931472
      %v1129 = vlog2.pop %v1002
      %v1130 = vmul.f32 %v1129, 0.6931472
      %v1131 = vlog2.pop %v1004
      %v1132 = vmul.f32 %v1131, 0.6931472
      %v1133 = vlog2.pop %v1006
      %v1134 = vmul.f32 %v1133, 0.6931472
      %v1135 = vlog2.pop %v1008
      %v1136 = vmul.f32 %v1135, 0.6931472
      %v1137 = vlog2.pop %v1010
      %v1138 = vmul.f32 %v1137, 0.6931472
      %v1139 = vlog2.pop %v1012
      %v1140 = vmul.f32 %v1139, 0.6931472
      %v1141 = vlog2.pop %v1014
      %v1142 = vmul.f32 %v1141, 0.6931472
      %v1143 = vlog2.pop %v1016
      %v1144 = vmul.f32 %v1143, 0.6931472
      %v1145 = vlog2.pop %v1018
      %v1146 = vmul.f32 %v1145, 0.6931472
      %v1147 = vlog2.pop %v1020
      %v1148 = vmul.f32 %v1147, 0.6931472
      %v1149 = vlog2.pop %v1022
      %v1150 = vmul.f32 %v1149, 0.6931472
      %v1151 = vlog2.pop %v1024
      %v1152 = vmul.f32 %v1151, 0.6931472
      %v1153 = vlog2.pop %v1026
      %v1154 = vmul.f32 %v1153, 0.6931472
      %v1155 = vlog2.pop %v1028
      %v1156 = vmul.f32 %v1155, 0.6931472
      %v1157 = vlog2.pop %v1030
      %v1158 = vmul.f32 %v1157, 0.6931472
      %v1159 = vlog2.pop %v1032
      %v1160 = vmul.f32 %v1159, 0.6931472
      %v1161 = vlog2.pop %v1034
      %v1162 = vmul.f32 %v1161, 0.6931472
      %v1163 = vlog2.pop %v1036
      %v1164 = vmul.f32 %v1163, 0.6931472
      %v1165 = vlog2.pop %v1038
      %v1166 = vmul.f32 %v1165, 0.6931472
      %v1167 = vlog2.pop %v1040
      %v1168 = vmul.f32 %v1167, 0.6931472
      %v1169 = vlog2.pop %v1042
      %v1170 = vmul.f32 %v1169, 0.6931472
      %v1171 = vlog2.pop %v1044
      %v1172 = vmul.f32 %v1171, 0.6931472
      %v1173 = vlog2.pop %v1046
      %v1174 = vmul.f32 %v1173, 0.6931472
      %v1175 = vlog2.pop %v1048
      %v1176 = vmul.f32 %v1175, 0.6931472
      %v1177 = vlog2.pop %v1050
      %v1178 = vmul.f32 %v1177, 0.6931472
      %v1179 = vlog2.pop %v1052
      %v1180 = vmul.f32 %v1179, 0.6931472
      %v1181 = vlog2.pop %v1054
      %v1182 = vmul.f32 %v1181, 0.6931472
      %v1183 = vlog2.pop %v1056
      %v1184 = vmul.f32 %v1183, 0.6931472
      %v1185 = vlog2.pop %v1058
      %v1186 = vmul.f32 %v1185, 0.6931472
      %v1187 = vlog2.pop %v1060
      %v1188 = vmul.f32 %v1187, 0.6931472
      %v1189 = vlog2.pop %v1062
      %v1190 = vmul.f32 %v1189, 0.6931472
      %v1191 = vlog2.pop %v1064
      %v1192 = vmul.f32 %v1191, 0.6931472
      %v1193 = vlog2.pop %v1066
      %v1194 = vmul.f32 %v1193, 0.6931472
      %v1195 = vlog2.pop %v1068
      %v1196 = vmul.f32 %v1195, 0.6931472
      %v1197 = vlog2.pop %v1070
      %v1198 = vmul.f32 %v1197, 0.6931472
      %v1199 = vlog2.pop %v1072
      %v1200 = vmul.f32 %v1199, 0.6931472
      %v1201 = vlog2.pop %v1074
      %v1202 = vmul.f32 %v1201, 0.6931472
      %v1203 = vlog2.pop %v1076
      %v1204 = vmul.f32 %v1203, 0.6931472
      %v1205 = vlog2.pop %v1078
      %v1206 = vmul.f32 %v1205, 0.6931472
      %v1207 = vsub.f32 %v759, %v1080
      %v1208 = vsub.f32 %v760, %v1082
      %v1209 = vsub.f32 %v761, %v1084
      %v1210 = vsub.f32 %v762, %v1086
      %v1211 = vsub.f32 %v763, %v1088
      %v1212 = vsub.f32 %v764, %v1090
      %v1213 = vsub.f32 %v765, %v1092
      %v1214 = vsub.f32 %v766, %v1094
      %v1215 = vsub.f32 %v767, %v1096
      %v1216 = vsub.f32 %v768, %v1098
      %v1217 = vsub.f32 %v769, %v1100
      %v1218 = vsub.f32 %v770, %v1102
      %v1219 = vsub.f32 %v771, %v1104
      %v1220 = vsub.f32 %v772, %v1106
      %v1221 = vsub.f32 %v773, %v1108
      %v1222 = vsub.f32 %v774, %v1110
      %v1223 = vsub.f32 %v775, %v1112
      %v1224 = vsub.f32 %v776, %v1114
      %v1225 = vsub.f32 %v777, %v1116
      %v1226 = vsub.f32 %v778, %v1118
      %v1227 = vsub.f32 %v779, %v1120
      %v1228 = vsub.f32 %v780, %v1122
      %v1229 = vsub.f32 %v781, %v1124
      %v1230 = vsub.f32 %v782, %v1126
      %v1231 = vsub.f32 %v783, %v1128
      %v1232 = vsub.f32 %v784, %v1130
      %v1233 = vsub.f32 %v785, %v1132
      %v1234 = vsub.f32 %v786, %v1134
      %v1235 = vsub.f32 %v787, %v1136
      %v1236 = vsub.f32 %v788, %v1138
      %v1237 = vsub.f32 %v789, %v1140
      %v1238 = vsub.f32 %v790, %v1142
      %v1239 = vsub.f32 %v791, %v1144
      %v1240 = vsub.f32 %v792, %v1146
      %v1241 = vsub.f32 %v793, %v1148
      %v1242 = vsub.f32 %v794, %v1150
      %v1243 = vsub.f32 %v795, %v1152
      %v1244 = vsub.f32 %v796, %v1154
      %v1245 = vsub.f32 %v797, %v1156
      %v1246 = vsub.f32 %v798, %v1158
      %v1247 = vsub.f32 %v799, %v1160
      %v1248 = vsub.f32 %v800, %v1162
      %v1249 = vsub.f32 %v801, %v1164
      %v1250 = vsub.f32 %v802, %v1166
      %v1251 = vsub.f32 %v803, %v1168
      %v1252 = vsub.f32 %v804, %v1170
      %v1253 = vsub.f32 %v805, %v1172
      %v1254 = vsub.f32 %v806, %v1174
      %v1255 = vsub.f32 %v807, %v1176
      %v1256 = vsub.f32 %v808, %v1178
      %v1257 = vsub.f32 %v809, %v1180
      %v1258 = vsub.f32 %v810, %v1182
      %v1259 = vsub.f32 %v811, %v1184
      %v1260 = vsub.f32 %v812, %v1186
      %v1261 = vsub.f32 %v813, %v1188
      %v1262 = vsub.f32 %v814, %v1190
      %v1263 = vsub.f32 %v815, %v1192
      %v1264 = vsub.f32 %v816, %v1194
      %v1265 = vsub.f32 %v817, %v1196
      %v1266 = vsub.f32 %v818, %v1198
      %v1267 = vsub.f32 %v819, %v1200
      %v1268 = vsub.f32 %v820, %v1202
      %v1269 = vsub.f32 %v821, %v1204
      %v1270 = vsub.f32 %v822, %v1206
      %1271 = vst [vmem:[%s172] sm:$0xff] %v1207
      %1272 = vst [vmem:[%s172 + $0x8] sm:$0xff] %v1208
      %1273 = vst [vmem:[%s172 + $0x10] sm:$0xff] %v1209
      %1274 = vst [vmem:[%s172 + $0x18] sm:$0xff] %v1210
      %1275 = vst [vmem:[%s172 + $0x20] sm:$0xff] %v1211
      %1276 = vst [vmem:[%s172 + $0x28] sm:$0xff] %v1212
      %1277 = vst [vmem:[%s172 + $0x30] sm:$0xff] %v1213
      %1278 = vst [vmem:[%s172 + $0x38] sm:$0xff] %v1214
      %1279 = vst [vmem:[%s172 + $0x40] sm:$0xff] %v1215
      %1280 = vst [vmem:[%s172 + $0x48] sm:$0xff] %v1216
      %1281 = vst [vmem:[%s172 + $0x50] sm:$0xff] %v1217
      %1282 = vst [vmem:[%s172 + $0x58] sm:$0xff] %v1218
      %1283 = vst [vmem:[%s172 + $0x60] sm:$0xff] %v1219
      %1284 = vst [vmem:[%s172 + $0x68] sm:$0xff] %v1220
      %1285 = vst [vmem:[%s172 + $0x70] sm:$0xff] %v1221
      %1286 = vst [vmem:[%s172 + $0x78] sm:$0xff] %v1222
      %1287 = vst [vmem:[%s172 + $0x80] sm:$0xff] %v1223
      %1288 = vst [vmem:[%s172 + $0x88] sm:$0xff] %v1224
      %1289 = vst [vmem:[%s172 + $0x90] sm:$0xff] %v1225
      %1290 = vst [vmem:[%s172 + $0x98] sm:$0xff] %v1226
      %1291 = vst [vmem:[%s172 + $0xa0] sm:$0xff] %v1227
      %1292 = vst [vmem:[%s172 + $0xa8] sm:$0xff] %v1228
      %1293 = vst [vmem:[%s172 + $0xb0] sm:$0xff] %v1229
      %1294 = vst [vmem:[%s172 + $0xb8] sm:$0xff] %v1230
      %1295 = vst [vmem:[%s172 + $0xc0] sm:$0xff] %v1231
      %1296 = vst [vmem:[%s172 + $0xc8] sm:$0xff] %v1232
      %1297 = vst [vmem:[%s172 + $0xd0] sm:$0xff] %v1233
      %1298 = vst [vmem:[%s172 + $0xd8] sm:$0xff] %v1234
      %1299 = vst [vmem:[%s172 + $0xe0] sm:$0xff] %v1235
      %1300 = vst [vmem:[%s172 + $0xe8] sm:$0xff] %v1236
      %1301 = vst [vmem:[%s172 + $0xf0] sm:$0xff] %v1237
      %1302 = vst [vmem:[%s172 + $0xf8] sm:$0xff] %v1238
      %1303 = vst [vmem:[%s172 + $0x100] sm:$0xff] %v1239
      %1304 = vst [vmem:[%s172 + $0x108] sm:$0xff] %v1240
      %1305 = vst [vmem:[%s172 + $0x110] sm:$0xff] %v1241
      %1306 = vst [vmem:[%s172 + $0x118] sm:$0xff] %v1242
      %1307 = vst [vmem:[%s172 + $0x120] sm:$0xff] %v1243
      %1308 = vst [vmem:[%s172 + $0x128] sm:$0xff] %v1244
      %1309 = vst [vmem:[%s172 + $0x130] sm:$0xff] %v1245
      %1310 = vst [vmem:[%s172 + $0x138] sm:$0xff] %v1246
      %1311 = vst [vmem:[%s172 + $0x140] sm:$0xff] %v1247
      %1312 = vst [vmem:[%s172 + $0x148] sm:$0xff] %v1248
      %1313 = vst [vmem:[%s172 + $0x150] sm:$0xff] %v1249
      %1314 = vst [vmem:[%s172 + $0x158] sm:$0xff] %v1250
      %1315 = vst [vmem:[%s172 + $0x160] sm:$0xff] %v1251
      %1316 = vst [vmem:[%s172 + $0x168] sm:$0xff] %v1252
      %1317 = vst [vmem:[%s172 + $0x170] sm:$0xff] %v1253
      %1318 = vst [vmem:[%s172 + $0x178] sm:$0xff] %v1254
      %1319 = vst [vmem:[%s172 + $0x180] sm:$0xff] %v1255
      %1320 = vst [vmem:[%s172 + $0x188] sm:$0xff] %v1256
      %1321 = vst [vmem:[%s172 + $0x190] sm:$0xff] %v1257
      %1322 = vst [vmem:[%s172 + $0x198] sm:$0xff] %v1258
      %1323 = vst [vmem:[%s172 + $0x1a0] sm:$0xff] %v1259
      %1324 = vst [vmem:[%s172 + $0x1a8] sm:$0xff] %v1260
      %1325 = vst [vmem:[%s172 + $0x1b0] sm:$0xff] %v1261
      %1326 = vst [vmem:[%s172 + $0x1b8] sm:$0xff] %v1262
      %1327 = vst [vmem:[%s172 + $0x1c0] sm:$0xff] %v1263
      %1328 = vst [vmem:[%s172 + $0x1c8] sm:$0xff] %v1264
      %1329 = vst [vmem:[%s172 + $0x1d0] sm:$0xff] %v1265
      %1330 = vst [vmem:[%s172 + $0x1d8] sm:$0xff] %v1266
      %1331 = vst [vmem:[%s172 + $0x1e0] sm:$0xff] %v1267
      %1332 = vst [vmem:[%s172 + $0x1e8] sm:$0xff] %v1268
      %1333 = vst [vmem:[%s172 + $0x1f0] sm:$0xff] %v1269
      %1334 = vst [vmem:[%s172 + $0x1f8] sm:$0xff] %v1270
      %s1335 = smul.u32 64, %s14
      %p1336 = scmp.lt.s32.totalorder %s1335, 127
      %s1337 = scalar_select %p1336, %s1335, 127
      %s1338 = smul.addr %s1337, 8
      %s1339 = scalar_lea.vmem %s3, %s1338
      // Predicated region
      $region33: #{gcn_res_forward.15} parent=31 // pred_check
        %p1340 = pneg %p100
      $region34: #{gcn_res_forward.15} parent=31 // pred_check_branch
        %1342 = sbr.rel (%p1340) target = $region36
      $region35: #{gcn_res_forward.15} parent=31 // pred_region
        %s1343 = smul.u32 64, %s14
      $region36: #{gcn_res_forward.15} parent=31 // pred_fallthru
        _
    $region32: #{gcn_res_forward.15} parent=5 // pred_fallthru
      _
    %p1344 = scmp.le.s32.totalorder 2, %s9
    // Predicated region
    $region37: #{gcn_res_forward.15} parent=5 // pred_check
      %p1345 = pneg %p1344
    $region38: #{gcn_res_forward.15} parent=5 // pred_check_branch
      %1347 = sbr.rel (%p1345) target = $region40
    $region39: #{gcn_res_forward.15} parent=5 // pred_region
      %s1348 = ssub.s32 %s9, 2
      // Predicated region
      $region41: #{gcn_res_forward.15} parent=39 // pred_check
        %p1349 = pneg %p106
      $region42: #{gcn_res_forward.15} parent=39 // pred_check_branch
        %1351 = sbr.rel (%p1349) target = $region44
      $region43: #{gcn_res_forward.15} parent=39 // pred_region
        %s1352 = smul.u32 64, %s15
        %p1353 = scmp.lt.s32.totalorder %s1352, 127
        %s1354 = scalar_select %p1353, %s1352, 127
        %s1355 = smul.addr %s1354, 8
        %s1356 = scalar_lea.vmem %s3, %s1355
      $region44: #{gcn_res_forward.15} parent=39 // pred_fallthru
        _
    $region40: #{gcn_res_forward.15} parent=5 // pred_fallthru
      _
  $region6: #{gcn_res_forward.15} parent=0 // loop_footer
    %s13 = sadd.s32 1, %s9
  $region7: #{gcn_res_forward.15} parent=0 // loop_footer_branch
    %8 = sbr.rel target = $region3
  $region8: #{gcn_res_forward.15} parent=0 // loop_exit
    _

</llo_original>
